<compile_context>
chip_gen: v7x
topology: tpu7x:2x2x1
jax: 0.10.0
libtpu: 0.0.40
codegen_flags: <defaults>
</compile_context>

<pallas_src>
import functools

import jax
import jax.numpy as jnp
from jax.experimental import pallas as pl
from jax.experimental.pallas import tpu as pltpu


# ---------------------------------------------------------------------------
# In-kernel math helpers
# ---------------------------------------------------------------------------
def _erf(v):
    # Abramowitz & Stegun 7.1.26 -> exact-GELU (erf) parity with nn.GELU()
    # within f32 tolerance; the exp goes to the EUP slot.
    a1, a2, a3, a4, a5 = (0.254829592, -0.284496736, 1.421413741,
                          -1.453152027, 1.061405429)
    p = 0.3275911
    av = jnp.abs(v)
    t = 1.0 / (1.0 + p * av)
    poly = ((((a5 * t + a4) * t + a3) * t + a2) * t + a1) * t
    e = 1.0 - poly * jnp.exp(-av * av)
    return jnp.where(v < 0.0, -e, e)


def _gelu(v):
    # nn.GELU() default = exact erf form.
    return 0.5 * v * (1.0 + _erf(v * 0.7071067811865476))


def _layernorm_c(v, w, b):
    # LayerNorm2d: normalize over the channel (lane) axis per pixel, biased var.
    mu = jnp.mean(v, axis=-1, keepdims=True)
    var = jnp.mean((v - mu) ** 2, axis=-1, keepdims=True)
    return (v - mu) * jax.lax.rsqrt(var + 1e-6) * w + b


# ---------------------------------------------------------------------------
# Kernel: one (image, spatial tile) per grid step.
#   xt/xc/xb: top halo (W pixels), center tile (TP pixels), bottom halo (W).
# ---------------------------------------------------------------------------
def resblock_kernel(xt_ref, xc_ref, xb_ref,
                    ln1w, ln1b, w1, b1, w2, b2, w3, b3,
                    ln2w, ln2b, w4, b4, w5, b5,
                    out_ref, *, W, TP, P):
    j = pl.program_id(1)
    L = TP + 2 * W
    dw = w1.shape[1]

    x_c = xc_ref[0, 0].astype(jnp.float32)                       # (TP, C)
    x_full = jnp.concatenate(
        [xt_ref[0, 0].astype(jnp.float32), x_c,
         xb_ref[0, 0].astype(jnp.float32)], axis=0)               # (L, C)

    def mm(a, wref, bref):
        # bf16 operands on the MXU, f32 accumulate (mixed precision).
        return jnp.dot(a.astype(jnp.bfloat16), wref[...],
                       preferred_element_type=jnp.float32) + bref[...]

    # ----- branch 1: norm1 -> conv1 (1x1) -> conv2 (3x3 dw) -> gelu -> conv3
    h = _layernorm_c(x_full, ln1w[...], ln1b[...])
    h = mm(h, w1, b1)                                             # (L, dw) f32

    # conv2's zero padding applies to its input h: zero rows outside the image.
    row = jax.lax.broadcasted_iota(jnp.int32, (L, 1), 0)
    g = j * TP - W + row                                          # global pixel id
    h = jnp.where((g >= 0) & (g < P), h, 0.0)

    # One zero row on each end so every tap is a single static slice.
    zrow = jnp.zeros((1, dw), jnp.float32)
    h_pad = jnp.concatenate([zrow, h, zrow], axis=0)              # (L + 2, dw)

    # Column masks of the *output* pixel, hoisted out of the tap loop.
    # (j*TP + r) % W == r % W because TP is a multiple of W.
    col = jax.lax.broadcasted_iota(jnp.int32, (TP, 1), 0) % W
    mask_l = col >= 1
    mask_r = col <= W - 2

    w2v = w2[...]                                                 # (9, dw)
    acc = jnp.zeros((TP, dw), jnp.float32)
    for dx in (-1, 0, 1):
        part = None
        for dy in (-1, 0, 1):
            s = dy * W + dx
            piece = h_pad[W + 1 + s: W + 1 + s + TP]              # (TP, dw)
            contrib = piece * w2v[(dy + 1) * 3 + (dx + 1)].reshape(1, dw)
            part = contrib if part is None else part + contrib
        if dx == -1:
            part = jnp.where(mask_l, part, 0.0)
        elif dx == 1:
            part = jnp.where(mask_r, part, 0.0)
        acc = acc + part

    hc = _gelu(acc + b2[...])
    hc = mm(hc, w3, b3)                                           # (TP, C)

    # TODO(synk): MaskGuidedMechanism (MI=True path) is undefined in the given
    # source; this kernel implements MI=False, so no mask modulation here.
    y = x_c + hc                                                  # beta = 1

    # ----- branch 2 (FFN): norm2 -> conv4 (1x1) -> gelu -> conv5 (1x1)
    z = _layernorm_c(y, ln2w[...], ln2b[...])
    z = mm(z, w4, b4)                                             # (TP, ffn)
    z = _gelu(z)
    z = mm(z, w5, b5)                                             # (TP, C)

    out_ref[0, 0] = (y + z).astype(out_ref.dtype)                 # gamma = 1


# ---------------------------------------------------------------------------
# Wrapper
# ---------------------------------------------------------------------------
PARAM_ORDER = ("ln1_w", "ln1_b", "w1", "b1", "w2", "b2", "w3", "b3",
               "ln2_w", "ln2_b", "w4", "b4", "w5", "b5")
_BF16_MATMUL_WEIGHTS = ("w1", "w3", "w4", "w5")


def _pick_tile_pixels(H, W, C, dw, ffn, budget_bytes=32 * 1024 * 1024):
    # Rough per-pixel f32 VMEM footprint (double-buffered I/O tiles + the
    # largest simultaneously-live kernel intermediates).  Keeps the footprint
    # within v7x's 64 MiB VMEM while picking the biggest legal tile.
    per_pixel = 4 * (8 * C + 6 * dw + 3 * ffn)
    max_rows = max(W, budget_bytes // max(per_pixel, 1))
    tp = W
    for k in range(1, H + 1):
        if H % k == 0 and k * W <= max_rows:
            tp = k * W                      # multiple of W, divides H*W
    return tp


def resblock_forward(inp_nchw, params, mask=None, tile_pixels=None):
    del mask  # MI=False: mask is accepted but unused.
    N, C, H, W = inp_nchw.shape
    P = H * W
    dw = params["w1"].shape[1]
    ffn = params["w4"].shape[1]

    TP = tile_pixels or _pick_tile_pixels(H, W, C, dw, ffn)
    assert TP % W == 0 and P % TP == 0
    T = P // TP

    # NCHW -> (N, T, TP, C): pixels x channels, tiled along the flat pixel axis.
    x = jnp.transpose(inp_nchw, (0, 2, 3, 1)).reshape(N, T, TP, C)

    # +/- one image row (W pixels) of halo per tile for the 3x3 depthwise conv.
    # Content at image boundaries is irrelevant (masked in-kernel); use zeros.
    zero = jnp.zeros((N, 1, W, C), x.dtype)
    top = jnp.concatenate([zero, x[:, :T - 1, TP - W:, :]], axis=1)   # (N,T,W,C)
    bot = jnp.concatenate([x[:, 1:, :W, :], zero], axis=1)            # (N,T,W,C)

    halo_spec = pl.BlockSpec((1, 1, W, C), lambda n, j: (n, j, 0, 0))
    tile_spec = pl.BlockSpec((1, 1, TP, C), lambda n, j: (n, j, 0, 0))

    def p_spec(shape):
        nd = len(shape)
        return pl.BlockSpec(shape, lambda n, j, _nd=nd: (0,) * _nd)

    param_list = []
    for k in PARAM_ORDER:
        p = params[k]
        if k in _BF16_MATMUL_WEIGHTS:
            p = p.astype(jnp.bfloat16)    # MXU operands in bf16, accum in f32
        param_list.append(p)

    in_specs = [halo_spec, tile_spec, halo_spec] + [p_spec(p.shape) for p in param_list]

    out = pl.pallas_call(
        functools.partial(resblock_kernel, W=W, TP=TP, P=P),
        grid=(N, T),
        in_specs=in_specs,
        out_specs=tile_spec,
        out_shape=jax.ShapeDtypeStruct((N, T, TP, C), inp_nchw.dtype),
        compiler_params=pltpu.CompilerParams(
            dimension_semantics=("parallel", "parallel"),
            vmem_limit_bytes=48 * 1024 * 1024,
        ),
    )(top, x, bot, *param_list)

    return jnp.transpose(out.reshape(N, H, W, C), (0, 3, 1, 2))


def init_params(key, chan, width_ratio=1):
    # Deterministic synthetic init. Correspondence to PyTorch parameters:
    #   conv1.weight (dw, chan, 1, 1) -> w1 (chan, dw)   [transposed, squeezed]
    #   conv2.weight (dw, 1, 3, 3)    -> w2 (9, dw)      [w2[dy*3+dx, c] = W[c,0,dy,dx]]
    #   conv3.weight (chan, dw, 1, 1) -> w3 (dw, chan)
    #   conv4/conv5 analogous; LayerNorm2d weight=1, bias=0 (default init).
    dw = chan * width_ratio
    ffn = chan * width_ratio
    keys = jax.random.split(key, 10)

    def w(k, shape, scale=0.1):
        return (scale * jax.random.normal(k, shape)).astype(jnp.float32)

    return {
        "ln1_w": jnp.ones((1, chan), jnp.float32),
        "ln1_b": jnp.zeros((1, chan), jnp.float32),
        "w1": w(keys[0], (chan, dw)),
        "b1": w(keys[1], (1, dw)),
        "w2": w(keys[2], (9, dw)),
        "b2": w(keys[3], (1, dw)),
        "w3": w(keys[4], (dw, chan)),
        "b3": w(keys[5], (1, chan)),
        "ln2_w": jnp.ones((1, chan), jnp.float32),
        "ln2_b": jnp.zeros((1, chan), jnp.float32),
        "w4": w(keys[6], (chan, ffn)),
        "b4": w(keys[7], (1, ffn)),
        "w5": w(keys[8], (ffn, chan)),
        "b5": w(keys[9], (1, chan)),
    }


if __name__ == "__main__":
    chan, width_ratio = 4, 2
    N, H, W = 2, 16, 16

    key = jax.random.PRNGKey(0)
    kx, kp = jax.random.split(key)
    inp = jax.random.normal(kx, (N, chan, H, W), dtype=jnp.float32)   # NCHW
    mask = jax.random.normal(jax.random.PRNGKey(1), (N, 1, H, W),
                             dtype=jnp.float32)  # accepted but unused (MI=False)
    params = init_params(kp, chan, width_ratio)

    out = resblock_forward(inp, params, mask)
    jax.block_until_ready(out)
    assert out.shape == inp.shape and out.dtype == inp.dtype
    print("KERNEL_OK")
</pallas_src>

<mosaic_0001>
module attributes {stable_mosaic.version = 11 : i64} {
  func.func @resblock_kernel(%arg0: i32, %arg1: i32, %arg2: memref<1x1x16x4xf32, #tpu.memory_space<vmem>>, %arg3: memref<1x1x256x4xf32, #tpu.memory_space<vmem>>, %arg4: memref<1x1x16x4xf32, #tpu.memory_space<vmem>>, %arg5: memref<1x4xf32, #tpu.memory_space<vmem>>, %arg6: memref<1x4xf32, #tpu.memory_space<vmem>>, %arg7: memref<4x8xbf16, #tpu.memory_space<vmem>>, %arg8: memref<1x8xf32, #tpu.memory_space<vmem>>, %arg9: memref<9x8xf32, #tpu.memory_space<vmem>>, %arg10: memref<1x8xf32, #tpu.memory_space<vmem>>, %arg11: memref<8x4xbf16, #tpu.memory_space<vmem>>, %arg12: memref<1x4xf32, #tpu.memory_space<vmem>>, %arg13: memref<1x4xf32, #tpu.memory_space<vmem>>, %arg14: memref<1x4xf32, #tpu.memory_space<vmem>>, %arg15: memref<4x8xbf16, #tpu.memory_space<vmem>>, %arg16: memref<1x8xf32, #tpu.memory_space<vmem>>, %arg17: memref<8x4xbf16, #tpu.memory_space<vmem>>, %arg18: memref<1x4xf32, #tpu.memory_space<vmem>>, %arg19: memref<1x1x256x4xf32, #tpu.memory_space<vmem>>) attributes {dimension_semantics = [#tpu.dimension_semantics<parallel>, #tpu.dimension_semantics<parallel>], iteration_bounds = array<i64: 2, 1>, scalar_prefetch = 0 : i64, scratch_operands = 0 : i64, tpu.core_type = #tpu.core_type<tc>, window_params = [{transform_indices = @transform_0, window_bounds = array<i64: 1, 1, 16, 4>}, {transform_indices = @transform_1, window_bounds = array<i64: 1, 1, 256, 4>}, {transform_indices = @transform_2, window_bounds = array<i64: 1, 1, 16, 4>}, {pipeline_mode = #tpu.pipeline_mode<synchronous>, transform_indices = @transform_3, window_bounds = array<i64: 1, 4>}, {pipeline_mode = #tpu.pipeline_mode<synchronous>, transform_indices = @transform_4, window_bounds = array<i64: 1, 4>}, {pipeline_mode = #tpu.pipeline_mode<synchronous>, transform_indices = @transform_5, window_bounds = array<i64: 4, 8>}, {pipeline_mode = #tpu.pipeline_mode<synchronous>, transform_indices = @transform_6, window_bounds = array<i64: 1, 8>}, {pipeline_mode = #tpu.pipeline_mode<synchronous>, transform_indices = @transform_7, window_bounds = array<i64: 9, 8>}, {pipeline_mode = #tpu.pipeline_mode<synchronous>, transform_indices = @transform_8, window_bounds = array<i64: 1, 8>}, {pipeline_mode = #tpu.pipeline_mode<synchronous>, transform_indices = @transform_9, window_bounds = array<i64: 8, 4>}, {pipeline_mode = #tpu.pipeline_mode<synchronous>, transform_indices = @transform_10, window_bounds = array<i64: 1, 4>}, {pipeline_mode = #tpu.pipeline_mode<synchronous>, transform_indices = @transform_11, window_bounds = array<i64: 1, 4>}, {pipeline_mode = #tpu.pipeline_mode<synchronous>, transform_indices = @transform_12, window_bounds = array<i64: 1, 4>}, {pipeline_mode = #tpu.pipeline_mode<synchronous>, transform_indices = @transform_13, window_bounds = array<i64: 4, 8>}, {pipeline_mode = #tpu.pipeline_mode<synchronous>, transform_indices = @transform_14, window_bounds = array<i64: 1, 8>}, {pipeline_mode = #tpu.pipeline_mode<synchronous>, transform_indices = @transform_15, window_bounds = array<i64: 8, 4>}, {pipeline_mode = #tpu.pipeline_mode<synchronous>, transform_indices = @transform_16, window_bounds = array<i64: 1, 4>}, {transform_indices = @transform_17, window_bounds = array<i64: 1, 1, 256, 4>}]} {
    %c0 = arith.constant 0 : index
    %c0_0 = arith.constant 0 : index
    %c0_1 = arith.constant 0 : index
    %c0_2 = arith.constant 0 : index
    %0 = vector.load %arg3[%c0, %c0_0, %c0_1, %c0_2] : memref<1x1x256x4xf32, #tpu.memory_space<vmem>>, vector<1x1x256x4xf32>
    %1 = vector.shape_cast %0 : vector<1x1x256x4xf32> to vector<256x4xf32>
    %c0_3 = arith.constant 0 : index
    %c0_4 = arith.constant 0 : index
    %c0_5 = arith.constant 0 : index
    %c0_6 = arith.constant 0 : index
    %2 = vector.load %arg2[%c0_3, %c0_4, %c0_5, %c0_6] : memref<1x1x16x4xf32, #tpu.memory_space<vmem>>, vector<1x1x16x4xf32>
    %3 = vector.shape_cast %2 : vector<1x1x16x4xf32> to vector<16x4xf32>
    %c0_7 = arith.constant 0 : index
    %c0_8 = arith.constant 0 : index
    %c0_9 = arith.constant 0 : index
    %c0_10 = arith.constant 0 : index
    %4 = vector.load %arg4[%c0_7, %c0_8, %c0_9, %c0_10] : memref<1x1x16x4xf32, #tpu.memory_space<vmem>>, vector<1x1x16x4xf32>
    %5 = vector.shape_cast %4 : vector<1x1x16x4xf32> to vector<16x4xf32>
    %6 = tpu.concatenate %3, %1, %5 in 0 : vector<16x4xf32>, vector<256x4xf32>, vector<16x4xf32> -> vector<288x4xf32>
    %c0_11 = arith.constant 0 : index
    %c0_12 = arith.constant 0 : index
    %7 = vector.load %arg5[%c0_11, %c0_12] : memref<1x4xf32, #tpu.memory_space<vmem>>, vector<1x4xf32>
    %c0_13 = arith.constant 0 : index
    %c0_14 = arith.constant 0 : index
    %8 = vector.load %arg6[%c0_13, %c0_14] : memref<1x4xf32, #tpu.memory_space<vmem>>, vector<1x4xf32>
    %cst = arith.constant dense<0.000000e+00> : vector<288xf32>
    %9 = vector.multi_reduction <add>, %6, %cst [1] : vector<288x4xf32> to vector<288xf32>
    %10 = vector.shape_cast %9 : vector<288xf32> to vector<288x1xf32>
    %cst_15 = arith.constant 4.000000e+00 : f32
    %11 = vector.broadcast %cst_15 : f32 to vector<288x1xf32>
    %12 = arith.divf %10, %11 : vector<288x1xf32>
    %13 = vector.broadcast %12 : vector<288x1xf32> to vector<288x4xf32>
    %14 = arith.subf %6, %13 : vector<288x4xf32>
    %15 = arith.mulf %14, %14 : vector<288x4xf32>
    %cst_16 = arith.constant dense<0.000000e+00> : vector<288xf32>
    %16 = vector.multi_reduction <add>, %15, %cst_16 [1] : vector<288x4xf32> to vector<288xf32>
    %17 = vector.shape_cast %16 : vector<288xf32> to vector<288x1xf32>
    %cst_17 = arith.constant 4.000000e+00 : f32
    %18 = vector.broadcast %cst_17 : f32 to vector<288x1xf32>
    %19 = arith.divf %17, %18 : vector<288x1xf32>
    %20 = vector.broadcast %12 : vector<288x1xf32> to vector<288x4xf32>
    %21 = arith.subf %6, %20 : vector<288x4xf32>
    %cst_18 = arith.constant 9.99999997E-7 : f32
    %22 = vector.broadcast %cst_18 : f32 to vector<288x1xf32>
    %23 = arith.addf %19, %22 : vector<288x1xf32>
    %24 = math.rsqrt %23 : vector<288x1xf32>
    %25 = vector.broadcast %24 : vector<288x1xf32> to vector<288x4xf32>
    %26 = arith.mulf %21, %25 : vector<288x4xf32>
    %27 = vector.broadcast %7 : vector<1x4xf32> to vector<288x4xf32>
    %28 = arith.mulf %26, %27 : vector<288x4xf32>
    %29 = vector.broadcast %8 : vector<1x4xf32> to vector<288x4xf32>
    %30 = arith.addf %28, %29 : vector<288x4xf32>
    %31 = arith.truncf %30 : vector<288x4xf32> to vector<288x4xbf16>
    %c0_19 = arith.constant 0 : index
    %c0_20 = arith.constant 0 : index
    %32 = vector.load %arg7[%c0_19, %c0_20] : memref<4x8xbf16, #tpu.memory_space<vmem>>, vector<4x8xbf16>
    %cst_21 = arith.constant dense<0.000000e+00> : vector<288x8xf32>
    %33 = tpu.matmul %31, %32, %cst_21 {dimension_numbers = #tpu.dot_dimension_numbers<[1], [0], [0], [1], [0, 0, 1, 1], [], []>} : vector<288x4xbf16>, vector<4x8xbf16>, vector<288x8xf32> -> vector<288x8xf32>
    %c0_22 = arith.constant 0 : index
    %c0_23 = arith.constant 0 : index
    %34 = vector.load %arg8[%c0_22, %c0_23] : memref<1x8xf32, #tpu.memory_space<vmem>>, vector<1x8xf32>
    %35 = vector.broadcast %34 : vector<1x8xf32> to vector<288x8xf32>
    %36 = arith.addf %33, %35 : vector<288x8xf32>
    %37 = tpu.iota {dimensions = array<i32: 0>} : vector<288x1xi32>
    %c256_i32 = arith.constant 256 : i32
    %38 = arith.muli %arg1, %c256_i32 : i32
    %c16_i32 = arith.constant 16 : i32
    %39 = arith.subi %38, %c16_i32 : i32
    %40 = vector.broadcast %39 : i32 to vector<288x1xi32>
    %41 = arith.addi %40, %37 : vector<288x1xi32>
    %c0_i32 = arith.constant 0 : i32
    %42 = vector.broadcast %c0_i32 : i32 to vector<288x1xi32>
    %43 = arith.cmpi sge, %41, %42 : vector<288x1xi32>
    %c256_i32_24 = arith.constant 256 : i32
    %44 = vector.broadcast %c256_i32_24 : i32 to vector<288x1xi32>
    %45 = arith.cmpi slt, %41, %44 : vector<288x1xi32>
    %46 = arith.andi %43, %45 : vector<288x1xi1>
    %cst_25 = arith.constant 0.000000e+00 : f32
    %47 = vector.shape_cast %46 : vector<288x1xi1> to vector<288x1xi1>
    %48 = vector.broadcast %47 : vector<288x1xi1> to vector<288x8xi1>
    %49 = vector.broadcast %cst_25 : f32 to vector<288x8xf32>
    %50 = arith.select %48, %36, %49 : vector<288x8xi1>, vector<288x8xf32>
    %cst_26 = arith.constant 0.000000e+00 : f32
    %51 = vector.broadcast %cst_26 : f32 to vector<1x8xf32>
    %52 = tpu.concatenate %51, %50, %51 in 0 : vector<1x8xf32>, vector<288x8xf32>, vector<1x8xf32> -> vector<290x8xf32>
    %53 = tpu.iota {dimensions = array<i32: 0>} : vector<256x1xi32>
    %c16_i32_27 = arith.constant 16 : i32
    %c0_i32_28 = arith.constant 0 : i32
    %54 = arith.cmpi eq, %c16_i32_27, %c0_i32_28 : i32
    %c1_i32 = arith.constant 1 : i32
    %55 = arith.select %54, %c1_i32, %c16_i32_27 : i32
    %56 = vector.broadcast %55 : i32 to vector<256x1xi32>
    %57 = arith.remsi %53, %56 : vector<256x1xi32>
    %c0_i32_29 = arith.constant 0 : i32
    %58 = vector.broadcast %c0_i32_29 : i32 to vector<256x1xi32>
    %59 = arith.cmpi ne, %57, %58 : vector<256x1xi32>
    %c0_i32_30 = arith.constant 0 : i32
    %60 = vector.broadcast %c0_i32_30 : i32 to vector<256x1xi32>
    %61 = arith.cmpi slt, %57, %60 : vector<256x1xi32>
    %c0_i32_31 = arith.constant 0 : i32
    %62 = arith.cmpi slt, %55, %c0_i32_31 : i32
    %63 = vector.broadcast %62 : i1 to vector<256x1xi1>
    %64 = vector.broadcast %63 : vector<256x1xi1> to vector<256x1xi1>
    %65 = arith.xori %61, %64 : vector<256x1xi1>
    %66 = arith.andi %65, %59 : vector<256x1xi1>
    %67 = vector.broadcast %55 : i32 to vector<256x1xi32>
    %68 = arith.addi %57, %67 : vector<256x1xi32>
    %69 = arith.select %66, %68, %57 : vector<256x1xi1>, vector<256x1xi32>
    %c1_i32_32 = arith.constant 1 : i32
    %70 = vector.broadcast %c1_i32_32 : i32 to vector<256x1xi32>
    %71 = arith.cmpi sge, %69, %70 : vector<256x1xi32>
    %c14_i32 = arith.constant 14 : i32
    %72 = vector.broadcast %c14_i32 : i32 to vector<256x1xi32>
    %73 = arith.cmpi sle, %69, %72 : vector<256x1xi32>
    %c0_33 = arith.constant 0 : index
    %c0_34 = arith.constant 0 : index
    %74 = vector.load %arg9[%c0_33, %c0_34] : memref<9x8xf32, #tpu.memory_space<vmem>>, vector<9x8xf32>
    %cst_35 = arith.constant 0.000000e+00 : f32
    %75 = vector.broadcast %cst_35 : f32 to vector<256x8xf32>
    %76 = vector.extract_strided_slice %52 {offsets = [0, 0], sizes = [256, 8], strides = [1, 1]} : vector<290x8xf32> to vector<256x8xf32>
    %77 = vector.extract_strided_slice %74 {offsets = [0, 0], sizes = [1, 8], strides = [1, 1]} : vector<9x8xf32> to vector<1x8xf32>
    %78 = vector.shape_cast %77 : vector<1x8xf32> to vector<8xf32>
    %79 = vector.shape_cast %78 : vector<8xf32> to vector<1x8xf32>
    %80 = vector.broadcast %79 : vector<1x8xf32> to vector<256x8xf32>
    %81 = arith.mulf %76, %80 : vector<256x8xf32>
    %82 = vector.extract_strided_slice %52 {offsets = [16, 0], sizes = [256, 8], strides = [1, 1]} : vector<290x8xf32> to vector<256x8xf32>
    %83 = vector.extract_strided_slice %74 {offsets = [3, 0], sizes = [1, 8], strides = [1, 1]} : vector<9x8xf32> to vector<1x8xf32>
    %84 = vector.shape_cast %83 : vector<1x8xf32> to vector<8xf32>
    %85 = vector.shape_cast %84 : vector<8xf32> to vector<1x8xf32>
    %86 = vector.broadcast %85 : vector<1x8xf32> to vector<256x8xf32>
    %87 = arith.mulf %82, %86 : vector<256x8xf32>
    %88 = arith.addf %81, %87 : vector<256x8xf32>
    %89 = vector.extract_strided_slice %52 {offsets = [32, 0], sizes = [256, 8], strides = [1, 1]} : vector<290x8xf32> to vector<256x8xf32>
    %90 = vector.extract_strided_slice %74 {offsets = [6, 0], sizes = [1, 8], strides = [1, 1]} : vector<9x8xf32> to vector<1x8xf32>
    %91 = vector.shape_cast %90 : vector<1x8xf32> to vector<8xf32>
    %92 = vector.shape_cast %91 : vector<8xf32> to vector<1x8xf32>
    %93 = vector.broadcast %92 : vector<1x8xf32> to vector<256x8xf32>
    %94 = arith.mulf %89, %93 : vector<256x8xf32>
    %95 = arith.addf %88, %94 : vector<256x8xf32>
    %cst_36 = arith.constant 0.000000e+00 : f32
    %96 = vector.shape_cast %71 : vector<256x1xi1> to vector<256x1xi1>
    %97 = vector.broadcast %96 : vector<256x1xi1> to vector<256x8xi1>
    %98 = vector.broadcast %cst_36 : f32 to vector<256x8xf32>
    %99 = arith.select %97, %95, %98 : vector<256x8xi1>, vector<256x8xf32>
    %100 = arith.addf %75, %99 : vector<256x8xf32>
    %101 = vector.extract_strided_slice %52 {offsets = [1, 0], sizes = [256, 8], strides = [1, 1]} : vector<290x8xf32> to vector<256x8xf32>
    %102 = vector.extract_strided_slice %74 {offsets = [1, 0], sizes = [1, 8], strides = [1, 1]} : vector<9x8xf32> to vector<1x8xf32>
    %103 = vector.shape_cast %102 : vector<1x8xf32> to vector<8xf32>
    %104 = vector.shape_cast %103 : vector<8xf32> to vector<1x8xf32>
    %105 = vector.broadcast %104 : vector<1x8xf32> to vector<256x8xf32>
    %106 = arith.mulf %101, %105 : vector<256x8xf32>
    %107 = vector.extract_strided_slice %52 {offsets = [17, 0], sizes = [256, 8], strides = [1, 1]} : vector<290x8xf32> to vector<256x8xf32>
    %108 = vector.extract_strided_slice %74 {offsets = [4, 0], sizes = [1, 8], strides = [1, 1]} : vector<9x8xf32> to vector<1x8xf32>
    %109 = vector.shape_cast %108 : vector<1x8xf32> to vector<8xf32>
    %110 = vector.shape_cast %109 : vector<8xf32> to vector<1x8xf32>
    %111 = vector.broadcast %110 : vector<1x8xf32> to vector<256x8xf32>
    %112 = arith.mulf %107, %111 : vector<256x8xf32>
    %113 = arith.addf %106, %112 : vector<256x8xf32>
    %114 = vector.extract_strided_slice %52 {offsets = [33, 0], sizes = [256, 8], strides = [1, 1]} : vector<290x8xf32> to vector<256x8xf32>
    %115 = vector.extract_strided_slice %74 {offsets = [7, 0], sizes = [1, 8], strides = [1, 1]} : vector<9x8xf32> to vector<1x8xf32>
    %116 = vector.shape_cast %115 : vector<1x8xf32> to vector<8xf32>
    %117 = vector.shape_cast %116 : vector<8xf32> to vector<1x8xf32>
    %118 = vector.broadcast %117 : vector<1x8xf32> to vector<256x8xf32>
    %119 = arith.mulf %114, %118 : vector<256x8xf32>
    %120 = arith.addf %113, %119 : vector<256x8xf32>
    %121 = arith.addf %100, %120 : vector<256x8xf32>
    %122 = vector.extract_strided_slice %52 {offsets = [2, 0], sizes = [256, 8], strides = [1, 1]} : vector<290x8xf32> to vector<256x8xf32>
    %123 = vector.extract_strided_slice %74 {offsets = [2, 0], sizes = [1, 8], strides = [1, 1]} : vector<9x8xf32> to vector<1x8xf32>
    %124 = vector.shape_cast %123 : vector<1x8xf32> to vector<8xf32>
    %125 = vector.shape_cast %124 : vector<8xf32> to vector<1x8xf32>
    %126 = vector.broadcast %125 : vector<1x8xf32> to vector<256x8xf32>
    %127 = arith.mulf %122, %126 : vector<256x8xf32>
    %128 = vector.extract_strided_slice %52 {offsets = [18, 0], sizes = [256, 8], strides = [1, 1]} : vector<290x8xf32> to vector<256x8xf32>
    %129 = vector.extract_strided_slice %74 {offsets = [5, 0], sizes = [1, 8], strides = [1, 1]} : vector<9x8xf32> to vector<1x8xf32>
    %130 = vector.shape_cast %129 : vector<1x8xf32> to vector<8xf32>
    %131 = vector.shape_cast %130 : vector<8xf32> to vector<1x8xf32>
    %132 = vector.broadcast %131 : vector<1x8xf32> to vector<256x8xf32>
    %133 = arith.mulf %128, %132 : vector<256x8xf32>
    %134 = arith.addf %127, %133 : vector<256x8xf32>
    %135 = vector.extract_strided_slice %52 {offsets = [34, 0], sizes = [256, 8], strides = [1, 1]} : vector<290x8xf32> to vector<256x8xf32>
    %136 = vector.extract_strided_slice %74 {offsets = [8, 0], sizes = [1, 8], strides = [1, 1]} : vector<9x8xf32> to vector<1x8xf32>
    %137 = vector.shape_cast %136 : vector<1x8xf32> to vector<8xf32>
    %138 = vector.shape_cast %137 : vector<8xf32> to vector<1x8xf32>
    %139 = vector.broadcast %138 : vector<1x8xf32> to vector<256x8xf32>
    %140 = arith.mulf %135, %139 : vector<256x8xf32>
    %141 = arith.addf %134, %140 : vector<256x8xf32>
    %cst_37 = arith.constant 0.000000e+00 : f32
    %142 = vector.shape_cast %73 : vector<256x1xi1> to vector<256x1xi1>
    %143 = vector.broadcast %142 : vector<256x1xi1> to vector<256x8xi1>
    %144 = vector.broadcast %cst_37 : f32 to vector<256x8xf32>
    %145 = arith.select %143, %141, %144 : vector<256x8xi1>, vector<256x8xf32>
    %146 = arith.addf %121, %145 : vector<256x8xf32>
    %c0_38 = arith.constant 0 : index
    %c0_39 = arith.constant 0 : index
    %147 = vector.load %arg10[%c0_38, %c0_39] : memref<1x8xf32, #tpu.memory_space<vmem>>, vector<1x8xf32>
    %148 = vector.broadcast %147 : vector<1x8xf32> to vector<256x8xf32>
    %149 = arith.addf %146, %148 : vector<256x8xf32>
    %cst_40 = arith.constant 5.000000e-01 : f32
    %150 = vector.broadcast %cst_40 : f32 to vector<256x8xf32>
    %151 = arith.mulf %150, %149 : vector<256x8xf32>
    %cst_41 = arith.constant 0.707106769 : f32
    %152 = vector.broadcast %cst_41 : f32 to vector<256x8xf32>
    %153 = arith.mulf %149, %152 : vector<256x8xf32>
    %154 = math.absf %153 : vector<256x8xf32>
    %cst_42 = arith.constant 0.327591091 : f32
    %155 = vector.broadcast %cst_42 : f32 to vector<256x8xf32>
    %156 = arith.mulf %155, %154 : vector<256x8xf32>
    %cst_43 = arith.constant 1.000000e+00 : f32
    %157 = vector.broadcast %cst_43 : f32 to vector<256x8xf32>
    %158 = arith.addf %157, %156 : vector<256x8xf32>
    %cst_44 = arith.constant 1.000000e+00 : f32
    %159 = vector.broadcast %cst_44 : f32 to vector<256x8xf32>
    %160 = arith.divf %159, %158 : vector<256x8xf32>
    %cst_45 = arith.constant 1.06140542 : f32
    %161 = vector.broadcast %cst_45 : f32 to vector<256x8xf32>
    %162 = arith.mulf %161, %160 : vector<256x8xf32>
    %cst_46 = arith.constant -1.45315206 : f32
    %163 = vector.broadcast %cst_46 : f32 to vector<256x8xf32>
    %164 = arith.addf %162, %163 : vector<256x8xf32>
    %165 = arith.mulf %164, %160 : vector<256x8xf32>
    %cst_47 = arith.constant 1.42141378 : f32
    %166 = vector.broadcast %cst_47 : f32 to vector<256x8xf32>
    %167 = arith.addf %165, %166 : vector<256x8xf32>
    %168 = arith.mulf %167, %160 : vector<256x8xf32>
    %cst_48 = arith.constant -0.284496725 : f32
    %169 = vector.broadcast %cst_48 : f32 to vector<256x8xf32>
    %170 = arith.addf %168, %169 : vector<256x8xf32>
    %171 = arith.mulf %170, %160 : vector<256x8xf32>
    %cst_49 = arith.constant 0.254829586 : f32
    %172 = vector.broadcast %cst_49 : f32 to vector<256x8xf32>
    %173 = arith.addf %171, %172 : vector<256x8xf32>
    %174 = arith.mulf %173, %160 : vector<256x8xf32>
    %cst_50 = arith.constant 0.000000e+00 : f32
    %175 = vector.broadcast %cst_50 : f32 to vector<256x8xf32>
    %176 = arith.subf %175, %154 : vector<256x8xf32>
    %177 = arith.mulf %176, %154 : vector<256x8xf32>
    %178 = math.exp %177 : vector<256x8xf32>
    %179 = arith.mulf %174, %178 : vector<256x8xf32>
    %cst_51 = arith.constant 1.000000e+00 : f32
    %180 = vector.broadcast %cst_51 : f32 to vector<256x8xf32>
    %181 = arith.subf %180, %179 : vector<256x8xf32>
    %cst_52 = arith.constant 0.000000e+00 : f32
    %182 = vector.broadcast %cst_52 : f32 to vector<256x8xf32>
    %183 = arith.cmpf olt, %153, %182 : vector<256x8xf32>
    %cst_53 = arith.constant 0.000000e+00 : f32
    %184 = vector.broadcast %cst_53 : f32 to vector<256x8xf32>
    %185 = arith.subf %184, %181 : vector<256x8xf32>
    %186 = arith.select %183, %185, %181 : vector<256x8xi1>, vector<256x8xf32>
    %cst_54 = arith.constant 1.000000e+00 : f32
    %187 = vector.broadcast %cst_54 : f32 to vector<256x8xf32>
    %188 = arith.addf %187, %186 : vector<256x8xf32>
    %189 = arith.mulf %151, %188 : vector<256x8xf32>
    %190 = arith.truncf %189 : vector<256x8xf32> to vector<256x8xbf16>
    %c0_55 = arith.constant 0 : index
    %c0_56 = arith.constant 0 : index
    %191 = vector.load %arg11[%c0_55, %c0_56] : memref<8x4xbf16, #tpu.memory_space<vmem>>, vector<8x4xbf16>
    %cst_57 = arith.constant dense<0.000000e+00> : vector<256x4xf32>
    %192 = tpu.matmul %190, %191, %cst_57 {dimension_numbers = #tpu.dot_dimension_numbers<[1], [0], [0], [1], [0, 0, 1, 1], [], []>} : vector<256x8xbf16>, vector<8x4xbf16>, vector<256x4xf32> -> vector<256x4xf32>
    %c0_58 = arith.constant 0 : index
    %c0_59 = arith.constant 0 : index
    %193 = vector.load %arg12[%c0_58, %c0_59] : memref<1x4xf32, #tpu.memory_space<vmem>>, vector<1x4xf32>
    %194 = vector.broadcast %193 : vector<1x4xf32> to vector<256x4xf32>
    %195 = arith.addf %192, %194 : vector<256x4xf32>
    %196 = arith.addf %1, %195 : vector<256x4xf32>
    %c0_60 = arith.constant 0 : index
    %c0_61 = arith.constant 0 : index
    %197 = vector.load %arg13[%c0_60, %c0_61] : memref<1x4xf32, #tpu.memory_space<vmem>>, vector<1x4xf32>
    %c0_62 = arith.constant 0 : index
    %c0_63 = arith.constant 0 : index
    %198 = vector.load %arg14[%c0_62, %c0_63] : memref<1x4xf32, #tpu.memory_space<vmem>>, vector<1x4xf32>
    %cst_64 = arith.constant dense<0.000000e+00> : vector<256xf32>
    %199 = vector.multi_reduction <add>, %196, %cst_64 [1] : vector<256x4xf32> to vector<256xf32>
    %200 = vector.shape_cast %199 : vector<256xf32> to vector<256x1xf32>
    %cst_65 = arith.constant 4.000000e+00 : f32
    %201 = vector.broadcast %cst_65 : f32 to vector<256x1xf32>
    %202 = arith.divf %200, %201 : vector<256x1xf32>
    %203 = vector.broadcast %202 : vector<256x1xf32> to vector<256x4xf32>
    %204 = arith.subf %196, %203 : vector<256x4xf32>
    %205 = arith.mulf %204, %204 : vector<256x4xf32>
    %cst_66 = arith.constant dense<0.000000e+00> : vector<256xf32>
    %206 = vector.multi_reduction <add>, %205, %cst_66 [1] : vector<256x4xf32> to vector<256xf32>
    %207 = vector.shape_cast %206 : vector<256xf32> to vector<256x1xf32>
    %cst_67 = arith.constant 4.000000e+00 : f32
    %208 = vector.broadcast %cst_67 : f32 to vector<256x1xf32>
    %209 = arith.divf %207, %208 : vector<256x1xf32>
    %210 = vector.broadcast %202 : vector<256x1xf32> to vector<256x4xf32>
    %211 = arith.subf %196, %210 : vector<256x4xf32>
    %cst_68 = arith.constant 9.99999997E-7 : f32
    %212 = vector.broadcast %cst_68 : f32 to vector<256x1xf32>
    %213 = arith.addf %209, %212 : vector<256x1xf32>
    %214 = math.rsqrt %213 : vector<256x1xf32>
    %215 = vector.broadcast %214 : vector<256x1xf32> to vector<256x4xf32>
    %216 = arith.mulf %211, %215 : vector<256x4xf32>
    %217 = vector.broadcast %197 : vector<1x4xf32> to vector<256x4xf32>
    %218 = arith.mulf %216, %217 : vector<256x4xf32>
    %219 = vector.broadcast %198 : vector<1x4xf32> to vector<256x4xf32>
    %220 = arith.addf %218, %219 : vector<256x4xf32>
    %221 = arith.truncf %220 : vector<256x4xf32> to vector<256x4xbf16>
    %c0_69 = arith.constant 0 : index
    %c0_70 = arith.constant 0 : index
    %222 = vector.load %arg15[%c0_69, %c0_70] : memref<4x8xbf16, #tpu.memory_space<vmem>>, vector<4x8xbf16>
    %cst_71 = arith.constant dense<0.000000e+00> : vector<256x8xf32>
    %223 = tpu.matmul %221, %222, %cst_71 {dimension_numbers = #tpu.dot_dimension_numbers<[1], [0], [0], [1], [0, 0, 1, 1], [], []>} : vector<256x4xbf16>, vector<4x8xbf16>, vector<256x8xf32> -> vector<256x8xf32>
    %c0_72 = arith.constant 0 : index
    %c0_73 = arith.constant 0 : index
    %224 = vector.load %arg16[%c0_72, %c0_73] : memref<1x8xf32, #tpu.memory_space<vmem>>, vector<1x8xf32>
    %225 = vector.broadcast %224 : vector<1x8xf32> to vector<256x8xf32>
    %226 = arith.addf %223, %225 : vector<256x8xf32>
    %cst_74 = arith.constant 5.000000e-01 : f32
    %227 = vector.broadcast %cst_74 : f32 to vector<256x8xf32>
    %228 = arith.mulf %227, %226 : vector<256x8xf32>
    %cst_75 = arith.constant 0.707106769 : f32
    %229 = vector.broadcast %cst_75 : f32 to vector<256x8xf32>
    %230 = arith.mulf %226, %229 : vector<256x8xf32>
    %231 = math.absf %230 : vector<256x8xf32>
    %cst_76 = arith.constant 0.327591091 : f32
    %232 = vector.broadcast %cst_76 : f32 to vector<256x8xf32>
    %233 = arith.mulf %232, %231 : vector<256x8xf32>
    %cst_77 = arith.constant 1.000000e+00 : f32
    %234 = vector.broadcast %cst_77 : f32 to vector<256x8xf32>
    %235 = arith.addf %234, %233 : vector<256x8xf32>
    %cst_78 = arith.constant 1.000000e+00 : f32
    %236 = vector.broadcast %cst_78 : f32 to vector<256x8xf32>
    %237 = arith.divf %236, %235 : vector<256x8xf32>
    %cst_79 = arith.constant 1.06140542 : f32
    %238 = vector.broadcast %cst_79 : f32 to vector<256x8xf32>
    %239 = arith.mulf %238, %237 : vector<256x8xf32>
    %cst_80 = arith.constant -1.45315206 : f32
    %240 = vector.broadcast %cst_80 : f32 to vector<256x8xf32>
    %241 = arith.addf %239, %240 : vector<256x8xf32>
    %242 = arith.mulf %241, %237 : vector<256x8xf32>
    %cst_81 = arith.constant 1.42141378 : f32
    %243 = vector.broadcast %cst_81 : f32 to vector<256x8xf32>
    %244 = arith.addf %242, %243 : vector<256x8xf32>
    %245 = arith.mulf %244, %237 : vector<256x8xf32>
    %cst_82 = arith.constant -0.284496725 : f32
    %246 = vector.broadcast %cst_82 : f32 to vector<256x8xf32>
    %247 = arith.addf %245, %246 : vector<256x8xf32>
    %248 = arith.mulf %247, %237 : vector<256x8xf32>
    %cst_83 = arith.constant 0.254829586 : f32
    %249 = vector.broadcast %cst_83 : f32 to vector<256x8xf32>
    %250 = arith.addf %248, %249 : vector<256x8xf32>
    %251 = arith.mulf %250, %237 : vector<256x8xf32>
    %cst_84 = arith.constant 0.000000e+00 : f32
    %252 = vector.broadcast %cst_84 : f32 to vector<256x8xf32>
    %253 = arith.subf %252, %231 : vector<256x8xf32>
    %254 = arith.mulf %253, %231 : vector<256x8xf32>
    %255 = math.exp %254 : vector<256x8xf32>
    %256 = arith.mulf %251, %255 : vector<256x8xf32>
    %cst_85 = arith.constant 1.000000e+00 : f32
    %257 = vector.broadcast %cst_85 : f32 to vector<256x8xf32>
    %258 = arith.subf %257, %256 : vector<256x8xf32>
    %cst_86 = arith.constant 0.000000e+00 : f32
    %259 = vector.broadcast %cst_86 : f32 to vector<256x8xf32>
    %260 = arith.cmpf olt, %230, %259 : vector<256x8xf32>
    %cst_87 = arith.constant 0.000000e+00 : f32
    %261 = vector.broadcast %cst_87 : f32 to vector<256x8xf32>
    %262 = arith.subf %261, %258 : vector<256x8xf32>
    %263 = arith.select %260, %262, %258 : vector<256x8xi1>, vector<256x8xf32>
    %cst_88 = arith.constant 1.000000e+00 : f32
    %264 = vector.broadcast %cst_88 : f32 to vector<256x8xf32>
    %265 = arith.addf %264, %263 : vector<256x8xf32>
    %266 = arith.mulf %228, %265 : vector<256x8xf32>
    %267 = arith.truncf %266 : vector<256x8xf32> to vector<256x8xbf16>
    %c0_89 = arith.constant 0 : index
    %c0_90 = arith.constant 0 : index
    %268 = vector.load %arg17[%c0_89, %c0_90] : memref<8x4xbf16, #tpu.memory_space<vmem>>, vector<8x4xbf16>
    %cst_91 = arith.constant dense<0.000000e+00> : vector<256x4xf32>
    %269 = tpu.matmul %267, %268, %cst_91 {dimension_numbers = #tpu.dot_dimension_numbers<[1], [0], [0], [1], [0, 0, 1, 1], [], []>} : vector<256x8xbf16>, vector<8x4xbf16>, vector<256x4xf32> -> vector<256x4xf32>
    %c0_92 = arith.constant 0 : index
    %c0_93 = arith.constant 0 : index
    %270 = vector.load %arg18[%c0_92, %c0_93] : memref<1x4xf32, #tpu.memory_space<vmem>>, vector<1x4xf32>
    %271 = vector.broadcast %270 : vector<1x4xf32> to vector<256x4xf32>
    %272 = arith.addf %269, %271 : vector<256x4xf32>
    %273 = arith.addf %196, %272 : vector<256x4xf32>
    %c0_94 = arith.constant 0 : index
    %c0_95 = arith.constant 0 : index
    %c0_96 = arith.constant 0 : index
    %c0_97 = arith.constant 0 : index
    %274 = vector.load %arg19[%c0_94, %c0_95, %c0_96, %c0_97] : memref<1x1x256x4xf32, #tpu.memory_space<vmem>>, vector<1x1x256x4xf32>
    %275 = vector.shape_cast %274 : vector<1x1x256x4xf32> to vector<256x4xf32>
    %276 = vector.shape_cast %273 : vector<256x4xf32> to vector<1x1x256x4xf32>
    tpu.vector_store %arg19[%c0_94, %c0_95, %c0_96, %c0_97], %276 {strides = array<i32>} : memref<1x1x256x4xf32, #tpu.memory_space<vmem>>, vector<1x1x256x4xf32>,
    return
  }
  func.func @transform_0(%arg0: i32, %arg1: i32) -> (i32, i32, i32, i32) {
    %c0_i32 = arith.constant 0 : i32
    %c0_i32_0 = arith.constant 0 : i32
    %c0_i32_1 = arith.constant 0 : i32
    return %arg0, %arg1, %c0_i32, %c0_i32_0 : i32, i32, i32, i32
  }
  func.func @transform_1(%arg0: i32, %arg1: i32) -> (i32, i32, i32, i32) {
    %c0_i32 = arith.constant 0 : i32
    %c0_i32_0 = arith.constant 0 : i32
    %c0_i32_1 = arith.constant 0 : i32
    return %arg0, %arg1, %c0_i32, %c0_i32_0 : i32, i32, i32, i32
  }
  func.func @transform_2(%arg0: i32, %arg1: i32) -> (i32, i32, i32, i32) {
    %c0_i32 = arith.constant 0 : i32
    %c0_i32_0 = arith.constant 0 : i32
    %c0_i32_1 = arith.constant 0 : i32
    return %arg0, %arg1, %c0_i32, %c0_i32_0 : i32, i32, i32, i32
  }
  func.func @transform_3(%arg0: i32, %arg1: i32) -> (i32, i32) {
    %c0_i32 = arith.constant 0 : i32
    %c0_i32_0 = arith.constant 0 : i32
    %c0_i32_1 = arith.constant 0 : i32
    return %c0_i32, %c0_i32_0 : i32, i32
  }
  func.func @transform_4(%arg0: i32, %arg1: i32) -> (i32, i32) {
    %c0_i32 = arith.constant 0 : i32
    %c0_i32_0 = arith.constant 0 : i32
    %c0_i32_1 = arith.constant 0 : i32
    return %c0_i32, %c0_i32_0 : i32, i32
  }
  func.func @transform_5(%arg0: i32, %arg1: i32) -> (i32, i32) {
    %c0_i32 = arith.constant 0 : i32
    %c0_i32_0 = arith.constant 0 : i32
    %c0_i32_1 = arith.constant 0 : i32
    return %c0_i32, %c0_i32_0 : i32, i32
  }
  func.func @transform_6(%arg0: i32, %arg1: i32) -> (i32, i32) {
    %c0_i32 = arith.constant 0 : i32
    %c0_i32_0 = arith.constant 0 : i32
    %c0_i32_1 = arith.constant 0 : i32
    return %c0_i32, %c0_i32_0 : i32, i32
  }
  func.func @transform_7(%arg0: i32, %arg1: i32) -> (i32, i32) {
    %c0_i32 = arith.constant 0 : i32
    %c0_i32_0 = arith.constant 0 : i32
    %c0_i32_1 = arith.constant 0 : i32
    return %c0_i32, %c0_i32_0 : i32, i32
  }
  func.func @transform_8(%arg0: i32, %arg1: i32) -> (i32, i32) {
    %c0_i32 = arith.constant 0 : i32
    %c0_i32_0 = arith.constant 0 : i32
    %c0_i32_1 = arith.constant 0 : i32
    return %c0_i32, %c0_i32_0 : i32, i32
  }
  func.func @transform_9(%arg0: i32, %arg1: i32) -> (i32, i32) {
    %c0_i32 = arith.constant 0 : i32
    %c0_i32_0 = arith.constant 0 : i32
    %c0_i32_1 = arith.constant 0 : i32
    return %c0_i32, %c0_i32_0 : i32, i32
  }
  func.func @transform_10(%arg0: i32, %arg1: i32) -> (i32, i32) {
    %c0_i32 = arith.constant 0 : i32
    %c0_i32_0 = arith.constant 0 : i32
    %c0_i32_1 = arith.constant 0 : i32
    return %c0_i32, %c0_i32_0 : i32, i32
  }
  func.func @transform_11(%arg0: i32, %arg1: i32) -> (i32, i32) {
    %c0_i32 = arith.constant 0 : i32
    %c0_i32_0 = arith.constant 0 : i32
    %c0_i32_1 = arith.constant 0 : i32
    return %c0_i32, %c0_i32_0 : i32, i32
  }
  func.func @transform_12(%arg0: i32, %arg1: i32) -> (i32, i32) {
    %c0_i32 = arith.constant 0 : i32
    %c0_i32_0 = arith.constant 0 : i32
    %c0_i32_1 = arith.constant 0 : i32
    return %c0_i32, %c0_i32_0 : i32, i32
  }
  func.func @transform_13(%arg0: i32, %arg1: i32) -> (i32, i32) {
    %c0_i32 = arith.constant 0 : i32
    %c0_i32_0 = arith.constant 0 : i32
    %c0_i32_1 = arith.constant 0 : i32
    return %c0_i32, %c0_i32_0 : i32, i32
  }
  func.func @transform_14(%arg0: i32, %arg1: i32) -> (i32, i32) {
    %c0_i32 = arith.constant 0 : i32
    %c0_i32_0 = arith.constant 0 : i32
    %c0_i32_1 = arith.constant 0 : i32
    return %c0_i32, %c0_i32_0 : i32, i32
  }
  func.func @transform_15(%arg0: i32, %arg1: i32) -> (i32, i32) {
    %c0_i32 = arith.constant 0 : i32
    %c0_i32_0 = arith.constant 0 : i32
    %c0_i32_1 = arith.constant 0 : i32
    return %c0_i32, %c0_i32_0 : i32, i32
  }
  func.func @transform_16(%arg0: i32, %arg1: i32) -> (i32, i32) {
    %c0_i32 = arith.constant 0 : i32
    %c0_i32_0 = arith.constant 0 : i32
    %c0_i32_1 = arith.constant 0 : i32
    return %c0_i32, %c0_i32_0 : i32, i32
  }
  func.func @transform_17(%arg0: i32, %arg1: i32) -> (i32, i32, i32, i32) {
    %c0_i32 = arith.constant 0 : i32
    %c0_i32_0 = arith.constant 0 : i32
    %c0_i32_1 = arith.constant 0 : i32
    return %arg0, %arg1, %c0_i32, %c0_i32_0 : i32, i32, i32, i32
  }
}

</mosaic_0001>

<llo_original>
// kernel: tpu_custom_call.1
$region0: #{tpu_custom_call.1}
  #allocation0 [shape = 'u32[]', space=smem, size = 0x4, offset = 0x4, fixed_abs, tag = 'smem constant byte address 0x4 - core index']
  #allocation1 [shape = 'u32[144,128]{1,0:T(1,128)}', space=vmem, size = 0x12000, scoped, tag = 'internal scratch']
  %s0 = inlined_call_operand.vmem [shape: f32[2,1,16,4], index: 0, kind: input, shape index: {}]
  %s1 = inlined_call_operand.vmem [shape: f32[2,1,256,4], index: 1, kind: input, shape index: {}]
  %s2 = inlined_call_operand.vmem [shape: f32[2,1,16,4], index: 2, kind: input, shape index: {}]
  %s3 = inlined_call_operand.vmem [shape: f32[1,4], index: 3, kind: input, shape index: {}]
  %s4 = inlined_call_operand.vmem [shape: f32[1,4], index: 4, kind: input, shape index: {}]
  %s5 = inlined_call_operand.vmem [shape: bf16[4,8], index: 5, kind: input, shape index: {}]
  %s6 = inlined_call_operand.vmem [shape: f32[1,8], index: 6, kind: input, shape index: {}]
  %s7 = inlined_call_operand.vmem [shape: f32[9,8], index: 7, kind: input, shape index: {}]
  %s8 = inlined_call_operand.vmem [shape: f32[1,8], index: 8, kind: input, shape index: {}]
  %s9 = inlined_call_operand.vmem [shape: bf16[8,4], index: 9, kind: input, shape index: {}]
  %s10 = inlined_call_operand.vmem [shape: f32[1,4], index: 10, kind: input, shape index: {}]
  %s11 = inlined_call_operand.vmem [shape: f32[1,4], index: 11, kind: input, shape index: {}]
  %s12 = inlined_call_operand.vmem [shape: f32[1,4], index: 12, kind: input, shape index: {}]
  %s13 = inlined_call_operand.vmem [shape: bf16[4,8], index: 13, kind: input, shape index: {}]
  %s14 = inlined_call_operand.vmem [shape: f32[1,8], index: 14, kind: input, shape index: {}]
  %s15 = inlined_call_operand.vmem [shape: bf16[8,4], index: 15, kind: input, shape index: {}]
  %s16 = inlined_call_operand.vmem [shape: f32[1,4], index: 16, kind: input, shape index: {}]
  %s17 = inlined_call_operand.vmem [shape: f32[2,1,256,4], index: 17, kind: output, shape index: {}]
  %s18 = sld [smem:[#allocation0]]
  $region101: #{tpu_custom_call.1} parent=0
    _
  %s20 = ssub.s32 1, %s18
  %s21 = scalar_select 0, %s20, %s18
  loop: start=0, step=1, limit=4
  $region2: #{tpu_custom_call.1} parent=0 // loop_pre_header
    _
  $region3: #{tpu_custom_call.1} parent=0 // loop_header
    %s23 = sphi 0, %s27
    %p24 = scmp.ge.s32.totalorder %s23, 4
    %s30 = sphi 0, %s42
    %s31 = sphi 0, %s38
    %s32 = sphi 0, %s30
    %s33 = sphi 0, %s31
    %s34 = sphi 0, %s32
    %s35 = sphi 0, %s33
    %s47 = sphi 0, %s49
    %s50 = sphi 0, %s47
    %s51 = sphi 0, %s50
    %s67 = sphi 0, %s51
    %s75 = sphi 0, %s77
    %s78 = sphi 0, %s75
    %s79 = sphi 0, %s78
    %s95 = sphi 0, %s79
    %s103 = sphi 0, %s105
    %s106 = sphi 0, %s103
    %s107 = sphi 0, %s106
    %s123 = sphi 0, %s107
    %s127 = sphi 0, %s127
    %s129 = sphi 0, %s127
    %s130 = sphi 0, %s129
    %s144 = sphi 0, %s130
    %s148 = sphi 0, %s148
    %s150 = sphi 0, %s148
    %s151 = sphi 0, %s150
    %s165 = sphi 0, %s151
    %s169 = sphi 0, %s169
    %s171 = sphi 0, %s169
    %s172 = sphi 0, %s171
    %s186 = sphi 0, %s172
    %s190 = sphi 0, %s190
    %s192 = sphi 0, %s190
    %s193 = sphi 0, %s192
    %s207 = sphi 0, %s193
    %s211 = sphi 0, %s211
    %s213 = sphi 0, %s211
    %s214 = sphi 0, %s213
    %s228 = sphi 0, %s214
    %s232 = sphi 0, %s232
    %s234 = sphi 0, %s232
    %s235 = sphi 0, %s234
    %s249 = sphi 0, %s235
    %s253 = sphi 0, %s253
    %s255 = sphi 0, %s253
    %s256 = sphi 0, %s255
    %s270 = sphi 0, %s256
    %s274 = sphi 0, %s274
    %s276 = sphi 0, %s274
    %s277 = sphi 0, %s276
    %s291 = sphi 0, %s277
    %s295 = sphi 0, %s295
    %s297 = sphi 0, %s295
    %s298 = sphi 0, %s297
    %s312 = sphi 0, %s298
    %s316 = sphi 0, %s316
    %s318 = sphi 0, %s316
    %s319 = sphi 0, %s318
    %s333 = sphi 0, %s319
    %s337 = sphi 0, %s337
    %s339 = sphi 0, %s337
    %s340 = sphi 0, %s339
    %s354 = sphi 0, %s340
    %s358 = sphi 0, %s358
    %s360 = sphi 0, %s358
    %s361 = sphi 0, %s360
    %s375 = sphi 0, %s361
    %s379 = sphi 0, %s379
    %s381 = sphi 0, %s379
    %s382 = sphi 0, %s381
    %s396 = sphi 0, %s382
    %s400 = sphi 0, %s400
    %s402 = sphi 0, %s400
    %s403 = sphi 0, %s402
    %s417 = sphi 0, %s403
    %s425 = sphi 0, %s427
    %s428 = sphi 0, %s425
    %s429 = sphi 0, %s428
    %s445 = sphi 0, %s429
  $region4: #{tpu_custom_call.1} parent=0 // loop_header_branch
    %26 = sbr.rel (%p24) target = $region8
  $region5: #{tpu_custom_call.1} parent=0 // loop_body
    %s28 = ssub.s32 %s23, 1
    %s29 = ssub.s32 %s23, 2
    %s36 = sadd.s32 1, %s31
    %p37 = scmp.ge.s32.totalorder %s36, 1
    %s38 = scalar_select %p37, 0, %s36
    %s39 = sadd.s32 1, %s30
    %s40 = scalar_select %p37, %s39, %s30
    %p41 = scmp.ge.s32.totalorder %s40, 2
    %s42 = scalar_select %p41, 0, %s40
    %s43 = ssub.s32 %s30, %s42
    %s44 = ssub.s32 %s31, %s38
    %s45 = sor.u32 %s43, %s44
    %p46 = scmp.eq.s32.totalorder %s45, 0
    %s48 = sadd.s32 %s47, 1
    %s49 = scalar_select %p46, %s47, %s48
    %p52 = pneg %p46
    %p53 = scmp.eq.s32.totalorder %s23, 1
    %p54 = por %p52, %p53
    %p55 = scmp.ne.s32.totalorder %s47, %s50
    %p56 = scmp.eq.s32.totalorder %s23, 0
    %p57 = por %p55, %p56
    %p58 = scmp.ne.s32.totalorder %s47, %s50
    %p59 = scmp.eq.s32.totalorder %s28, 1
    %p60 = por %p58, %p59
    %p61 = scmp.ne.s32.totalorder %s50, %s51
    %p62 = scmp.eq.s32.totalorder %s28, 0
    %p63 = por %p61, %p62
    %p64 = scmp.ne.s32.totalorder %s50, %s51
    %p65 = scmp.eq.s32.totalorder %s29, 1
    %p66 = por %p64, %p65
    %p68 = scmp.ne.s32.totalorder %s51, %s67
    %p69 = scmp.eq.s32.totalorder %s29, 0
    %p70 = por %p68, %p69
    %s71 = ssub.s32 %s30, %s42
    %s72 = ssub.s32 %s31, %s38
    %s73 = sor.u32 %s71, %s72
    %p74 = scmp.eq.s32.totalorder %s73, 0
    %s76 = sadd.s32 %s75, 1
    %s77 = scalar_select %p74, %s75, %s76
    %p80 = pneg %p74
    %p81 = scmp.eq.s32.totalorder %s23, 1
    %p82 = por %p80, %p81
    %p83 = scmp.ne.s32.totalorder %s75, %s78
    %p84 = scmp.eq.s32.totalorder %s23, 0
    %p85 = por %p83, %p84
    %p86 = scmp.ne.s32.totalorder %s75, %s78
    %p87 = scmp.eq.s32.totalorder %s28, 1
    %p88 = por %p86, %p87
    %p89 = scmp.ne.s32.totalorder %s78, %s79
    %p90 = scmp.eq.s32.totalorder %s28, 0
    %p91 = por %p89, %p90
    %p92 = scmp.ne.s32.totalorder %s78, %s79
    %p93 = scmp.eq.s32.totalorder %s29, 1
    %p94 = por %p92, %p93
    %p96 = scmp.ne.s32.totalorder %s79, %s95
    %p97 = scmp.eq.s32.totalorder %s29, 0
    %p98 = por %p96, %p97
    %s99 = ssub.s32 %s30, %s42
    %s100 = ssub.s32 %s31, %s38
    %s101 = sor.u32 %s99, %s100
    %p102 = scmp.eq.s32.totalorder %s101, 0
    %s104 = sadd.s32 %s103, 1
    %s105 = scalar_select %p102, %s103, %s104
    %p108 = pneg %p102
    %p109 = scmp.eq.s32.totalorder %s23, 1
    %p110 = por %p108, %p109
    %p111 = scmp.ne.s32.totalorder %s103, %s106
    %p112 = scmp.eq.s32.totalorder %s23, 0
    %p113 = por %p111, %p112
    %p114 = scmp.ne.s32.totalorder %s103, %s106
    %p115 = scmp.eq.s32.totalorder %s28, 1
    %p116 = por %p114, %p115
    %p117 = scmp.ne.s32.totalorder %s106, %s107
    %p118 = scmp.eq.s32.totalorder %s28, 0
    %p119 = por %p117, %p118
    %p120 = scmp.ne.s32.totalorder %s106, %s107
    %p121 = scmp.eq.s32.totalorder %s29, 1
    %p122 = por %p120, %p121
    %p124 = scmp.ne.s32.totalorder %s107, %s123
    %p125 = scmp.eq.s32.totalorder %s29, 0
    %p126 = por %p124, %p125
    %s128 = sadd.s32 %s127, 1
    %p131 = scmp.eq.s32.totalorder %s23, 1
    %p132 = scmp.ne.s32.totalorder %s127, %s129
    %p133 = scmp.eq.s32.totalorder %s23, 0
    %p134 = por %p132, %p133
    %p135 = scmp.ne.s32.totalorder %s127, %s129
    %p136 = scmp.eq.s32.totalorder %s28, 1
    %p137 = por %p135, %p136
    %p138 = scmp.ne.s32.totalorder %s129, %s130
    %p139 = scmp.eq.s32.totalorder %s28, 0
    %p140 = por %p138, %p139
    %p141 = scmp.ne.s32.totalorder %s129, %s130
    %p142 = scmp.eq.s32.totalorder %s29, 1
    %p143 = por %p141, %p142
    %p145 = scmp.ne.s32.totalorder %s130, %s144
    %p146 = scmp.eq.s32.totalorder %s29, 0
    %p147 = por %p145, %p146
    %s149 = sadd.s32 %s148, 1
    %p152 = scmp.eq.s32.totalorder %s23, 1
    %p153 = scmp.ne.s32.totalorder %s148, %s150
    %p154 = scmp.eq.s32.totalorder %s23, 0
    %p155 = por %p153, %p154
    %p156 = scmp.ne.s32.totalorder %s148, %s150
    %p157 = scmp.eq.s32.totalorder %s28, 1
    %p158 = por %p156, %p157
    %p159 = scmp.ne.s32.totalorder %s150, %s151
    %p160 = scmp.eq.s32.totalorder %s28, 0
    %p161 = por %p159, %p160
    %p162 = scmp.ne.s32.totalorder %s150, %s151
    %p163 = scmp.eq.s32.totalorder %s29, 1
    %p164 = por %p162, %p163
    %p166 = scmp.ne.s32.totalorder %s151, %s165
    %p167 = scmp.eq.s32.totalorder %s29, 0
    %p168 = por %p166, %p167
    %s170 = sadd.s32 %s169, 1
    %p173 = scmp.eq.s32.totalorder %s23, 1
    %p174 = scmp.ne.s32.totalorder %s169, %s171
    %p175 = scmp.eq.s32.totalorder %s23, 0
    %p176 = por %p174, %p175
    %p177 = scmp.ne.s32.totalorder %s169, %s171
    %p178 = scmp.eq.s32.totalorder %s28, 1
    %p179 = por %p177, %p178
    %p180 = scmp.ne.s32.totalorder %s171, %s172
    %p181 = scmp.eq.s32.totalorder %s28, 0
    %p182 = por %p180, %p181
    %p183 = scmp.ne.s32.totalorder %s171, %s172
    %p184 = scmp.eq.s32.totalorder %s29, 1
    %p185 = por %p183, %p184
    %p187 = scmp.ne.s32.totalorder %s172, %s186
    %p188 = scmp.eq.s32.totalorder %s29, 0
    %p189 = por %p187, %p188
    %s191 = sadd.s32 %s190, 1
    %p194 = scmp.eq.s32.totalorder %s23, 1
    %p195 = scmp.ne.s32.totalorder %s190, %s192
    %p196 = scmp.eq.s32.totalorder %s23, 0
    %p197 = por %p195, %p196
    %p198 = scmp.ne.s32.totalorder %s190, %s192
    %p199 = scmp.eq.s32.totalorder %s28, 1
    %p200 = por %p198, %p199
    %p201 = scmp.ne.s32.totalorder %s192, %s193
    %p202 = scmp.eq.s32.totalorder %s28, 0
    %p203 = por %p201, %p202
    %p204 = scmp.ne.s32.totalorder %s192, %s193
    %p205 = scmp.eq.s32.totalorder %s29, 1
    %p206 = por %p204, %p205
    %p208 = scmp.ne.s32.totalorder %s193, %s207
    %p209 = scmp.eq.s32.totalorder %s29, 0
    %p210 = por %p208, %p209
    %s212 = sadd.s32 %s211, 1
    %p215 = scmp.eq.s32.totalorder %s23, 1
    %p216 = scmp.ne.s32.totalorder %s211, %s213
    %p217 = scmp.eq.s32.totalorder %s23, 0
    %p218 = por %p216, %p217
    %p219 = scmp.ne.s32.totalorder %s211, %s213
    %p220 = scmp.eq.s32.totalorder %s28, 1
    %p221 = por %p219, %p220
    %p222 = scmp.ne.s32.totalorder %s213, %s214
    %p223 = scmp.eq.s32.totalorder %s28, 0
    %p224 = por %p222, %p223
    %p225 = scmp.ne.s32.totalorder %s213, %s214
    %p226 = scmp.eq.s32.totalorder %s29, 1
    %p227 = por %p225, %p226
    %p229 = scmp.ne.s32.totalorder %s214, %s228
    %p230 = scmp.eq.s32.totalorder %s29, 0
    %p231 = por %p229, %p230
    %s233 = sadd.s32 %s232, 1
    %p236 = scmp.eq.s32.totalorder %s23, 1
    %p237 = scmp.ne.s32.totalorder %s232, %s234
    %p238 = scmp.eq.s32.totalorder %s23, 0
    %p239 = por %p237, %p238
    %p240 = scmp.ne.s32.totalorder %s232, %s234
    %p241 = scmp.eq.s32.totalorder %s28, 1
    %p242 = por %p240, %p241
    %p243 = scmp.ne.s32.totalorder %s234, %s235
    %p244 = scmp.eq.s32.totalorder %s28, 0
    %p245 = por %p243, %p244
    %p246 = scmp.ne.s32.totalorder %s234, %s235
    %p247 = scmp.eq.s32.totalorder %s29, 1
    %p248 = por %p246, %p247
    %p250 = scmp.ne.s32.totalorder %s235, %s249
    %p251 = scmp.eq.s32.totalorder %s29, 0
    %p252 = por %p250, %p251
    %s254 = sadd.s32 %s253, 1
    %p257 = scmp.eq.s32.totalorder %s23, 1
    %p258 = scmp.ne.s32.totalorder %s253, %s255
    %p259 = scmp.eq.s32.totalorder %s23, 0
    %p260 = por %p258, %p259
    %p261 = scmp.ne.s32.totalorder %s253, %s255
    %p262 = scmp.eq.s32.totalorder %s28, 1
    %p263 = por %p261, %p262
    %p264 = scmp.ne.s32.totalorder %s255, %s256
    %p265 = scmp.eq.s32.totalorder %s28, 0
    %p266 = por %p264, %p265
    %p267 = scmp.ne.s32.totalorder %s255, %s256
    %p268 = scmp.eq.s32.totalorder %s29, 1
    %p269 = por %p267, %p268
    %p271 = scmp.ne.s32.totalorder %s256, %s270
    %p272 = scmp.eq.s32.totalorder %s29, 0
    %p273 = por %p271, %p272
    %s275 = sadd.s32 %s274, 1
    %p278 = scmp.eq.s32.totalorder %s23, 1
    %p279 = scmp.ne.s32.totalorder %s274, %s276
    %p280 = scmp.eq.s32.totalorder %s23, 0
    %p281 = por %p279, %p280
    %p282 = scmp.ne.s32.totalorder %s274, %s276
    %p283 = scmp.eq.s32.totalorder %s28, 1
    %p284 = por %p282, %p283
    %p285 = scmp.ne.s32.totalorder %s276, %s277
    %p286 = scmp.eq.s32.totalorder %s28, 0
    %p287 = por %p285, %p286
    %p288 = scmp.ne.s32.totalorder %s276, %s277
    %p289 = scmp.eq.s32.totalorder %s29, 1
    %p290 = por %p288, %p289
    %p292 = scmp.ne.s32.totalorder %s277, %s291
    %p293 = scmp.eq.s32.totalorder %s29, 0
    %p294 = por %p292, %p293
    %s296 = sadd.s32 %s295, 1
    %p299 = scmp.eq.s32.totalorder %s23, 1
    %p300 = scmp.ne.s32.totalorder %s295, %s297
    %p301 = scmp.eq.s32.totalorder %s23, 0
    %p302 = por %p300, %p301
    %p303 = scmp.ne.s32.totalorder %s295, %s297
    %p304 = scmp.eq.s32.totalorder %s28, 1
    %p305 = por %p303, %p304
    %p306 = scmp.ne.s32.totalorder %s297, %s298
    %p307 = scmp.eq.s32.totalorder %s28, 0
    %p308 = por %p306, %p307
    %p309 = scmp.ne.s32.totalorder %s297, %s298
    %p310 = scmp.eq.s32.totalorder %s29, 1
    %p311 = por %p309, %p310
    %p313 = scmp.ne.s32.totalorder %s298, %s312
    %p314 = scmp.eq.s32.totalorder %s29, 0
    %p315 = por %p313, %p314
    %s317 = sadd.s32 %s316, 1
    %p320 = scmp.eq.s32.totalorder %s23, 1
    %p321 = scmp.ne.s32.totalorder %s316, %s318
    %p322 = scmp.eq.s32.totalorder %s23, 0
    %p323 = por %p321, %p322
    %p324 = scmp.ne.s32.totalorder %s316, %s318
    %p325 = scmp.eq.s32.totalorder %s28, 1
    %p326 = por %p324, %p325
    %p327 = scmp.ne.s32.totalorder %s318, %s319
    %p328 = scmp.eq.s32.totalorder %s28, 0
    %p329 = por %p327, %p328
    %p330 = scmp.ne.s32.totalorder %s318, %s319
    %p331 = scmp.eq.s32.totalorder %s29, 1
    %p332 = por %p330, %p331
    %p334 = scmp.ne.s32.totalorder %s319, %s333
    %p335 = scmp.eq.s32.totalorder %s29, 0
    %p336 = por %p334, %p335
    %s338 = sadd.s32 %s337, 1
    %p341 = scmp.eq.s32.totalorder %s23, 1
    %p342 = scmp.ne.s32.totalorder %s337, %s339
    %p343 = scmp.eq.s32.totalorder %s23, 0
    %p344 = por %p342, %p343
    %p345 = scmp.ne.s32.totalorder %s337, %s339
    %p346 = scmp.eq.s32.totalorder %s28, 1
    %p347 = por %p345, %p346
    %p348 = scmp.ne.s32.totalorder %s339, %s340
    %p349 = scmp.eq.s32.totalorder %s28, 0
    %p350 = por %p348, %p349
    %p351 = scmp.ne.s32.totalorder %s339, %s340
    %p352 = scmp.eq.s32.totalorder %s29, 1
    %p353 = por %p351, %p352
    %p355 = scmp.ne.s32.totalorder %s340, %s354
    %p356 = scmp.eq.s32.totalorder %s29, 0
    %p357 = por %p355, %p356
    %s359 = sadd.s32 %s358, 1
    %p362 = scmp.eq.s32.totalorder %s23, 1
    %p363 = scmp.ne.s32.totalorder %s358, %s360
    %p364 = scmp.eq.s32.totalorder %s23, 0
    %p365 = por %p363, %p364
    %p366 = scmp.ne.s32.totalorder %s358, %s360
    %p367 = scmp.eq.s32.totalorder %s28, 1
    %p368 = por %p366, %p367
    %p369 = scmp.ne.s32.totalorder %s360, %s361
    %p370 = scmp.eq.s32.totalorder %s28, 0
    %p371 = por %p369, %p370
    %p372 = scmp.ne.s32.totalorder %s360, %s361
    %p373 = scmp.eq.s32.totalorder %s29, 1
    %p374 = por %p372, %p373
    %p376 = scmp.ne.s32.totalorder %s361, %s375
    %p377 = scmp.eq.s32.totalorder %s29, 0
    %p378 = por %p376, %p377
    %s380 = sadd.s32 %s379, 1
    %p383 = scmp.eq.s32.totalorder %s23, 1
    %p384 = scmp.ne.s32.totalorder %s379, %s381
    %p385 = scmp.eq.s32.totalorder %s23, 0
    %p386 = por %p384, %p385
    %p387 = scmp.ne.s32.totalorder %s379, %s381
    %p388 = scmp.eq.s32.totalorder %s28, 1
    %p389 = por %p387, %p388
    %p390 = scmp.ne.s32.totalorder %s381, %s382
    %p391 = scmp.eq.s32.totalorder %s28, 0
    %p392 = por %p390, %p391
    %p393 = scmp.ne.s32.totalorder %s381, %s382
    %p394 = scmp.eq.s32.totalorder %s29, 1
    %p395 = por %p393, %p394
    %p397 = scmp.ne.s32.totalorder %s382, %s396
    %p398 = scmp.eq.s32.totalorder %s29, 0
    %p399 = por %p397, %p398
    %s401 = sadd.s32 %s400, 1
    %p404 = scmp.eq.s32.totalorder %s23, 1
    %p405 = scmp.ne.s32.totalorder %s400, %s402
    %p406 = scmp.eq.s32.totalorder %s23, 0
    %p407 = por %p405, %p406
    %p408 = scmp.ne.s32.totalorder %s400, %s402
    %p409 = scmp.eq.s32.totalorder %s28, 1
    %p410 = por %p408, %p409
    %p411 = scmp.ne.s32.totalorder %s402, %s403
    %p412 = scmp.eq.s32.totalorder %s28, 0
    %p413 = por %p411, %p412
    %p414 = scmp.ne.s32.totalorder %s402, %s403
    %p415 = scmp.eq.s32.totalorder %s29, 1
    %p416 = por %p414, %p415
    %p418 = scmp.ne.s32.totalorder %s403, %s417
    %p419 = scmp.eq.s32.totalorder %s29, 0
    %p420 = por %p418, %p419
    %s421 = ssub.s32 %s30, %s42
    %s422 = ssub.s32 %s31, %s38
    %s423 = sor.u32 %s421, %s422
    %p424 = scmp.eq.s32.totalorder %s423, 0
    %s426 = sadd.s32 %s425, 1
    %s427 = scalar_select %p424, %s425, %s426
    %p430 = pneg %p424
    %p431 = scmp.eq.s32.totalorder %s23, 1
    %p432 = por %p430, %p431
    %p433 = scmp.ne.s32.totalorder %s425, %s428
    %p434 = scmp.eq.s32.totalorder %s23, 0
    %p435 = por %p433, %p434
    %p436 = scmp.ne.s32.totalorder %s425, %s428
    %p437 = scmp.eq.s32.totalorder %s28, 1
    %p438 = por %p436, %p437
    %p439 = scmp.ne.s32.totalorder %s428, %s429
    %p440 = scmp.eq.s32.totalorder %s28, 0
    %p441 = por %p439, %p440
    %p442 = scmp.ne.s32.totalorder %s428, %s429
    %p443 = scmp.eq.s32.totalorder %s29, 1
    %p444 = por %p442, %p443
    %p446 = scmp.ne.s32.totalorder %s429, %s445
    %p447 = scmp.eq.s32.totalorder %s29, 0
    %p448 = por %p446, %p447
    %p449 = scmp.le.s32.totalorder 1, %s23
    %p450 = scmp.lt.s32.totalorder %s23, 3
    %p451 = pnand %p449, %p450
    %p452 = pneg %p451
    // Predicated region
    $region9: #{tpu_custom_call.1} parent=5 // pred_check
      _
    $region10: #{tpu_custom_call.1} parent=5 // pred_check_branch
      %454 = sbr.rel (%p451) target = $region12
    $region11: #{tpu_custom_call.1} parent=5 // pred_region
      %s455 = ssub.s32 %s23, 1
      // Predicated region
      $region13: #{tpu_custom_call.1} parent=11 // pred_check
        %p456 = pneg %p140
      $region14: #{tpu_custom_call.1} parent=11 // pred_check_branch
        %458 = sbr.rel (%p456) target = $region16
      $region15: #{tpu_custom_call.1} parent=11 // pred_region
        _
      $region16: #{tpu_custom_call.1} parent=11 // pred_fallthru
        _
      // Predicated region
      $region17: #{tpu_custom_call.1} parent=11 // pred_check
        %p459 = pneg %p161
      $region18: #{tpu_custom_call.1} parent=11 // pred_check_branch
        %461 = sbr.rel (%p459) target = $region20
      $region19: #{tpu_custom_call.1} parent=11 // pred_region
        _
      $region20: #{tpu_custom_call.1} parent=11 // pred_fallthru
        _
      // Predicated region
      $region21: #{tpu_custom_call.1} parent=11 // pred_check
        %p462 = pneg %p182
      $region22: #{tpu_custom_call.1} parent=11 // pred_check_branch
        %464 = sbr.rel (%p462) target = $region24
      $region23: #{tpu_custom_call.1} parent=11 // pred_region
        _
      $region24: #{tpu_custom_call.1} parent=11 // pred_fallthru
        _
      // Predicated region
      $region25: #{tpu_custom_call.1} parent=11 // pred_check
        %p465 = pneg %p203
      $region26: #{tpu_custom_call.1} parent=11 // pred_check_branch
        %467 = sbr.rel (%p465) target = $region28
      $region27: #{tpu_custom_call.1} parent=11 // pred_region
        _
      $region28: #{tpu_custom_call.1} parent=11 // pred_fallthru
        _
      // Predicated region
      $region29: #{tpu_custom_call.1} parent=11 // pred_check
        %p468 = pneg %p224
      $region30: #{tpu_custom_call.1} parent=11 // pred_check_branch
        %470 = sbr.rel (%p468) target = $region32
      $region31: #{tpu_custom_call.1} parent=11 // pred_region
        _
      $region32: #{tpu_custom_call.1} parent=11 // pred_fallthru
        _
      // Predicated region
      $region33: #{tpu_custom_call.1} parent=11 // pred_check
        %p471 = pneg %p245
      $region34: #{tpu_custom_call.1} parent=11 // pred_check_branch
        %473 = sbr.rel (%p471) target = $region36
      $region35: #{tpu_custom_call.1} parent=11 // pred_region
        _
      $region36: #{tpu_custom_call.1} parent=11 // pred_fallthru
        _
      // Predicated region
      $region37: #{tpu_custom_call.1} parent=11 // pred_check
        %p474 = pneg %p266
      $region38: #{tpu_custom_call.1} parent=11 // pred_check_branch
        %476 = sbr.rel (%p474) target = $region40
      $region39: #{tpu_custom_call.1} parent=11 // pred_region
        _
      $region40: #{tpu_custom_call.1} parent=11 // pred_fallthru
        _
      // Predicated region
      $region41: #{tpu_custom_call.1} parent=11 // pred_check
        %p477 = pneg %p287
      $region42: #{tpu_custom_call.1} parent=11 // pred_check_branch
        %479 = sbr.rel (%p477) target = $region44
      $region43: #{tpu_custom_call.1} parent=11 // pred_region
        _
      $region44: #{tpu_custom_call.1} parent=11 // pred_fallthru
        _
      // Predicated region
      $region45: #{tpu_custom_call.1} parent=11 // pred_check
        %p480 = pneg %p308
      $region46: #{tpu_custom_call.1} parent=11 // pred_check_branch
        %482 = sbr.rel (%p480) target = $region48
      $region47: #{tpu_custom_call.1} parent=11 // pred_region
        _
      $region48: #{tpu_custom_call.1} parent=11 // pred_fallthru
        _
      // Predicated region
      $region49: #{tpu_custom_call.1} parent=11 // pred_check
        %p483 = pneg %p329
      $region50: #{tpu_custom_call.1} parent=11 // pred_check_branch
        %485 = sbr.rel (%p483) target = $region52
      $region51: #{tpu_custom_call.1} parent=11 // pred_region
        _
      $region52: #{tpu_custom_call.1} parent=11 // pred_fallthru
        _
      // Predicated region
      $region53: #{tpu_custom_call.1} parent=11 // pred_check
        %p486 = pneg %p350
      $region54: #{tpu_custom_call.1} parent=11 // pred_check_branch
        %488 = sbr.rel (%p486) target = $region56
      $region55: #{tpu_custom_call.1} parent=11 // pred_region
        _
      $region56: #{tpu_custom_call.1} parent=11 // pred_fallthru
        _
      // Predicated region
      $region57: #{tpu_custom_call.1} parent=11 // pred_check
        %p489 = pneg %p371
      $region58: #{tpu_custom_call.1} parent=11 // pred_check_branch
        %491 = sbr.rel (%p489) target = $region60
      $region59: #{tpu_custom_call.1} parent=11 // pred_region
        _
      $region60: #{tpu_custom_call.1} parent=11 // pred_fallthru
        _
      // Predicated region
      $region61: #{tpu_custom_call.1} parent=11 // pred_check
        %p492 = pneg %p392
      $region62: #{tpu_custom_call.1} parent=11 // pred_check_branch
        %494 = sbr.rel (%p492) target = $region64
      $region63: #{tpu_custom_call.1} parent=11 // pred_region
        _
      $region64: #{tpu_custom_call.1} parent=11 // pred_fallthru
        _
      // Predicated region
      $region65: #{tpu_custom_call.1} parent=11 // pred_check
        %p495 = pneg %p413
      $region66: #{tpu_custom_call.1} parent=11 // pred_check_branch
        %497 = sbr.rel (%p495) target = $region68
      $region67: #{tpu_custom_call.1} parent=11 // pred_region
        _
      $region68: #{tpu_custom_call.1} parent=11 // pred_fallthru
        _
    $region12: #{tpu_custom_call.1} parent=5 // pred_fallthru
      _
    %p498 = scmp.lt.s32.totalorder %s23, 2
    // Predicated region
    $region69: #{tpu_custom_call.1} parent=5 // pred_check
      %p499 = pneg %p498
    $region70: #{tpu_custom_call.1} parent=5 // pred_check_branch
      %501 = sbr.rel (%p499) target = $region72
    $region71: #{tpu_custom_call.1} parent=5 // pred_region
      // Predicated region
      $region73: #{tpu_custom_call.1} parent=71 // pred_check
        %p502 = pneg %p57
      $region74: #{tpu_custom_call.1} parent=71 // pred_check_branch
        %504 = sbr.rel (%p502) target = $region76
      $region75: #{tpu_custom_call.1} parent=71 // pred_region
        %p505 = scmp.lt.s32.totalorder %s30, 1
        %s506 = scalar_select %p505, %s30, 1
        %p507 = scmp.lt.s32.totalorder %s31, 0
        %s508 = scalar_select %p507, %s31, 0
        %s509 = smul.addr %s508, 2
        %s510 = smul.addr %s506, 2
        %s511 = sadd.s32 %s509, %s510
        %s512 = smul.addr %s511, 8
        %s513 = scalar_lea.vmem %s0, %s512
      $region76: #{tpu_custom_call.1} parent=71 // pred_fallthru
        _
      // Predicated region
      $region77: #{tpu_custom_call.1} parent=71 // pred_check
        %p514 = pneg %p85
      $region78: #{tpu_custom_call.1} parent=71 // pred_check_branch
        %516 = sbr.rel (%p514) target = $region80
      $region79: #{tpu_custom_call.1} parent=71 // pred_region
        %p517 = scmp.lt.s32.totalorder %s30, 1
        %s518 = scalar_select %p517, %s30, 1
        %p519 = scmp.lt.s32.totalorder %s31, 0
        %s520 = scalar_select %p519, %s31, 0
        %s521 = smul.addr %s520, 32
        %s522 = smul.addr %s518, 32
        %s523 = sadd.s32 %s521, %s522
        %s524 = smul.addr %s523, 8
        %s525 = scalar_lea.vmem %s1, %s524
      $region80: #{tpu_custom_call.1} parent=71 // pred_fallthru
        _
      // Predicated region
      $region81: #{tpu_custom_call.1} parent=71 // pred_check
        %p526 = pneg %p113
      $region82: #{tpu_custom_call.1} parent=71 // pred_check_branch
        %528 = sbr.rel (%p526) target = $region84
      $region83: #{tpu_custom_call.1} parent=71 // pred_region
        %p529 = scmp.lt.s32.totalorder %s30, 1
        %s530 = scalar_select %p529, %s30, 1
        %p531 = scmp.lt.s32.totalorder %s31, 0
        %s532 = scalar_select %p531, %s31, 0
        %s533 = smul.addr %s532, 2
        %s534 = smul.addr %s530, 2
        %s535 = sadd.s32 %s533, %s534
        %s536 = smul.addr %s535, 8
        %s537 = scalar_lea.vmem %s2, %s536
      $region84: #{tpu_custom_call.1} parent=71 // pred_fallthru
        _
    $region72: #{tpu_custom_call.1} parent=5 // pred_fallthru
      _
    %p538 = scmp.le.s32.totalorder 1, %s23
    %p539 = scmp.lt.s32.totalorder %s23, 3
    %p540 = pnand %p538, %p539
    %p541 = pneg %p540
    // Predicated region
    $region85: #{tpu_custom_call.1} parent=5 // pred_check
      _
    $region86: #{tpu_custom_call.1} parent=5 // pred_check_branch
      %543 = sbr.rel (%p540) target = $region88
    $region87: #{tpu_custom_call.1} parent=5 // pred_region
      %s544 = ssub.s32 %s23, 1
      %p545 = scmp.lt.s32.totalorder %s32, 1
      %s546 = scalar_select %p545, %s32, 1
      %p547 = scmp.lt.s32.totalorder %s33, 0
      %s548 = scalar_select %p547, %s33, 0
      %s549 = smul.addr %s548, 2
      %s550 = smul.addr %s546, 2
      %s551 = sadd.s32 %s549, %s550
      %s552 = smul.addr %s551, 8
      %s553 = scalar_lea.vmem %s0, %s552
      %p554 = pneg %p63
      %p555 = pneg %p60
      %p556 = scmp.lt.s32.totalorder %s32, 1
      %s557 = scalar_select %p556, %s32, 1
      %p558 = scmp.lt.s32.totalorder %s33, 0
      %s559 = scalar_select %p558, %s33, 0
      %s560 = smul.addr %s559, 32
      %s561 = smul.addr %s557, 32
      %s562 = sadd.s32 %s560, %s561
      %s563 = smul.addr %s562, 8
      %s564 = scalar_lea.vmem %s1, %s563
      %p565 = pneg %p91
      %p566 = pneg %p88
      %p567 = scmp.lt.s32.totalorder %s32, 1
      %s568 = scalar_select %p567, %s32, 1
      %p569 = scmp.lt.s32.totalorder %s33, 0
      %s570 = scalar_select %p569, %s33, 0
      %s571 = smul.addr %s570, 2
      %s572 = smul.addr %s568, 2
      %s573 = sadd.s32 %s571, %s572
      %s574 = smul.addr %s573, 8
      %s575 = scalar_lea.vmem %s2, %s574
      %p576 = pneg %p119
      %p577 = pneg %p116
      %p578 = pneg %p140
      %p579 = pneg %p137
      %p580 = pneg %p161
      %p581 = pneg %p158
      %p582 = pneg %p182
      %p583 = pneg %p179
      %p584 = pneg %p203
      %p585 = pneg %p200
      %p586 = pneg %p224
      %p587 = pneg %p221
      %p588 = pneg %p245
      %p589 = pneg %p242
      %p590 = pneg %p266
      %p591 = pneg %p263
      %p592 = pneg %p287
      %p593 = pneg %p284
      %p594 = pneg %p308
      %p595 = pneg %p305
      %p596 = pneg %p329
      %p597 = pneg %p326
      %p598 = pneg %p350
      %p599 = pneg %p347
      %p600 = pneg %p371
      %p601 = pneg %p368
      %p602 = pneg %p392
      %p603 = pneg %p389
      %p604 = pneg %p413
      %p605 = pneg %p410
      %p606 = pneg %p441
      %p607 = pneg %p438
      %p608 = scmp.lt.s32.totalorder %s32, 1
      %s609 = scalar_select %p608, %s32, 1
      %p610 = scmp.lt.s32.totalorder %s33, 0
      %s611 = scalar_select %p610, %s33, 0
      %s612 = smul.addr %s611, 32
      %s613 = smul.addr %s609, 32
      %s614 = sadd.s32 %s612, %s613
      %s615 = smul.addr %s614, 8
      %s616 = scalar_lea.vmem %s17, %s615
      %p617 = scmp.lt.s32.totalorder %s32, 1
      %s618 = scalar_select %p617, %s32, 1
      %p619 = scmp.lt.s32.totalorder %s33, 0
      %s620 = scalar_select %p619, %s33, 0
      %s621 = smul.addr %s620, 2
      %s622 = smul.addr %s618, 2
      %s623 = sadd.s32 %s621, %s622
      %s624 = smul.addr %s623, 8
      %s625 = scalar_lea.vmem %s0, %s624
      %p626 = scmp.lt.s32.totalorder %s32, 1
      %s627 = scalar_select %p626, %s32, 1
      %p628 = scmp.lt.s32.totalorder %s33, 0
      %s629 = scalar_select %p628, %s33, 0
      %s630 = smul.addr %s629, 32
      %s631 = smul.addr %s627, 32
      %s632 = sadd.s32 %s630, %s631
      %s633 = smul.addr %s632, 8
      %s634 = scalar_lea.vmem %s1, %s633
      %p635 = scmp.lt.s32.totalorder %s32, 1
      %s636 = scalar_select %p635, %s32, 1
      %p637 = scmp.lt.s32.totalorder %s33, 0
      %s638 = scalar_select %p637, %s33, 0
      %s639 = smul.addr %s638, 2
      %s640 = smul.addr %s636, 2
      %s641 = sadd.s32 %s639, %s640
      %s642 = smul.addr %s641, 8
      %s643 = scalar_lea.vmem %s2, %s642
      %p644 = scmp.lt.s32.totalorder %s32, 1
      %s645 = scalar_select %p644, %s32, 1
      %p646 = scmp.lt.s32.totalorder %s33, 0
      %s647 = scalar_select %p646, %s33, 0
      %s648 = smul.addr %s647, 32
      %s649 = smul.addr %s645, 32
      %s650 = sadd.s32 %s648, %s649
      %s651 = smul.addr %s650, 8
      %s652 = scalar_lea.vmem %s17, %s651
      %v654 = vld [vmem:[%s634] sm:$0xff]
      %v655 = vld [vmem:[%s634 + $0x8] sm:$0xff]
      %v656 = vld [vmem:[%s634 + $0x10] sm:$0xff]
      %v657 = vld [vmem:[%s634 + $0x18] sm:$0xff]
      %v658 = vld [vmem:[%s634 + $0x20] sm:$0xff]
      %v659 = vld [vmem:[%s634 + $0x28] sm:$0xff]
      %v660 = vld [vmem:[%s634 + $0x30] sm:$0xff]
      %v661 = vld [vmem:[%s634 + $0x38] sm:$0xff]
      %v662 = vld [vmem:[%s634 + $0x40] sm:$0xff]
      %v663 = vld [vmem:[%s634 + $0x48] sm:$0xff]
      %v664 = vld [vmem:[%s634 + $0x50] sm:$0xff]
      %v665 = vld [vmem:[%s634 + $0x58] sm:$0xff]
      %v666 = vld [vmem:[%s634 + $0x60] sm:$0xff]
      %v667 = vld [vmem:[%s634 + $0x68] sm:$0xff]
      %v668 = vld [vmem:[%s634 + $0x70] sm:$0xff]
      %v669 = vld [vmem:[%s634 + $0x78] sm:$0xff]
      %v670 = vld [vmem:[%s634 + $0x80] sm:$0xff]
      %v671 = vld [vmem:[%s634 + $0x88] sm:$0xff]
      %v672 = vld [vmem:[%s634 + $0x90] sm:$0xff]
      %v673 = vld [vmem:[%s634 + $0x98] sm:$0xff]
      %v674 = vld [vmem:[%s634 + $0xa0] sm:$0xff]
      %v675 = vld [vmem:[%s634 + $0xa8] sm:$0xff]
      %v676 = vld [vmem:[%s634 + $0xb0] sm:$0xff]
      %v677 = vld [vmem:[%s634 + $0xb8] sm:$0xff]
      %v678 = vld [vmem:[%s634 + $0xc0] sm:$0xff]
      %v679 = vld [vmem:[%s634 + $0xc8] sm:$0xff]
      %v680 = vld [vmem:[%s634 + $0xd0] sm:$0xff]
      %v681 = vld [vmem:[%s634 + $0xd8] sm:$0xff]
      %v682 = vld [vmem:[%s634 + $0xe0] sm:$0xff]
      %v683 = vld [vmem:[%s634 + $0xe8] sm:$0xff]
      %v684 = vld [vmem:[%s634 + $0xf0] sm:$0xff]
      %v685 = vld [vmem:[%s634 + $0xf8] sm:$0xff]
      %v686 = vld [vmem:[%s625] sm:$0xff]
      %v687 = vld [vmem:[%s625 + $0x8] sm:$0xff]
      %v688 = vld [vmem:[%s643] sm:$0xff]
      %v689 = vld [vmem:[%s643 + $0x8] sm:$0xff]
      %v690 = vld [vmem:[%s3] sm:$0x1]
      %v691 = vld [vmem:[%s4] sm:$0x1]
      %vm692 = vcmask 31744
      %v693 = vsel %vm692, %v686, 0.0
      %694 = vadd.xlane.f32.xlu0 %v693
      %v695 = vpop.xlane.xlu0 %694
      %v696 = vsel %vm692, %v687, 0.0
      %697 = vadd.xlane.f32.xlu0 %v696
      %v698 = vpop.xlane.xlu0 %697
      %v699 = vsel %vm692, %v654, 0.0
      %700 = vadd.xlane.f32.xlu0 %v699
      %v701 = vpop.xlane.xlu0 %700
      %v702 = vsel %vm692, %v655, 0.0
      %703 = vadd.xlane.f32.xlu0 %v702
      %v704 = vpop.xlane.xlu0 %703
      %v705 = vsel %vm692, %v656, 0.0
      %706 = vadd.xlane.f32.xlu0 %v705
      %v707 = vpop.xlane.xlu0 %706
      %v708 = vsel %vm692, %v657, 0.0
      %709 = vadd.xlane.f32.xlu0 %v708
      %v710 = vpop.xlane.xlu0 %709
      %v711 = vsel %vm692, %v658, 0.0
      %712 = vadd.xlane.f32.xlu0 %v711
      %v713 = vpop.xlane.xlu0 %712
      %v714 = vsel %vm692, %v659, 0.0
      %715 = vadd.xlane.f32.xlu0 %v714
      %v716 = vpop.xlane.xlu0 %715
      %v717 = vsel %vm692, %v660, 0.0
      %718 = vadd.xlane.f32.xlu0 %v717
      %v719 = vpop.xlane.xlu0 %718
      %v720 = vsel %vm692, %v661, 0.0
      %721 = vadd.xlane.f32.xlu0 %v720
      %v722 = vpop.xlane.xlu0 %721
      %v723 = vsel %vm692, %v662, 0.0
      %724 = vadd.xlane.f32.xlu0 %v723
      %v725 = vpop.xlane.xlu0 %724
      %v726 = vsel %vm692, %v663, 0.0
      %727 = vadd.xlane.f32.xlu0 %v726
      %v728 = vpop.xlane.xlu0 %727
      %v729 = vsel %vm692, %v664, 0.0
      %730 = vadd.xlane.f32.xlu0 %v729
      %v731 = vpop.xlane.xlu0 %730
      %v732 = vsel %vm692, %v665, 0.0
      %733 = vadd.xlane.f32.xlu0 %v732
      %v734 = vpop.xlane.xlu0 %733
      %v735 = vsel %vm692, %v666, 0.0
      %736 = vadd.xlane.f32.xlu0 %v735
      %v737 = vpop.xlane.xlu0 %736
      %v738 = vsel %vm692, %v667, 0.0
      %739 = vadd.xlane.f32.xlu0 %v738
      %v740 = vpop.xlane.xlu0 %739
      %v741 = vsel %vm692, %v668, 0.0
      %742 = vadd.xlane.f32.xlu0 %v741
      %v743 = vpop.xlane.xlu0 %742
      %v744 = vsel %vm692, %v669, 0.0
      %745 = vadd.xlane.f32.xlu0 %v744
      %v746 = vpop.xlane.xlu0 %745
      %v747 = vsel %vm692, %v670, 0.0
      %748 = vadd.xlane.f32.xlu0 %v747
      %v749 = vpop.xlane.xlu0 %748
      %v750 = vsel %vm692, %v671, 0.0
      %751 = vadd.xlane.f32.xlu0 %v750
      %v752 = vpop.xlane.xlu0 %751
      %v753 = vsel %vm692, %v672, 0.0
      %754 = vadd.xlane.f32.xlu0 %v753
      %v755 = vpop.xlane.xlu0 %754
      %v756 = vsel %vm692, %v673, 0.0
      %757 = vadd.xlane.f32.xlu0 %v756
      %v758 = vpop.xlane.xlu0 %757
      %v759 = vsel %vm692, %v674, 0.0
      %760 = vadd.xlane.f32.xlu0 %v759
      %v761 = vpop.xlane.xlu0 %760
      %v762 = vsel %vm692, %v675, 0.0
      %763 = vadd.xlane.f32.xlu0 %v762
      %v764 = vpop.xlane.xlu0 %763
      %v765 = vsel %vm692, %v676, 0.0
      %766 = vadd.xlane.f32.xlu0 %v765
      %v767 = vpop.xlane.xlu0 %766
      %v768 = vsel %vm692, %v677, 0.0
      %769 = vadd.xlane.f32.xlu0 %v768
      %v770 = vpop.xlane.xlu0 %769
      %v771 = vsel %vm692, %v678, 0.0
      %772 = vadd.xlane.f32.xlu0 %v771
      %v773 = vpop.xlane.xlu0 %772
      %v774 = vsel %vm692, %v679, 0.0
      %775 = vadd.xlane.f32.xlu0 %v774
      %v776 = vpop.xlane.xlu0 %775
      %v777 = vsel %vm692, %v680, 0.0
      %778 = vadd.xlane.f32.xlu0 %v777
      %v779 = vpop.xlane.xlu0 %778
      %v780 = vsel %vm692, %v681, 0.0
      %781 = vadd.xlane.f32.xlu0 %v780
      %v782 = vpop.xlane.xlu0 %781
      %v783 = vsel %vm692, %v682, 0.0
      %784 = vadd.xlane.f32.xlu0 %v783
      %v785 = vpop.xlane.xlu0 %784
      %v786 = vsel %vm692, %v683, 0.0
      %787 = vadd.xlane.f32.xlu0 %v786
      %v788 = vpop.xlane.xlu0 %787
      %v789 = vsel %vm692, %v684, 0.0
      %790 = vadd.xlane.f32.xlu0 %v789
      %v791 = vpop.xlane.xlu0 %790
      %v792 = vsel %vm692, %v685, 0.0
      %793 = vadd.xlane.f32.xlu0 %v792
      %v794 = vpop.xlane.xlu0 %793
      %v795 = vsel %vm692, %v688, 0.0
      %796 = vadd.xlane.f32.xlu0 %v795
      %v797 = vpop.xlane.xlu0 %796
      %v798 = vsel %vm692, %v689, 0.0
      %799 = vadd.xlane.f32.xlu0 %v798
      %v800 = vpop.xlane.xlu0 %799
      %v801 = vrcp.pop 4.0
      %v802 = vmul.f32 %v695, %v801
      %v803 = vmul.f32 %v698, %v801
      %v804 = vmul.f32 %v701, %v801
      %v805 = vmul.f32 %v704, %v801
      %v806 = vmul.f32 %v707, %v801
      %v807 = vmul.f32 %v710, %v801
      %v808 = vmul.f32 %v713, %v801
      %v809 = vmul.f32 %v716, %v801
      %v810 = vmul.f32 %v719, %v801
      %v811 = vmul.f32 %v722, %v801
      %v812 = vmul.f32 %v725, %v801
      %v813 = vmul.f32 %v728, %v801
      %v814 = vmul.f32 %v731, %v801
      %v815 = vmul.f32 %v734, %v801
      %v816 = vmul.f32 %v737, %v801
      %v817 = vmul.f32 %v740, %v801
      %v818 = vmul.f32 %v743, %v801
      %v819 = vmul.f32 %v746, %v801
      %v820 = vmul.f32 %v749, %v801
      %v821 = vmul.f32 %v752, %v801
      %v822 = vmul.f32 %v755, %v801
      %v823 = vmul.f32 %v758, %v801
      %v824 = vmul.f32 %v761, %v801
      %v825 = vmul.f32 %v764, %v801
      %v826 = vmul.f32 %v767, %v801
      %v827 = vmul.f32 %v770, %v801
      %v828 = vmul.f32 %v773, %v801
      %v829 = vmul.f32 %v776, %v801
      %v830 = vmul.f32 %v779, %v801
      %v831 = vmul.f32 %v782, %v801
      %v832 = vmul.f32 %v785, %v801
      %v833 = vmul.f32 %v788, %v801
      %v834 = vmul.f32 %v791, %v801
      %v835 = vmul.f32 %v794, %v801
      %v836 = vmul.f32 %v797, %v801
      %v837 = vmul.f32 %v800, %v801
      %v838 = vsub.f32 %v686, %v802
      %v839 = vsub.f32 %v687, %v803
      %v840 = vsub.f32 %v654, %v804
      %v841 = vsub.f32 %v655, %v805
      %v842 = vsub.f32 %v656, %v806
      %v843 = vsub.f32 %v657, %v807
      %v844 = vsub.f32 %v658, %v808
      %v845 = vsub.f32 %v659, %v809
      %v846 = vsub.f32 %v660, %v810
      %v847 = vsub.f32 %v661, %v811
      %v848 = vsub.f32 %v662, %v812
      %v849 = vsub.f32 %v663, %v813
      %v850 = vsub.f32 %v664, %v814
      %v851 = vsub.f32 %v665, %v815
      %v852 = vsub.f32 %v666, %v816
      %v853 = vsub.f32 %v667, %v817
      %v854 = vsub.f32 %v668, %v818
      %v855 = vsub.f32 %v669, %v819
      %v856 = vsub.f32 %v670, %v820
      %v857 = vsub.f32 %v671, %v821
      %v858 = vsub.f32 %v672, %v822
      %v859 = vsub.f32 %v673, %v823
      %v860 = vsub.f32 %v674, %v824
      %v861 = vsub.f32 %v675, %v825
      %v862 = vsub.f32 %v676, %v826
      %v863 = vsub.f32 %v677, %v827
      %v864 = vsub.f32 %v678, %v828
      %v865 = vsub.f32 %v679, %v829
      %v866 = vsub.f32 %v680, %v830
      %v867 = vsub.f32 %v681, %v831
      %v868 = vsub.f32 %v682, %v832
      %v869 = vsub.f32 %v683, %v833
      %v870 = vsub.f32 %v684, %v834
      %v871 = vsub.f32 %v685, %v835
      %v872 = vsub.f32 %v688, %v836
      %v873 = vsub.f32 %v689, %v837
      %v874 = vmul.f32 %v838, %v838
      %v875 = vmul.f32 %v839, %v839
      %v876 = vmul.f32 %v840, %v840
      %v877 = vmul.f32 %v841, %v841
      %v878 = vmul.f32 %v842, %v842
      %v879 = vmul.f32 %v843, %v843
      %v880 = vmul.f32 %v844, %v844
      %v881 = vmul.f32 %v845, %v845
      %v882 = vmul.f32 %v846, %v846
      %v883 = vmul.f32 %v847, %v847
      %v884 = vmul.f32 %v848, %v848
      %v885 = vmul.f32 %v849, %v849
      %v886 = vmul.f32 %v850, %v850
      %v887 = vmul.f32 %v851, %v851
      %v888 = vmul.f32 %v852, %v852
      %v889 = vmul.f32 %v853, %v853
      %v890 = vmul.f32 %v854, %v854
      %v891 = vmul.f32 %v855, %v855
      %v892 = vmul.f32 %v856, %v856
      %v893 = vmul.f32 %v857, %v857
      %v894 = vmul.f32 %v858, %v858
      %v895 = vmul.f32 %v859, %v859
      %v896 = vmul.f32 %v860, %v860
      %v897 = vmul.f32 %v861, %v861
      %v898 = vmul.f32 %v862, %v862
      %v899 = vmul.f32 %v863, %v863
      %v900 = vmul.f32 %v864, %v864
      %v901 = vmul.f32 %v865, %v865
      %v902 = vmul.f32 %v866, %v866
      %v903 = vmul.f32 %v867, %v867
      %v904 = vmul.f32 %v868, %v868
      %v905 = vmul.f32 %v869, %v869
      %v906 = vmul.f32 %v870, %v870
      %v907 = vmul.f32 %v871, %v871
      %v908 = vmul.f32 %v872, %v872
      %v909 = vmul.f32 %v873, %v873
      %v910 = vsel %vm692, %v874, 0.0
      %911 = vadd.xlane.f32.xlu0 %v910
      %v912 = vpop.xlane.xlu0 %911
      %v913 = vsel %vm692, %v875, 0.0
      %914 = vadd.xlane.f32.xlu0 %v913
      %v915 = vpop.xlane.xlu0 %914
      %v916 = vsel %vm692, %v876, 0.0
      %917 = vadd.xlane.f32.xlu0 %v916
      %v918 = vpop.xlane.xlu0 %917
      %v919 = vsel %vm692, %v877, 0.0
      %920 = vadd.xlane.f32.xlu0 %v919
      %v921 = vpop.xlane.xlu0 %920
      %v922 = vsel %vm692, %v878, 0.0
      %923 = vadd.xlane.f32.xlu0 %v922
      %v924 = vpop.xlane.xlu0 %923
      %v925 = vsel %vm692, %v879, 0.0
      %926 = vadd.xlane.f32.xlu0 %v925
      %v927 = vpop.xlane.xlu0 %926
      %v928 = vsel %vm692, %v880, 0.0
      %929 = vadd.xlane.f32.xlu0 %v928
      %v930 = vpop.xlane.xlu0 %929
      %v931 = vsel %vm692, %v881, 0.0
      %932 = vadd.xlane.f32.xlu0 %v931
      %v933 = vpop.xlane.xlu0 %932
      %v934 = vsel %vm692, %v882, 0.0
      %935 = vadd.xlane.f32.xlu0 %v934
      %v936 = vpop.xlane.xlu0 %935
      %v937 = vsel %vm692, %v883, 0.0
      %938 = vadd.xlane.f32.xlu0 %v937
      %v939 = vpop.xlane.xlu0 %938
      %v940 = vsel %vm692, %v884, 0.0
      %941 = vadd.xlane.f32.xlu0 %v940
      %v942 = vpop.xlane.xlu0 %941
      %v943 = vsel %vm692, %v885, 0.0
      %944 = vadd.xlane.f32.xlu0 %v943
      %v945 = vpop.xlane.xlu0 %944
      %v946 = vsel %vm692, %v886, 0.0
      %947 = vadd.xlane.f32.xlu0 %v946
      %v948 = vpop.xlane.xlu0 %947
      %v949 = vsel %vm692, %v887, 0.0
      %950 = vadd.xlane.f32.xlu0 %v949
      %v951 = vpop.xlane.xlu0 %950
      %v952 = vsel %vm692, %v888, 0.0
      %953 = vadd.xlane.f32.xlu0 %v952
      %v954 = vpop.xlane.xlu0 %953
      %v955 = vsel %vm692, %v889, 0.0
      %956 = vadd.xlane.f32.xlu0 %v955
      %v957 = vpop.xlane.xlu0 %956
      %v958 = vsel %vm692, %v890, 0.0
      %959 = vadd.xlane.f32.xlu0 %v958
      %v960 = vpop.xlane.xlu0 %959
      %v961 = vsel %vm692, %v891, 0.0
      %962 = vadd.xlane.f32.xlu0 %v961
      %v963 = vpop.xlane.xlu0 %962
      %v964 = vsel %vm692, %v892, 0.0
      %965 = vadd.xlane.f32.xlu0 %v964
      %v966 = vpop.xlane.xlu0 %965
      %v967 = vsel %vm692, %v893, 0.0
      %968 = vadd.xlane.f32.xlu0 %v967
      %v969 = vpop.xlane.xlu0 %968
      %v970 = vsel %vm692, %v894, 0.0
      %971 = vadd.xlane.f32.xlu0 %v970
      %v972 = vpop.xlane.xlu0 %971
      %v973 = vsel %vm692, %v895, 0.0
      %974 = vadd.xlane.f32.xlu0 %v973
      %v975 = vpop.xlane.xlu0 %974
      %v976 = vsel %vm692, %v896, 0.0
      %977 = vadd.xlane.f32.xlu0 %v976
      %v978 = vpop.xlane.xlu0 %977
      %v979 = vsel %vm692, %v897, 0.0
      %980 = vadd.xlane.f32.xlu0 %v979
      %v981 = vpop.xlane.xlu0 %980
      %v982 = vsel %vm692, %v898, 0.0
      %983 = vadd.xlane.f32.xlu0 %v982
      %v984 = vpop.xlane.xlu0 %983
      %v985 = vsel %vm692, %v899, 0.0
      %986 = vadd.xlane.f32.xlu0 %v985
      %v987 = vpop.xlane.xlu0 %986
      %v988 = vsel %vm692, %v900, 0.0
      %989 = vadd.xlane.f32.xlu0 %v988
      %v990 = vpop.xlane.xlu0 %989
      %v991 = vsel %vm692, %v901, 0.0
      %992 = vadd.xlane.f32.xlu0 %v991
      %v993 = vpop.xlane.xlu0 %992
      %v994 = vsel %vm692, %v902, 0.0
      %995 = vadd.xlane.f32.xlu0 %v994
      %v996 = vpop.xlane.xlu0 %995
      %v997 = vsel %vm692, %v903, 0.0
      %998 = vadd.xlane.f32.xlu0 %v997
      %v999 = vpop.xlane.xlu0 %998
      %v1000 = vsel %vm692, %v904, 0.0
      %1001 = vadd.xlane.f32.xlu0 %v1000
      %v1002 = vpop.xlane.xlu0 %1001
      %v1003 = vsel %vm692, %v905, 0.0
      %1004 = vadd.xlane.f32.xlu0 %v1003
      %v1005 = vpop.xlane.xlu0 %1004
      %v1006 = vsel %vm692, %v906, 0.0
      %1007 = vadd.xlane.f32.xlu0 %v1006
      %v1008 = vpop.xlane.xlu0 %1007
      %v1009 = vsel %vm692, %v907, 0.0
      %1010 = vadd.xlane.f32.xlu0 %v1009
      %v1011 = vpop.xlane.xlu0 %1010
      %v1012 = vsel %vm692, %v908, 0.0
      %1013 = vadd.xlane.f32.xlu0 %v1012
      %v1014 = vpop.xlane.xlu0 %1013
      %v1015 = vsel %vm692, %v909, 0.0
      %1016 = vadd.xlane.f32.xlu0 %v1015
      %v1017 = vpop.xlane.xlu0 %1016
      %v1018 = vmul.f32 %v912, %v801
      %v1019 = vmul.f32 %v915, %v801
      %v1020 = vmul.f32 %v918, %v801
      %v1021 = vmul.f32 %v921, %v801
      %v1022 = vmul.f32 %v924, %v801
      %v1023 = vmul.f32 %v927, %v801
      %v1024 = vmul.f32 %v930, %v801
      %v1025 = vmul.f32 %v933, %v801
      %v1026 = vmul.f32 %v936, %v801
      %v1027 = vmul.f32 %v939, %v801
      %v1028 = vmul.f32 %v942, %v801
      %v1029 = vmul.f32 %v945, %v801
      %v1030 = vmul.f32 %v948, %v801
      %v1031 = vmul.f32 %v951, %v801
      %v1032 = vmul.f32 %v954, %v801
      %v1033 = vmul.f32 %v957, %v801
      %v1034 = vmul.f32 %v960, %v801
      %v1035 = vmul.f32 %v963, %v801
      %v1036 = vmul.f32 %v966, %v801
      %v1037 = vmul.f32 %v969, %v801
      %v1038 = vmul.f32 %v972, %v801
      %v1039 = vmul.f32 %v975, %v801
      %v1040 = vmul.f32 %v978, %v801
      %v1041 = vmul.f32 %v981, %v801
      %v1042 = vmul.f32 %v984, %v801
      %v1043 = vmul.f32 %v987, %v801
      %v1044 = vmul.f32 %v990, %v801
      %v1045 = vmul.f32 %v993, %v801
      %v1046 = vmul.f32 %v996, %v801
      %v1047 = vmul.f32 %v999, %v801
      %v1048 = vmul.f32 %v1002, %v801
      %v1049 = vmul.f32 %v1005, %v801
      %v1050 = vmul.f32 %v1008, %v801
      %v1051 = vmul.f32 %v1011, %v801
      %v1052 = vmul.f32 %v1014, %v801
      %v1053 = vmul.f32 %v1017, %v801
      %v1054 = vadd.f32 %v1018, 1e-06
      %v1055 = vadd.f32 %v1019, 1e-06
      %v1056 = vadd.f32 %v1020, 1e-06
      %v1057 = vadd.f32 %v1021, 1e-06
      %v1058 = vadd.f32 %v1022, 1e-06
      %v1059 = vadd.f32 %v1023, 1e-06
      %v1060 = vadd.f32 %v1024, 1e-06
      %v1061 = vadd.f32 %v1025, 1e-06
      %v1062 = vadd.f32 %v1026, 1e-06
      %v1063 = vadd.f32 %v1027, 1e-06
      %v1064 = vadd.f32 %v1028, 1e-06
      %v1065 = vadd.f32 %v1029, 1e-06
      %v1066 = vadd.f32 %v1030, 1e-06
      %v1067 = vadd.f32 %v1031, 1e-06
      %v1068 = vadd.f32 %v1032, 1e-06
      %v1069 = vadd.f32 %v1033, 1e-06
      %v1070 = vadd.f32 %v1034, 1e-06
      %v1071 = vadd.f32 %v1035, 1e-06
      %v1072 = vadd.f32 %v1036, 1e-06
      %v1073 = vadd.f32 %v1037, 1e-06
      %v1074 = vadd.f32 %v1038, 1e-06
      %v1075 = vadd.f32 %v1039, 1e-06
      %v1076 = vadd.f32 %v1040, 1e-06
      %v1077 = vadd.f32 %v1041, 1e-06
      %v1078 = vadd.f32 %v1042, 1e-06
      %v1079 = vadd.f32 %v1043, 1e-06
      %v1080 = vadd.f32 %v1044, 1e-06
      %v1081 = vadd.f32 %v1045, 1e-06
      %v1082 = vadd.f32 %v1046, 1e-06
      %v1083 = vadd.f32 %v1047, 1e-06
      %v1084 = vadd.f32 %v1048, 1e-06
      %v1085 = vadd.f32 %v1049, 1e-06
      %v1086 = vadd.f32 %v1050, 1e-06
      %v1087 = vadd.f32 %v1051, 1e-06
      %v1088 = vadd.f32 %v1052, 1e-06
      %v1089 = vadd.f32 %v1053, 1e-06
      %v1090 = vrsqrt.pop %v1054
      %v1091 = vrsqrt.pop %v1055
      %v1092 = vrsqrt.pop %v1056
      %v1093 = vrsqrt.pop %v1057
      %v1094 = vrsqrt.pop %v1058
      %v1095 = vrsqrt.pop %v1059
      %v1096 = vrsqrt.pop %v1060
      %v1097 = vrsqrt.pop %v1061
      %v1098 = vrsqrt.pop %v1062
      %v1099 = vrsqrt.pop %v1063
      %v1100 = vrsqrt.pop %v1064
      %v1101 = vrsqrt.pop %v1065
      %v1102 = vrsqrt.pop %v1066
      %v1103 = vrsqrt.pop %v1067
      %v1104 = vrsqrt.pop %v1068
      %v1105 = vrsqrt.pop %v1069
      %v1106 = vrsqrt.pop %v1070
      %v1107 = vrsqrt.pop %v1071
      %v1108 = vrsqrt.pop %v1072
      %v1109 = vrsqrt.pop %v1073
      %v1110 = vrsqrt.pop %v1074
      %v1111 = vrsqrt.pop %v1075
      %v1112 = vrsqrt.pop %v1076
      %v1113 = vrsqrt.pop %v1077
      %v1114 = vrsqrt.pop %v1078
      %v1115 = vrsqrt.pop %v1079
      %v1116 = vrsqrt.pop %v1080
      %v1117 = vrsqrt.pop %v1081
      %v1118 = vrsqrt.pop %v1082
      %v1119 = vrsqrt.pop %v1083
      %v1120 = vrsqrt.pop %v1084
      %v1121 = vrsqrt.pop %v1085
      %v1122 = vrsqrt.pop %v1086
      %v1123 = vrsqrt.pop %v1087
      %v1124 = vrsqrt.pop %v1088
      %v1125 = vrsqrt.pop %v1089
      %v1126 = vmul.f32 %v838, %v1090
      %v1127 = vmul.f32 %v839, %v1091
      %v1128 = vmul.f32 %v840, %v1092
      %v1129 = vmul.f32 %v841, %v1093
      %v1130 = vmul.f32 %v842, %v1094
      %v1131 = vmul.f32 %v843, %v1095
      %v1132 = vmul.f32 %v844, %v1096
      %v1133 = vmul.f32 %v845, %v1097
      %v1134 = vmul.f32 %v846, %v1098
      %v1135 = vmul.f32 %v847, %v1099
      %v1136 = vmul.f32 %v848, %v1100
      %v1137 = vmul.f32 %v849, %v1101
      %v1138 = vmul.f32 %v850, %v1102
      %v1139 = vmul.f32 %v851, %v1103
      %v1140 = vmul.f32 %v852, %v1104
      %v1141 = vmul.f32 %v853, %v1105
      %v1142 = vmul.f32 %v854, %v1106
      %v1143 = vmul.f32 %v855, %v1107
      %v1144 = vmul.f32 %v856, %v1108
      %v1145 = vmul.f32 %v857, %v1109
      %v1146 = vmul.f32 %v858, %v1110
      %v1147 = vmul.f32 %v859, %v1111
      %v1148 = vmul.f32 %v860, %v1112
      %v1149 = vmul.f32 %v861, %v1113
      %v1150 = vmul.f32 %v862, %v1114
      %v1151 = vmul.f32 %v863, %v1115
      %v1152 = vmul.f32 %v864, %v1116
      %v1153 = vmul.f32 %v865, %v1117
      %v1154 = vmul.f32 %v866, %v1118
      %v1155 = vmul.f32 %v867, %v1119
      %v1156 = vmul.f32 %v868, %v1120
      %v1157 = vmul.f32 %v869, %v1121
      %v1158 = vmul.f32 %v870, %v1122
      %v1159 = vmul.f32 %v871, %v1123
      %v1160 = vmul.f32 %v872, %v1124
      %v1161 = vmul.f32 %v873, %v1125
      %v1163 = vlaneseq
      %v1164 = vshrl.u32 %v1163, 7
      %v1165 = vsub.s32 0, %v1164
      %v1166 = vrot.slane %v690, %v1165
      %v1168 = vmul.f32 %v1126, %v1166
      %v1169 = vmul.f32 %v1127, %v1166
      %v1170 = vmul.f32 %v1128, %v1166
      %v1171 = vmul.f32 %v1129, %v1166
      %v1172 = vmul.f32 %v1130, %v1166
      %v1173 = vmul.f32 %v1131, %v1166
      %v1174 = vmul.f32 %v1132, %v1166
      %v1175 = vmul.f32 %v1133, %v1166
      %v1176 = vmul.f32 %v1134, %v1166
      %v1177 = vmul.f32 %v1135, %v1166
      %v1178 = vmul.f32 %v1136, %v1166
      %v1179 = vmul.f32 %v1137, %v1166
      %v1180 = vmul.f32 %v1138, %v1166
      %v1181 = vmul.f32 %v1139, %v1166
      %v1182 = vmul.f32 %v1140, %v1166
      %v1183 = vmul.f32 %v1141, %v1166
      %v1184 = vmul.f32 %v1142, %v1166
      %v1185 = vmul.f32 %v1143, %v1166
      %v1186 = vmul.f32 %v1144, %v1166
      %v1187 = vmul.f32 %v1145, %v1166
      %v1188 = vmul.f32 %v1146, %v1166
      %v1189 = vmul.f32 %v1147, %v1166
      %v1190 = vmul.f32 %v1148, %v1166
      %v1191 = vmul.f32 %v1149, %v1166
      %v1192 = vmul.f32 %v1150, %v1166
      %v1193 = vmul.f32 %v1151, %v1166
      %v1194 = vmul.f32 %v1152, %v1166
      %v1195 = vmul.f32 %v1153, %v1166
      %v1196 = vmul.f32 %v1154, %v1166
      %v1197 = vmul.f32 %v1155, %v1166
      %v1198 = vmul.f32 %v1156, %v1166
      %v1199 = vmul.f32 %v1157, %v1166
      %v1200 = vmul.f32 %v1158, %v1166
      %v1201 = vmul.f32 %v1159, %v1166
      %v1202 = vmul.f32 %v1160, %v1166
      %v1203 = vmul.f32 %v1161, %v1166
      %v1205 = vlaneseq
      %v1206 = vshrl.u32 %v1205, 7
      %v1207 = vsub.s32 0, %v1206
      %v1208 = vrot.slane %v691, %v1207
      %v1210 = vadd.f32 %v1168, %v1208
      %v1211 = vadd.f32 %v1169, %v1208
      %v1212 = vadd.f32 %v1170, %v1208
      %v1213 = vadd.f32 %v1171, %v1208
      %v1214 = vadd.f32 %v1172, %v1208
      %v1215 = vadd.f32 %v1173, %v1208
      %v1216 = vadd.f32 %v1174, %v1208
      %v1217 = vadd.f32 %v1175, %v1208
      %v1218 = vadd.f32 %v1176, %v1208
      %v1219 = vadd.f32 %v1177, %v1208
      %v1220 = vadd.f32 %v1178, %v1208
      %v1221 = vadd.f32 %v1179, %v1208
      %v1222 = vadd.f32 %v1180, %v1208
      %v1223 = vadd.f32 %v1181, %v1208
      %v1224 = vadd.f32 %v1182, %v1208
      %v1225 = vadd.f32 %v1183, %v1208
      %v1226 = vadd.f32 %v1184, %v1208
      %v1227 = vadd.f32 %v1185, %v1208
      %v1228 = vadd.f32 %v1186, %v1208
      %v1229 = vadd.f32 %v1187, %v1208
      %v1230 = vadd.f32 %v1188, %v1208
      %v1231 = vadd.f32 %v1189, %v1208
      %v1232 = vadd.f32 %v1190, %v1208
      %v1233 = vadd.f32 %v1191, %v1208
      %v1234 = vadd.f32 %v1192, %v1208
      %v1235 = vadd.f32 %v1193, %v1208
      %v1236 = vadd.f32 %v1194, %v1208
      %v1237 = vadd.f32 %v1195, %v1208
      %v1238 = vadd.f32 %v1196, %v1208
      %v1239 = vadd.f32 %v1197, %v1208
      %v1240 = vadd.f32 %v1198, %v1208
      %v1241 = vadd.f32 %v1199, %v1208
      %v1242 = vadd.f32 %v1200, %v1208
      %v1243 = vadd.f32 %v1201, %v1208
      %v1244 = vadd.f32 %v1202, %v1208
      %v1245 = vadd.f32 %v1203, %v1208
      %v1246 = vpack.c.bf16 %v1211, %v1210
      %v1247 = vpack.c.bf16 %v1213, %v1212
      %v1248 = vpack.c.bf16 %v1215, %v1214
      %v1249 = vpack.c.bf16 %v1217, %v1216
      %v1250 = vpack.c.bf16 %v1219, %v1218
      %v1251 = vpack.c.bf16 %v1221, %v1220
      %v1252 = vpack.c.bf16 %v1223, %v1222
      %v1253 = vpack.c.bf16 %v1225, %v1224
      %v1254 = vpack.c.bf16 %v1227, %v1226
      %v1255 = vpack.c.bf16 %v1229, %v1228
      %v1256 = vpack.c.bf16 %v1231, %v1230
      %v1257 = vpack.c.bf16 %v1233, %v1232
      %v1258 = vpack.c.bf16 %v1235, %v1234
      %v1259 = vpack.c.bf16 %v1237, %v1236
      %v1260 = vpack.c.bf16 %v1239, %v1238
      %v1261 = vpack.c.bf16 %v1241, %v1240
      %v1262 = vpack.c.bf16 %v1243, %v1242
      %v1263 = vpack.c.bf16 %v1245, %v1244
      %v1264 = vld [vmem:[%s5] sm:$0x3]
      %v1265 = vld [vmem:[%s6] sm:$0x1]
      %v1267 = vlaneseq
      %v1268 = vshrl.u32 %v1267, 7
      %v1269 = vsub.s32 0, %v1268
      %v1270 = vrot.slane %v1265, %v1269
      %v1273 = vsel %vm692, %v1246, 0
      %v1276 = vsel %vm692, %v1247, 0
      %v1279 = vsel %vm692, %v1248, 0
      %v1282 = vsel %vm692, %v1249, 0
      %v1285 = vsel %vm692, %v1250, 0
      %v1288 = vsel %vm692, %v1251, 0
      %v1291 = vsel %vm692, %v1252, 0
      %v1294 = vsel %vm692, %v1253, 0
      %v1297 = vsel %vm692, %v1254, 0
      %v1300 = vsel %vm692, %v1255, 0
      %v1303 = vsel %vm692, %v1256, 0
      %v1306 = vsel %vm692, %v1257, 0
      %v1309 = vsel %vm692, %v1258, 0
      %v1312 = vsel %vm692, %v1259, 0
      %v1315 = vsel %vm692, %v1260, 0
      %v1318 = vsel %vm692, %v1261, 0
      %v1321 = vsel %vm692, %v1262, 0
      %v1324 = vsel %vm692, %v1263, 0
      %vm1326 = vcmask 1041408
      %v1328 = vsel %vm1326, %v1264, 0
      %1330 = vmatprep.subr.bf16.mxu0 0
      %1331 = vmatpush1.bf16.msra.mxu0 %v1328
      %1332 = vmatprep.subr.bf16.mxu0 0
      %1333 = vmatpush1.bf16.msra.mxu0 0
      %1334 = vmatprep.subr.bf16.mxu0 0
      %1335 = vmatpush1.bf16.msra.mxu0 0
      %1336 = vmatprep.subr.bf16.mxu0 0
      %1337 = vmatpush1.bf16.msra.mxu0 0
      %1338 = vmatprep.subr.bf16.mxu0 0
      %1339 = vmatpush1.bf16.msra.mxu0 0
      %1340 = vmatprep.subr.bf16.mxu0 0
      %1341 = vmatpush1.bf16.msra.mxu0 0
      %1342 = vmatprep.subr.bf16.mxu0 0
      %1343 = vmatpush1.bf16.msra.mxu0 0
      %1344 = vmatprep.subr.bf16.mxu0 0
      %1345 = vmatpush1.bf16.msra.mxu0 0
      %1346 = vmatprep.subr.bf16.mxu0 0
      %1347 = vmatpush1.bf16.msra.mxu0 0
      %1348 = vmatprep.subr.bf16.mxu0 0
      %1349 = vmatpush1.bf16.msra.mxu0 0
      %1350 = vmatprep.subr.bf16.mxu0 0
      %1351 = vmatpush1.bf16.msra.mxu0 0
      %1352 = vmatprep.subr.bf16.mxu0 0
      %1353 = vmatpush1.bf16.msra.mxu0 0
      %1354 = vmatprep.subr.bf16.mxu0 0
      %1355 = vmatpush1.bf16.msra.mxu0 0
      %1356 = vmatprep.subr.bf16.mxu0 0
      %1357 = vmatpush1.bf16.msra.mxu0 0
      %1358 = vmatprep.subr.bf16.mxu0 0
      %1359 = vmatpush1.bf16.msra.mxu0 0
      %1360 = vmatprep.subr.bf16.mxu0 0
      %1361 = vmatpush1.bf16.msra.mxu0 0
      %1362 = vmatprep.mubr.bf16.mxu0 0
      %1363 = vmatmul.mubr.bf16.gmra.mrb[0].mxu0 %v1273
      %v1364 = vpop.f32.mrb[0].mxu0
      %v1365 = vadd.f32 %v1270, %v1364
      %v1366 = vpop.f32.mrb[0].mxu0
      %v1367 = vpop.f32.mrb[0].mxu0
      %v1368 = vadd.f32 %v1270, %v1367
      %v1369 = vpop.f32.mrb[0].mxu0
      %1370 = vmatprep.mubr.bf16.mxu0 0
      %1371 = vmatmul.mubr.bf16.gmra.mrb[0].mxu0 %v1276
      %v1372 = vpop.f32.mrb[0].mxu0
      %v1373 = vadd.f32 %v1270, %v1372
      %v1374 = vpop.f32.mrb[0].mxu0
      %v1375 = vpop.f32.mrb[0].mxu0
      %v1376 = vadd.f32 %v1270, %v1375
      %v1377 = vpop.f32.mrb[0].mxu0
      %1378 = vmatprep.mubr.bf16.mxu0 0
      %1379 = vmatmul.mubr.bf16.gmra.mrb[0].mxu0 %v1279
      %v1380 = vpop.f32.mrb[0].mxu0
      %v1381 = vadd.f32 %v1270, %v1380
      %v1382 = vpop.f32.mrb[0].mxu0
      %v1383 = vpop.f32.mrb[0].mxu0
      %v1384 = vadd.f32 %v1270, %v1383
      %v1385 = vpop.f32.mrb[0].mxu0
      %1386 = vmatprep.mubr.bf16.mxu0 0
      %1387 = vmatmul.mubr.bf16.gmra.mrb[0].mxu0 %v1282
      %v1388 = vpop.f32.mrb[0].mxu0
      %v1389 = vadd.f32 %v1270, %v1388
      %v1390 = vpop.f32.mrb[0].mxu0
      %v1391 = vpop.f32.mrb[0].mxu0
      %v1392 = vadd.f32 %v1270, %v1391
      %v1393 = vpop.f32.mrb[0].mxu0
      %1394 = vmatprep.mubr.bf16.mxu0 0
      %1395 = vmatmul.mubr.bf16.gmra.mrb[0].mxu0 %v1285
      %v1396 = vpop.f32.mrb[0].mxu0
      %v1397 = vadd.f32 %v1270, %v1396
      %v1398 = vpop.f32.mrb[0].mxu0
      %v1399 = vpop.f32.mrb[0].mxu0
      %v1400 = vadd.f32 %v1270, %v1399
      %v1401 = vpop.f32.mrb[0].mxu0
      %1402 = vmatprep.mubr.bf16.mxu0 0
      %1403 = vmatmul.mubr.bf16.gmra.mrb[0].mxu0 %v1288
      %v1404 = vpop.f32.mrb[0].mxu0
      %v1405 = vadd.f32 %v1270, %v1404
      %v1406 = vpop.f32.mrb[0].mxu0
      %v1407 = vpop.f32.mrb[0].mxu0
      %v1408 = vadd.f32 %v1270, %v1407
      %v1409 = vpop.f32.mrb[0].mxu0
      %1410 = vmatprep.mubr.bf16.mxu0 0
      %1411 = vmatmul.mubr.bf16.gmra.mrb[0].mxu0 %v1291
      %v1412 = vpop.f32.mrb[0].mxu0
      %v1413 = vadd.f32 %v1270, %v1412
      %v1414 = vpop.f32.mrb[0].mxu0
      %v1415 = vpop.f32.mrb[0].mxu0
      %v1416 = vadd.f32 %v1270, %v1415
      %v1417 = vpop.f32.mrb[0].mxu0
      %1418 = vmatprep.mubr.bf16.mxu0 0
      %1419 = vmatmul.mubr.bf16.gmra.mrb[0].mxu0 %v1294
      %v1420 = vpop.f32.mrb[0].mxu0
      %v1421 = vadd.f32 %v1270, %v1420
      %v1422 = vpop.f32.mrb[0].mxu0
      %v1423 = vpop.f32.mrb[0].mxu0
      %v1424 = vadd.f32 %v1270, %v1423
      %v1425 = vpop.f32.mrb[0].mxu0
      %1426 = vmatprep.mubr.bf16.mxu0 0
      %1427 = vmatmul.mubr.bf16.gmra.mrb[0].mxu0 %v1297
      %v1428 = vpop.f32.mrb[0].mxu0
      %v1429 = vadd.f32 %v1270, %v1428
      %v1430 = vpop.f32.mrb[0].mxu0
      %v1431 = vpop.f32.mrb[0].mxu0
      %v1432 = vadd.f32 %v1270, %v1431
      %v1433 = vpop.f32.mrb[0].mxu0
      %1434 = vmatprep.mubr.bf16.mxu0 0
      %1435 = vmatmul.mubr.bf16.gmra.mrb[0].mxu0 %v1300
      %v1436 = vpop.f32.mrb[0].mxu0
      %v1437 = vadd.f32 %v1270, %v1436
      %v1438 = vpop.f32.mrb[0].mxu0
      %v1439 = vpop.f32.mrb[0].mxu0
      %v1440 = vadd.f32 %v1270, %v1439
      %v1441 = vpop.f32.mrb[0].mxu0
      %1442 = vmatprep.mubr.bf16.mxu0 0
      %1443 = vmatmul.mubr.bf16.gmra.mrb[0].mxu0 %v1303
      %v1444 = vpop.f32.mrb[0].mxu0
      %v1445 = vadd.f32 %v1270, %v1444
      %v1446 = vpop.f32.mrb[0].mxu0
      %v1447 = vpop.f32.mrb[0].mxu0
      %v1448 = vadd.f32 %v1270, %v1447
      %v1449 = vpop.f32.mrb[0].mxu0
      %1450 = vmatprep.mubr.bf16.mxu0 0
      %1451 = vmatmul.mubr.bf16.gmra.mrb[0].mxu0 %v1306
      %v1452 = vpop.f32.mrb[0].mxu0
      %v1453 = vadd.f32 %v1270, %v1452
      %v1454 = vpop.f32.mrb[0].mxu0
      %v1455 = vpop.f32.mrb[0].mxu0
      %v1456 = vadd.f32 %v1270, %v1455
      %v1457 = vpop.f32.mrb[0].mxu0
      %1458 = vmatprep.mubr.bf16.mxu0 0
      %1459 = vmatmul.mubr.bf16.gmra.mrb[0].mxu0 %v1309
      %v1460 = vpop.f32.mrb[0].mxu0
      %v1461 = vadd.f32 %v1270, %v1460
      %v1462 = vpop.f32.mrb[0].mxu0
      %v1463 = vpop.f32.mrb[0].mxu0
      %v1464 = vadd.f32 %v1270, %v1463
      %v1465 = vpop.f32.mrb[0].mxu0
      %1466 = vmatprep.mubr.bf16.mxu0 0
      %1467 = vmatmul.mubr.bf16.gmra.mrb[0].mxu0 %v1312
      %v1468 = vpop.f32.mrb[0].mxu0
      %v1469 = vadd.f32 %v1270, %v1468
      %v1470 = vpop.f32.mrb[0].mxu0
      %v1471 = vpop.f32.mrb[0].mxu0
      %v1472 = vadd.f32 %v1270, %v1471
      %v1473 = vpop.f32.mrb[0].mxu0
      %1474 = vmatprep.mubr.bf16.mxu0 0
      %1475 = vmatmul.mubr.bf16.gmra.mrb[0].mxu0 %v1315
      %v1476 = vpop.f32.mrb[0].mxu0
      %v1477 = vadd.f32 %v1270, %v1476
      %v1478 = vpop.f32.mrb[0].mxu0
      %v1479 = vpop.f32.mrb[0].mxu0
      %v1480 = vadd.f32 %v1270, %v1479
      %v1481 = vpop.f32.mrb[0].mxu0
      %1482 = vmatprep.mubr.bf16.mxu0 0
      %1483 = vmatmul.mubr.bf16.gmra.mrb[0].mxu0 %v1318
      %v1484 = vpop.f32.mrb[0].mxu0
      %v1485 = vadd.f32 %v1270, %v1484
      %v1486 = vpop.f32.mrb[0].mxu0
      %v1487 = vpop.f32.mrb[0].mxu0
      %v1488 = vadd.f32 %v1270, %v1487
      %v1489 = vpop.f32.mrb[0].mxu0
      %1490 = vmatprep.mubr.bf16.mxu0 0
      %1491 = vmatmul.mubr.bf16.gmra.mrb[0].mxu0 %v1321
      %v1492 = vpop.f32.mrb[0].mxu0
      %v1493 = vadd.f32 %v1270, %v1492
      %v1494 = vpop.f32.mrb[0].mxu0
      %v1495 = vpop.f32.mrb[0].mxu0
      %v1496 = vadd.f32 %v1270, %v1495
      %v1497 = vpop.f32.mrb[0].mxu0
      %1498 = vmatprep.mubr.bf16.mxu0 0
      %1499 = vmatmul.mubr.bf16.gmra.mrb[0].mxu0 %v1324
      %v1500 = vpop.f32.mrb[0].mxu0
      %v1501 = vadd.f32 %v1270, %v1500
      %v1502 = vpop.f32.mrb[0].mxu0
      %v1503 = vpop.f32.mrb[0].mxu0
      %v1504 = vadd.f32 %v1270, %v1503
      %v1505 = vpop.f32.mrb[0].mxu0
      %1506 = vdwg.mxu0
      %v1507 = vlaneseq
      %v1508 = vshrl.u32 %v1507, 7
      %v1509 = vadd.s32 %v1508, 8
      %v1510 = vadd.s32 %v1508, 16
      %v1511 = vadd.s32 %v1508, 24
      %v1512 = vadd.s32 %v1508, 32
      %v1513 = vadd.s32 %v1508, 40
      %v1514 = vadd.s32 %v1508, 48
      %v1515 = vadd.s32 %v1508, 56
      %v1516 = vadd.s32 %v1508, 64
      %v1517 = vadd.s32 %v1508, 72
      %v1518 = vadd.s32 %v1508, 80
      %v1519 = vadd.s32 %v1508, 88
      %v1520 = vadd.s32 %v1508, 96
      %v1521 = vadd.s32 %v1508, 104
      %v1522 = vadd.s32 %v1508, 112
      %v1523 = vadd.s32 %v1508, 120
      %v1524 = vadd.s32 %v1508, 128
      %v1525 = vadd.s32 %v1508, 136
      %v1526 = vadd.s32 %v1508, 144
      %v1527 = vadd.s32 %v1508, 152
      %v1528 = vadd.s32 %v1508, 160
      %v1529 = vadd.s32 %v1508, 168
      %v1530 = vadd.s32 %v1508, 176
      %v1531 = vadd.s32 %v1508, 184
      %v1532 = vadd.s32 %v1508, 192
      %v1533 = vadd.s32 %v1508, 200
      %v1534 = vadd.s32 %v1508, 208
      %v1535 = vadd.s32 %v1508, 216
      %v1536 = vadd.s32 %v1508, 224
      %v1537 = vadd.s32 %v1508, 232
      %v1538 = vadd.s32 %v1508, 240
      %v1539 = vadd.s32 %v1508, 248
      %v1540 = vadd.s32 %v1508, 256
      %v1541 = vadd.s32 %v1508, 264
      %v1542 = vadd.s32 %v1508, 272
      %v1543 = vadd.s32 %v1508, 280
      %s1544 = smul.u32 %s33, 256
      %s1545 = ssub.s32 %s1544, 16
      %v1546 = vstv %s1545
      %v1547 = vadd.s32 %v1546, %v1508
      %v1548 = vadd.s32 %v1546, %v1509
      %v1549 = vadd.s32 %v1546, %v1510
      %v1550 = vadd.s32 %v1546, %v1511
      %v1551 = vadd.s32 %v1546, %v1512
      %v1552 = vadd.s32 %v1546, %v1513
      %v1553 = vadd.s32 %v1546, %v1514
      %v1554 = vadd.s32 %v1546, %v1515
      %v1555 = vadd.s32 %v1546, %v1516
      %v1556 = vadd.s32 %v1546, %v1517
      %v1557 = vadd.s32 %v1546, %v1518
      %v1558 = vadd.s32 %v1546, %v1519
      %v1559 = vadd.s32 %v1546, %v1520
      %v1560 = vadd.s32 %v1546, %v1521
      %v1561 = vadd.s32 %v1546, %v1522
      %v1562 = vadd.s32 %v1546, %v1523
      %v1563 = vadd.s32 %v1546, %v1524
      %v1564 = vadd.s32 %v1546, %v1525
      %v1565 = vadd.s32 %v1546, %v1526
      %v1566 = vadd.s32 %v1546, %v1527
      %v1567 = vadd.s32 %v1546, %v1528
      %v1568 = vadd.s32 %v1546, %v1529
      %v1569 = vadd.s32 %v1546, %v1530
      %v1570 = vadd.s32 %v1546, %v1531
      %v1571 = vadd.s32 %v1546, %v1532
      %v1572 = vadd.s32 %v1546, %v1533
      %v1573 = vadd.s32 %v1546, %v1534
      %v1574 = vadd.s32 %v1546, %v1535
      %v1575 = vadd.s32 %v1546, %v1536
      %v1576 = vadd.s32 %v1546, %v1537
      %v1577 = vadd.s32 %v1546, %v1538
      %v1578 = vadd.s32 %v1546, %v1539
      %v1579 = vadd.s32 %v1546, %v1540
      %v1580 = vadd.s32 %v1546, %v1541
      %v1581 = vadd.s32 %v1546, %v1542
      %v1582 = vadd.s32 %v1546, %v1543
      %vm1583 = vcmp.ge.s32.totalorder %v1547, 0
      %vm1584 = vcmp.ge.s32.totalorder %v1548, 0
      %vm1585 = vcmp.ge.s32.totalorder %v1549, 0
      %vm1586 = vcmp.ge.s32.totalorder %v1550, 0
      %vm1587 = vcmp.ge.s32.totalorder %v1551, 0
      %vm1588 = vcmp.ge.s32.totalorder %v1552, 0
      %vm1589 = vcmp.ge.s32.totalorder %v1553, 0
      %vm1590 = vcmp.ge.s32.totalorder %v1554, 0
      %vm1591 = vcmp.ge.s32.totalorder %v1555, 0
      %vm1592 = vcmp.ge.s32.totalorder %v1556, 0
      %vm1593 = vcmp.ge.s32.totalorder %v1557, 0
      %vm1594 = vcmp.ge.s32.totalorder %v1558, 0
      %vm1595 = vcmp.ge.s32.totalorder %v1559, 0
      %vm1596 = vcmp.ge.s32.totalorder %v1560, 0
      %vm1597 = vcmp.ge.s32.totalorder %v1561, 0
      %vm1598 = vcmp.ge.s32.totalorder %v1562, 0
      %vm1599 = vcmp.ge.s32.totalorder %v1563, 0
      %vm1600 = vcmp.ge.s32.totalorder %v1564, 0
      %vm1601 = vcmp.ge.s32.totalorder %v1565, 0
      %vm1602 = vcmp.ge.s32.totalorder %v1566, 0
      %vm1603 = vcmp.ge.s32.totalorder %v1567, 0
      %vm1604 = vcmp.ge.s32.totalorder %v1568, 0
      %vm1605 = vcmp.ge.s32.totalorder %v1569, 0
      %vm1606 = vcmp.ge.s32.totalorder %v1570, 0
      %vm1607 = vcmp.ge.s32.totalorder %v1571, 0
      %vm1608 = vcmp.ge.s32.totalorder %v1572, 0
      %vm1609 = vcmp.ge.s32.totalorder %v1573, 0
      %vm1610 = vcmp.ge.s32.totalorder %v1574, 0
      %vm1611 = vcmp.ge.s32.totalorder %v1575, 0
      %vm1612 = vcmp.ge.s32.totalorder %v1576, 0
      %vm1613 = vcmp.ge.s32.totalorder %v1577, 0
      %vm1614 = vcmp.ge.s32.totalorder %v1578, 0
      %vm1615 = vcmp.ge.s32.totalorder %v1579, 0
      %vm1616 = vcmp.ge.s32.totalorder %v1580, 0
      %vm1617 = vcmp.ge.s32.totalorder %v1581, 0
      %vm1618 = vcmp.ge.s32.totalorder %v1582, 0
      %vm1619 = vcmp.lt.s32.totalorder %v1547, 256
      %vm1620 = vcmp.lt.s32.totalorder %v1548, 256
      %vm1621 = vcmp.lt.s32.totalorder %v1549, 256
      %vm1622 = vcmp.lt.s32.totalorder %v1550, 256
      %vm1623 = vcmp.lt.s32.totalorder %v1551, 256
      %vm1624 = vcmp.lt.s32.totalorder %v1552, 256
      %vm1625 = vcmp.lt.s32.totalorder %v1553, 256
      %vm1626 = vcmp.lt.s32.totalorder %v1554, 256
      %vm1627 = vcmp.lt.s32.totalorder %v1555, 256
      %vm1628 = vcmp.lt.s32.totalorder %v1556, 256
      %vm1629 = vcmp.lt.s32.totalorder %v1557, 256
      %vm1630 = vcmp.lt.s32.totalorder %v1558, 256
      %vm1631 = vcmp.lt.s32.totalorder %v1559, 256
      %vm1632 = vcmp.lt.s32.totalorder %v1560, 256
      %vm1633 = vcmp.lt.s32.totalorder %v1561, 256
      %vm1634 = vcmp.lt.s32.totalorder %v1562, 256
      %vm1635 = vcmp.lt.s32.totalorder %v1563, 256
      %vm1636 = vcmp.lt.s32.totalorder %v1564, 256
      %vm1637 = vcmp.lt.s32.totalorder %v1565, 256
      %vm1638 = vcmp.lt.s32.totalorder %v1566, 256
      %vm1639 = vcmp.lt.s32.totalorder %v1567, 256
      %vm1640 = vcmp.lt.s32.totalorder %v1568, 256
      %vm1641 = vcmp.lt.s32.totalorder %v1569, 256
      %vm1642 = vcmp.lt.s32.totalorder %v1570, 256
      %vm1643 = vcmp.lt.s32.totalorder %v1571, 256
      %vm1644 = vcmp.lt.s32.totalorder %v1572, 256
      %vm1645 = vcmp.lt.s32.totalorder %v1573, 256
      %vm1646 = vcmp.lt.s32.totalorder %v1574, 256
      %vm1647 = vcmp.lt.s32.totalorder %v1575, 256
      %vm1648 = vcmp.lt.s32.totalorder %v1576, 256
      %vm1649 = vcmp.lt.s32.totalorder %v1577, 256
      %vm1650 = vcmp.lt.s32.totalorder %v1578, 256
      %vm1651 = vcmp.lt.s32.totalorder %v1579, 256
      %vm1652 = vcmp.lt.s32.totalorder %v1580, 256
      %vm1653 = vcmp.lt.s32.totalorder %v1581, 256
      %vm1654 = vcmp.lt.s32.totalorder %v1582, 256
      %vm1655 = vmand %vm1583, %vm1619
      %vm1656 = vmand %vm1584, %vm1620
      %vm1657 = vmand %vm1585, %vm1621
      %vm1658 = vmand %vm1586, %vm1622
      %vm1659 = vmand %vm1587, %vm1623
      %vm1660 = vmand %vm1588, %vm1624
      %vm1661 = vmand %vm1589, %vm1625
      %vm1662 = vmand %vm1590, %vm1626
      %vm1663 = vmand %vm1591, %vm1627
      %vm1664 = vmand %vm1592, %vm1628
      %vm1665 = vmand %vm1593, %vm1629
      %vm1666 = vmand %vm1594, %vm1630
      %vm1667 = vmand %vm1595, %vm1631
      %vm1668 = vmand %vm1596, %vm1632
      %vm1669 = vmand %vm1597, %vm1633
      %vm1670 = vmand %vm1598, %vm1634
      %vm1671 = vmand %vm1599, %vm1635
      %vm1672 = vmand %vm1600, %vm1636
      %vm1673 = vmand %vm1601, %vm1637
      %vm1674 = vmand %vm1602, %vm1638
      %vm1675 = vmand %vm1603, %vm1639
      %vm1676 = vmand %vm1604, %vm1640
      %vm1677 = vmand %vm1605, %vm1641
      %vm1678 = vmand %vm1606, %vm1642
      %vm1679 = vmand %vm1607, %vm1643
      %vm1680 = vmand %vm1608, %vm1644
      %vm1681 = vmand %vm1609, %vm1645
      %vm1682 = vmand %vm1610, %vm1646
      %vm1683 = vmand %vm1611, %vm1647
      %vm1684 = vmand %vm1612, %vm1648
      %vm1685 = vmand %vm1613, %vm1649
      %vm1686 = vmand %vm1614, %vm1650
      %vm1687 = vmand %vm1615, %vm1651
      %vm1688 = vmand %vm1616, %vm1652
      %vm1689 = vmand %vm1617, %vm1653
      %vm1690 = vmand %vm1618, %vm1654
      %v1691 = vsel %vm1655, 1, 0
      %v1692 = vsel %vm1656, 1, 0
      %v1693 = vsel %vm1657, 1, 0
      %v1694 = vsel %vm1658, 1, 0
      %v1695 = vsel %vm1659, 1, 0
      %v1696 = vsel %vm1660, 1, 0
      %v1697 = vsel %vm1661, 1, 0
      %v1698 = vsel %vm1662, 1, 0
      %v1699 = vsel %vm1663, 1, 0
      %v1700 = vsel %vm1664, 1, 0
      %v1701 = vsel %vm1665, 1, 0
      %v1702 = vsel %vm1666, 1, 0
      %v1703 = vsel %vm1667, 1, 0
      %v1704 = vsel %vm1668, 1, 0
      %v1705 = vsel %vm1669, 1, 0
      %v1706 = vsel %vm1670, 1, 0
      %v1707 = vsel %vm1671, 1, 0
      %v1708 = vsel %vm1672, 1, 0
      %v1709 = vsel %vm1673, 1, 0
      %v1710 = vsel %vm1674, 1, 0
      %v1711 = vsel %vm1675, 1, 0
      %v1712 = vsel %vm1676, 1, 0
      %v1713 = vsel %vm1677, 1, 0
      %v1714 = vsel %vm1678, 1, 0
      %v1715 = vsel %vm1679, 1, 0
      %v1716 = vsel %vm1680, 1, 0
      %v1717 = vsel %vm1681, 1, 0
      %v1718 = vsel %vm1682, 1, 0
      %v1719 = vsel %vm1683, 1, 0
      %v1720 = vsel %vm1684, 1, 0
      %v1721 = vsel %vm1685, 1, 0
      %v1722 = vsel %vm1686, 1, 0
      %v1723 = vsel %vm1687, 1, 0
      %v1724 = vsel %vm1688, 1, 0
      %v1725 = vsel %vm1689, 1, 0
      %v1726 = vsel %vm1690, 1, 0
      %vm1727 = vcmp.eq.s32.totalorder %v1691, 1
      %vm1728 = vcmp.eq.s32.totalorder %v1692, 1
      %vm1729 = vcmp.eq.s32.totalorder %v1693, 1
      %vm1730 = vcmp.eq.s32.totalorder %v1694, 1
      %vm1731 = vcmp.eq.s32.totalorder %v1695, 1
      %vm1732 = vcmp.eq.s32.totalorder %v1696, 1
      %vm1733 = vcmp.eq.s32.totalorder %v1697, 1
      %vm1734 = vcmp.eq.s32.totalorder %v1698, 1
      %vm1735 = vcmp.eq.s32.totalorder %v1699, 1
      %vm1736 = vcmp.eq.s32.totalorder %v1700, 1
      %vm1737 = vcmp.eq.s32.totalorder %v1701, 1
      %vm1738 = vcmp.eq.s32.totalorder %v1702, 1
      %vm1739 = vcmp.eq.s32.totalorder %v1703, 1
      %vm1740 = vcmp.eq.s32.totalorder %v1704, 1
      %vm1741 = vcmp.eq.s32.totalorder %v1705, 1
      %vm1742 = vcmp.eq.s32.totalorder %v1706, 1
      %vm1743 = vcmp.eq.s32.totalorder %v1707, 1
      %vm1744 = vcmp.eq.s32.totalorder %v1708, 1
      %vm1745 = vcmp.eq.s32.totalorder %v1709, 1
      %vm1746 = vcmp.eq.s32.totalorder %v1710, 1
      %vm1747 = vcmp.eq.s32.totalorder %v1711, 1
      %vm1748 = vcmp.eq.s32.totalorder %v1712, 1
      %vm1749 = vcmp.eq.s32.totalorder %v1713, 1
      %vm1750 = vcmp.eq.s32.totalorder %v1714, 1
      %vm1751 = vcmp.eq.s32.totalorder %v1715, 1
      %vm1752 = vcmp.eq.s32.totalorder %v1716, 1
      %vm1753 = vcmp.eq.s32.totalorder %v1717, 1
      %vm1754 = vcmp.eq.s32.totalorder %v1718, 1
      %vm1755 = vcmp.eq.s32.totalorder %v1719, 1
      %vm1756 = vcmp.eq.s32.totalorder %v1720, 1
      %vm1757 = vcmp.eq.s32.totalorder %v1721, 1
      %vm1758 = vcmp.eq.s32.totalorder %v1722, 1
      %vm1759 = vcmp.eq.s32.totalorder %v1723, 1
      %vm1760 = vcmp.eq.s32.totalorder %v1724, 1
      %vm1761 = vcmp.eq.s32.totalorder %v1725, 1
      %vm1762 = vcmp.eq.s32.totalorder %v1726, 1
      %v1763 = vsel %vm1727, %v1365, 0.0
      %v1764 = vsel %vm1728, %v1368, 0.0
      %v1765 = vsel %vm1729, %v1373, 0.0
      %v1766 = vsel %vm1730, %v1376, 0.0
      %v1767 = vsel %vm1731, %v1381, 0.0
      %v1768 = vsel %vm1732, %v1384, 0.0
      %v1769 = vsel %vm1733, %v1389, 0.0
      %v1770 = vsel %vm1734, %v1392, 0.0
      %v1771 = vsel %vm1735, %v1397, 0.0
      %v1772 = vsel %vm1736, %v1400, 0.0
      %v1773 = vsel %vm1737, %v1405, 0.0
      %v1774 = vsel %vm1738, %v1408, 0.0
      %v1775 = vsel %vm1739, %v1413, 0.0
      %v1776 = vsel %vm1740, %v1416, 0.0
      %v1777 = vsel %vm1741, %v1421, 0.0
      %v1778 = vsel %vm1742, %v1424, 0.0
      %v1779 = vsel %vm1743, %v1429, 0.0
      %v1780 = vsel %vm1744, %v1432, 0.0
      %v1781 = vsel %vm1745, %v1437, 0.0
      %v1782 = vsel %vm1746, %v1440, 0.0
      %v1783 = vsel %vm1747, %v1445, 0.0
      %v1784 = vsel %vm1748, %v1448, 0.0
      %v1785 = vsel %vm1749, %v1453, 0.0
      %v1786 = vsel %vm1750, %v1456, 0.0
      %v1787 = vsel %vm1751, %v1461, 0.0
      %v1788 = vsel %vm1752, %v1464, 0.0
      %v1789 = vsel %vm1753, %v1469, 0.0
      %v1790 = vsel %vm1754, %v1472, 0.0
      %v1791 = vsel %vm1755, %v1477, 0.0
      %v1792 = vsel %vm1756, %v1480, 0.0
      %v1793 = vsel %vm1757, %v1485, 0.0
      %v1794 = vsel %vm1758, %v1488, 0.0
      %v1795 = vsel %vm1759, %v1493, 0.0
      %v1796 = vsel %vm1760, %v1496, 0.0
      %v1797 = vsel %vm1761, %v1501, 0.0
      %v1798 = vsel %vm1762, %v1504, 0.0
      %vm1835 = vcmask 1040384
      %v1836 = vrot.slane %v1763, 7
      %v1837 = vrot.slane %v1764, 7
      %v1838 = vsel %vm1835, %v1836, %v1837
      %v1839 = vrot.slane %v1765, 7
      %v1840 = vsel %vm1835, %v1837, %v1839
      %v1841 = vrot.slane %v1766, 7
      %v1842 = vsel %vm1835, %v1839, %v1841
      %v1843 = vrot.slane %v1767, 7
      %v1844 = vsel %vm1835, %v1841, %v1843
      %v1845 = vrot.slane %v1768, 7
      %v1846 = vsel %vm1835, %v1843, %v1845
      %v1847 = vrot.slane %v1769, 7
      %v1848 = vsel %vm1835, %v1845, %v1847
      %v1849 = vrot.slane %v1770, 7
      %v1850 = vsel %vm1835, %v1847, %v1849
      %v1851 = vrot.slane %v1771, 7
      %v1852 = vsel %vm1835, %v1849, %v1851
      %v1853 = vrot.slane %v1772, 7
      %v1854 = vsel %vm1835, %v1851, %v1853
      %v1855 = vrot.slane %v1773, 7
      %v1856 = vsel %vm1835, %v1853, %v1855
      %v1857 = vrot.slane %v1774, 7
      %v1858 = vsel %vm1835, %v1855, %v1857
      %v1859 = vrot.slane %v1775, 7
      %v1860 = vsel %vm1835, %v1857, %v1859
      %v1861 = vrot.slane %v1776, 7
      %v1862 = vsel %vm1835, %v1859, %v1861
      %v1863 = vrot.slane %v1777, 7
      %v1864 = vsel %vm1835, %v1861, %v1863
      %v1865 = vrot.slane %v1778, 7
      %v1866 = vsel %vm1835, %v1863, %v1865
      %v1867 = vrot.slane %v1779, 7
      %v1868 = vsel %vm1835, %v1865, %v1867
      %v1869 = vrot.slane %v1780, 7
      %v1870 = vsel %vm1835, %v1867, %v1869
      %v1871 = vrot.slane %v1781, 7
      %v1872 = vsel %vm1835, %v1869, %v1871
      %v1873 = vrot.slane %v1782, 7
      %v1874 = vsel %vm1835, %v1871, %v1873
      %v1875 = vrot.slane %v1783, 7
      %v1876 = vsel %vm1835, %v1873, %v1875
      %v1877 = vrot.slane %v1784, 7
      %v1878 = vsel %vm1835, %v1875, %v1877
      %v1879 = vrot.slane %v1785, 7
      %v1880 = vsel %vm1835, %v1877, %v1879
      %v1881 = vrot.slane %v1786, 7
      %v1882 = vsel %vm1835, %v1879, %v1881
      %v1883 = vrot.slane %v1787, 7
      %v1884 = vsel %vm1835, %v1881, %v1883
      %v1885 = vrot.slane %v1788, 7
      %v1886 = vsel %vm1835, %v1883, %v1885
      %v1887 = vrot.slane %v1789, 7
      %v1888 = vsel %vm1835, %v1885, %v1887
      %v1889 = vrot.slane %v1790, 7
      %v1890 = vsel %vm1835, %v1887, %v1889
      %v1891 = vrot.slane %v1791, 7
      %v1892 = vsel %vm1835, %v1889, %v1891
      %v1893 = vrot.slane %v1792, 7
      %v1894 = vsel %vm1835, %v1891, %v1893
      %v1895 = vrot.slane %v1793, 7
      %v1896 = vsel %vm1835, %v1893, %v1895
      %v1897 = vrot.slane %v1794, 7
      %v1898 = vsel %vm1835, %v1895, %v1897
      %v1899 = vrot.slane %v1795, 7
      %v1900 = vsel %vm1835, %v1897, %v1899
      %v1901 = vrot.slane %v1796, 7
      %v1902 = vsel %vm1835, %v1899, %v1901
      %v1903 = vrot.slane %v1797, 7
      %v1904 = vsel %vm1835, %v1901, %v1903
      %v1905 = vrot.slane %v1798, 7
      %v1906 = vsel %vm1835, %v1903, %v1905
      %v1944 = vsel %vm1835, 0.0, %v1836
      %v1945 = vsel %vm1835, %v1905, 0.0
      %vm1946 = vcmp.lt.s32.totalorder %v1508, 0
      %v1947 = vsub.s32 0, %v1508
      %v1948 = vsel %vm1946, %v1947, %v1508
      %v1949 = vshrl.u32 %v1948, 4
      %v1950 = vand.u32 %v1948, 15
      %v1951 = vsub.s32 0, %v1950
      %v1952 = vsel %vm1946, %v1951, %v1950
      %vm1953 = vcmp.lt.s32.totalorder %v1509, 0
      %v1954 = vsub.s32 0, %v1509
      %v1955 = vsel %vm1953, %v1954, %v1509
      %v1956 = vshrl.u32 %v1955, 4
      %v1957 = vand.u32 %v1955, 15
      %v1958 = vsub.s32 0, %v1957
      %v1959 = vsel %vm1953, %v1958, %v1957
      %vm1960 = vcmp.lt.s32.totalorder %v1510, 0
      %v1961 = vsub.s32 0, %v1510
      %v1962 = vsel %vm1960, %v1961, %v1510
      %v1963 = vshrl.u32 %v1962, 4
      %v1964 = vand.u32 %v1962, 15
      %v1965 = vsub.s32 0, %v1964
      %v1966 = vsel %vm1960, %v1965, %v1964
      %vm1967 = vcmp.lt.s32.totalorder %v1511, 0
      %v1968 = vsub.s32 0, %v1511
      %v1969 = vsel %vm1967, %v1968, %v1511
      %v1970 = vshrl.u32 %v1969, 4
      %v1971 = vand.u32 %v1969, 15
      %v1972 = vsub.s32 0, %v1971
      %v1973 = vsel %vm1967, %v1972, %v1971
      %vm1974 = vcmp.lt.s32.totalorder %v1512, 0
      %v1975 = vsub.s32 0, %v1512
      %v1976 = vsel %vm1974, %v1975, %v1512
      %v1977 = vshrl.u32 %v1976, 4
      %v1978 = vand.u32 %v1976, 15
      %v1979 = vsub.s32 0, %v1978
      %v1980 = vsel %vm1974, %v1979, %v1978
      %vm1981 = vcmp.lt.s32.totalorder %v1513, 0
      %v1982 = vsub.s32 0, %v1513
      %v1983 = vsel %vm1981, %v1982, %v1513
      %v1984 = vshrl.u32 %v1983, 4
      %v1985 = vand.u32 %v1983, 15
      %v1986 = vsub.s32 0, %v1985
      %v1987 = vsel %vm1981, %v1986, %v1985
      %vm1988 = vcmp.lt.s32.totalorder %v1514, 0
      %v1989 = vsub.s32 0, %v1514
      %v1990 = vsel %vm1988, %v1989, %v1514
      %v1991 = vshrl.u32 %v1990, 4
      %v1992 = vand.u32 %v1990, 15
      %v1993 = vsub.s32 0, %v1992
      %v1994 = vsel %vm1988, %v1993, %v1992
      %vm1995 = vcmp.lt.s32.totalorder %v1515, 0
      %v1996 = vsub.s32 0, %v1515
      %v1997 = vsel %vm1995, %v1996, %v1515
      %v1998 = vshrl.u32 %v1997, 4
      %v1999 = vand.u32 %v1997, 15
      %v2000 = vsub.s32 0, %v1999
      %v2001 = vsel %vm1995, %v2000, %v1999
      %vm2002 = vcmp.lt.s32.totalorder %v1516, 0
      %v2003 = vsub.s32 0, %v1516
      %v2004 = vsel %vm2002, %v2003, %v1516
      %v2005 = vshrl.u32 %v2004, 4
      %v2006 = vand.u32 %v2004, 15
      %v2007 = vsub.s32 0, %v2006
      %v2008 = vsel %vm2002, %v2007, %v2006
      %vm2009 = vcmp.lt.s32.totalorder %v1517, 0
      %v2010 = vsub.s32 0, %v1517
      %v2011 = vsel %vm2009, %v2010, %v1517
      %v2012 = vshrl.u32 %v2011, 4
      %v2013 = vand.u32 %v2011, 15
      %v2014 = vsub.s32 0, %v2013
      %v2015 = vsel %vm2009, %v2014, %v2013
      %vm2016 = vcmp.lt.s32.totalorder %v1518, 0
      %v2017 = vsub.s32 0, %v1518
      %v2018 = vsel %vm2016, %v2017, %v1518
      %v2019 = vshrl.u32 %v2018, 4
      %v2020 = vand.u32 %v2018, 15
      %v2021 = vsub.s32 0, %v2020
      %v2022 = vsel %vm2016, %v2021, %v2020
      %vm2023 = vcmp.lt.s32.totalorder %v1519, 0
      %v2024 = vsub.s32 0, %v1519
      %v2025 = vsel %vm2023, %v2024, %v1519
      %v2026 = vshrl.u32 %v2025, 4
      %v2027 = vand.u32 %v2025, 15
      %v2028 = vsub.s32 0, %v2027
      %v2029 = vsel %vm2023, %v2028, %v2027
      %vm2030 = vcmp.lt.s32.totalorder %v1520, 0
      %v2031 = vsub.s32 0, %v1520
      %v2032 = vsel %vm2030, %v2031, %v1520
      %v2033 = vshrl.u32 %v2032, 4
      %v2034 = vand.u32 %v2032, 15
      %v2035 = vsub.s32 0, %v2034
      %v2036 = vsel %vm2030, %v2035, %v2034
      %vm2037 = vcmp.lt.s32.totalorder %v1521, 0
      %v2038 = vsub.s32 0, %v1521
      %v2039 = vsel %vm2037, %v2038, %v1521
      %v2040 = vshrl.u32 %v2039, 4
      %v2041 = vand.u32 %v2039, 15
      %v2042 = vsub.s32 0, %v2041
      %v2043 = vsel %vm2037, %v2042, %v2041
      %vm2044 = vcmp.lt.s32.totalorder %v1522, 0
      %v2045 = vsub.s32 0, %v1522
      %v2046 = vsel %vm2044, %v2045, %v1522
      %v2047 = vshrl.u32 %v2046, 4
      %v2048 = vand.u32 %v2046, 15
      %v2049 = vsub.s32 0, %v2048
      %v2050 = vsel %vm2044, %v2049, %v2048
      %vm2051 = vcmp.lt.s32.totalorder %v1523, 0
      %v2052 = vsub.s32 0, %v1523
      %v2053 = vsel %vm2051, %v2052, %v1523
      %v2054 = vshrl.u32 %v2053, 4
      %v2055 = vand.u32 %v2053, 15
      %v2056 = vsub.s32 0, %v2055
      %v2057 = vsel %vm2051, %v2056, %v2055
      %vm2058 = vcmp.lt.s32.totalorder %v1524, 0
      %v2059 = vsub.s32 0, %v1524
      %v2060 = vsel %vm2058, %v2059, %v1524
      %v2061 = vshrl.u32 %v2060, 4
      %v2062 = vand.u32 %v2060, 15
      %v2063 = vsub.s32 0, %v2062
      %v2064 = vsel %vm2058, %v2063, %v2062
      %vm2065 = vcmp.lt.s32.totalorder %v1525, 0
      %v2066 = vsub.s32 0, %v1525
      %v2067 = vsel %vm2065, %v2066, %v1525
      %v2068 = vshrl.u32 %v2067, 4
      %v2069 = vand.u32 %v2067, 15
      %v2070 = vsub.s32 0, %v2069
      %v2071 = vsel %vm2065, %v2070, %v2069
      %vm2072 = vcmp.lt.s32.totalorder %v1526, 0
      %v2073 = vsub.s32 0, %v1526
      %v2074 = vsel %vm2072, %v2073, %v1526
      %v2075 = vshrl.u32 %v2074, 4
      %v2076 = vand.u32 %v2074, 15
      %v2077 = vsub.s32 0, %v2076
      %v2078 = vsel %vm2072, %v2077, %v2076
      %vm2079 = vcmp.lt.s32.totalorder %v1527, 0
      %v2080 = vsub.s32 0, %v1527
      %v2081 = vsel %vm2079, %v2080, %v1527
      %v2082 = vshrl.u32 %v2081, 4
      %v2083 = vand.u32 %v2081, 15
      %v2084 = vsub.s32 0, %v2083
      %v2085 = vsel %vm2079, %v2084, %v2083
      %vm2086 = vcmp.lt.s32.totalorder %v1528, 0
      %v2087 = vsub.s32 0, %v1528
      %v2088 = vsel %vm2086, %v2087, %v1528
      %v2089 = vshrl.u32 %v2088, 4
      %v2090 = vand.u32 %v2088, 15
      %v2091 = vsub.s32 0, %v2090
      %v2092 = vsel %vm2086, %v2091, %v2090
      %vm2093 = vcmp.lt.s32.totalorder %v1529, 0
      %v2094 = vsub.s32 0, %v1529
      %v2095 = vsel %vm2093, %v2094, %v1529
      %v2096 = vshrl.u32 %v2095, 4
      %v2097 = vand.u32 %v2095, 15
      %v2098 = vsub.s32 0, %v2097
      %v2099 = vsel %vm2093, %v2098, %v2097
      %vm2100 = vcmp.lt.s32.totalorder %v1530, 0
      %v2101 = vsub.s32 0, %v1530
      %v2102 = vsel %vm2100, %v2101, %v1530
      %v2103 = vshrl.u32 %v2102, 4
      %v2104 = vand.u32 %v2102, 15
      %v2105 = vsub.s32 0, %v2104
      %v2106 = vsel %vm2100, %v2105, %v2104
      %vm2107 = vcmp.lt.s32.totalorder %v1531, 0
      %v2108 = vsub.s32 0, %v1531
      %v2109 = vsel %vm2107, %v2108, %v1531
      %v2110 = vshrl.u32 %v2109, 4
      %v2111 = vand.u32 %v2109, 15
      %v2112 = vsub.s32 0, %v2111
      %v2113 = vsel %vm2107, %v2112, %v2111
      %vm2114 = vcmp.lt.s32.totalorder %v1532, 0
      %v2115 = vsub.s32 0, %v1532
      %v2116 = vsel %vm2114, %v2115, %v1532
      %v2117 = vshrl.u32 %v2116, 4
      %v2118 = vand.u32 %v2116, 15
      %v2119 = vsub.s32 0, %v2118
      %v2120 = vsel %vm2114, %v2119, %v2118
      %vm2121 = vcmp.lt.s32.totalorder %v1533, 0
      %v2122 = vsub.s32 0, %v1533
      %v2123 = vsel %vm2121, %v2122, %v1533
      %v2124 = vshrl.u32 %v2123, 4
      %v2125 = vand.u32 %v2123, 15
      %v2126 = vsub.s32 0, %v2125
      %v2127 = vsel %vm2121, %v2126, %v2125
      %vm2128 = vcmp.lt.s32.totalorder %v1534, 0
      %v2129 = vsub.s32 0, %v1534
      %v2130 = vsel %vm2128, %v2129, %v1534
      %v2131 = vshrl.u32 %v2130, 4
      %v2132 = vand.u32 %v2130, 15
      %v2133 = vsub.s32 0, %v2132
      %v2134 = vsel %vm2128, %v2133, %v2132
      %vm2135 = vcmp.lt.s32.totalorder %v1535, 0
      %v2136 = vsub.s32 0, %v1535
      %v2137 = vsel %vm2135, %v2136, %v1535
      %v2138 = vshrl.u32 %v2137, 4
      %v2139 = vand.u32 %v2137, 15
      %v2140 = vsub.s32 0, %v2139
      %v2141 = vsel %vm2135, %v2140, %v2139
      %vm2142 = vcmp.lt.s32.totalorder %v1536, 0
      %v2143 = vsub.s32 0, %v1536
      %v2144 = vsel %vm2142, %v2143, %v1536
      %v2145 = vshrl.u32 %v2144, 4
      %v2146 = vand.u32 %v2144, 15
      %v2147 = vsub.s32 0, %v2146
      %v2148 = vsel %vm2142, %v2147, %v2146
      %vm2149 = vcmp.lt.s32.totalorder %v1537, 0
      %v2150 = vsub.s32 0, %v1537
      %v2151 = vsel %vm2149, %v2150, %v1537
      %v2152 = vshrl.u32 %v2151, 4
      %v2153 = vand.u32 %v2151, 15
      %v2154 = vsub.s32 0, %v2153
      %v2155 = vsel %vm2149, %v2154, %v2153
      %vm2156 = vcmp.lt.s32.totalorder %v1538, 0
      %v2157 = vsub.s32 0, %v1538
      %v2158 = vsel %vm2156, %v2157, %v1538
      %v2159 = vshrl.u32 %v2158, 4
      %v2160 = vand.u32 %v2158, 15
      %v2161 = vsub.s32 0, %v2160
      %v2162 = vsel %vm2156, %v2161, %v2160
      %vm2163 = vcmp.lt.s32.totalorder %v1539, 0
      %v2164 = vsub.s32 0, %v1539
      %v2165 = vsel %vm2163, %v2164, %v1539
      %v2166 = vshrl.u32 %v2165, 4
      %v2167 = vand.u32 %v2165, 15
      %v2168 = vsub.s32 0, %v2167
      %v2169 = vsel %vm2163, %v2168, %v2167
      %vm2170 = vcmp.ne.s32.totalorder %v1952, 0
      %vm2171 = vcmp.ne.s32.totalorder %v1959, 0
      %vm2172 = vcmp.ne.s32.totalorder %v1966, 0
      %vm2173 = vcmp.ne.s32.totalorder %v1973, 0
      %vm2174 = vcmp.ne.s32.totalorder %v1980, 0
      %vm2175 = vcmp.ne.s32.totalorder %v1987, 0
      %vm2176 = vcmp.ne.s32.totalorder %v1994, 0
      %vm2177 = vcmp.ne.s32.totalorder %v2001, 0
      %vm2178 = vcmp.ne.s32.totalorder %v2008, 0
      %vm2179 = vcmp.ne.s32.totalorder %v2015, 0
      %vm2180 = vcmp.ne.s32.totalorder %v2022, 0
      %vm2181 = vcmp.ne.s32.totalorder %v2029, 0
      %vm2182 = vcmp.ne.s32.totalorder %v2036, 0
      %vm2183 = vcmp.ne.s32.totalorder %v2043, 0
      %vm2184 = vcmp.ne.s32.totalorder %v2050, 0
      %vm2185 = vcmp.ne.s32.totalorder %v2057, 0
      %vm2186 = vcmp.ne.s32.totalorder %v2064, 0
      %vm2187 = vcmp.ne.s32.totalorder %v2071, 0
      %vm2188 = vcmp.ne.s32.totalorder %v2078, 0
      %vm2189 = vcmp.ne.s32.totalorder %v2085, 0
      %vm2190 = vcmp.ne.s32.totalorder %v2092, 0
      %vm2191 = vcmp.ne.s32.totalorder %v2099, 0
      %vm2192 = vcmp.ne.s32.totalorder %v2106, 0
      %vm2193 = vcmp.ne.s32.totalorder %v2113, 0
      %vm2194 = vcmp.ne.s32.totalorder %v2120, 0
      %vm2195 = vcmp.ne.s32.totalorder %v2127, 0
      %vm2196 = vcmp.ne.s32.totalorder %v2134, 0
      %vm2197 = vcmp.ne.s32.totalorder %v2141, 0
      %vm2198 = vcmp.ne.s32.totalorder %v2148, 0
      %vm2199 = vcmp.ne.s32.totalorder %v2155, 0
      %vm2200 = vcmp.ne.s32.totalorder %v2162, 0
      %vm2201 = vcmp.ne.s32.totalorder %v2169, 0
      %vm2202 = vcmp.lt.s32.totalorder %v1952, 0
      %vm2203 = vcmp.lt.s32.totalorder %v1959, 0
      %vm2204 = vcmp.lt.s32.totalorder %v1966, 0
      %vm2205 = vcmp.lt.s32.totalorder %v1973, 0
      %vm2206 = vcmp.lt.s32.totalorder %v1980, 0
      %vm2207 = vcmp.lt.s32.totalorder %v1987, 0
      %vm2208 = vcmp.lt.s32.totalorder %v1994, 0
      %vm2209 = vcmp.lt.s32.totalorder %v2001, 0
      %vm2210 = vcmp.lt.s32.totalorder %v2008, 0
      %vm2211 = vcmp.lt.s32.totalorder %v2015, 0
      %vm2212 = vcmp.lt.s32.totalorder %v2022, 0
      %vm2213 = vcmp.lt.s32.totalorder %v2029, 0
      %vm2214 = vcmp.lt.s32.totalorder %v2036, 0
      %vm2215 = vcmp.lt.s32.totalorder %v2043, 0
      %vm2216 = vcmp.lt.s32.totalorder %v2050, 0
      %vm2217 = vcmp.lt.s32.totalorder %v2057, 0
      %vm2218 = vcmp.lt.s32.totalorder %v2064, 0
      %vm2219 = vcmp.lt.s32.totalorder %v2071, 0
      %vm2220 = vcmp.lt.s32.totalorder %v2078, 0
      %vm2221 = vcmp.lt.s32.totalorder %v2085, 0
      %vm2222 = vcmp.lt.s32.totalorder %v2092, 0
      %vm2223 = vcmp.lt.s32.totalorder %v2099, 0
      %vm2224 = vcmp.lt.s32.totalorder %v2106, 0
      %vm2225 = vcmp.lt.s32.totalorder %v2113, 0
      %vm2226 = vcmp.lt.s32.totalorder %v2120, 0
      %vm2227 = vcmp.lt.s32.totalorder %v2127, 0
      %vm2228 = vcmp.lt.s32.totalorder %v2134, 0
      %vm2229 = vcmp.lt.s32.totalorder %v2141, 0
      %vm2230 = vcmp.lt.s32.totalorder %v2148, 0
      %vm2231 = vcmp.lt.s32.totalorder %v2155, 0
      %vm2232 = vcmp.lt.s32.totalorder %v2162, 0
      %vm2233 = vcmp.lt.s32.totalorder %v2169, 0
      %vm2234 = vmand %vm2202, %vm2170
      %vm2235 = vmand %vm2203, %vm2171
      %vm2236 = vmand %vm2204, %vm2172
      %vm2237 = vmand %vm2205, %vm2173
      %vm2238 = vmand %vm2206, %vm2174
      %vm2239 = vmand %vm2207, %vm2175
      %vm2240 = vmand %vm2208, %vm2176
      %vm2241 = vmand %vm2209, %vm2177
      %vm2242 = vmand %vm2210, %vm2178
      %vm2243 = vmand %vm2211, %vm2179
      %vm2244 = vmand %vm2212, %vm2180
      %vm2245 = vmand %vm2213, %vm2181
      %vm2246 = vmand %vm2214, %vm2182
      %vm2247 = vmand %vm2215, %vm2183
      %vm2248 = vmand %vm2216, %vm2184
      %vm2249 = vmand %vm2217, %vm2185
      %vm2250 = vmand %vm2218, %vm2186
      %vm2251 = vmand %vm2219, %vm2187
      %vm2252 = vmand %vm2220, %vm2188
      %vm2253 = vmand %vm2221, %vm2189
      %vm2254 = vmand %vm2222, %vm2190
      %vm2255 = vmand %vm2223, %vm2191
      %vm2256 = vmand %vm2224, %vm2192
      %vm2257 = vmand %vm2225, %vm2193
      %vm2258 = vmand %vm2226, %vm2194
      %vm2259 = vmand %vm2227, %vm2195
      %vm2260 = vmand %vm2228, %vm2196
      %vm2261 = vmand %vm2229, %vm2197
      %vm2262 = vmand %vm2230, %vm2198
      %vm2263 = vmand %vm2231, %vm2199
      %vm2264 = vmand %vm2232, %vm2200
      %vm2265 = vmand %vm2233, %vm2201
      %v2266 = vadd.s32 %v1952, 16
      %v2267 = vadd.s32 %v1959, 16
      %v2268 = vadd.s32 %v1966, 16
      %v2269 = vadd.s32 %v1973, 16
      %v2270 = vadd.s32 %v1980, 16
      %v2271 = vadd.s32 %v1987, 16
      %v2272 = vadd.s32 %v1994, 16
      %v2273 = vadd.s32 %v2001, 16
      %v2274 = vadd.s32 %v2008, 16
      %v2275 = vadd.s32 %v2015, 16
      %v2276 = vadd.s32 %v2022, 16
      %v2277 = vadd.s32 %v2029, 16
      %v2278 = vadd.s32 %v2036, 16
      %v2279 = vadd.s32 %v2043, 16
      %v2280 = vadd.s32 %v2050, 16
      %v2281 = vadd.s32 %v2057, 16
      %v2282 = vadd.s32 %v2064, 16
      %v2283 = vadd.s32 %v2071, 16
      %v2284 = vadd.s32 %v2078, 16
      %v2285 = vadd.s32 %v2085, 16
      %v2286 = vadd.s32 %v2092, 16
      %v2287 = vadd.s32 %v2099, 16
      %v2288 = vadd.s32 %v2106, 16
      %v2289 = vadd.s32 %v2113, 16
      %v2290 = vadd.s32 %v2120, 16
      %v2291 = vadd.s32 %v2127, 16
      %v2292 = vadd.s32 %v2134, 16
      %v2293 = vadd.s32 %v2141, 16
      %v2294 = vadd.s32 %v2148, 16
      %v2295 = vadd.s32 %v2155, 16
      %v2296 = vadd.s32 %v2162, 16
      %v2297 = vadd.s32 %v2169, 16
      %v2298 = vsel %vm2234, %v2266, %v1952
      %v2299 = vsel %vm2235, %v2267, %v1959
      %v2300 = vsel %vm2236, %v2268, %v1966
      %v2301 = vsel %vm2237, %v2269, %v1973
      %v2302 = vsel %vm2238, %v2270, %v1980
      %v2303 = vsel %vm2239, %v2271, %v1987
      %v2304 = vsel %vm2240, %v2272, %v1994
      %v2305 = vsel %vm2241, %v2273, %v2001
      %v2306 = vsel %vm2242, %v2274, %v2008
      %v2307 = vsel %vm2243, %v2275, %v2015
      %v2308 = vsel %vm2244, %v2276, %v2022
      %v2309 = vsel %vm2245, %v2277, %v2029
      %v2310 = vsel %vm2246, %v2278, %v2036
      %v2311 = vsel %vm2247, %v2279, %v2043
      %v2312 = vsel %vm2248, %v2280, %v2050
      %v2313 = vsel %vm2249, %v2281, %v2057
      %v2314 = vsel %vm2250, %v2282, %v2064
      %v2315 = vsel %vm2251, %v2283, %v2071
      %v2316 = vsel %vm2252, %v2284, %v2078
      %v2317 = vsel %vm2253, %v2285, %v2085
      %v2318 = vsel %vm2254, %v2286, %v2092
      %v2319 = vsel %vm2255, %v2287, %v2099
      %v2320 = vsel %vm2256, %v2288, %v2106
      %v2321 = vsel %vm2257, %v2289, %v2113
      %v2322 = vsel %vm2258, %v2290, %v2120
      %v2323 = vsel %vm2259, %v2291, %v2127
      %v2324 = vsel %vm2260, %v2292, %v2134
      %v2325 = vsel %vm2261, %v2293, %v2141
      %v2326 = vsel %vm2262, %v2294, %v2148
      %v2327 = vsel %vm2263, %v2295, %v2155
      %v2328 = vsel %vm2264, %v2296, %v2162
      %v2329 = vsel %vm2265, %v2297, %v2169
      %vm2330 = vcmp.ge.s32.totalorder %v2298, 1
      %vm2331 = vcmp.ge.s32.totalorder %v2299, 1
      %vm2332 = vcmp.ge.s32.totalorder %v2300, 1
      %vm2333 = vcmp.ge.s32.totalorder %v2301, 1
      %vm2334 = vcmp.ge.s32.totalorder %v2302, 1
      %vm2335 = vcmp.ge.s32.totalorder %v2303, 1
      %vm2336 = vcmp.ge.s32.totalorder %v2304, 1
      %vm2337 = vcmp.ge.s32.totalorder %v2305, 1
      %vm2338 = vcmp.ge.s32.totalorder %v2306, 1
      %vm2339 = vcmp.ge.s32.totalorder %v2307, 1
      %vm2340 = vcmp.ge.s32.totalorder %v2308, 1
      %vm2341 = vcmp.ge.s32.totalorder %v2309, 1
      %vm2342 = vcmp.ge.s32.totalorder %v2310, 1
      %vm2343 = vcmp.ge.s32.totalorder %v2311, 1
      %vm2344 = vcmp.ge.s32.totalorder %v2312, 1
      %vm2345 = vcmp.ge.s32.totalorder %v2313, 1
      %vm2346 = vcmp.ge.s32.totalorder %v2314, 1
      %vm2347 = vcmp.ge.s32.totalorder %v2315, 1
      %vm2348 = vcmp.ge.s32.totalorder %v2316, 1
      %vm2349 = vcmp.ge.s32.totalorder %v2317, 1
      %vm2350 = vcmp.ge.s32.totalorder %v2318, 1
      %vm2351 = vcmp.ge.s32.totalorder %v2319, 1
      %vm2352 = vcmp.ge.s32.totalorder %v2320, 1
      %vm2353 = vcmp.ge.s32.totalorder %v2321, 1
      %vm2354 = vcmp.ge.s32.totalorder %v2322, 1
      %vm2355 = vcmp.ge.s32.totalorder %v2323, 1
      %vm2356 = vcmp.ge.s32.totalorder %v2324, 1
      %vm2357 = vcmp.ge.s32.totalorder %v2325, 1
      %vm2358 = vcmp.ge.s32.totalorder %v2326, 1
      %vm2359 = vcmp.ge.s32.totalorder %v2327, 1
      %vm2360 = vcmp.ge.s32.totalorder %v2328, 1
      %vm2361 = vcmp.ge.s32.totalorder %v2329, 1
      %vm2362 = vcmp.le.s32.totalorder %v2298, 14
      %vm2363 = vcmp.le.s32.totalorder %v2299, 14
      %vm2364 = vcmp.le.s32.totalorder %v2300, 14
      %vm2365 = vcmp.le.s32.totalorder %v2301, 14
      %vm2366 = vcmp.le.s32.totalorder %v2302, 14
      %vm2367 = vcmp.le.s32.totalorder %v2303, 14
      %vm2368 = vcmp.le.s32.totalorder %v2304, 14
      %vm2369 = vcmp.le.s32.totalorder %v2305, 14
      %vm2370 = vcmp.le.s32.totalorder %v2306, 14
      %vm2371 = vcmp.le.s32.totalorder %v2307, 14
      %vm2372 = vcmp.le.s32.totalorder %v2308, 14
      %vm2373 = vcmp.le.s32.totalorder %v2309, 14
      %vm2374 = vcmp.le.s32.totalorder %v2310, 14
      %vm2375 = vcmp.le.s32.totalorder %v2311, 14
      %vm2376 = vcmp.le.s32.totalorder %v2312, 14
      %vm2377 = vcmp.le.s32.totalorder %v2313, 14
      %vm2378 = vcmp.le.s32.totalorder %v2314, 14
      %vm2379 = vcmp.le.s32.totalorder %v2315, 14
      %vm2380 = vcmp.le.s32.totalorder %v2316, 14
      %vm2381 = vcmp.le.s32.totalorder %v2317, 14
      %vm2382 = vcmp.le.s32.totalorder %v2318, 14
      %vm2383 = vcmp.le.s32.totalorder %v2319, 14
      %vm2384 = vcmp.le.s32.totalorder %v2320, 14
      %vm2385 = vcmp.le.s32.totalorder %v2321, 14
      %vm2386 = vcmp.le.s32.totalorder %v2322, 14
      %vm2387 = vcmp.le.s32.totalorder %v2323, 14
      %vm2388 = vcmp.le.s32.totalorder %v2324, 14
      %vm2389 = vcmp.le.s32.totalorder %v2325, 14
      %vm2390 = vcmp.le.s32.totalorder %v2326, 14
      %vm2391 = vcmp.le.s32.totalorder %v2327, 14
      %vm2392 = vcmp.le.s32.totalorder %v2328, 14
      %vm2393 = vcmp.le.s32.totalorder %v2329, 14
      %v2394 = vld [vmem:[%s7] sm:$0xff]
      %v2395 = vld [vmem:[%s7 + $0x8] sm:$0x1]
      %v2396 = vlaneseq
      %v2397 = vshrl.u32 %v2396, 7
      %v2398 = vsub.s32 0, %v2397
      %v2399 = vrot.slane %v2394, %v2398
      %v2400 = vmul.f32 %v1944, %v2399
      %v2401 = vmul.f32 %v1838, %v2399
      %v2402 = vmul.f32 %v1840, %v2399
      %v2403 = vmul.f32 %v1842, %v2399
      %v2404 = vmul.f32 %v1844, %v2399
      %v2405 = vmul.f32 %v1846, %v2399
      %v2406 = vmul.f32 %v1848, %v2399
      %v2407 = vmul.f32 %v1850, %v2399
      %v2408 = vmul.f32 %v1852, %v2399
      %v2409 = vmul.f32 %v1854, %v2399
      %v2410 = vmul.f32 %v1856, %v2399
      %v2411 = vmul.f32 %v1858, %v2399
      %v2412 = vmul.f32 %v1860, %v2399
      %v2413 = vmul.f32 %v1862, %v2399
      %v2414 = vmul.f32 %v1864, %v2399
      %v2415 = vmul.f32 %v1866, %v2399
      %v2416 = vmul.f32 %v1868, %v2399
      %v2417 = vmul.f32 %v1870, %v2399
      %v2418 = vmul.f32 %v1872, %v2399
      %v2419 = vmul.f32 %v1874, %v2399
      %v2420 = vmul.f32 %v1876, %v2399
      %v2421 = vmul.f32 %v1878, %v2399
      %v2422 = vmul.f32 %v1880, %v2399
      %v2423 = vmul.f32 %v1882, %v2399
      %v2424 = vmul.f32 %v1884, %v2399
      %v2425 = vmul.f32 %v1886, %v2399
      %v2426 = vmul.f32 %v1888, %v2399
      %v2427 = vmul.f32 %v1890, %v2399
      %v2428 = vmul.f32 %v1892, %v2399
      %v2429 = vmul.f32 %v1894, %v2399
      %v2430 = vmul.f32 %v1896, %v2399
      %v2431 = vmul.f32 %v1898, %v2399
      %v2432 = vlaneseq
      %v2433 = vshrl.u32 %v2432, 7
      %v2434 = vsub.s32 3, %v2433
      %v2435 = vrot.slane %v2394, %v2434
      %v2436 = vmul.f32 %v1840, %v2435
      %v2437 = vmul.f32 %v1842, %v2435
      %v2438 = vmul.f32 %v1844, %v2435
      %v2439 = vmul.f32 %v1846, %v2435
      %v2440 = vmul.f32 %v1848, %v2435
      %v2441 = vmul.f32 %v1850, %v2435
      %v2442 = vmul.f32 %v1852, %v2435
      %v2443 = vmul.f32 %v1854, %v2435
      %v2444 = vmul.f32 %v1856, %v2435
      %v2445 = vmul.f32 %v1858, %v2435
      %v2446 = vmul.f32 %v1860, %v2435
      %v2447 = vmul.f32 %v1862, %v2435
      %v2448 = vmul.f32 %v1864, %v2435
      %v2449 = vmul.f32 %v1866, %v2435
      %v2450 = vmul.f32 %v1868, %v2435
      %v2451 = vmul.f32 %v1870, %v2435
      %v2452 = vmul.f32 %v1872, %v2435
      %v2453 = vmul.f32 %v1874, %v2435
      %v2454 = vmul.f32 %v1876, %v2435
      %v2455 = vmul.f32 %v1878, %v2435
      %v2456 = vmul.f32 %v1880, %v2435
      %v2457 = vmul.f32 %v1882, %v2435
      %v2458 = vmul.f32 %v1884, %v2435
      %v2459 = vmul.f32 %v1886, %v2435
      %v2460 = vmul.f32 %v1888, %v2435
      %v2461 = vmul.f32 %v1890, %v2435
      %v2462 = vmul.f32 %v1892, %v2435
      %v2463 = vmul.f32 %v1894, %v2435
      %v2464 = vmul.f32 %v1896, %v2435
      %v2465 = vmul.f32 %v1898, %v2435
      %v2466 = vmul.f32 %v1900, %v2435
      %v2467 = vmul.f32 %v1902, %v2435
      %v2468 = vadd.f32 %v2400, %v2436
      %v2469 = vadd.f32 %v2401, %v2437
      %v2470 = vadd.f32 %v2402, %v2438
      %v2471 = vadd.f32 %v2403, %v2439
      %v2472 = vadd.f32 %v2404, %v2440
      %v2473 = vadd.f32 %v2405, %v2441
      %v2474 = vadd.f32 %v2406, %v2442
      %v2475 = vadd.f32 %v2407, %v2443
      %v2476 = vadd.f32 %v2408, %v2444
      %v2477 = vadd.f32 %v2409, %v2445
      %v2478 = vadd.f32 %v2410, %v2446
      %v2479 = vadd.f32 %v2411, %v2447
      %v2480 = vadd.f32 %v2412, %v2448
      %v2481 = vadd.f32 %v2413, %v2449
      %v2482 = vadd.f32 %v2414, %v2450
      %v2483 = vadd.f32 %v2415, %v2451
      %v2484 = vadd.f32 %v2416, %v2452
      %v2485 = vadd.f32 %v2417, %v2453
      %v2486 = vadd.f32 %v2418, %v2454
      %v2487 = vadd.f32 %v2419, %v2455
      %v2488 = vadd.f32 %v2420, %v2456
      %v2489 = vadd.f32 %v2421, %v2457
      %v2490 = vadd.f32 %v2422, %v2458
      %v2491 = vadd.f32 %v2423, %v2459
      %v2492 = vadd.f32 %v2424, %v2460
      %v2493 = vadd.f32 %v2425, %v2461
      %v2494 = vadd.f32 %v2426, %v2462
      %v2495 = vadd.f32 %v2427, %v2463
      %v2496 = vadd.f32 %v2428, %v2464
      %v2497 = vadd.f32 %v2429, %v2465
      %v2498 = vadd.f32 %v2430, %v2466
      %v2499 = vadd.f32 %v2431, %v2467
      %v2500 = vlaneseq
      %v2501 = vshrl.u32 %v2500, 7
      %v2502 = vsub.s32 6, %v2501
      %v2503 = vrot.slane %v2394, %v2502
      %v2504 = vmul.f32 %v1844, %v2503
      %v2505 = vmul.f32 %v1846, %v2503
      %v2506 = vmul.f32 %v1848, %v2503
      %v2507 = vmul.f32 %v1850, %v2503
      %v2508 = vmul.f32 %v1852, %v2503
      %v2509 = vmul.f32 %v1854, %v2503
      %v2510 = vmul.f32 %v1856, %v2503
      %v2511 = vmul.f32 %v1858, %v2503
      %v2512 = vmul.f32 %v1860, %v2503
      %v2513 = vmul.f32 %v1862, %v2503
      %v2514 = vmul.f32 %v1864, %v2503
      %v2515 = vmul.f32 %v1866, %v2503
      %v2516 = vmul.f32 %v1868, %v2503
      %v2517 = vmul.f32 %v1870, %v2503
      %v2518 = vmul.f32 %v1872, %v2503
      %v2519 = vmul.f32 %v1874, %v2503
      %v2520 = vmul.f32 %v1876, %v2503
      %v2521 = vmul.f32 %v1878, %v2503
      %v2522 = vmul.f32 %v1880, %v2503
      %v2523 = vmul.f32 %v1882, %v2503
      %v2524 = vmul.f32 %v1884, %v2503
      %v2525 = vmul.f32 %v1886, %v2503
      %v2526 = vmul.f32 %v1888, %v2503
      %v2527 = vmul.f32 %v1890, %v2503
      %v2528 = vmul.f32 %v1892, %v2503
      %v2529 = vmul.f32 %v1894, %v2503
      %v2530 = vmul.f32 %v1896, %v2503
      %v2531 = vmul.f32 %v1898, %v2503
      %v2532 = vmul.f32 %v1900, %v2503
      %v2533 = vmul.f32 %v1902, %v2503
      %v2534 = vmul.f32 %v1904, %v2503
      %v2535 = vmul.f32 %v1906, %v2503
      %v2536 = vadd.f32 %v2468, %v2504
      %v2537 = vadd.f32 %v2469, %v2505
      %v2538 = vadd.f32 %v2470, %v2506
      %v2539 = vadd.f32 %v2471, %v2507
      %v2540 = vadd.f32 %v2472, %v2508
      %v2541 = vadd.f32 %v2473, %v2509
      %v2542 = vadd.f32 %v2474, %v2510
      %v2543 = vadd.f32 %v2475, %v2511
      %v2544 = vadd.f32 %v2476, %v2512
      %v2545 = vadd.f32 %v2477, %v2513
      %v2546 = vadd.f32 %v2478, %v2514
      %v2547 = vadd.f32 %v2479, %v2515
      %v2548 = vadd.f32 %v2480, %v2516
      %v2549 = vadd.f32 %v2481, %v2517
      %v2550 = vadd.f32 %v2482, %v2518
      %v2551 = vadd.f32 %v2483, %v2519
      %v2552 = vadd.f32 %v2484, %v2520
      %v2553 = vadd.f32 %v2485, %v2521
      %v2554 = vadd.f32 %v2486, %v2522
      %v2555 = vadd.f32 %v2487, %v2523
      %v2556 = vadd.f32 %v2488, %v2524
      %v2557 = vadd.f32 %v2489, %v2525
      %v2558 = vadd.f32 %v2490, %v2526
      %v2559 = vadd.f32 %v2491, %v2527
      %v2560 = vadd.f32 %v2492, %v2528
      %v2561 = vadd.f32 %v2493, %v2529
      %v2562 = vadd.f32 %v2494, %v2530
      %v2563 = vadd.f32 %v2495, %v2531
      %v2564 = vadd.f32 %v2496, %v2532
      %v2565 = vadd.f32 %v2497, %v2533
      %v2566 = vadd.f32 %v2498, %v2534
      %v2567 = vadd.f32 %v2499, %v2535
      %v2568 = vsel %vm2330, 1, 0
      %v2569 = vsel %vm2331, 1, 0
      %v2570 = vsel %vm2332, 1, 0
      %v2571 = vsel %vm2333, 1, 0
      %v2572 = vsel %vm2334, 1, 0
      %v2573 = vsel %vm2335, 1, 0
      %v2574 = vsel %vm2336, 1, 0
      %v2575 = vsel %vm2337, 1, 0
      %v2576 = vsel %vm2338, 1, 0
      %v2577 = vsel %vm2339, 1, 0
      %v2578 = vsel %vm2340, 1, 0
      %v2579 = vsel %vm2341, 1, 0
      %v2580 = vsel %vm2342, 1, 0
      %v2581 = vsel %vm2343, 1, 0
      %v2582 = vsel %vm2344, 1, 0
      %v2583 = vsel %vm2345, 1, 0
      %v2584 = vsel %vm2346, 1, 0
      %v2585 = vsel %vm2347, 1, 0
      %v2586 = vsel %vm2348, 1, 0
      %v2587 = vsel %vm2349, 1, 0
      %v2588 = vsel %vm2350, 1, 0
      %v2589 = vsel %vm2351, 1, 0
      %v2590 = vsel %vm2352, 1, 0
      %v2591 = vsel %vm2353, 1, 0
      %v2592 = vsel %vm2354, 1, 0
      %v2593 = vsel %vm2355, 1, 0
      %v2594 = vsel %vm2356, 1, 0
      %v2595 = vsel %vm2357, 1, 0
      %v2596 = vsel %vm2358, 1, 0
      %v2597 = vsel %vm2359, 1, 0
      %v2598 = vsel %vm2360, 1, 0
      %v2599 = vsel %vm2361, 1, 0
      %vm2600 = vcmp.eq.s32.totalorder %v2568, 1
      %vm2601 = vcmp.eq.s32.totalorder %v2569, 1
      %vm2602 = vcmp.eq.s32.totalorder %v2570, 1
      %vm2603 = vcmp.eq.s32.totalorder %v2571, 1
      %vm2604 = vcmp.eq.s32.totalorder %v2572, 1
      %vm2605 = vcmp.eq.s32.totalorder %v2573, 1
      %vm2606 = vcmp.eq.s32.totalorder %v2574, 1
      %vm2607 = vcmp.eq.s32.totalorder %v2575, 1
      %vm2608 = vcmp.eq.s32.totalorder %v2576, 1
      %vm2609 = vcmp.eq.s32.totalorder %v2577, 1
      %vm2610 = vcmp.eq.s32.totalorder %v2578, 1
      %vm2611 = vcmp.eq.s32.totalorder %v2579, 1
      %vm2612 = vcmp.eq.s32.totalorder %v2580, 1
      %vm2613 = vcmp.eq.s32.totalorder %v2581, 1
      %vm2614 = vcmp.eq.s32.totalorder %v2582, 1
      %vm2615 = vcmp.eq.s32.totalorder %v2583, 1
      %vm2616 = vcmp.eq.s32.totalorder %v2584, 1
      %vm2617 = vcmp.eq.s32.totalorder %v2585, 1
      %vm2618 = vcmp.eq.s32.totalorder %v2586, 1
      %vm2619 = vcmp.eq.s32.totalorder %v2587, 1
      %vm2620 = vcmp.eq.s32.totalorder %v2588, 1
      %vm2621 = vcmp.eq.s32.totalorder %v2589, 1
      %vm2622 = vcmp.eq.s32.totalorder %v2590, 1
      %vm2623 = vcmp.eq.s32.totalorder %v2591, 1
      %vm2624 = vcmp.eq.s32.totalorder %v2592, 1
      %vm2625 = vcmp.eq.s32.totalorder %v2593, 1
      %vm2626 = vcmp.eq.s32.totalorder %v2594, 1
      %vm2627 = vcmp.eq.s32.totalorder %v2595, 1
      %vm2628 = vcmp.eq.s32.totalorder %v2596, 1
      %vm2629 = vcmp.eq.s32.totalorder %v2597, 1
      %vm2630 = vcmp.eq.s32.totalorder %v2598, 1
      %vm2631 = vcmp.eq.s32.totalorder %v2599, 1
      %v2632 = vsel %vm2600, %v2536, 0.0
      %v2633 = vsel %vm2601, %v2537, 0.0
      %v2634 = vsel %vm2602, %v2538, 0.0
      %v2635 = vsel %vm2603, %v2539, 0.0
      %v2636 = vsel %vm2604, %v2540, 0.0
      %v2637 = vsel %vm2605, %v2541, 0.0
      %v2638 = vsel %vm2606, %v2542, 0.0
      %v2639 = vsel %vm2607, %v2543, 0.0
      %v2640 = vsel %vm2608, %v2544, 0.0
      %v2641 = vsel %vm2609, %v2545, 0.0
      %v2642 = vsel %vm2610, %v2546, 0.0
      %v2643 = vsel %vm2611, %v2547, 0.0
      %v2644 = vsel %vm2612, %v2548, 0.0
      %v2645 = vsel %vm2613, %v2549, 0.0
      %v2646 = vsel %vm2614, %v2550, 0.0
      %v2647 = vsel %vm2615, %v2551, 0.0
      %v2648 = vsel %vm2616, %v2552, 0.0
      %v2649 = vsel %vm2617, %v2553, 0.0
      %v2650 = vsel %vm2618, %v2554, 0.0
      %v2651 = vsel %vm2619, %v2555, 0.0
      %v2652 = vsel %vm2620, %v2556, 0.0
      %v2653 = vsel %vm2621, %v2557, 0.0
      %v2654 = vsel %vm2622, %v2558, 0.0
      %v2655 = vsel %vm2623, %v2559, 0.0
      %v2656 = vsel %vm2624, %v2560, 0.0
      %v2657 = vsel %vm2625, %v2561, 0.0
      %v2658 = vsel %vm2626, %v2562, 0.0
      %v2659 = vsel %vm2627, %v2563, 0.0
      %v2660 = vsel %vm2628, %v2564, 0.0
      %v2661 = vsel %vm2629, %v2565, 0.0
      %v2662 = vsel %vm2630, %v2566, 0.0
      %v2663 = vsel %vm2631, %v2567, 0.0
      %v2664 = vadd.f32 %v2632, 0.0
      %v2665 = vadd.f32 %v2633, 0.0
      %v2666 = vadd.f32 %v2634, 0.0
      %v2667 = vadd.f32 %v2635, 0.0
      %v2668 = vadd.f32 %v2636, 0.0
      %v2669 = vadd.f32 %v2637, 0.0
      %v2670 = vadd.f32 %v2638, 0.0
      %v2671 = vadd.f32 %v2639, 0.0
      %v2672 = vadd.f32 %v2640, 0.0
      %v2673 = vadd.f32 %v2641, 0.0
      %v2674 = vadd.f32 %v2642, 0.0
      %v2675 = vadd.f32 %v2643, 0.0
      %v2676 = vadd.f32 %v2644, 0.0
      %v2677 = vadd.f32 %v2645, 0.0
      %v2678 = vadd.f32 %v2646, 0.0
      %v2679 = vadd.f32 %v2647, 0.0
      %v2680 = vadd.f32 %v2648, 0.0
      %v2681 = vadd.f32 %v2649, 0.0
      %v2682 = vadd.f32 %v2650, 0.0
      %v2683 = vadd.f32 %v2651, 0.0
      %v2684 = vadd.f32 %v2652, 0.0
      %v2685 = vadd.f32 %v2653, 0.0
      %v2686 = vadd.f32 %v2654, 0.0
      %v2687 = vadd.f32 %v2655, 0.0
      %v2688 = vadd.f32 %v2656, 0.0
      %v2689 = vadd.f32 %v2657, 0.0
      %v2690 = vadd.f32 %v2658, 0.0
      %v2691 = vadd.f32 %v2659, 0.0
      %v2692 = vadd.f32 %v2660, 0.0
      %v2693 = vadd.f32 %v2661, 0.0
      %v2694 = vadd.f32 %v2662, 0.0
      %v2695 = vadd.f32 %v2663, 0.0
      %v2696 = vlaneseq
      %v2697 = vshrl.u32 %v2696, 7
      %v2698 = vsub.s32 1, %v2697
      %v2699 = vrot.slane %v2394, %v2698
      %v2700 = vmul.f32 %v1944, %v2699
      %v2701 = vmul.f32 %v1838, %v2699
      %v2702 = vmul.f32 %v1840, %v2699
      %v2703 = vmul.f32 %v1842, %v2699
      %v2704 = vmul.f32 %v1844, %v2699
      %v2705 = vmul.f32 %v1846, %v2699
      %v2706 = vmul.f32 %v1848, %v2699
      %v2707 = vmul.f32 %v1850, %v2699
      %v2708 = vmul.f32 %v1852, %v2699
      %v2709 = vmul.f32 %v1854, %v2699
      %v2710 = vmul.f32 %v1856, %v2699
      %v2711 = vmul.f32 %v1858, %v2699
      %v2712 = vmul.f32 %v1860, %v2699
      %v2713 = vmul.f32 %v1862, %v2699
      %v2714 = vmul.f32 %v1864, %v2699
      %v2715 = vmul.f32 %v1866, %v2699
      %v2716 = vmul.f32 %v1868, %v2699
      %v2717 = vmul.f32 %v1870, %v2699
      %v2718 = vmul.f32 %v1872, %v2699
      %v2719 = vmul.f32 %v1874, %v2699
      %v2720 = vmul.f32 %v1876, %v2699
      %v2721 = vmul.f32 %v1878, %v2699
      %v2722 = vmul.f32 %v1880, %v2699
      %v2723 = vmul.f32 %v1882, %v2699
      %v2724 = vmul.f32 %v1884, %v2699
      %v2725 = vmul.f32 %v1886, %v2699
      %v2726 = vmul.f32 %v1888, %v2699
      %v2727 = vmul.f32 %v1890, %v2699
      %v2728 = vmul.f32 %v1892, %v2699
      %v2729 = vmul.f32 %v1894, %v2699
      %v2730 = vmul.f32 %v1896, %v2699
      %v2731 = vmul.f32 %v1898, %v2699
      %v2732 = vmul.f32 %v1900, %v2699
      %v2733 = vlaneseq
      %v2734 = vshrl.u32 %v2733, 7
      %v2735 = vsub.s32 4, %v2734
      %v2736 = vrot.slane %v2394, %v2735
      %v2737 = vmul.f32 %v1840, %v2736
      %v2738 = vmul.f32 %v1842, %v2736
      %v2739 = vmul.f32 %v1844, %v2736
      %v2740 = vmul.f32 %v1846, %v2736
      %v2741 = vmul.f32 %v1848, %v2736
      %v2742 = vmul.f32 %v1850, %v2736
      %v2743 = vmul.f32 %v1852, %v2736
      %v2744 = vmul.f32 %v1854, %v2736
      %v2745 = vmul.f32 %v1856, %v2736
      %v2746 = vmul.f32 %v1858, %v2736
      %v2747 = vmul.f32 %v1860, %v2736
      %v2748 = vmul.f32 %v1862, %v2736
      %v2749 = vmul.f32 %v1864, %v2736
      %v2750 = vmul.f32 %v1866, %v2736
      %v2751 = vmul.f32 %v1868, %v2736
      %v2752 = vmul.f32 %v1870, %v2736
      %v2753 = vmul.f32 %v1872, %v2736
      %v2754 = vmul.f32 %v1874, %v2736
      %v2755 = vmul.f32 %v1876, %v2736
      %v2756 = vmul.f32 %v1878, %v2736
      %v2757 = vmul.f32 %v1880, %v2736
      %v2758 = vmul.f32 %v1882, %v2736
      %v2759 = vmul.f32 %v1884, %v2736
      %v2760 = vmul.f32 %v1886, %v2736
      %v2761 = vmul.f32 %v1888, %v2736
      %v2762 = vmul.f32 %v1890, %v2736
      %v2763 = vmul.f32 %v1892, %v2736
      %v2764 = vmul.f32 %v1894, %v2736
      %v2765 = vmul.f32 %v1896, %v2736
      %v2766 = vmul.f32 %v1898, %v2736
      %v2767 = vmul.f32 %v1900, %v2736
      %v2768 = vmul.f32 %v1902, %v2736
      %v2769 = vmul.f32 %v1904, %v2736
      %v2770 = vadd.f32 %v2700, %v2737
      %v2771 = vadd.f32 %v2701, %v2738
      %v2772 = vadd.f32 %v2702, %v2739
      %v2773 = vadd.f32 %v2703, %v2740
      %v2774 = vadd.f32 %v2704, %v2741
      %v2775 = vadd.f32 %v2705, %v2742
      %v2776 = vadd.f32 %v2706, %v2743
      %v2777 = vadd.f32 %v2707, %v2744
      %v2778 = vadd.f32 %v2708, %v2745
      %v2779 = vadd.f32 %v2709, %v2746
      %v2780 = vadd.f32 %v2710, %v2747
      %v2781 = vadd.f32 %v2711, %v2748
      %v2782 = vadd.f32 %v2712, %v2749
      %v2783 = vadd.f32 %v2713, %v2750
      %v2784 = vadd.f32 %v2714, %v2751
      %v2785 = vadd.f32 %v2715, %v2752
      %v2786 = vadd.f32 %v2716, %v2753
      %v2787 = vadd.f32 %v2717, %v2754
      %v2788 = vadd.f32 %v2718, %v2755
      %v2789 = vadd.f32 %v2719, %v2756
      %v2790 = vadd.f32 %v2720, %v2757
      %v2791 = vadd.f32 %v2721, %v2758
      %v2792 = vadd.f32 %v2722, %v2759
      %v2793 = vadd.f32 %v2723, %v2760
      %v2794 = vadd.f32 %v2724, %v2761
      %v2795 = vadd.f32 %v2725, %v2762
      %v2796 = vadd.f32 %v2726, %v2763
      %v2797 = vadd.f32 %v2727, %v2764
      %v2798 = vadd.f32 %v2728, %v2765
      %v2799 = vadd.f32 %v2729, %v2766
      %v2800 = vadd.f32 %v2730, %v2767
      %v2801 = vadd.f32 %v2731, %v2768
      %v2802 = vadd.f32 %v2732, %v2769
      %v2803 = vlaneseq
      %v2804 = vshrl.u32 %v2803, 7
      %v2805 = vsub.s32 7, %v2804
      %v2806 = vrot.slane %v2394, %v2805
      %v2807 = vmul.f32 %v1844, %v2806
      %v2808 = vmul.f32 %v1846, %v2806
      %v2809 = vmul.f32 %v1848, %v2806
      %v2810 = vmul.f32 %v1850, %v2806
      %v2811 = vmul.f32 %v1852, %v2806
      %v2812 = vmul.f32 %v1854, %v2806
      %v2813 = vmul.f32 %v1856, %v2806
      %v2814 = vmul.f32 %v1858, %v2806
      %v2815 = vmul.f32 %v1860, %v2806
      %v2816 = vmul.f32 %v1862, %v2806
      %v2817 = vmul.f32 %v1864, %v2806
      %v2818 = vmul.f32 %v1866, %v2806
      %v2819 = vmul.f32 %v1868, %v2806
      %v2820 = vmul.f32 %v1870, %v2806
      %v2821 = vmul.f32 %v1872, %v2806
      %v2822 = vmul.f32 %v1874, %v2806
      %v2823 = vmul.f32 %v1876, %v2806
      %v2824 = vmul.f32 %v1878, %v2806
      %v2825 = vmul.f32 %v1880, %v2806
      %v2826 = vmul.f32 %v1882, %v2806
      %v2827 = vmul.f32 %v1884, %v2806
      %v2828 = vmul.f32 %v1886, %v2806
      %v2829 = vmul.f32 %v1888, %v2806
      %v2830 = vmul.f32 %v1890, %v2806
      %v2831 = vmul.f32 %v1892, %v2806
      %v2832 = vmul.f32 %v1894, %v2806
      %v2833 = vmul.f32 %v1896, %v2806
      %v2834 = vmul.f32 %v1898, %v2806
      %v2835 = vmul.f32 %v1900, %v2806
      %v2836 = vmul.f32 %v1902, %v2806
      %v2837 = vmul.f32 %v1904, %v2806
      %v2838 = vmul.f32 %v1906, %v2806
      %v2839 = vmul.f32 %v1945, %v2806
      %v2840 = vadd.f32 %v2770, %v2807
      %v2841 = vadd.f32 %v2771, %v2808
      %v2842 = vadd.f32 %v2772, %v2809
      %v2843 = vadd.f32 %v2773, %v2810
      %v2844 = vadd.f32 %v2774, %v2811
      %v2845 = vadd.f32 %v2775, %v2812
      %v2846 = vadd.f32 %v2776, %v2813
      %v2847 = vadd.f32 %v2777, %v2814
      %v2848 = vadd.f32 %v2778, %v2815
      %v2849 = vadd.f32 %v2779, %v2816
      %v2850 = vadd.f32 %v2780, %v2817
      %v2851 = vadd.f32 %v2781, %v2818
      %v2852 = vadd.f32 %v2782, %v2819
      %v2853 = vadd.f32 %v2783, %v2820
      %v2854 = vadd.f32 %v2784, %v2821
      %v2855 = vadd.f32 %v2785, %v2822
      %v2856 = vadd.f32 %v2786, %v2823
      %v2857 = vadd.f32 %v2787, %v2824
      %v2858 = vadd.f32 %v2788, %v2825
      %v2859 = vadd.f32 %v2789, %v2826
      %v2860 = vadd.f32 %v2790, %v2827
      %v2861 = vadd.f32 %v2791, %v2828
      %v2862 = vadd.f32 %v2792, %v2829
      %v2863 = vadd.f32 %v2793, %v2830
      %v2864 = vadd.f32 %v2794, %v2831
      %v2865 = vadd.f32 %v2795, %v2832
      %v2866 = vadd.f32 %v2796, %v2833
      %v2867 = vadd.f32 %v2797, %v2834
      %v2868 = vadd.f32 %v2798, %v2835
      %v2869 = vadd.f32 %v2799, %v2836
      %v2870 = vadd.f32 %v2800, %v2837
      %v2871 = vadd.f32 %v2801, %v2838
      %v2872 = vadd.f32 %v2802, %v2839
      %vm2906 = vcmask 1046528
      %v2907 = vrot.slane %v2840, 1
      %v2908 = vrot.slane %v2841, 1
      %v2909 = vsel %vm2906, %v2907, %v2908
      %v2910 = vrot.slane %v2842, 1
      %v2911 = vsel %vm2906, %v2908, %v2910
      %v2912 = vrot.slane %v2843, 1
      %v2913 = vsel %vm2906, %v2910, %v2912
      %v2914 = vrot.slane %v2844, 1
      %v2915 = vsel %vm2906, %v2912, %v2914
      %v2916 = vrot.slane %v2845, 1
      %v2917 = vsel %vm2906, %v2914, %v2916
      %v2918 = vrot.slane %v2846, 1
      %v2919 = vsel %vm2906, %v2916, %v2918
      %v2920 = vrot.slane %v2847, 1
      %v2921 = vsel %vm2906, %v2918, %v2920
      %v2922 = vrot.slane %v2848, 1
      %v2923 = vsel %vm2906, %v2920, %v2922
      %v2924 = vrot.slane %v2849, 1
      %v2925 = vsel %vm2906, %v2922, %v2924
      %v2926 = vrot.slane %v2850, 1
      %v2927 = vsel %vm2906, %v2924, %v2926
      %v2928 = vrot.slane %v2851, 1
      %v2929 = vsel %vm2906, %v2926, %v2928
      %v2930 = vrot.slane %v2852, 1
      %v2931 = vsel %vm2906, %v2928, %v2930
      %v2932 = vrot.slane %v2853, 1
      %v2933 = vsel %vm2906, %v2930, %v2932
      %v2934 = vrot.slane %v2854, 1
      %v2935 = vsel %vm2906, %v2932, %v2934
      %v2936 = vrot.slane %v2855, 1
      %v2937 = vsel %vm2906, %v2934, %v2936
      %v2938 = vrot.slane %v2856, 1
      %v2939 = vsel %vm2906, %v2936, %v2938
      %v2940 = vrot.slane %v2857, 1
      %v2941 = vsel %vm2906, %v2938, %v2940
      %v2942 = vrot.slane %v2858, 1
      %v2943 = vsel %vm2906, %v2940, %v2942
      %v2944 = vrot.slane %v2859, 1
      %v2945 = vsel %vm2906, %v2942, %v2944
      %v2946 = vrot.slane %v2860, 1
      %v2947 = vsel %vm2906, %v2944, %v2946
      %v2948 = vrot.slane %v2861, 1
      %v2949 = vsel %vm2906, %v2946, %v2948
      %v2950 = vrot.slane %v2862, 1
      %v2951 = vsel %vm2906, %v2948, %v2950
      %v2952 = vrot.slane %v2863, 1
      %v2953 = vsel %vm2906, %v2950, %v2952
      %v2954 = vrot.slane %v2864, 1
      %v2955 = vsel %vm2906, %v2952, %v2954
      %v2956 = vrot.slane %v2865, 1
      %v2957 = vsel %vm2906, %v2954, %v2956
      %v2958 = vrot.slane %v2866, 1
      %v2959 = vsel %vm2906, %v2956, %v2958
      %v2960 = vrot.slane %v2867, 1
      %v2961 = vsel %vm2906, %v2958, %v2960
      %v2962 = vrot.slane %v2868, 1
      %v2963 = vsel %vm2906, %v2960, %v2962
      %v2964 = vrot.slane %v2869, 1
      %v2965 = vsel %vm2906, %v2962, %v2964
      %v2966 = vrot.slane %v2870, 1
      %v2967 = vsel %vm2906, %v2964, %v2966
      %v2968 = vrot.slane %v2871, 1
      %v2969 = vsel %vm2906, %v2966, %v2968
      %v2970 = vrot.slane %v2872, 1
      %v2971 = vsel %vm2906, %v2968, %v2970
      %v3004 = vadd.f32 %v2664, %v2909
      %v3005 = vadd.f32 %v2665, %v2911
      %v3006 = vadd.f32 %v2666, %v2913
      %v3007 = vadd.f32 %v2667, %v2915
      %v3008 = vadd.f32 %v2668, %v2917
      %v3009 = vadd.f32 %v2669, %v2919
      %v3010 = vadd.f32 %v2670, %v2921
      %v3011 = vadd.f32 %v2671, %v2923
      %v3012 = vadd.f32 %v2672, %v2925
      %v3013 = vadd.f32 %v2673, %v2927
      %v3014 = vadd.f32 %v2674, %v2929
      %v3015 = vadd.f32 %v2675, %v2931
      %v3016 = vadd.f32 %v2676, %v2933
      %v3017 = vadd.f32 %v2677, %v2935
      %v3018 = vadd.f32 %v2678, %v2937
      %v3019 = vadd.f32 %v2679, %v2939
      %v3020 = vadd.f32 %v2680, %v2941
      %v3021 = vadd.f32 %v2681, %v2943
      %v3022 = vadd.f32 %v2682, %v2945
      %v3023 = vadd.f32 %v2683, %v2947
      %v3024 = vadd.f32 %v2684, %v2949
      %v3025 = vadd.f32 %v2685, %v2951
      %v3026 = vadd.f32 %v2686, %v2953
      %v3027 = vadd.f32 %v2687, %v2955
      %v3028 = vadd.f32 %v2688, %v2957
      %v3029 = vadd.f32 %v2689, %v2959
      %v3030 = vadd.f32 %v2690, %v2961
      %v3031 = vadd.f32 %v2691, %v2963
      %v3032 = vadd.f32 %v2692, %v2965
      %v3033 = vadd.f32 %v2693, %v2967
      %v3034 = vadd.f32 %v2694, %v2969
      %v3035 = vadd.f32 %v2695, %v2971
      %v3036 = vlaneseq
      %v3037 = vshrl.u32 %v3036, 7
      %v3038 = vsub.s32 2, %v3037
      %v3039 = vrot.slane %v2394, %v3038
      %v3040 = vmul.f32 %v1944, %v3039
      %v3041 = vmul.f32 %v1838, %v3039
      %v3042 = vmul.f32 %v1840, %v3039
      %v3043 = vmul.f32 %v1842, %v3039
      %v3044 = vmul.f32 %v1844, %v3039
      %v3045 = vmul.f32 %v1846, %v3039
      %v3046 = vmul.f32 %v1848, %v3039
      %v3047 = vmul.f32 %v1850, %v3039
      %v3048 = vmul.f32 %v1852, %v3039
      %v3049 = vmul.f32 %v1854, %v3039
      %v3050 = vmul.f32 %v1856, %v3039
      %v3051 = vmul.f32 %v1858, %v3039
      %v3052 = vmul.f32 %v1860, %v3039
      %v3053 = vmul.f32 %v1862, %v3039
      %v3054 = vmul.f32 %v1864, %v3039
      %v3055 = vmul.f32 %v1866, %v3039
      %v3056 = vmul.f32 %v1868, %v3039
      %v3057 = vmul.f32 %v1870, %v3039
      %v3058 = vmul.f32 %v1872, %v3039
      %v3059 = vmul.f32 %v1874, %v3039
      %v3060 = vmul.f32 %v1876, %v3039
      %v3061 = vmul.f32 %v1878, %v3039
      %v3062 = vmul.f32 %v1880, %v3039
      %v3063 = vmul.f32 %v1882, %v3039
      %v3064 = vmul.f32 %v1884, %v3039
      %v3065 = vmul.f32 %v1886, %v3039
      %v3066 = vmul.f32 %v1888, %v3039
      %v3067 = vmul.f32 %v1890, %v3039
      %v3068 = vmul.f32 %v1892, %v3039
      %v3069 = vmul.f32 %v1894, %v3039
      %v3070 = vmul.f32 %v1896, %v3039
      %v3071 = vmul.f32 %v1898, %v3039
      %v3072 = vmul.f32 %v1900, %v3039
      %v3073 = vlaneseq
      %v3074 = vshrl.u32 %v3073, 7
      %v3075 = vsub.s32 5, %v3074
      %v3076 = vrot.slane %v2394, %v3075
      %v3077 = vmul.f32 %v1840, %v3076
      %v3078 = vmul.f32 %v1842, %v3076
      %v3079 = vmul.f32 %v1844, %v3076
      %v3080 = vmul.f32 %v1846, %v3076
      %v3081 = vmul.f32 %v1848, %v3076
      %v3082 = vmul.f32 %v1850, %v3076
      %v3083 = vmul.f32 %v1852, %v3076
      %v3084 = vmul.f32 %v1854, %v3076
      %v3085 = vmul.f32 %v1856, %v3076
      %v3086 = vmul.f32 %v1858, %v3076
      %v3087 = vmul.f32 %v1860, %v3076
      %v3088 = vmul.f32 %v1862, %v3076
      %v3089 = vmul.f32 %v1864, %v3076
      %v3090 = vmul.f32 %v1866, %v3076
      %v3091 = vmul.f32 %v1868, %v3076
      %v3092 = vmul.f32 %v1870, %v3076
      %v3093 = vmul.f32 %v1872, %v3076
      %v3094 = vmul.f32 %v1874, %v3076
      %v3095 = vmul.f32 %v1876, %v3076
      %v3096 = vmul.f32 %v1878, %v3076
      %v3097 = vmul.f32 %v1880, %v3076
      %v3098 = vmul.f32 %v1882, %v3076
      %v3099 = vmul.f32 %v1884, %v3076
      %v3100 = vmul.f32 %v1886, %v3076
      %v3101 = vmul.f32 %v1888, %v3076
      %v3102 = vmul.f32 %v1890, %v3076
      %v3103 = vmul.f32 %v1892, %v3076
      %v3104 = vmul.f32 %v1894, %v3076
      %v3105 = vmul.f32 %v1896, %v3076
      %v3106 = vmul.f32 %v1898, %v3076
      %v3107 = vmul.f32 %v1900, %v3076
      %v3108 = vmul.f32 %v1902, %v3076
      %v3109 = vmul.f32 %v1904, %v3076
      %v3110 = vadd.f32 %v3040, %v3077
      %v3111 = vadd.f32 %v3041, %v3078
      %v3112 = vadd.f32 %v3042, %v3079
      %v3113 = vadd.f32 %v3043, %v3080
      %v3114 = vadd.f32 %v3044, %v3081
      %v3115 = vadd.f32 %v3045, %v3082
      %v3116 = vadd.f32 %v3046, %v3083
      %v3117 = vadd.f32 %v3047, %v3084
      %v3118 = vadd.f32 %v3048, %v3085
      %v3119 = vadd.f32 %v3049, %v3086
      %v3120 = vadd.f32 %v3050, %v3087
      %v3121 = vadd.f32 %v3051, %v3088
      %v3122 = vadd.f32 %v3052, %v3089
      %v3123 = vadd.f32 %v3053, %v3090
      %v3124 = vadd.f32 %v3054, %v3091
      %v3125 = vadd.f32 %v3055, %v3092
      %v3126 = vadd.f32 %v3056, %v3093
      %v3127 = vadd.f32 %v3057, %v3094
      %v3128 = vadd.f32 %v3058, %v3095
      %v3129 = vadd.f32 %v3059, %v3096
      %v3130 = vadd.f32 %v3060, %v3097
      %v3131 = vadd.f32 %v3061, %v3098
      %v3132 = vadd.f32 %v3062, %v3099
      %v3133 = vadd.f32 %v3063, %v3100
      %v3134 = vadd.f32 %v3064, %v3101
      %v3135 = vadd.f32 %v3065, %v3102
      %v3136 = vadd.f32 %v3066, %v3103
      %v3137 = vadd.f32 %v3067, %v3104
      %v3138 = vadd.f32 %v3068, %v3105
      %v3139 = vadd.f32 %v3069, %v3106
      %v3140 = vadd.f32 %v3070, %v3107
      %v3141 = vadd.f32 %v3071, %v3108
      %v3142 = vadd.f32 %v3072, %v3109
      %v3143 = vlaneseq
      %v3144 = vshrl.u32 %v3143, 7
      %v3145 = vsub.s32 0, %v3144
      %v3146 = vrot.slane %v2395, %v3145
      %v3147 = vmul.f32 %v1844, %v3146
      %v3148 = vmul.f32 %v1846, %v3146
      %v3149 = vmul.f32 %v1848, %v3146
      %v3150 = vmul.f32 %v1850, %v3146
      %v3151 = vmul.f32 %v1852, %v3146
      %v3152 = vmul.f32 %v1854, %v3146
      %v3153 = vmul.f32 %v1856, %v3146
      %v3154 = vmul.f32 %v1858, %v3146
      %v3155 = vmul.f32 %v1860, %v3146
      %v3156 = vmul.f32 %v1862, %v3146
      %v3157 = vmul.f32 %v1864, %v3146
      %v3158 = vmul.f32 %v1866, %v3146
      %v3159 = vmul.f32 %v1868, %v3146
      %v3160 = vmul.f32 %v1870, %v3146
      %v3161 = vmul.f32 %v1872, %v3146
      %v3162 = vmul.f32 %v1874, %v3146
      %v3163 = vmul.f32 %v1876, %v3146
      %v3164 = vmul.f32 %v1878, %v3146
      %v3165 = vmul.f32 %v1880, %v3146
      %v3166 = vmul.f32 %v1882, %v3146
      %v3167 = vmul.f32 %v1884, %v3146
      %v3168 = vmul.f32 %v1886, %v3146
      %v3169 = vmul.f32 %v1888, %v3146
      %v3170 = vmul.f32 %v1890, %v3146
      %v3171 = vmul.f32 %v1892, %v3146
      %v3172 = vmul.f32 %v1894, %v3146
      %v3173 = vmul.f32 %v1896, %v3146
      %v3174 = vmul.f32 %v1898, %v3146
      %v3175 = vmul.f32 %v1900, %v3146
      %v3176 = vmul.f32 %v1902, %v3146
      %v3177 = vmul.f32 %v1904, %v3146
      %v3178 = vmul.f32 %v1906, %v3146
      %v3179 = vmul.f32 %v1945, %v3146
      %v3180 = vadd.f32 %v3110, %v3147
      %v3181 = vadd.f32 %v3111, %v3148
      %v3182 = vadd.f32 %v3112, %v3149
      %v3183 = vadd.f32 %v3113, %v3150
      %v3184 = vadd.f32 %v3114, %v3151
      %v3185 = vadd.f32 %v3115, %v3152
      %v3186 = vadd.f32 %v3116, %v3153
      %v3187 = vadd.f32 %v3117, %v3154
      %v3188 = vadd.f32 %v3118, %v3155
      %v3189 = vadd.f32 %v3119, %v3156
      %v3190 = vadd.f32 %v3120, %v3157
      %v3191 = vadd.f32 %v3121, %v3158
      %v3192 = vadd.f32 %v3122, %v3159
      %v3193 = vadd.f32 %v3123, %v3160
      %v3194 = vadd.f32 %v3124, %v3161
      %v3195 = vadd.f32 %v3125, %v3162
      %v3196 = vadd.f32 %v3126, %v3163
      %v3197 = vadd.f32 %v3127, %v3164
      %v3198 = vadd.f32 %v3128, %v3165
      %v3199 = vadd.f32 %v3129, %v3166
      %v3200 = vadd.f32 %v3130, %v3167
      %v3201 = vadd.f32 %v3131, %v3168
      %v3202 = vadd.f32 %v3132, %v3169
      %v3203 = vadd.f32 %v3133, %v3170
      %v3204 = vadd.f32 %v3134, %v3171
      %v3205 = vadd.f32 %v3135, %v3172
      %v3206 = vadd.f32 %v3136, %v3173
      %v3207 = vadd.f32 %v3137, %v3174
      %v3208 = vadd.f32 %v3138, %v3175
      %v3209 = vadd.f32 %v3139, %v3176
      %v3210 = vadd.f32 %v3140, %v3177
      %v3211 = vadd.f32 %v3141, %v3178
      %v3212 = vadd.f32 %v3142, %v3179
      %v3213 = vsel %vm2362, 1, 0
      %v3214 = vsel %vm2363, 1, 0
      %v3215 = vsel %vm2364, 1, 0
      %v3216 = vsel %vm2365, 1, 0
      %v3217 = vsel %vm2366, 1, 0
      %v3218 = vsel %vm2367, 1, 0
      %v3219 = vsel %vm2368, 1, 0
      %v3220 = vsel %vm2369, 1, 0
      %v3221 = vsel %vm2370, 1, 0
      %v3222 = vsel %vm2371, 1, 0
      %v3223 = vsel %vm2372, 1, 0
      %v3224 = vsel %vm2373, 1, 0
      %v3225 = vsel %vm2374, 1, 0
      %v3226 = vsel %vm2375, 1, 0
      %v3227 = vsel %vm2376, 1, 0
      %v3228 = vsel %vm2377, 1, 0
      %v3229 = vsel %vm2378, 1, 0
      %v3230 = vsel %vm2379, 1, 0
      %v3231 = vsel %vm2380, 1, 0
      %v3232 = vsel %vm2381, 1, 0
      %v3233 = vsel %vm2382, 1, 0
      %v3234 = vsel %vm2383, 1, 0
      %v3235 = vsel %vm2384, 1, 0
      %v3236 = vsel %vm2385, 1, 0
      %v3237 = vsel %vm2386, 1, 0
      %v3238 = vsel %vm2387, 1, 0
      %v3239 = vsel %vm2388, 1, 0
      %v3240 = vsel %vm2389, 1, 0
      %v3241 = vsel %vm2390, 1, 0
      %v3242 = vsel %vm2391, 1, 0
      %v3243 = vsel %vm2392, 1, 0
      %v3244 = vsel %vm2393, 1, 0
      %vm3245 = vcmp.eq.s32.totalorder %v3213, 1
      %vm3246 = vcmp.eq.s32.totalorder %v3214, 1
      %vm3247 = vcmp.eq.s32.totalorder %v3215, 1
      %vm3248 = vcmp.eq.s32.totalorder %v3216, 1
      %vm3249 = vcmp.eq.s32.totalorder %v3217, 1
      %vm3250 = vcmp.eq.s32.totalorder %v3218, 1
      %vm3251 = vcmp.eq.s32.totalorder %v3219, 1
      %vm3252 = vcmp.eq.s32.totalorder %v3220, 1
      %vm3253 = vcmp.eq.s32.totalorder %v3221, 1
      %vm3254 = vcmp.eq.s32.totalorder %v3222, 1
      %vm3255 = vcmp.eq.s32.totalorder %v3223, 1
      %vm3256 = vcmp.eq.s32.totalorder %v3224, 1
      %vm3257 = vcmp.eq.s32.totalorder %v3225, 1
      %vm3258 = vcmp.eq.s32.totalorder %v3226, 1
      %vm3259 = vcmp.eq.s32.totalorder %v3227, 1
      %vm3260 = vcmp.eq.s32.totalorder %v3228, 1
      %vm3261 = vcmp.eq.s32.totalorder %v3229, 1
      %vm3262 = vcmp.eq.s32.totalorder %v3230, 1
      %vm3263 = vcmp.eq.s32.totalorder %v3231, 1
      %vm3264 = vcmp.eq.s32.totalorder %v3232, 1
      %vm3265 = vcmp.eq.s32.totalorder %v3233, 1
      %vm3266 = vcmp.eq.s32.totalorder %v3234, 1
      %vm3267 = vcmp.eq.s32.totalorder %v3235, 1
      %vm3268 = vcmp.eq.s32.totalorder %v3236, 1
      %vm3269 = vcmp.eq.s32.totalorder %v3237, 1
      %vm3270 = vcmp.eq.s32.totalorder %v3238, 1
      %vm3271 = vcmp.eq.s32.totalorder %v3239, 1
      %vm3272 = vcmp.eq.s32.totalorder %v3240, 1
      %vm3273 = vcmp.eq.s32.totalorder %v3241, 1
      %vm3274 = vcmp.eq.s32.totalorder %v3242, 1
      %vm3275 = vcmp.eq.s32.totalorder %v3243, 1
      %vm3276 = vcmp.eq.s32.totalorder %v3244, 1
      %vm3310 = vcmask 1045504
      %v3311 = vrot.slane %v3180, 2
      %v3312 = vrot.slane %v3181, 2
      %v3313 = vsel %vm3310, %v3311, %v3312
      %v3314 = vrot.slane %v3182, 2
      %v3315 = vsel %vm3310, %v3312, %v3314
      %v3316 = vrot.slane %v3183, 2
      %v3317 = vsel %vm3310, %v3314, %v3316
      %v3318 = vrot.slane %v3184, 2
      %v3319 = vsel %vm3310, %v3316, %v3318
      %v3320 = vrot.slane %v3185, 2
      %v3321 = vsel %vm3310, %v3318, %v3320
      %v3322 = vrot.slane %v3186, 2
      %v3323 = vsel %vm3310, %v3320, %v3322
      %v3324 = vrot.slane %v3187, 2
      %v3325 = vsel %vm3310, %v3322, %v3324
      %v3326 = vrot.slane %v3188, 2
      %v3327 = vsel %vm3310, %v3324, %v3326
      %v3328 = vrot.slane %v3189, 2
      %v3329 = vsel %vm3310, %v3326, %v3328
      %v3330 = vrot.slane %v3190, 2
      %v3331 = vsel %vm3310, %v3328, %v3330
      %v3332 = vrot.slane %v3191, 2
      %v3333 = vsel %vm3310, %v3330, %v3332
      %v3334 = vrot.slane %v3192, 2
      %v3335 = vsel %vm3310, %v3332, %v3334
      %v3336 = vrot.slane %v3193, 2
      %v3337 = vsel %vm3310, %v3334, %v3336
      %v3338 = vrot.slane %v3194, 2
      %v3339 = vsel %vm3310, %v3336, %v3338
      %v3340 = vrot.slane %v3195, 2
      %v3341 = vsel %vm3310, %v3338, %v3340
      %v3342 = vrot.slane %v3196, 2
      %v3343 = vsel %vm3310, %v3340, %v3342
      %v3344 = vrot.slane %v3197, 2
      %v3345 = vsel %vm3310, %v3342, %v3344
      %v3346 = vrot.slane %v3198, 2
      %v3347 = vsel %vm3310, %v3344, %v3346
      %v3348 = vrot.slane %v3199, 2
      %v3349 = vsel %vm3310, %v3346, %v3348
      %v3350 = vrot.slane %v3200, 2
      %v3351 = vsel %vm3310, %v3348, %v3350
      %v3352 = vrot.slane %v3201, 2
      %v3353 = vsel %vm3310, %v3350, %v3352
      %v3354 = vrot.slane %v3202, 2
      %v3355 = vsel %vm3310, %v3352, %v3354
      %v3356 = vrot.slane %v3203, 2
      %v3357 = vsel %vm3310, %v3354, %v3356
      %v3358 = vrot.slane %v3204, 2
      %v3359 = vsel %vm3310, %v3356, %v3358
      %v3360 = vrot.slane %v3205, 2
      %v3361 = vsel %vm3310, %v3358, %v3360
      %v3362 = vrot.slane %v3206, 2
      %v3363 = vsel %vm3310, %v3360, %v3362
      %v3364 = vrot.slane %v3207, 2
      %v3365 = vsel %vm3310, %v3362, %v3364
      %v3366 = vrot.slane %v3208, 2
      %v3367 = vsel %vm3310, %v3364, %v3366
      %v3368 = vrot.slane %v3209, 2
      %v3369 = vsel %vm3310, %v3366, %v3368
      %v3370 = vrot.slane %v3210, 2
      %v3371 = vsel %vm3310, %v3368, %v3370
      %v3372 = vrot.slane %v3211, 2
      %v3373 = vsel %vm3310, %v3370, %v3372
      %v3374 = vrot.slane %v3212, 2
      %v3375 = vsel %vm3310, %v3372, %v3374
      %v3408 = vsel %vm3245, %v3313, 0.0
      %v3409 = vsel %vm3246, %v3315, 0.0
      %v3410 = vsel %vm3247, %v3317, 0.0
      %v3411 = vsel %vm3248, %v3319, 0.0
      %v3412 = vsel %vm3249, %v3321, 0.0
      %v3413 = vsel %vm3250, %v3323, 0.0
      %v3414 = vsel %vm3251, %v3325, 0.0
      %v3415 = vsel %vm3252, %v3327, 0.0
      %v3416 = vsel %vm3253, %v3329, 0.0
      %v3417 = vsel %vm3254, %v3331, 0.0
      %v3418 = vsel %vm3255, %v3333, 0.0
      %v3419 = vsel %vm3256, %v3335, 0.0
      %v3420 = vsel %vm3257, %v3337, 0.0
      %v3421 = vsel %vm3258, %v3339, 0.0
      %v3422 = vsel %vm3259, %v3341, 0.0
      %v3423 = vsel %vm3260, %v3343, 0.0
      %v3424 = vsel %vm3261, %v3345, 0.0
      %v3425 = vsel %vm3262, %v3347, 0.0
      %v3426 = vsel %vm3263, %v3349, 0.0
      %v3427 = vsel %vm3264, %v3351, 0.0
      %v3428 = vsel %vm3265, %v3353, 0.0
      %v3429 = vsel %vm3266, %v3355, 0.0
      %v3430 = vsel %vm3267, %v3357, 0.0
      %v3431 = vsel %vm3268, %v3359, 0.0
      %v3432 = vsel %vm3269, %v3361, 0.0
      %v3433 = vsel %vm3270, %v3363, 0.0
      %v3434 = vsel %vm3271, %v3365, 0.0
      %v3435 = vsel %vm3272, %v3367, 0.0
      %v3436 = vsel %vm3273, %v3369, 0.0
      %v3437 = vsel %vm3274, %v3371, 0.0
      %v3438 = vsel %vm3275, %v3373, 0.0
      %v3439 = vsel %vm3276, %v3375, 0.0
      %v3440 = vadd.f32 %v3004, %v3408
      %v3441 = vadd.f32 %v3005, %v3409
      %v3442 = vadd.f32 %v3006, %v3410
      %v3443 = vadd.f32 %v3007, %v3411
      %v3444 = vadd.f32 %v3008, %v3412
      %v3445 = vadd.f32 %v3009, %v3413
      %v3446 = vadd.f32 %v3010, %v3414
      %v3447 = vadd.f32 %v3011, %v3415
      %v3448 = vadd.f32 %v3012, %v3416
      %v3449 = vadd.f32 %v3013, %v3417
      %v3450 = vadd.f32 %v3014, %v3418
      %v3451 = vadd.f32 %v3015, %v3419
      %v3452 = vadd.f32 %v3016, %v3420
      %v3453 = vadd.f32 %v3017, %v3421
      %v3454 = vadd.f32 %v3018, %v3422
      %v3455 = vadd.f32 %v3019, %v3423
      %v3456 = vadd.f32 %v3020, %v3424
      %v3457 = vadd.f32 %v3021, %v3425
      %v3458 = vadd.f32 %v3022, %v3426
      %v3459 = vadd.f32 %v3023, %v3427
      %v3460 = vadd.f32 %v3024, %v3428
      %v3461 = vadd.f32 %v3025, %v3429
      %v3462 = vadd.f32 %v3026, %v3430
      %v3463 = vadd.f32 %v3027, %v3431
      %v3464 = vadd.f32 %v3028, %v3432
      %v3465 = vadd.f32 %v3029, %v3433
      %v3466 = vadd.f32 %v3030, %v3434
      %v3467 = vadd.f32 %v3031, %v3435
      %v3468 = vadd.f32 %v3032, %v3436
      %v3469 = vadd.f32 %v3033, %v3437
      %v3470 = vadd.f32 %v3034, %v3438
      %v3471 = vadd.f32 %v3035, %v3439
      %v3472 = vld [vmem:[%s8] sm:$0x1]
      %v3474 = vlaneseq
      %v3475 = vshrl.u32 %v3474, 7
      %v3476 = vsub.s32 0, %v3475
      %v3477 = vrot.slane %v3472, %v3476
      %v3479 = vadd.f32 %v3440, %v3477
      %v3480 = vadd.f32 %v3441, %v3477
      %v3481 = vadd.f32 %v3442, %v3477
      %v3482 = vadd.f32 %v3443, %v3477
      %v3483 = vadd.f32 %v3444, %v3477
      %v3484 = vadd.f32 %v3445, %v3477
      %v3485 = vadd.f32 %v3446, %v3477
      %v3486 = vadd.f32 %v3447, %v3477
      %v3487 = vadd.f32 %v3448, %v3477
      %v3488 = vadd.f32 %v3449, %v3477
      %v3489 = vadd.f32 %v3450, %v3477
      %v3490 = vadd.f32 %v3451, %v3477
      %v3491 = vadd.f32 %v3452, %v3477
      %v3492 = vadd.f32 %v3453, %v3477
      %v3493 = vadd.f32 %v3454, %v3477
      %v3494 = vadd.f32 %v3455, %v3477
      %v3495 = vadd.f32 %v3456, %v3477
      %v3496 = vadd.f32 %v3457, %v3477
      %v3497 = vadd.f32 %v3458, %v3477
      %v3498 = vadd.f32 %v3459, %v3477
      %v3499 = vadd.f32 %v3460, %v3477
      %v3500 = vadd.f32 %v3461, %v3477
      %v3501 = vadd.f32 %v3462, %v3477
      %v3502 = vadd.f32 %v3463, %v3477
      %v3503 = vadd.f32 %v3464, %v3477
      %v3504 = vadd.f32 %v3465, %v3477
      %v3505 = vadd.f32 %v3466, %v3477
      %v3506 = vadd.f32 %v3467, %v3477
      %v3507 = vadd.f32 %v3468, %v3477
      %v3508 = vadd.f32 %v3469, %v3477
      %v3509 = vadd.f32 %v3470, %v3477
      %v3510 = vadd.f32 %v3471, %v3477
      %v3511 = vmul.f32 %v3479, 0.5
      %v3512 = vmul.f32 %v3480, 0.5
      %v3513 = vmul.f32 %v3481, 0.5
      %v3514 = vmul.f32 %v3482, 0.5
      %v3515 = vmul.f32 %v3483, 0.5
      %v3516 = vmul.f32 %v3484, 0.5
      %v3517 = vmul.f32 %v3485, 0.5
      %v3518 = vmul.f32 %v3486, 0.5
      %v3519 = vmul.f32 %v3487, 0.5
      %v3520 = vmul.f32 %v3488, 0.5
      %v3521 = vmul.f32 %v3489, 0.5
      %v3522 = vmul.f32 %v3490, 0.5
      %v3523 = vmul.f32 %v3491, 0.5
      %v3524 = vmul.f32 %v3492, 0.5
      %v3525 = vmul.f32 %v3493, 0.5
      %v3526 = vmul.f32 %v3494, 0.5
      %v3527 = vmul.f32 %v3495, 0.5
      %v3528 = vmul.f32 %v3496, 0.5
      %v3529 = vmul.f32 %v3497, 0.5
      %v3530 = vmul.f32 %v3498, 0.5
      %v3531 = vmul.f32 %v3499, 0.5
      %v3532 = vmul.f32 %v3500, 0.5
      %v3533 = vmul.f32 %v3501, 0.5
      %v3534 = vmul.f32 %v3502, 0.5
      %v3535 = vmul.f32 %v3503, 0.5
      %v3536 = vmul.f32 %v3504, 0.5
      %v3537 = vmul.f32 %v3505, 0.5
      %v3538 = vmul.f32 %v3506, 0.5
      %v3539 = vmul.f32 %v3507, 0.5
      %v3540 = vmul.f32 %v3508, 0.5
      %v3541 = vmul.f32 %v3509, 0.5
      %v3542 = vmul.f32 %v3510, 0.5
      %v3543 = vmul.f32 %v3479, 0.70710677
      %v3544 = vmul.f32 %v3480, 0.70710677
      %v3545 = vmul.f32 %v3481, 0.70710677
      %v3546 = vmul.f32 %v3482, 0.70710677
      %v3547 = vmul.f32 %v3483, 0.70710677
      %v3548 = vmul.f32 %v3484, 0.70710677
      %v3549 = vmul.f32 %v3485, 0.70710677
      %v3550 = vmul.f32 %v3486, 0.70710677
      %v3551 = vmul.f32 %v3487, 0.70710677
      %v3552 = vmul.f32 %v3488, 0.70710677
      %v3553 = vmul.f32 %v3489, 0.70710677
      %v3554 = vmul.f32 %v3490, 0.70710677
      %v3555 = vmul.f32 %v3491, 0.70710677
      %v3556 = vmul.f32 %v3492, 0.70710677
      %v3557 = vmul.f32 %v3493, 0.70710677
      %v3558 = vmul.f32 %v3494, 0.70710677
      %v3559 = vmul.f32 %v3495, 0.70710677
      %v3560 = vmul.f32 %v3496, 0.70710677
      %v3561 = vmul.f32 %v3497, 0.70710677
      %v3562 = vmul.f32 %v3498, 0.70710677
      %v3563 = vmul.f32 %v3499, 0.70710677
      %v3564 = vmul.f32 %v3500, 0.70710677
      %v3565 = vmul.f32 %v3501, 0.70710677
      %v3566 = vmul.f32 %v3502, 0.70710677
      %v3567 = vmul.f32 %v3503, 0.70710677
      %v3568 = vmul.f32 %v3504, 0.70710677
      %v3569 = vmul.f32 %v3505, 0.70710677
      %v3570 = vmul.f32 %v3506, 0.70710677
      %v3571 = vmul.f32 %v3507, 0.70710677
      %v3572 = vmul.f32 %v3508, 0.70710677
      %v3573 = vmul.f32 %v3509, 0.70710677
      %v3574 = vmul.f32 %v3510, 0.70710677
      %v3575 = vand.u32 2147483647, %v3543
      %v3576 = vand.u32 2147483647, %v3544
      %v3577 = vand.u32 2147483647, %v3545
      %v3578 = vand.u32 2147483647, %v3546
      %v3579 = vand.u32 2147483647, %v3547
      %v3580 = vand.u32 2147483647, %v3548
      %v3581 = vand.u32 2147483647, %v3549
      %v3582 = vand.u32 2147483647, %v3550
      %v3583 = vand.u32 2147483647, %v3551
      %v3584 = vand.u32 2147483647, %v3552
      %v3585 = vand.u32 2147483647, %v3553
      %v3586 = vand.u32 2147483647, %v3554
      %v3587 = vand.u32 2147483647, %v3555
      %v3588 = vand.u32 2147483647, %v3556
      %v3589 = vand.u32 2147483647, %v3557
      %v3590 = vand.u32 2147483647, %v3558
      %v3591 = vand.u32 2147483647, %v3559
      %v3592 = vand.u32 2147483647, %v3560
      %v3593 = vand.u32 2147483647, %v3561
      %v3594 = vand.u32 2147483647, %v3562
      %v3595 = vand.u32 2147483647, %v3563
      %v3596 = vand.u32 2147483647, %v3564
      %v3597 = vand.u32 2147483647, %v3565
      %v3598 = vand.u32 2147483647, %v3566
      %v3599 = vand.u32 2147483647, %v3567
      %v3600 = vand.u32 2147483647, %v3568
      %v3601 = vand.u32 2147483647, %v3569
      %v3602 = vand.u32 2147483647, %v3570
      %v3603 = vand.u32 2147483647, %v3571
      %v3604 = vand.u32 2147483647, %v3572
      %v3605 = vand.u32 2147483647, %v3573
      %v3606 = vand.u32 2147483647, %v3574
      %v3607 = vmul.f32 %v3575, 0.3275911
      %v3608 = vmul.f32 %v3576, 0.3275911
      %v3609 = vmul.f32 %v3577, 0.3275911
      %v3610 = vmul.f32 %v3578, 0.3275911
      %v3611 = vmul.f32 %v3579, 0.3275911
      %v3612 = vmul.f32 %v3580, 0.3275911
      %v3613 = vmul.f32 %v3581, 0.3275911
      %v3614 = vmul.f32 %v3582, 0.3275911
      %v3615 = vmul.f32 %v3583, 0.3275911
      %v3616 = vmul.f32 %v3584, 0.3275911
      %v3617 = vmul.f32 %v3585, 0.3275911
      %v3618 = vmul.f32 %v3586, 0.3275911
      %v3619 = vmul.f32 %v3587, 0.3275911
      %v3620 = vmul.f32 %v3588, 0.3275911
      %v3621 = vmul.f32 %v3589, 0.3275911
      %v3622 = vmul.f32 %v3590, 0.3275911
      %v3623 = vmul.f32 %v3591, 0.3275911
      %v3624 = vmul.f32 %v3592, 0.3275911
      %v3625 = vmul.f32 %v3593, 0.3275911
      %v3626 = vmul.f32 %v3594, 0.3275911
      %v3627 = vmul.f32 %v3595, 0.3275911
      %v3628 = vmul.f32 %v3596, 0.3275911
      %v3629 = vmul.f32 %v3597, 0.3275911
      %v3630 = vmul.f32 %v3598, 0.3275911
      %v3631 = vmul.f32 %v3599, 0.3275911
      %v3632 = vmul.f32 %v3600, 0.3275911
      %v3633 = vmul.f32 %v3601, 0.3275911
      %v3634 = vmul.f32 %v3602, 0.3275911
      %v3635 = vmul.f32 %v3603, 0.3275911
      %v3636 = vmul.f32 %v3604, 0.3275911
      %v3637 = vmul.f32 %v3605, 0.3275911
      %v3638 = vmul.f32 %v3606, 0.3275911
      %v3639 = vadd.f32 %v3607, 1.0
      %v3640 = vadd.f32 %v3608, 1.0
      %v3641 = vadd.f32 %v3609, 1.0
      %v3642 = vadd.f32 %v3610, 1.0
      %v3643 = vadd.f32 %v3611, 1.0
      %v3644 = vadd.f32 %v3612, 1.0
      %v3645 = vadd.f32 %v3613, 1.0
      %v3646 = vadd.f32 %v3614, 1.0
      %v3647 = vadd.f32 %v3615, 1.0
      %v3648 = vadd.f32 %v3616, 1.0
      %v3649 = vadd.f32 %v3617, 1.0
      %v3650 = vadd.f32 %v3618, 1.0
      %v3651 = vadd.f32 %v3619, 1.0
      %v3652 = vadd.f32 %v3620, 1.0
      %v3653 = vadd.f32 %v3621, 1.0
      %v3654 = vadd.f32 %v3622, 1.0
      %v3655 = vadd.f32 %v3623, 1.0
      %v3656 = vadd.f32 %v3624, 1.0
      %v3657 = vadd.f32 %v3625, 1.0
      %v3658 = vadd.f32 %v3626, 1.0
      %v3659 = vadd.f32 %v3627, 1.0
      %v3660 = vadd.f32 %v3628, 1.0
      %v3661 = vadd.f32 %v3629, 1.0
      %v3662 = vadd.f32 %v3630, 1.0
      %v3663 = vadd.f32 %v3631, 1.0
      %v3664 = vadd.f32 %v3632, 1.0
      %v3665 = vadd.f32 %v3633, 1.0
      %v3666 = vadd.f32 %v3634, 1.0
      %v3667 = vadd.f32 %v3635, 1.0
      %v3668 = vadd.f32 %v3636, 1.0
      %v3669 = vadd.f32 %v3637, 1.0
      %v3670 = vadd.f32 %v3638, 1.0
      %v3671 = vrcp.pop %v3639
      %v3672 = vmul.f32 1.0, %v3671
      %v3673 = vrcp.pop %v3640
      %v3674 = vmul.f32 1.0, %v3673
      %v3675 = vrcp.pop %v3641
      %v3676 = vmul.f32 1.0, %v3675
      %v3677 = vrcp.pop %v3642
      %v3678 = vmul.f32 1.0, %v3677
      %v3679 = vrcp.pop %v3643
      %v3680 = vmul.f32 1.0, %v3679
      %v3681 = vrcp.pop %v3644
      %v3682 = vmul.f32 1.0, %v3681
      %v3683 = vrcp.pop %v3645
      %v3684 = vmul.f32 1.0, %v3683
      %v3685 = vrcp.pop %v3646
      %v3686 = vmul.f32 1.0, %v3685
      %v3687 = vrcp.pop %v3647
      %v3688 = vmul.f32 1.0, %v3687
      %v3689 = vrcp.pop %v3648
      %v3690 = vmul.f32 1.0, %v3689
      %v3691 = vrcp.pop %v3649
      %v3692 = vmul.f32 1.0, %v3691
      %v3693 = vrcp.pop %v3650
      %v3694 = vmul.f32 1.0, %v3693
      %v3695 = vrcp.pop %v3651
      %v3696 = vmul.f32 1.0, %v3695
      %v3697 = vrcp.pop %v3652
      %v3698 = vmul.f32 1.0, %v3697
      %v3699 = vrcp.pop %v3653
      %v3700 = vmul.f32 1.0, %v3699
      %v3701 = vrcp.pop %v3654
      %v3702 = vmul.f32 1.0, %v3701
      %v3703 = vrcp.pop %v3655
      %v3704 = vmul.f32 1.0, %v3703
      %v3705 = vrcp.pop %v3656
      %v3706 = vmul.f32 1.0, %v3705
      %v3707 = vrcp.pop %v3657
      %v3708 = vmul.f32 1.0, %v3707
      %v3709 = vrcp.pop %v3658
      %v3710 = vmul.f32 1.0, %v3709
      %v3711 = vrcp.pop %v3659
      %v3712 = vmul.f32 1.0, %v3711
      %v3713 = vrcp.pop %v3660
      %v3714 = vmul.f32 1.0, %v3713
      %v3715 = vrcp.pop %v3661
      %v3716 = vmul.f32 1.0, %v3715
      %v3717 = vrcp.pop %v3662
      %v3718 = vmul.f32 1.0, %v3717
      %v3719 = vrcp.pop %v3663
      %v3720 = vmul.f32 1.0, %v3719
      %v3721 = vrcp.pop %v3664
      %v3722 = vmul.f32 1.0, %v3721
      %v3723 = vrcp.pop %v3665
      %v3724 = vmul.f32 1.0, %v3723
      %v3725 = vrcp.pop %v3666
      %v3726 = vmul.f32 1.0, %v3725
      %v3727 = vrcp.pop %v3667
      %v3728 = vmul.f32 1.0, %v3727
      %v3729 = vrcp.pop %v3668
      %v3730 = vmul.f32 1.0, %v3729
      %v3731 = vrcp.pop %v3669
      %v3732 = vmul.f32 1.0, %v3731
      %v3733 = vrcp.pop %v3670
      %v3734 = vmul.f32 1.0, %v3733
      %v3735 = vmul.f32 %v3672, 1.0614054
      %v3736 = vmul.f32 %v3674, 1.0614054
      %v3737 = vmul.f32 %v3676, 1.0614054
      %v3738 = vmul.f32 %v3678, 1.0614054
      %v3739 = vmul.f32 %v3680, 1.0614054
      %v3740 = vmul.f32 %v3682, 1.0614054
      %v3741 = vmul.f32 %v3684, 1.0614054
      %v3742 = vmul.f32 %v3686, 1.0614054
      %v3743 = vmul.f32 %v3688, 1.0614054
      %v3744 = vmul.f32 %v3690, 1.0614054
      %v3745 = vmul.f32 %v3692, 1.0614054
      %v3746 = vmul.f32 %v3694, 1.0614054
      %v3747 = vmul.f32 %v3696, 1.0614054
      %v3748 = vmul.f32 %v3698, 1.0614054
      %v3749 = vmul.f32 %v3700, 1.0614054
      %v3750 = vmul.f32 %v3702, 1.0614054
      %v3751 = vmul.f32 %v3704, 1.0614054
      %v3752 = vmul.f32 %v3706, 1.0614054
      %v3753 = vmul.f32 %v3708, 1.0614054
      %v3754 = vmul.f32 %v3710, 1.0614054
      %v3755 = vmul.f32 %v3712, 1.0614054
      %v3756 = vmul.f32 %v3714, 1.0614054
      %v3757 = vmul.f32 %v3716, 1.0614054
      %v3758 = vmul.f32 %v3718, 1.0614054
      %v3759 = vmul.f32 %v3720, 1.0614054
      %v3760 = vmul.f32 %v3722, 1.0614054
      %v3761 = vmul.f32 %v3724, 1.0614054
      %v3762 = vmul.f32 %v3726, 1.0614054
      %v3763 = vmul.f32 %v3728, 1.0614054
      %v3764 = vmul.f32 %v3730, 1.0614054
      %v3765 = vmul.f32 %v3732, 1.0614054
      %v3766 = vmul.f32 %v3734, 1.0614054
      %v3767 = vadd.f32 %v3735, -1.4531521
      %v3768 = vadd.f32 %v3736, -1.4531521
      %v3769 = vadd.f32 %v3737, -1.4531521
      %v3770 = vadd.f32 %v3738, -1.4531521
      %v3771 = vadd.f32 %v3739, -1.4531521
      %v3772 = vadd.f32 %v3740, -1.4531521
      %v3773 = vadd.f32 %v3741, -1.4531521
      %v3774 = vadd.f32 %v3742, -1.4531521
      %v3775 = vadd.f32 %v3743, -1.4531521
      %v3776 = vadd.f32 %v3744, -1.4531521
      %v3777 = vadd.f32 %v3745, -1.4531521
      %v3778 = vadd.f32 %v3746, -1.4531521
      %v3779 = vadd.f32 %v3747, -1.4531521
      %v3780 = vadd.f32 %v3748, -1.4531521
      %v3781 = vadd.f32 %v3749, -1.4531521
      %v3782 = vadd.f32 %v3750, -1.4531521
      %v3783 = vadd.f32 %v3751, -1.4531521
      %v3784 = vadd.f32 %v3752, -1.4531521
      %v3785 = vadd.f32 %v3753, -1.4531521
      %v3786 = vadd.f32 %v3754, -1.4531521
      %v3787 = vadd.f32 %v3755, -1.4531521
      %v3788 = vadd.f32 %v3756, -1.4531521
      %v3789 = vadd.f32 %v3757, -1.4531521
      %v3790 = vadd.f32 %v3758, -1.4531521
      %v3791 = vadd.f32 %v3759, -1.4531521
      %v3792 = vadd.f32 %v3760, -1.4531521
      %v3793 = vadd.f32 %v3761, -1.4531521
      %v3794 = vadd.f32 %v3762, -1.4531521
      %v3795 = vadd.f32 %v3763, -1.4531521
      %v3796 = vadd.f32 %v3764, -1.4531521
      %v3797 = vadd.f32 %v3765, -1.4531521
      %v3798 = vadd.f32 %v3766, -1.4531521
      %v3799 = vmul.f32 %v3767, %v3672
      %v3800 = vmul.f32 %v3768, %v3674
      %v3801 = vmul.f32 %v3769, %v3676
      %v3802 = vmul.f32 %v3770, %v3678
      %v3803 = vmul.f32 %v3771, %v3680
      %v3804 = vmul.f32 %v3772, %v3682
      %v3805 = vmul.f32 %v3773, %v3684
      %v3806 = vmul.f32 %v3774, %v3686
      %v3807 = vmul.f32 %v3775, %v3688
      %v3808 = vmul.f32 %v3776, %v3690
      %v3809 = vmul.f32 %v3777, %v3692
      %v3810 = vmul.f32 %v3778, %v3694
      %v3811 = vmul.f32 %v3779, %v3696
      %v3812 = vmul.f32 %v3780, %v3698
      %v3813 = vmul.f32 %v3781, %v3700
      %v3814 = vmul.f32 %v3782, %v3702
      %v3815 = vmul.f32 %v3783, %v3704
      %v3816 = vmul.f32 %v3784, %v3706
      %v3817 = vmul.f32 %v3785, %v3708
      %v3818 = vmul.f32 %v3786, %v3710
      %v3819 = vmul.f32 %v3787, %v3712
      %v3820 = vmul.f32 %v3788, %v3714
      %v3821 = vmul.f32 %v3789, %v3716
      %v3822 = vmul.f32 %v3790, %v3718
      %v3823 = vmul.f32 %v3791, %v3720
      %v3824 = vmul.f32 %v3792, %v3722
      %v3825 = vmul.f32 %v3793, %v3724
      %v3826 = vmul.f32 %v3794, %v3726
      %v3827 = vmul.f32 %v3795, %v3728
      %v3828 = vmul.f32 %v3796, %v3730
      %v3829 = vmul.f32 %v3797, %v3732
      %v3830 = vmul.f32 %v3798, %v3734
      %v3831 = vadd.f32 %v3799, 1.4214138
      %v3832 = vadd.f32 %v3800, 1.4214138
      %v3833 = vadd.f32 %v3801, 1.4214138
      %v3834 = vadd.f32 %v3802, 1.4214138
      %v3835 = vadd.f32 %v3803, 1.4214138
      %v3836 = vadd.f32 %v3804, 1.4214138
      %v3837 = vadd.f32 %v3805, 1.4214138
      %v3838 = vadd.f32 %v3806, 1.4214138
      %v3839 = vadd.f32 %v3807, 1.4214138
      %v3840 = vadd.f32 %v3808, 1.4214138
      %v3841 = vadd.f32 %v3809, 1.4214138
      %v3842 = vadd.f32 %v3810, 1.4214138
      %v3843 = vadd.f32 %v3811, 1.4214138
      %v3844 = vadd.f32 %v3812, 1.4214138
      %v3845 = vadd.f32 %v3813, 1.4214138
      %v3846 = vadd.f32 %v3814, 1.4214138
      %v3847 = vadd.f32 %v3815, 1.4214138
      %v3848 = vadd.f32 %v3816, 1.4214138
      %v3849 = vadd.f32 %v3817, 1.4214138
      %v3850 = vadd.f32 %v3818, 1.4214138
      %v3851 = vadd.f32 %v3819, 1.4214138
      %v3852 = vadd.f32 %v3820, 1.4214138
      %v3853 = vadd.f32 %v3821, 1.4214138
      %v3854 = vadd.f32 %v3822, 1.4214138
      %v3855 = vadd.f32 %v3823, 1.4214138
      %v3856 = vadd.f32 %v3824, 1.4214138
      %v3857 = vadd.f32 %v3825, 1.4214138
      %v3858 = vadd.f32 %v3826, 1.4214138
      %v3859 = vadd.f32 %v3827, 1.4214138
      %v3860 = vadd.f32 %v3828, 1.4214138
      %v3861 = vadd.f32 %v3829, 1.4214138
      %v3862 = vadd.f32 %v3830, 1.4214138
      %v3863 = vmul.f32 %v3831, %v3672
      %v3864 = vmul.f32 %v3832, %v3674
      %v3865 = vmul.f32 %v3833, %v3676
      %v3866 = vmul.f32 %v3834, %v3678
      %v3867 = vmul.f32 %v3835, %v3680
      %v3868 = vmul.f32 %v3836, %v3682
      %v3869 = vmul.f32 %v3837, %v3684
      %v3870 = vmul.f32 %v3838, %v3686
      %v3871 = vmul.f32 %v3839, %v3688
      %v3872 = vmul.f32 %v3840, %v3690
      %v3873 = vmul.f32 %v3841, %v3692
      %v3874 = vmul.f32 %v3842, %v3694
      %v3875 = vmul.f32 %v3843, %v3696
      %v3876 = vmul.f32 %v3844, %v3698
      %v3877 = vmul.f32 %v3845, %v3700
      %v3878 = vmul.f32 %v3846, %v3702
      %v3879 = vmul.f32 %v3847, %v3704
      %v3880 = vmul.f32 %v3848, %v3706
      %v3881 = vmul.f32 %v3849, %v3708
      %v3882 = vmul.f32 %v3850, %v3710
      %v3883 = vmul.f32 %v3851, %v3712
      %v3884 = vmul.f32 %v3852, %v3714
      %v3885 = vmul.f32 %v3853, %v3716
      %v3886 = vmul.f32 %v3854, %v3718
      %v3887 = vmul.f32 %v3855, %v3720
      %v3888 = vmul.f32 %v3856, %v3722
      %v3889 = vmul.f32 %v3857, %v3724
      %v3890 = vmul.f32 %v3858, %v3726
      %v3891 = vmul.f32 %v3859, %v3728
      %v3892 = vmul.f32 %v3860, %v3730
      %v3893 = vmul.f32 %v3861, %v3732
      %v3894 = vmul.f32 %v3862, %v3734
      %v3895 = vadd.f32 %v3863, -0.28449672
      %v3896 = vadd.f32 %v3864, -0.28449672
      %v3897 = vadd.f32 %v3865, -0.28449672
      %v3898 = vadd.f32 %v3866, -0.28449672
      %v3899 = vadd.f32 %v3867, -0.28449672
      %v3900 = vadd.f32 %v3868, -0.28449672
      %v3901 = vadd.f32 %v3869, -0.28449672
      %v3902 = vadd.f32 %v3870, -0.28449672
      %v3903 = vadd.f32 %v3871, -0.28449672
      %v3904 = vadd.f32 %v3872, -0.28449672
      %v3905 = vadd.f32 %v3873, -0.28449672
      %v3906 = vadd.f32 %v3874, -0.28449672
      %v3907 = vadd.f32 %v3875, -0.28449672
      %v3908 = vadd.f32 %v3876, -0.28449672
      %v3909 = vadd.f32 %v3877, -0.28449672
      %v3910 = vadd.f32 %v3878, -0.28449672
      %v3911 = vadd.f32 %v3879, -0.28449672
      %v3912 = vadd.f32 %v3880, -0.28449672
      %v3913 = vadd.f32 %v3881, -0.28449672
      %v3914 = vadd.f32 %v3882, -0.28449672
      %v3915 = vadd.f32 %v3883, -0.28449672
      %v3916 = vadd.f32 %v3884, -0.28449672
      %v3917 = vadd.f32 %v3885, -0.28449672
      %v3918 = vadd.f32 %v3886, -0.28449672
      %v3919 = vadd.f32 %v3887, -0.28449672
      %v3920 = vadd.f32 %v3888, -0.28449672
      %v3921 = vadd.f32 %v3889, -0.28449672
      %v3922 = vadd.f32 %v3890, -0.28449672
      %v3923 = vadd.f32 %v3891, -0.28449672
      %v3924 = vadd.f32 %v3892, -0.28449672
      %v3925 = vadd.f32 %v3893, -0.28449672
      %v3926 = vadd.f32 %v3894, -0.28449672
      %v3927 = vmul.f32 %v3895, %v3672
      %v3928 = vmul.f32 %v3896, %v3674
      %v3929 = vmul.f32 %v3897, %v3676
      %v3930 = vmul.f32 %v3898, %v3678
      %v3931 = vmul.f32 %v3899, %v3680
      %v3932 = vmul.f32 %v3900, %v3682
      %v3933 = vmul.f32 %v3901, %v3684
      %v3934 = vmul.f32 %v3902, %v3686
      %v3935 = vmul.f32 %v3903, %v3688
      %v3936 = vmul.f32 %v3904, %v3690
      %v3937 = vmul.f32 %v3905, %v3692
      %v3938 = vmul.f32 %v3906, %v3694
      %v3939 = vmul.f32 %v3907, %v3696
      %v3940 = vmul.f32 %v3908, %v3698
      %v3941 = vmul.f32 %v3909, %v3700
      %v3942 = vmul.f32 %v3910, %v3702
      %v3943 = vmul.f32 %v3911, %v3704
      %v3944 = vmul.f32 %v3912, %v3706
      %v3945 = vmul.f32 %v3913, %v3708
      %v3946 = vmul.f32 %v3914, %v3710
      %v3947 = vmul.f32 %v3915, %v3712
      %v3948 = vmul.f32 %v3916, %v3714
      %v3949 = vmul.f32 %v3917, %v3716
      %v3950 = vmul.f32 %v3918, %v3718
      %v3951 = vmul.f32 %v3919, %v3720
      %v3952 = vmul.f32 %v3920, %v3722
      %v3953 = vmul.f32 %v3921, %v3724
      %v3954 = vmul.f32 %v3922, %v3726
      %v3955 = vmul.f32 %v3923, %v3728
      %v3956 = vmul.f32 %v3924, %v3730
      %v3957 = vmul.f32 %v3925, %v3732
      %v3958 = vmul.f32 %v3926, %v3734
      %v3959 = vadd.f32 %v3927, 0.2548296
      %v3960 = vadd.f32 %v3928, 0.2548296
      %v3961 = vadd.f32 %v3929, 0.2548296
      %v3962 = vadd.f32 %v3930, 0.2548296
      %v3963 = vadd.f32 %v3931, 0.2548296
      %v3964 = vadd.f32 %v3932, 0.2548296
      %v3965 = vadd.f32 %v3933, 0.2548296
      %v3966 = vadd.f32 %v3934, 0.2548296
      %v3967 = vadd.f32 %v3935, 0.2548296
      %v3968 = vadd.f32 %v3936, 0.2548296
      %v3969 = vadd.f32 %v3937, 0.2548296
      %v3970 = vadd.f32 %v3938, 0.2548296
      %v3971 = vadd.f32 %v3939, 0.2548296
      %v3972 = vadd.f32 %v3940, 0.2548296
      %v3973 = vadd.f32 %v3941, 0.2548296
      %v3974 = vadd.f32 %v3942, 0.2548296
      %v3975 = vadd.f32 %v3943, 0.2548296
      %v3976 = vadd.f32 %v3944, 0.2548296
      %v3977 = vadd.f32 %v3945, 0.2548296
      %v3978 = vadd.f32 %v3946, 0.2548296
      %v3979 = vadd.f32 %v3947, 0.2548296
      %v3980 = vadd.f32 %v3948, 0.2548296
      %v3981 = vadd.f32 %v3949, 0.2548296
      %v3982 = vadd.f32 %v3950, 0.2548296
      %v3983 = vadd.f32 %v3951, 0.2548296
      %v3984 = vadd.f32 %v3952, 0.2548296
      %v3985 = vadd.f32 %v3953, 0.2548296
      %v3986 = vadd.f32 %v3954, 0.2548296
      %v3987 = vadd.f32 %v3955, 0.2548296
      %v3988 = vadd.f32 %v3956, 0.2548296
      %v3989 = vadd.f32 %v3957, 0.2548296
      %v3990 = vadd.f32 %v3958, 0.2548296
      %v3991 = vmul.f32 %v3959, %v3672
      %v3992 = vmul.f32 %v3960, %v3674
      %v3993 = vmul.f32 %v3961, %v3676
      %v3994 = vmul.f32 %v3962, %v3678
      %v3995 = vmul.f32 %v3963, %v3680
      %v3996 = vmul.f32 %v3964, %v3682
      %v3997 = vmul.f32 %v3965, %v3684
      %v3998 = vmul.f32 %v3966, %v3686
      %v3999 = vmul.f32 %v3967, %v3688
      %v4000 = vmul.f32 %v3968, %v3690
      %v4001 = vmul.f32 %v3969, %v3692
      %v4002 = vmul.f32 %v3970, %v3694
      %v4003 = vmul.f32 %v3971, %v3696
      %v4004 = vmul.f32 %v3972, %v3698
      %v4005 = vmul.f32 %v3973, %v3700
      %v4006 = vmul.f32 %v3974, %v3702
      %v4007 = vmul.f32 %v3975, %v3704
      %v4008 = vmul.f32 %v3976, %v3706
      %v4009 = vmul.f32 %v3977, %v3708
      %v4010 = vmul.f32 %v3978, %v3710
      %v4011 = vmul.f32 %v3979, %v3712
      %v4012 = vmul.f32 %v3980, %v3714
      %v4013 = vmul.f32 %v3981, %v3716
      %v4014 = vmul.f32 %v3982, %v3718
      %v4015 = vmul.f32 %v3983, %v3720
      %v4016 = vmul.f32 %v3984, %v3722
      %v4017 = vmul.f32 %v3985, %v3724
      %v4018 = vmul.f32 %v3986, %v3726
      %v4019 = vmul.f32 %v3987, %v3728
      %v4020 = vmul.f32 %v3988, %v3730
      %v4021 = vmul.f32 %v3989, %v3732
      %v4022 = vmul.f32 %v3990, %v3734
      %v4023 = vsub.f32 0.0, %v3575
      %v4024 = vsub.f32 0.0, %v3576
      %v4025 = vsub.f32 0.0, %v3577
      %v4026 = vsub.f32 0.0, %v3578
      %v4027 = vsub.f32 0.0, %v3579
      %v4028 = vsub.f32 0.0, %v3580
      %v4029 = vsub.f32 0.0, %v3581
      %v4030 = vsub.f32 0.0, %v3582
      %v4031 = vsub.f32 0.0, %v3583
      %v4032 = vsub.f32 0.0, %v3584
      %v4033 = vsub.f32 0.0, %v3585
      %v4034 = vsub.f32 0.0, %v3586
      %v4035 = vsub.f32 0.0, %v3587
      %v4036 = vsub.f32 0.0, %v3588
      %v4037 = vsub.f32 0.0, %v3589
      %v4038 = vsub.f32 0.0, %v3590
      %v4039 = vsub.f32 0.0, %v3591
      %v4040 = vsub.f32 0.0, %v3592
      %v4041 = vsub.f32 0.0, %v3593
      %v4042 = vsub.f32 0.0, %v3594
      %v4043 = vsub.f32 0.0, %v3595
      %v4044 = vsub.f32 0.0, %v3596
      %v4045 = vsub.f32 0.0, %v3597
      %v4046 = vsub.f32 0.0, %v3598
      %v4047 = vsub.f32 0.0, %v3599
      %v4048 = vsub.f32 0.0, %v3600
      %v4049 = vsub.f32 0.0, %v3601
      %v4050 = vsub.f32 0.0, %v3602
      %v4051 = vsub.f32 0.0, %v3603
      %v4052 = vsub.f32 0.0, %v3604
      %v4053 = vsub.f32 0.0, %v3605
      %v4054 = vsub.f32 0.0, %v3606
      %v4055 = vmul.f32 %v4023, %v3575
      %v4056 = vmul.f32 %v4024, %v3576
      %v4057 = vmul.f32 %v4025, %v3577
      %v4058 = vmul.f32 %v4026, %v3578
      %v4059 = vmul.f32 %v4027, %v3579
      %v4060 = vmul.f32 %v4028, %v3580
      %v4061 = vmul.f32 %v4029, %v3581
      %v4062 = vmul.f32 %v4030, %v3582
      %v4063 = vmul.f32 %v4031, %v3583
      %v4064 = vmul.f32 %v4032, %v3584
      %v4065 = vmul.f32 %v4033, %v3585
      %v4066 = vmul.f32 %v4034, %v3586
      %v4067 = vmul.f32 %v4035, %v3587
      %v4068 = vmul.f32 %v4036, %v3588
      %v4069 = vmul.f32 %v4037, %v3589
      %v4070 = vmul.f32 %v4038, %v3590
      %v4071 = vmul.f32 %v4039, %v3591
      %v4072 = vmul.f32 %v4040, %v3592
      %v4073 = vmul.f32 %v4041, %v3593
      %v4074 = vmul.f32 %v4042, %v3594
      %v4075 = vmul.f32 %v4043, %v3595
      %v4076 = vmul.f32 %v4044, %v3596
      %v4077 = vmul.f32 %v4045, %v3597
      %v4078 = vmul.f32 %v4046, %v3598
      %v4079 = vmul.f32 %v4047, %v3599
      %v4080 = vmul.f32 %v4048, %v3600
      %v4081 = vmul.f32 %v4049, %v3601
      %v4082 = vmul.f32 %v4050, %v3602
      %v4083 = vmul.f32 %v4051, %v3603
      %v4084 = vmul.f32 %v4052, %v3604
      %v4085 = vmul.f32 %v4053, %v3605
      %v4086 = vmul.f32 %v4054, %v3606
      %v4087 = vmul.f32 %v4055, 1.442695
      %v4088 = vpow.pop %v4087
      %v4089 = vmul.f32 %v4056, 1.442695
      %v4090 = vpow.pop %v4089
      %v4091 = vmul.f32 %v4057, 1.442695
      %v4092 = vpow.pop %v4091
      %v4093 = vmul.f32 %v4058, 1.442695
      %v4094 = vpow.pop %v4093
      %v4095 = vmul.f32 %v4059, 1.442695
      %v4096 = vpow.pop %v4095
      %v4097 = vmul.f32 %v4060, 1.442695
      %v4098 = vpow.pop %v4097
      %v4099 = vmul.f32 %v4061, 1.442695
      %v4100 = vpow.pop %v4099
      %v4101 = vmul.f32 %v4062, 1.442695
      %v4102 = vpow.pop %v4101
      %v4103 = vmul.f32 %v4063, 1.442695
      %v4104 = vpow.pop %v4103
      %v4105 = vmul.f32 %v4064, 1.442695
      %v4106 = vpow.pop %v4105
      %v4107 = vmul.f32 %v4065, 1.442695
      %v4108 = vpow.pop %v4107
      %v4109 = vmul.f32 %v4066, 1.442695
      %v4110 = vpow.pop %v4109
      %v4111 = vmul.f32 %v4067, 1.442695
      %v4112 = vpow.pop %v4111
      %v4113 = vmul.f32 %v4068, 1.442695
      %v4114 = vpow.pop %v4113
      %v4115 = vmul.f32 %v4069, 1.442695
      %v4116 = vpow.pop %v4115
      %v4117 = vmul.f32 %v4070, 1.442695
      %v4118 = vpow.pop %v4117
      %v4119 = vmul.f32 %v4071, 1.442695
      %v4120 = vpow.pop %v4119
      %v4121 = vmul.f32 %v4072, 1.442695
      %v4122 = vpow.pop %v4121
      %v4123 = vmul.f32 %v4073, 1.442695
      %v4124 = vpow.pop %v4123
      %v4125 = vmul.f32 %v4074, 1.442695
      %v4126 = vpow.pop %v4125
      %v4127 = vmul.f32 %v4075, 1.442695
      %v4128 = vpow.pop %v4127
      %v4129 = vmul.f32 %v4076, 1.442695
      %v4130 = vpow.pop %v4129
      %v4131 = vmul.f32 %v4077, 1.442695
      %v4132 = vpow.pop %v4131
      %v4133 = vmul.f32 %v4078, 1.442695
      %v4134 = vpow.pop %v4133
      %v4135 = vmul.f32 %v4079, 1.442695
      %v4136 = vpow.pop %v4135
      %v4137 = vmul.f32 %v4080, 1.442695
      %v4138 = vpow.pop %v4137
      %v4139 = vmul.f32 %v4081, 1.442695
      %v4140 = vpow.pop %v4139
      %v4141 = vmul.f32 %v4082, 1.442695
      %v4142 = vpow.pop %v4141
      %v4143 = vmul.f32 %v4083, 1.442695
      %v4144 = vpow.pop %v4143
      %v4145 = vmul.f32 %v4084, 1.442695
      %v4146 = vpow.pop %v4145
      %v4147 = vmul.f32 %v4085, 1.442695
      %v4148 = vpow.pop %v4147
      %v4149 = vmul.f32 %v4086, 1.442695
      %v4150 = vpow.pop %v4149
      %v4151 = vmul.f32 %v3991, %v4088
      %v4152 = vmul.f32 %v3992, %v4090
      %v4153 = vmul.f32 %v3993, %v4092
      %v4154 = vmul.f32 %v3994, %v4094
      %v4155 = vmul.f32 %v3995, %v4096
      %v4156 = vmul.f32 %v3996, %v4098
      %v4157 = vmul.f32 %v3997, %v4100
      %v4158 = vmul.f32 %v3998, %v4102
      %v4159 = vmul.f32 %v3999, %v4104
      %v4160 = vmul.f32 %v4000, %v4106
      %v4161 = vmul.f32 %v4001, %v4108
      %v4162 = vmul.f32 %v4002, %v4110
      %v4163 = vmul.f32 %v4003, %v4112
      %v4164 = vmul.f32 %v4004, %v4114
      %v4165 = vmul.f32 %v4005, %v4116
      %v4166 = vmul.f32 %v4006, %v4118
      %v4167 = vmul.f32 %v4007, %v4120
      %v4168 = vmul.f32 %v4008, %v4122
      %v4169 = vmul.f32 %v4009, %v4124
      %v4170 = vmul.f32 %v4010, %v4126
      %v4171 = vmul.f32 %v4011, %v4128
      %v4172 = vmul.f32 %v4012, %v4130
      %v4173 = vmul.f32 %v4013, %v4132
      %v4174 = vmul.f32 %v4014, %v4134
      %v4175 = vmul.f32 %v4015, %v4136
      %v4176 = vmul.f32 %v4016, %v4138
      %v4177 = vmul.f32 %v4017, %v4140
      %v4178 = vmul.f32 %v4018, %v4142
      %v4179 = vmul.f32 %v4019, %v4144
      %v4180 = vmul.f32 %v4020, %v4146
      %v4181 = vmul.f32 %v4021, %v4148
      %v4182 = vmul.f32 %v4022, %v4150
      %v4183 = vsub.f32 1.0, %v4151
      %v4184 = vsub.f32 1.0, %v4152
      %v4185 = vsub.f32 1.0, %v4153
      %v4186 = vsub.f32 1.0, %v4154
      %v4187 = vsub.f32 1.0, %v4155
      %v4188 = vsub.f32 1.0, %v4156
      %v4189 = vsub.f32 1.0, %v4157
      %v4190 = vsub.f32 1.0, %v4158
      %v4191 = vsub.f32 1.0, %v4159
      %v4192 = vsub.f32 1.0, %v4160
      %v4193 = vsub.f32 1.0, %v4161
      %v4194 = vsub.f32 1.0, %v4162
      %v4195 = vsub.f32 1.0, %v4163
      %v4196 = vsub.f32 1.0, %v4164
      %v4197 = vsub.f32 1.0, %v4165
      %v4198 = vsub.f32 1.0, %v4166
      %v4199 = vsub.f32 1.0, %v4167
      %v4200 = vsub.f32 1.0, %v4168
      %v4201 = vsub.f32 1.0, %v4169
      %v4202 = vsub.f32 1.0, %v4170
      %v4203 = vsub.f32 1.0, %v4171
      %v4204 = vsub.f32 1.0, %v4172
      %v4205 = vsub.f32 1.0, %v4173
      %v4206 = vsub.f32 1.0, %v4174
      %v4207 = vsub.f32 1.0, %v4175
      %v4208 = vsub.f32 1.0, %v4176
      %v4209 = vsub.f32 1.0, %v4177
      %v4210 = vsub.f32 1.0, %v4178
      %v4211 = vsub.f32 1.0, %v4179
      %v4212 = vsub.f32 1.0, %v4180
      %v4213 = vsub.f32 1.0, %v4181
      %v4214 = vsub.f32 1.0, %v4182
      %vm4215 = vcmp.lt.f32.partialorder %v3543, 0.0
      %vm4216 = vcmp.lt.f32.partialorder %v3544, 0.0
      %vm4217 = vcmp.lt.f32.partialorder %v3545, 0.0
      %vm4218 = vcmp.lt.f32.partialorder %v3546, 0.0
      %vm4219 = vcmp.lt.f32.partialorder %v3547, 0.0
      %vm4220 = vcmp.lt.f32.partialorder %v3548, 0.0
      %vm4221 = vcmp.lt.f32.partialorder %v3549, 0.0
      %vm4222 = vcmp.lt.f32.partialorder %v3550, 0.0
      %vm4223 = vcmp.lt.f32.partialorder %v3551, 0.0
      %vm4224 = vcmp.lt.f32.partialorder %v3552, 0.0
      %vm4225 = vcmp.lt.f32.partialorder %v3553, 0.0
      %vm4226 = vcmp.lt.f32.partialorder %v3554, 0.0
      %vm4227 = vcmp.lt.f32.partialorder %v3555, 0.0
      %vm4228 = vcmp.lt.f32.partialorder %v3556, 0.0
      %vm4229 = vcmp.lt.f32.partialorder %v3557, 0.0
      %vm4230 = vcmp.lt.f32.partialorder %v3558, 0.0
      %vm4231 = vcmp.lt.f32.partialorder %v3559, 0.0
      %vm4232 = vcmp.lt.f32.partialorder %v3560, 0.0
      %vm4233 = vcmp.lt.f32.partialorder %v3561, 0.0
      %vm4234 = vcmp.lt.f32.partialorder %v3562, 0.0
      %vm4235 = vcmp.lt.f32.partialorder %v3563, 0.0
      %vm4236 = vcmp.lt.f32.partialorder %v3564, 0.0
      %vm4237 = vcmp.lt.f32.partialorder %v3565, 0.0
      %vm4238 = vcmp.lt.f32.partialorder %v3566, 0.0
      %vm4239 = vcmp.lt.f32.partialorder %v3567, 0.0
      %vm4240 = vcmp.lt.f32.partialorder %v3568, 0.0
      %vm4241 = vcmp.lt.f32.partialorder %v3569, 0.0
      %vm4242 = vcmp.lt.f32.partialorder %v3570, 0.0
      %vm4243 = vcmp.lt.f32.partialorder %v3571, 0.0
      %vm4244 = vcmp.lt.f32.partialorder %v3572, 0.0
      %vm4245 = vcmp.lt.f32.partialorder %v3573, 0.0
      %vm4246 = vcmp.lt.f32.partialorder %v3574, 0.0
      %v4247 = vsub.f32 0.0, %v4183
      %v4248 = vsub.f32 0.0, %v4184
      %v4249 = vsub.f32 0.0, %v4185
      %v4250 = vsub.f32 0.0, %v4186
      %v4251 = vsub.f32 0.0, %v4187
      %v4252 = vsub.f32 0.0, %v4188
      %v4253 = vsub.f32 0.0, %v4189
      %v4254 = vsub.f32 0.0, %v4190
      %v4255 = vsub.f32 0.0, %v4191
      %v4256 = vsub.f32 0.0, %v4192
      %v4257 = vsub.f32 0.0, %v4193
      %v4258 = vsub.f32 0.0, %v4194
      %v4259 = vsub.f32 0.0, %v4195
      %v4260 = vsub.f32 0.0, %v4196
      %v4261 = vsub.f32 0.0, %v4197
      %v4262 = vsub.f32 0.0, %v4198
      %v4263 = vsub.f32 0.0, %v4199
      %v4264 = vsub.f32 0.0, %v4200
      %v4265 = vsub.f32 0.0, %v4201
      %v4266 = vsub.f32 0.0, %v4202
      %v4267 = vsub.f32 0.0, %v4203
      %v4268 = vsub.f32 0.0, %v4204
      %v4269 = vsub.f32 0.0, %v4205
      %v4270 = vsub.f32 0.0, %v4206
      %v4271 = vsub.f32 0.0, %v4207
      %v4272 = vsub.f32 0.0, %v4208
      %v4273 = vsub.f32 0.0, %v4209
      %v4274 = vsub.f32 0.0, %v4210
      %v4275 = vsub.f32 0.0, %v4211
      %v4276 = vsub.f32 0.0, %v4212
      %v4277 = vsub.f32 0.0, %v4213
      %v4278 = vsub.f32 0.0, %v4214
      %v4279 = vsel %vm4215, %v4247, %v4183
      %v4280 = vsel %vm4216, %v4248, %v4184
      %v4281 = vsel %vm4217, %v4249, %v4185
      %v4282 = vsel %vm4218, %v4250, %v4186
      %v4283 = vsel %vm4219, %v4251, %v4187
      %v4284 = vsel %vm4220, %v4252, %v4188
      %v4285 = vsel %vm4221, %v4253, %v4189
      %v4286 = vsel %vm4222, %v4254, %v4190
      %v4287 = vsel %vm4223, %v4255, %v4191
      %v4288 = vsel %vm4224, %v4256, %v4192
      %v4289 = vsel %vm4225, %v4257, %v4193
      %v4290 = vsel %vm4226, %v4258, %v4194
      %v4291 = vsel %vm4227, %v4259, %v4195
      %v4292 = vsel %vm4228, %v4260, %v4196
      %v4293 = vsel %vm4229, %v4261, %v4197
      %v4294 = vsel %vm4230, %v4262, %v4198
      %v4295 = vsel %vm4231, %v4263, %v4199
      %v4296 = vsel %vm4232, %v4264, %v4200
      %v4297 = vsel %vm4233, %v4265, %v4201
      %v4298 = vsel %vm4234, %v4266, %v4202
      %v4299 = vsel %vm4235, %v4267, %v4203
      %v4300 = vsel %vm4236, %v4268, %v4204
      %v4301 = vsel %vm4237, %v4269, %v4205
      %v4302 = vsel %vm4238, %v4270, %v4206
      %v4303 = vsel %vm4239, %v4271, %v4207
      %v4304 = vsel %vm4240, %v4272, %v4208
      %v4305 = vsel %vm4241, %v4273, %v4209
      %v4306 = vsel %vm4242, %v4274, %v4210
      %v4307 = vsel %vm4243, %v4275, %v4211
      %v4308 = vsel %vm4244, %v4276, %v4212
      %v4309 = vsel %vm4245, %v4277, %v4213
      %v4310 = vsel %vm4246, %v4278, %v4214
      %v4311 = vadd.f32 %v4279, 1.0
      %v4312 = vadd.f32 %v4280, 1.0
      %v4313 = vadd.f32 %v4281, 1.0
      %v4314 = vadd.f32 %v4282, 1.0
      %v4315 = vadd.f32 %v4283, 1.0
      %v4316 = vadd.f32 %v4284, 1.0
      %v4317 = vadd.f32 %v4285, 1.0
      %v4318 = vadd.f32 %v4286, 1.0
      %v4319 = vadd.f32 %v4287, 1.0
      %v4320 = vadd.f32 %v4288, 1.0
      %v4321 = vadd.f32 %v4289, 1.0
      %v4322 = vadd.f32 %v4290, 1.0
      %v4323 = vadd.f32 %v4291, 1.0
      %v4324 = vadd.f32 %v4292, 1.0
      %v4325 = vadd.f32 %v4293, 1.0
      %v4326 = vadd.f32 %v4294, 1.0
      %v4327 = vadd.f32 %v4295, 1.0
      %v4328 = vadd.f32 %v4296, 1.0
      %v4329 = vadd.f32 %v4297, 1.0
      %v4330 = vadd.f32 %v4298, 1.0
      %v4331 = vadd.f32 %v4299, 1.0
      %v4332 = vadd.f32 %v4300, 1.0
      %v4333 = vadd.f32 %v4301, 1.0
      %v4334 = vadd.f32 %v4302, 1.0
      %v4335 = vadd.f32 %v4303, 1.0
      %v4336 = vadd.f32 %v4304, 1.0
      %v4337 = vadd.f32 %v4305, 1.0
      %v4338 = vadd.f32 %v4306, 1.0
      %v4339 = vadd.f32 %v4307, 1.0
      %v4340 = vadd.f32 %v4308, 1.0
      %v4341 = vadd.f32 %v4309, 1.0
      %v4342 = vadd.f32 %v4310, 1.0
      %v4343 = vmul.f32 %v3511, %v4311
      %v4344 = vmul.f32 %v3512, %v4312
      %v4345 = vmul.f32 %v3513, %v4313
      %v4346 = vmul.f32 %v3514, %v4314
      %v4347 = vmul.f32 %v3515, %v4315
      %v4348 = vmul.f32 %v3516, %v4316
      %v4349 = vmul.f32 %v3517, %v4317
      %v4350 = vmul.f32 %v3518, %v4318
      %v4351 = vmul.f32 %v3519, %v4319
      %v4352 = vmul.f32 %v3520, %v4320
      %v4353 = vmul.f32 %v3521, %v4321
      %v4354 = vmul.f32 %v3522, %v4322
      %v4355 = vmul.f32 %v3523, %v4323
      %v4356 = vmul.f32 %v3524, %v4324
      %v4357 = vmul.f32 %v3525, %v4325
      %v4358 = vmul.f32 %v3526, %v4326
      %v4359 = vmul.f32 %v3527, %v4327
      %v4360 = vmul.f32 %v3528, %v4328
      %v4361 = vmul.f32 %v3529, %v4329
      %v4362 = vmul.f32 %v3530, %v4330
      %v4363 = vmul.f32 %v3531, %v4331
      %v4364 = vmul.f32 %v3532, %v4332
      %v4365 = vmul.f32 %v3533, %v4333
      %v4366 = vmul.f32 %v3534, %v4334
      %v4367 = vmul.f32 %v3535, %v4335
      %v4368 = vmul.f32 %v3536, %v4336
      %v4369 = vmul.f32 %v3537, %v4337
      %v4370 = vmul.f32 %v3538, %v4338
      %v4371 = vmul.f32 %v3539, %v4339
      %v4372 = vmul.f32 %v3540, %v4340
      %v4373 = vmul.f32 %v3541, %v4341
      %v4374 = vmul.f32 %v3542, %v4342
      %v4375 = vpack.c.bf16 %v4344, %v4343
      %v4376 = vpack.c.bf16 %v4346, %v4345
      %v4377 = vpack.c.bf16 %v4348, %v4347
      %v4378 = vpack.c.bf16 %v4350, %v4349
      %v4379 = vpack.c.bf16 %v4352, %v4351
      %v4380 = vpack.c.bf16 %v4354, %v4353
      %v4381 = vpack.c.bf16 %v4356, %v4355
      %v4382 = vpack.c.bf16 %v4358, %v4357
      %v4383 = vpack.c.bf16 %v4360, %v4359
      %v4384 = vpack.c.bf16 %v4362, %v4361
      %v4385 = vpack.c.bf16 %v4364, %v4363
      %v4386 = vpack.c.bf16 %v4366, %v4365
      %v4387 = vpack.c.bf16 %v4368, %v4367
      %v4388 = vpack.c.bf16 %v4370, %v4369
      %v4389 = vpack.c.bf16 %v4372, %v4371
      %v4390 = vpack.c.bf16 %v4374, %v4373
      %v4391 = vld [vmem:[%s9] sm:$0xf]
      %v4392 = vld [vmem:[%s10] sm:$0x1]
      %v4394 = vlaneseq
      %v4395 = vshrl.u32 %v4394, 7
      %v4396 = vsub.s32 0, %v4395
      %v4397 = vrot.slane %v4392, %v4396
      %vm4399 = vcmask 64512
      %v4401 = vsel %vm4399, %v4375, 0
      %v4404 = vsel %vm4399, %v4376, 0
      %v4407 = vsel %vm4399, %v4377, 0
      %v4410 = vsel %vm4399, %v4378, 0
      %v4413 = vsel %vm4399, %v4379, 0
      %v4416 = vsel %vm4399, %v4380, 0
      %v4419 = vsel %vm4399, %v4381, 0
      %v4422 = vsel %vm4399, %v4382, 0
      %v4425 = vsel %vm4399, %v4383, 0
      %v4428 = vsel %vm4399, %v4384, 0
      %v4431 = vsel %vm4399, %v4385, 0
      %v4434 = vsel %vm4399, %v4386, 0
      %v4437 = vsel %vm4399, %v4387, 0
      %v4440 = vsel %vm4399, %v4388, 0
      %v4443 = vsel %vm4399, %v4389, 0
      %v4446 = vsel %vm4399, %v4390, 0
      %vm4448 = vcmask 1043456
      %v4450 = vsel %vm4448, %v4391, 0
      %4452 = vmatprep.subr.bf16.mxu0 0
      %4453 = vmatpush1.bf16.msra.mxu0 %v4450
      %4454 = vmatprep.subr.bf16.mxu0 0
      %4455 = vmatpush1.bf16.msra.mxu0 0
      %4456 = vmatprep.subr.bf16.mxu0 0
      %4457 = vmatpush1.bf16.msra.mxu0 0
      %4458 = vmatprep.subr.bf16.mxu0 0
      %4459 = vmatpush1.bf16.msra.mxu0 0
      %4460 = vmatprep.subr.bf16.mxu0 0
      %4461 = vmatpush1.bf16.msra.mxu0 0
      %4462 = vmatprep.subr.bf16.mxu0 0
      %4463 = vmatpush1.bf16.msra.mxu0 0
      %4464 = vmatprep.subr.bf16.mxu0 0
      %4465 = vmatpush1.bf16.msra.mxu0 0
      %4466 = vmatprep.subr.bf16.mxu0 0
      %4467 = vmatpush1.bf16.msra.mxu0 0
      %4468 = vmatprep.subr.bf16.mxu0 0
      %4469 = vmatpush1.bf16.msra.mxu0 0
      %4470 = vmatprep.subr.bf16.mxu0 0
      %4471 = vmatpush1.bf16.msra.mxu0 0
      %4472 = vmatprep.subr.bf16.mxu0 0
      %4473 = vmatpush1.bf16.msra.mxu0 0
      %4474 = vmatprep.subr.bf16.mxu0 0
      %4475 = vmatpush1.bf16.msra.mxu0 0
      %4476 = vmatprep.subr.bf16.mxu0 0
      %4477 = vmatpush1.bf16.msra.mxu0 0
      %4478 = vmatprep.subr.bf16.mxu0 0
      %4479 = vmatpush1.bf16.msra.mxu0 0
      %4480 = vmatprep.subr.bf16.mxu0 0
      %4481 = vmatpush1.bf16.msra.mxu0 0
      %4482 = vmatprep.subr.bf16.mxu0 0
      %4483 = vmatpush1.bf16.msra.mxu0 0
      %4484 = vmatprep.mubr.bf16.mxu0 0
      %4485 = vmatmul.mubr.bf16.gmra.mrb[0].mxu0 %v4401
      %v4486 = vpop.f32.mrb[0].mxu0
      %v4487 = vadd.f32 %v4397, %v4486
      %v4488 = vpop.f32.mrb[0].mxu0
      %v4489 = vpop.f32.mrb[0].mxu0
      %v4490 = vadd.f32 %v4397, %v4489
      %v4491 = vpop.f32.mrb[0].mxu0
      %4492 = vmatprep.mubr.bf16.mxu0 0
      %4493 = vmatmul.mubr.bf16.gmra.mrb[0].mxu0 %v4404
      %v4494 = vpop.f32.mrb[0].mxu0
      %v4495 = vadd.f32 %v4397, %v4494
      %v4496 = vpop.f32.mrb[0].mxu0
      %v4497 = vpop.f32.mrb[0].mxu0
      %v4498 = vadd.f32 %v4397, %v4497
      %v4499 = vpop.f32.mrb[0].mxu0
      %4500 = vmatprep.mubr.bf16.mxu0 0
      %4501 = vmatmul.mubr.bf16.gmra.mrb[0].mxu0 %v4407
      %v4502 = vpop.f32.mrb[0].mxu0
      %v4503 = vadd.f32 %v4397, %v4502
      %v4504 = vpop.f32.mrb[0].mxu0
      %v4505 = vpop.f32.mrb[0].mxu0
      %v4506 = vadd.f32 %v4397, %v4505
      %v4507 = vpop.f32.mrb[0].mxu0
      %4508 = vmatprep.mubr.bf16.mxu0 0
      %4509 = vmatmul.mubr.bf16.gmra.mrb[0].mxu0 %v4410
      %v4510 = vpop.f32.mrb[0].mxu0
      %v4511 = vadd.f32 %v4397, %v4510
      %v4512 = vpop.f32.mrb[0].mxu0
      %v4513 = vpop.f32.mrb[0].mxu0
      %v4514 = vadd.f32 %v4397, %v4513
      %v4515 = vpop.f32.mrb[0].mxu0
      %4516 = vmatprep.mubr.bf16.mxu0 0
      %4517 = vmatmul.mubr.bf16.gmra.mrb[0].mxu0 %v4413
      %v4518 = vpop.f32.mrb[0].mxu0
      %v4519 = vadd.f32 %v4397, %v4518
      %v4520 = vpop.f32.mrb[0].mxu0
      %v4521 = vpop.f32.mrb[0].mxu0
      %v4522 = vadd.f32 %v4397, %v4521
      %v4523 = vpop.f32.mrb[0].mxu0
      %4524 = vmatprep.mubr.bf16.mxu0 0
      %4525 = vmatmul.mubr.bf16.gmra.mrb[0].mxu0 %v4416
      %v4526 = vpop.f32.mrb[0].mxu0
      %v4527 = vadd.f32 %v4397, %v4526
      %v4528 = vpop.f32.mrb[0].mxu0
      %v4529 = vpop.f32.mrb[0].mxu0
      %v4530 = vadd.f32 %v4397, %v4529
      %v4531 = vpop.f32.mrb[0].mxu0
      %4532 = vmatprep.mubr.bf16.mxu0 0
      %4533 = vmatmul.mubr.bf16.gmra.mrb[0].mxu0 %v4419
      %v4534 = vpop.f32.mrb[0].mxu0
      %v4535 = vadd.f32 %v4397, %v4534
      %v4536 = vpop.f32.mrb[0].mxu0
      %v4537 = vpop.f32.mrb[0].mxu0
      %v4538 = vadd.f32 %v4397, %v4537
      %v4539 = vpop.f32.mrb[0].mxu0
      %4540 = vmatprep.mubr.bf16.mxu0 0
      %4541 = vmatmul.mubr.bf16.gmra.mrb[0].mxu0 %v4422
      %v4542 = vpop.f32.mrb[0].mxu0
      %v4543 = vadd.f32 %v4397, %v4542
      %v4544 = vpop.f32.mrb[0].mxu0
      %v4545 = vpop.f32.mrb[0].mxu0
      %v4546 = vadd.f32 %v4397, %v4545
      %v4547 = vpop.f32.mrb[0].mxu0
      %4548 = vmatprep.mubr.bf16.mxu0 0
      %4549 = vmatmul.mubr.bf16.gmra.mrb[0].mxu0 %v4425
      %v4550 = vpop.f32.mrb[0].mxu0
      %v4551 = vadd.f32 %v4397, %v4550
      %v4552 = vpop.f32.mrb[0].mxu0
      %v4553 = vpop.f32.mrb[0].mxu0
      %v4554 = vadd.f32 %v4397, %v4553
      %v4555 = vpop.f32.mrb[0].mxu0
      %4556 = vmatprep.mubr.bf16.mxu0 0
      %4557 = vmatmul.mubr.bf16.gmra.mrb[0].mxu0 %v4428
      %v4558 = vpop.f32.mrb[0].mxu0
      %v4559 = vadd.f32 %v4397, %v4558
      %v4560 = vpop.f32.mrb[0].mxu0
      %v4561 = vpop.f32.mrb[0].mxu0
      %v4562 = vadd.f32 %v4397, %v4561
      %v4563 = vpop.f32.mrb[0].mxu0
      %4564 = vmatprep.mubr.bf16.mxu0 0
      %4565 = vmatmul.mubr.bf16.gmra.mrb[0].mxu0 %v4431
      %v4566 = vpop.f32.mrb[0].mxu0
      %v4567 = vadd.f32 %v4397, %v4566
      %v4568 = vpop.f32.mrb[0].mxu0
      %v4569 = vpop.f32.mrb[0].mxu0
      %v4570 = vadd.f32 %v4397, %v4569
      %v4571 = vpop.f32.mrb[0].mxu0
      %4572 = vmatprep.mubr.bf16.mxu0 0
      %4573 = vmatmul.mubr.bf16.gmra.mrb[0].mxu0 %v4434
      %v4574 = vpop.f32.mrb[0].mxu0
      %v4575 = vadd.f32 %v4397, %v4574
      %v4576 = vpop.f32.mrb[0].mxu0
      %v4577 = vpop.f32.mrb[0].mxu0
      %v4578 = vadd.f32 %v4397, %v4577
      %v4579 = vpop.f32.mrb[0].mxu0
      %4580 = vmatprep.mubr.bf16.mxu0 0
      %4581 = vmatmul.mubr.bf16.gmra.mrb[0].mxu0 %v4437
      %v4582 = vpop.f32.mrb[0].mxu0
      %v4583 = vadd.f32 %v4397, %v4582
      %v4584 = vpop.f32.mrb[0].mxu0
      %v4585 = vpop.f32.mrb[0].mxu0
      %v4586 = vadd.f32 %v4397, %v4585
      %v4587 = vpop.f32.mrb[0].mxu0
      %4588 = vmatprep.mubr.bf16.mxu0 0
      %4589 = vmatmul.mubr.bf16.gmra.mrb[0].mxu0 %v4440
      %v4590 = vpop.f32.mrb[0].mxu0
      %v4591 = vadd.f32 %v4397, %v4590
      %v4592 = vpop.f32.mrb[0].mxu0
      %v4593 = vpop.f32.mrb[0].mxu0
      %v4594 = vadd.f32 %v4397, %v4593
      %v4595 = vpop.f32.mrb[0].mxu0
      %4596 = vmatprep.mubr.bf16.mxu0 0
      %4597 = vmatmul.mubr.bf16.gmra.mrb[0].mxu0 %v4443
      %v4598 = vpop.f32.mrb[0].mxu0
      %v4599 = vadd.f32 %v4397, %v4598
      %v4600 = vpop.f32.mrb[0].mxu0
      %v4601 = vpop.f32.mrb[0].mxu0
      %v4602 = vadd.f32 %v4397, %v4601
      %v4603 = vpop.f32.mrb[0].mxu0
      %4604 = vmatprep.mubr.bf16.mxu0 0
      %4605 = vmatmul.mubr.bf16.gmra.mrb[0].mxu0 %v4446
      %v4606 = vpop.f32.mrb[0].mxu0
      %v4607 = vadd.f32 %v4397, %v4606
      %v4608 = vpop.f32.mrb[0].mxu0
      %v4609 = vpop.f32.mrb[0].mxu0
      %v4610 = vadd.f32 %v4397, %v4609
      %v4611 = vpop.f32.mrb[0].mxu0
      %4612 = vdwg.mxu0
      %v4613 = vadd.f32 %v654, %v4487
      %v4614 = vadd.f32 %v655, %v4490
      %v4615 = vadd.f32 %v656, %v4495
      %v4616 = vadd.f32 %v657, %v4498
      %v4617 = vadd.f32 %v658, %v4503
      %v4618 = vadd.f32 %v659, %v4506
      %v4619 = vadd.f32 %v660, %v4511
      %v4620 = vadd.f32 %v661, %v4514
      %v4621 = vadd.f32 %v662, %v4519
      %v4622 = vadd.f32 %v663, %v4522
      %v4623 = vadd.f32 %v664, %v4527
      %v4624 = vadd.f32 %v665, %v4530
      %v4625 = vadd.f32 %v666, %v4535
      %v4626 = vadd.f32 %v667, %v4538
      %v4627 = vadd.f32 %v668, %v4543
      %v4628 = vadd.f32 %v669, %v4546
      %v4629 = vadd.f32 %v670, %v4551
      %v4630 = vadd.f32 %v671, %v4554
      %v4631 = vadd.f32 %v672, %v4559
      %v4632 = vadd.f32 %v673, %v4562
      %v4633 = vadd.f32 %v674, %v4567
      %v4634 = vadd.f32 %v675, %v4570
      %v4635 = vadd.f32 %v676, %v4575
      %v4636 = vadd.f32 %v677, %v4578
      %v4637 = vadd.f32 %v678, %v4583
      %v4638 = vadd.f32 %v679, %v4586
      %v4639 = vadd.f32 %v680, %v4591
      %v4640 = vadd.f32 %v681, %v4594
      %v4641 = vadd.f32 %v682, %v4599
      %v4642 = vadd.f32 %v683, %v4602
      %v4643 = vadd.f32 %v684, %v4607
      %v4644 = vadd.f32 %v685, %v4610
      %v4645 = vld [vmem:[%s11] sm:$0x1]
      %v4646 = vld [vmem:[%s12] sm:$0x1]
      %v4647 = vsel %vm692, %v4613, 0.0
      %4648 = vadd.xlane.f32.xlu0 %v4647
      %v4649 = vpop.xlane.xlu0 %4648
      %v4650 = vsel %vm692, %v4614, 0.0
      %4651 = vadd.xlane.f32.xlu0 %v4650
      %v4652 = vpop.xlane.xlu0 %4651
      %v4653 = vsel %vm692, %v4615, 0.0
      %4654 = vadd.xlane.f32.xlu0 %v4653
      %v4655 = vpop.xlane.xlu0 %4654
      %v4656 = vsel %vm692, %v4616, 0.0
      %4657 = vadd.xlane.f32.xlu0 %v4656
      %v4658 = vpop.xlane.xlu0 %4657
      %v4659 = vsel %vm692, %v4617, 0.0
      %4660 = vadd.xlane.f32.xlu0 %v4659
      %v4661 = vpop.xlane.xlu0 %4660
      %v4662 = vsel %vm692, %v4618, 0.0
      %4663 = vadd.xlane.f32.xlu0 %v4662
      %v4664 = vpop.xlane.xlu0 %4663
      %v4665 = vsel %vm692, %v4619, 0.0
      %4666 = vadd.xlane.f32.xlu0 %v4665
      %v4667 = vpop.xlane.xlu0 %4666
      %v4668 = vsel %vm692, %v4620, 0.0
      %4669 = vadd.xlane.f32.xlu0 %v4668
      %v4670 = vpop.xlane.xlu0 %4669
      %v4671 = vsel %vm692, %v4621, 0.0
      %4672 = vadd.xlane.f32.xlu0 %v4671
      %v4673 = vpop.xlane.xlu0 %4672
      %v4674 = vsel %vm692, %v4622, 0.0
      %4675 = vadd.xlane.f32.xlu0 %v4674
      %v4676 = vpop.xlane.xlu0 %4675
      %v4677 = vsel %vm692, %v4623, 0.0
      %4678 = vadd.xlane.f32.xlu0 %v4677
      %v4679 = vpop.xlane.xlu0 %4678
      %v4680 = vsel %vm692, %v4624, 0.0
      %4681 = vadd.xlane.f32.xlu0 %v4680
      %v4682 = vpop.xlane.xlu0 %4681
      %v4683 = vsel %vm692, %v4625, 0.0
      %4684 = vadd.xlane.f32.xlu0 %v4683
      %v4685 = vpop.xlane.xlu0 %4684
      %v4686 = vsel %vm692, %v4626, 0.0
      %4687 = vadd.xlane.f32.xlu0 %v4686
      %v4688 = vpop.xlane.xlu0 %4687
      %v4689 = vsel %vm692, %v4627, 0.0
      %4690 = vadd.xlane.f32.xlu0 %v4689
      %v4691 = vpop.xlane.xlu0 %4690
      %v4692 = vsel %vm692, %v4628, 0.0
      %4693 = vadd.xlane.f32.xlu0 %v4692
      %v4694 = vpop.xlane.xlu0 %4693
      %v4695 = vsel %vm692, %v4629, 0.0
      %4696 = vadd.xlane.f32.xlu0 %v4695
      %v4697 = vpop.xlane.xlu0 %4696
      %v4698 = vsel %vm692, %v4630, 0.0
      %4699 = vadd.xlane.f32.xlu0 %v4698
      %v4700 = vpop.xlane.xlu0 %4699
      %v4701 = vsel %vm692, %v4631, 0.0
      %4702 = vadd.xlane.f32.xlu0 %v4701
      %v4703 = vpop.xlane.xlu0 %4702
      %v4704 = vsel %vm692, %v4632, 0.0
      %4705 = vadd.xlane.f32.xlu0 %v4704
      %v4706 = vpop.xlane.xlu0 %4705
      %v4707 = vsel %vm692, %v4633, 0.0
      %4708 = vadd.xlane.f32.xlu0 %v4707
      %v4709 = vpop.xlane.xlu0 %4708
      %v4710 = vsel %vm692, %v4634, 0.0
      %4711 = vadd.xlane.f32.xlu0 %v4710
      %v4712 = vpop.xlane.xlu0 %4711
      %v4713 = vsel %vm692, %v4635, 0.0
      %4714 = vadd.xlane.f32.xlu0 %v4713
      %v4715 = vpop.xlane.xlu0 %4714
      %v4716 = vsel %vm692, %v4636, 0.0
      %4717 = vadd.xlane.f32.xlu0 %v4716
      %v4718 = vpop.xlane.xlu0 %4717
      %v4719 = vsel %vm692, %v4637, 0.0
      %4720 = vadd.xlane.f32.xlu0 %v4719
      %v4721 = vpop.xlane.xlu0 %4720
      %v4722 = vsel %vm692, %v4638, 0.0
      %4723 = vadd.xlane.f32.xlu0 %v4722
      %v4724 = vpop.xlane.xlu0 %4723
      %v4725 = vsel %vm692, %v4639, 0.0
      %4726 = vadd.xlane.f32.xlu0 %v4725
      %v4727 = vpop.xlane.xlu0 %4726
      %v4728 = vsel %vm692, %v4640, 0.0
      %4729 = vadd.xlane.f32.xlu0 %v4728
      %v4730 = vpop.xlane.xlu0 %4729
      %v4731 = vsel %vm692, %v4641, 0.0
      %4732 = vadd.xlane.f32.xlu0 %v4731
      %v4733 = vpop.xlane.xlu0 %4732
      %v4734 = vsel %vm692, %v4642, 0.0
      %4735 = vadd.xlane.f32.xlu0 %v4734
      %v4736 = vpop.xlane.xlu0 %4735
      %v4737 = vsel %vm692, %v4643, 0.0
      %4738 = vadd.xlane.f32.xlu0 %v4737
      %v4739 = vpop.xlane.xlu0 %4738
      %v4740 = vsel %vm692, %v4644, 0.0
      %4741 = vadd.xlane.f32.xlu0 %v4740
      %v4742 = vpop.xlane.xlu0 %4741
      %v4743 = vmul.f32 %v4649, %v801
      %v4744 = vmul.f32 %v4652, %v801
      %v4745 = vmul.f32 %v4655, %v801
      %v4746 = vmul.f32 %v4658, %v801
      %v4747 = vmul.f32 %v4661, %v801
      %v4748 = vmul.f32 %v4664, %v801
      %v4749 = vmul.f32 %v4667, %v801
      %v4750 = vmul.f32 %v4670, %v801
      %v4751 = vmul.f32 %v4673, %v801
      %v4752 = vmul.f32 %v4676, %v801
      %v4753 = vmul.f32 %v4679, %v801
      %v4754 = vmul.f32 %v4682, %v801
      %v4755 = vmul.f32 %v4685, %v801
      %v4756 = vmul.f32 %v4688, %v801
      %v4757 = vmul.f32 %v4691, %v801
      %v4758 = vmul.f32 %v4694, %v801
      %v4759 = vmul.f32 %v4697, %v801
      %v4760 = vmul.f32 %v4700, %v801
      %v4761 = vmul.f32 %v4703, %v801
      %v4762 = vmul.f32 %v4706, %v801
      %v4763 = vmul.f32 %v4709, %v801
      %v4764 = vmul.f32 %v4712, %v801
      %v4765 = vmul.f32 %v4715, %v801
      %v4766 = vmul.f32 %v4718, %v801
      %v4767 = vmul.f32 %v4721, %v801
      %v4768 = vmul.f32 %v4724, %v801
      %v4769 = vmul.f32 %v4727, %v801
      %v4770 = vmul.f32 %v4730, %v801
      %v4771 = vmul.f32 %v4733, %v801
      %v4772 = vmul.f32 %v4736, %v801
      %v4773 = vmul.f32 %v4739, %v801
      %v4774 = vmul.f32 %v4742, %v801
      %v4775 = vsub.f32 %v4613, %v4743
      %v4776 = vsub.f32 %v4614, %v4744
      %v4777 = vsub.f32 %v4615, %v4745
      %v4778 = vsub.f32 %v4616, %v4746
      %v4779 = vsub.f32 %v4617, %v4747
      %v4780 = vsub.f32 %v4618, %v4748
      %v4781 = vsub.f32 %v4619, %v4749
      %v4782 = vsub.f32 %v4620, %v4750
      %v4783 = vsub.f32 %v4621, %v4751
      %v4784 = vsub.f32 %v4622, %v4752
      %v4785 = vsub.f32 %v4623, %v4753
      %v4786 = vsub.f32 %v4624, %v4754
      %v4787 = vsub.f32 %v4625, %v4755
      %v4788 = vsub.f32 %v4626, %v4756
      %v4789 = vsub.f32 %v4627, %v4757
      %v4790 = vsub.f32 %v4628, %v4758
      %v4791 = vsub.f32 %v4629, %v4759
      %v4792 = vsub.f32 %v4630, %v4760
      %v4793 = vsub.f32 %v4631, %v4761
      %v4794 = vsub.f32 %v4632, %v4762
      %v4795 = vsub.f32 %v4633, %v4763
      %v4796 = vsub.f32 %v4634, %v4764
      %v4797 = vsub.f32 %v4635, %v4765
      %v4798 = vsub.f32 %v4636, %v4766
      %v4799 = vsub.f32 %v4637, %v4767
      %v4800 = vsub.f32 %v4638, %v4768
      %v4801 = vsub.f32 %v4639, %v4769
      %v4802 = vsub.f32 %v4640, %v4770
      %v4803 = vsub.f32 %v4641, %v4771
      %v4804 = vsub.f32 %v4642, %v4772
      %v4805 = vsub.f32 %v4643, %v4773
      %v4806 = vsub.f32 %v4644, %v4774
      %v4807 = vmul.f32 %v4775, %v4775
      %v4808 = vmul.f32 %v4776, %v4776
      %v4809 = vmul.f32 %v4777, %v4777
      %v4810 = vmul.f32 %v4778, %v4778
      %v4811 = vmul.f32 %v4779, %v4779
      %v4812 = vmul.f32 %v4780, %v4780
      %v4813 = vmul.f32 %v4781, %v4781
      %v4814 = vmul.f32 %v4782, %v4782
      %v4815 = vmul.f32 %v4783, %v4783
      %v4816 = vmul.f32 %v4784, %v4784
      %v4817 = vmul.f32 %v4785, %v4785
      %v4818 = vmul.f32 %v4786, %v4786
      %v4819 = vmul.f32 %v4787, %v4787
      %v4820 = vmul.f32 %v4788, %v4788
      %v4821 = vmul.f32 %v4789, %v4789
      %v4822 = vmul.f32 %v4790, %v4790
      %v4823 = vmul.f32 %v4791, %v4791
      %v4824 = vmul.f32 %v4792, %v4792
      %v4825 = vmul.f32 %v4793, %v4793
      %v4826 = vmul.f32 %v4794, %v4794
      %v4827 = vmul.f32 %v4795, %v4795
      %v4828 = vmul.f32 %v4796, %v4796
      %v4829 = vmul.f32 %v4797, %v4797
      %v4830 = vmul.f32 %v4798, %v4798
      %v4831 = vmul.f32 %v4799, %v4799
      %v4832 = vmul.f32 %v4800, %v4800
      %v4833 = vmul.f32 %v4801, %v4801
      %v4834 = vmul.f32 %v4802, %v4802
      %v4835 = vmul.f32 %v4803, %v4803
      %v4836 = vmul.f32 %v4804, %v4804
      %v4837 = vmul.f32 %v4805, %v4805
      %v4838 = vmul.f32 %v4806, %v4806
      %v4839 = vsel %vm692, %v4807, 0.0
      %4840 = vadd.xlane.f32.xlu0 %v4839
      %v4841 = vpop.xlane.xlu0 %4840
      %v4842 = vsel %vm692, %v4808, 0.0
      %4843 = vadd.xlane.f32.xlu0 %v4842
      %v4844 = vpop.xlane.xlu0 %4843
      %v4845 = vsel %vm692, %v4809, 0.0
      %4846 = vadd.xlane.f32.xlu0 %v4845
      %v4847 = vpop.xlane.xlu0 %4846
      %v4848 = vsel %vm692, %v4810, 0.0
      %4849 = vadd.xlane.f32.xlu0 %v4848
      %v4850 = vpop.xlane.xlu0 %4849
      %v4851 = vsel %vm692, %v4811, 0.0
      %4852 = vadd.xlane.f32.xlu0 %v4851
      %v4853 = vpop.xlane.xlu0 %4852
      %v4854 = vsel %vm692, %v4812, 0.0
      %4855 = vadd.xlane.f32.xlu0 %v4854
      %v4856 = vpop.xlane.xlu0 %4855
      %v4857 = vsel %vm692, %v4813, 0.0
      %4858 = vadd.xlane.f32.xlu0 %v4857
      %v4859 = vpop.xlane.xlu0 %4858
      %v4860 = vsel %vm692, %v4814, 0.0
      %4861 = vadd.xlane.f32.xlu0 %v4860
      %v4862 = vpop.xlane.xlu0 %4861
      %v4863 = vsel %vm692, %v4815, 0.0
      %4864 = vadd.xlane.f32.xlu0 %v4863
      %v4865 = vpop.xlane.xlu0 %4864
      %v4866 = vsel %vm692, %v4816, 0.0
      %4867 = vadd.xlane.f32.xlu0 %v4866
      %v4868 = vpop.xlane.xlu0 %4867
      %v4869 = vsel %vm692, %v4817, 0.0
      %4870 = vadd.xlane.f32.xlu0 %v4869
      %v4871 = vpop.xlane.xlu0 %4870
      %v4872 = vsel %vm692, %v4818, 0.0
      %4873 = vadd.xlane.f32.xlu0 %v4872
      %v4874 = vpop.xlane.xlu0 %4873
      %v4875 = vsel %vm692, %v4819, 0.0
      %4876 = vadd.xlane.f32.xlu0 %v4875
      %v4877 = vpop.xlane.xlu0 %4876
      %v4878 = vsel %vm692, %v4820, 0.0
      %4879 = vadd.xlane.f32.xlu0 %v4878
      %v4880 = vpop.xlane.xlu0 %4879
      %v4881 = vsel %vm692, %v4821, 0.0
      %4882 = vadd.xlane.f32.xlu0 %v4881
      %v4883 = vpop.xlane.xlu0 %4882
      %v4884 = vsel %vm692, %v4822, 0.0
      %4885 = vadd.xlane.f32.xlu0 %v4884
      %v4886 = vpop.xlane.xlu0 %4885
      %v4887 = vsel %vm692, %v4823, 0.0
      %4888 = vadd.xlane.f32.xlu0 %v4887
      %v4889 = vpop.xlane.xlu0 %4888
      %v4890 = vsel %vm692, %v4824, 0.0
      %4891 = vadd.xlane.f32.xlu0 %v4890
      %v4892 = vpop.xlane.xlu0 %4891
      %v4893 = vsel %vm692, %v4825, 0.0
      %4894 = vadd.xlane.f32.xlu0 %v4893
      %v4895 = vpop.xlane.xlu0 %4894
      %v4896 = vsel %vm692, %v4826, 0.0
      %4897 = vadd.xlane.f32.xlu0 %v4896
      %v4898 = vpop.xlane.xlu0 %4897
      %v4899 = vsel %vm692, %v4827, 0.0
      %4900 = vadd.xlane.f32.xlu0 %v4899
      %v4901 = vpop.xlane.xlu0 %4900
      %v4902 = vsel %vm692, %v4828, 0.0
      %4903 = vadd.xlane.f32.xlu0 %v4902
      %v4904 = vpop.xlane.xlu0 %4903
      %v4905 = vsel %vm692, %v4829, 0.0
      %4906 = vadd.xlane.f32.xlu0 %v4905
      %v4907 = vpop.xlane.xlu0 %4906
      %v4908 = vsel %vm692, %v4830, 0.0
      %4909 = vadd.xlane.f32.xlu0 %v4908
      %v4910 = vpop.xlane.xlu0 %4909
      %v4911 = vsel %vm692, %v4831, 0.0
      %4912 = vadd.xlane.f32.xlu0 %v4911
      %v4913 = vpop.xlane.xlu0 %4912
      %v4914 = vsel %vm692, %v4832, 0.0
      %4915 = vadd.xlane.f32.xlu0 %v4914
      %v4916 = vpop.xlane.xlu0 %4915
      %v4917 = vsel %vm692, %v4833, 0.0
      %4918 = vadd.xlane.f32.xlu0 %v4917
      %v4919 = vpop.xlane.xlu0 %4918
      %v4920 = vsel %vm692, %v4834, 0.0
      %4921 = vadd.xlane.f32.xlu0 %v4920
      %v4922 = vpop.xlane.xlu0 %4921
      %v4923 = vsel %vm692, %v4835, 0.0
      %4924 = vadd.xlane.f32.xlu0 %v4923
      %v4925 = vpop.xlane.xlu0 %4924
      %v4926 = vsel %vm692, %v4836, 0.0
      %4927 = vadd.xlane.f32.xlu0 %v4926
      %v4928 = vpop.xlane.xlu0 %4927
      %v4929 = vsel %vm692, %v4837, 0.0
      %4930 = vadd.xlane.f32.xlu0 %v4929
      %v4931 = vpop.xlane.xlu0 %4930
      %v4932 = vsel %vm692, %v4838, 0.0
      %4933 = vadd.xlane.f32.xlu0 %v4932
      %v4934 = vpop.xlane.xlu0 %4933
      %v4935 = vmul.f32 %v4841, %v801
      %v4936 = vmul.f32 %v4844, %v801
      %v4937 = vmul.f32 %v4847, %v801
      %v4938 = vmul.f32 %v4850, %v801
      %v4939 = vmul.f32 %v4853, %v801
      %v4940 = vmul.f32 %v4856, %v801
      %v4941 = vmul.f32 %v4859, %v801
      %v4942 = vmul.f32 %v4862, %v801
      %v4943 = vmul.f32 %v4865, %v801
      %v4944 = vmul.f32 %v4868, %v801
      %v4945 = vmul.f32 %v4871, %v801
      %v4946 = vmul.f32 %v4874, %v801
      %v4947 = vmul.f32 %v4877, %v801
      %v4948 = vmul.f32 %v4880, %v801
      %v4949 = vmul.f32 %v4883, %v801
      %v4950 = vmul.f32 %v4886, %v801
      %v4951 = vmul.f32 %v4889, %v801
      %v4952 = vmul.f32 %v4892, %v801
      %v4953 = vmul.f32 %v4895, %v801
      %v4954 = vmul.f32 %v4898, %v801
      %v4955 = vmul.f32 %v4901, %v801
      %v4956 = vmul.f32 %v4904, %v801
      %v4957 = vmul.f32 %v4907, %v801
      %v4958 = vmul.f32 %v4910, %v801
      %v4959 = vmul.f32 %v4913, %v801
      %v4960 = vmul.f32 %v4916, %v801
      %v4961 = vmul.f32 %v4919, %v801
      %v4962 = vmul.f32 %v4922, %v801
      %v4963 = vmul.f32 %v4925, %v801
      %v4964 = vmul.f32 %v4928, %v801
      %v4965 = vmul.f32 %v4931, %v801
      %v4966 = vmul.f32 %v4934, %v801
      %v4967 = vadd.f32 %v4935, 1e-06
      %v4968 = vadd.f32 %v4936, 1e-06
      %v4969 = vadd.f32 %v4937, 1e-06
      %v4970 = vadd.f32 %v4938, 1e-06
      %v4971 = vadd.f32 %v4939, 1e-06
      %v4972 = vadd.f32 %v4940, 1e-06
      %v4973 = vadd.f32 %v4941, 1e-06
      %v4974 = vadd.f32 %v4942, 1e-06
      %v4975 = vadd.f32 %v4943, 1e-06
      %v4976 = vadd.f32 %v4944, 1e-06
      %v4977 = vadd.f32 %v4945, 1e-06
      %v4978 = vadd.f32 %v4946, 1e-06
      %v4979 = vadd.f32 %v4947, 1e-06
      %v4980 = vadd.f32 %v4948, 1e-06
      %v4981 = vadd.f32 %v4949, 1e-06
      %v4982 = vadd.f32 %v4950, 1e-06
      %v4983 = vadd.f32 %v4951, 1e-06
      %v4984 = vadd.f32 %v4952, 1e-06
      %v4985 = vadd.f32 %v4953, 1e-06
      %v4986 = vadd.f32 %v4954, 1e-06
      %v4987 = vadd.f32 %v4955, 1e-06
      %v4988 = vadd.f32 %v4956, 1e-06
      %v4989 = vadd.f32 %v4957, 1e-06
      %v4990 = vadd.f32 %v4958, 1e-06
      %v4991 = vadd.f32 %v4959, 1e-06
      %v4992 = vadd.f32 %v4960, 1e-06
      %v4993 = vadd.f32 %v4961, 1e-06
      %v4994 = vadd.f32 %v4962, 1e-06
      %v4995 = vadd.f32 %v4963, 1e-06
      %v4996 = vadd.f32 %v4964, 1e-06
      %v4997 = vadd.f32 %v4965, 1e-06
      %v4998 = vadd.f32 %v4966, 1e-06
      %v4999 = vrsqrt.pop %v4967
      %v5000 = vrsqrt.pop %v4968
      %v5001 = vrsqrt.pop %v4969
      %v5002 = vrsqrt.pop %v4970
      %v5003 = vrsqrt.pop %v4971
      %v5004 = vrsqrt.pop %v4972
      %v5005 = vrsqrt.pop %v4973
      %v5006 = vrsqrt.pop %v4974
      %v5007 = vrsqrt.pop %v4975
      %v5008 = vrsqrt.pop %v4976
      %v5009 = vrsqrt.pop %v4977
      %v5010 = vrsqrt.pop %v4978
      %v5011 = vrsqrt.pop %v4979
      %v5012 = vrsqrt.pop %v4980
      %v5013 = vrsqrt.pop %v4981
      %v5014 = vrsqrt.pop %v4982
      %v5015 = vrsqrt.pop %v4983
      %v5016 = vrsqrt.pop %v4984
      %v5017 = vrsqrt.pop %v4985
      %v5018 = vrsqrt.pop %v4986
      %v5019 = vrsqrt.pop %v4987
      %v5020 = vrsqrt.pop %v4988
      %v5021 = vrsqrt.pop %v4989
      %v5022 = vrsqrt.pop %v4990
      %v5023 = vrsqrt.pop %v4991
      %v5024 = vrsqrt.pop %v4992
      %v5025 = vrsqrt.pop %v4993
      %v5026 = vrsqrt.pop %v4994
      %v5027 = vrsqrt.pop %v4995
      %v5028 = vrsqrt.pop %v4996
      %v5029 = vrsqrt.pop %v4997
      %v5030 = vrsqrt.pop %v4998
      %v5031 = vmul.f32 %v4775, %v4999
      %v5032 = vmul.f32 %v4776, %v5000
      %v5033 = vmul.f32 %v4777, %v5001
      %v5034 = vmul.f32 %v4778, %v5002
      %v5035 = vmul.f32 %v4779, %v5003
      %v5036 = vmul.f32 %v4780, %v5004
      %v5037 = vmul.f32 %v4781, %v5005
      %v5038 = vmul.f32 %v4782, %v5006
      %v5039 = vmul.f32 %v4783, %v5007
      %v5040 = vmul.f32 %v4784, %v5008
      %v5041 = vmul.f32 %v4785, %v5009
      %v5042 = vmul.f32 %v4786, %v5010
      %v5043 = vmul.f32 %v4787, %v5011
      %v5044 = vmul.f32 %v4788, %v5012
      %v5045 = vmul.f32 %v4789, %v5013
      %v5046 = vmul.f32 %v4790, %v5014
      %v5047 = vmul.f32 %v4791, %v5015
      %v5048 = vmul.f32 %v4792, %v5016
      %v5049 = vmul.f32 %v4793, %v5017
      %v5050 = vmul.f32 %v4794, %v5018
      %v5051 = vmul.f32 %v4795, %v5019
      %v5052 = vmul.f32 %v4796, %v5020
      %v5053 = vmul.f32 %v4797, %v5021
      %v5054 = vmul.f32 %v4798, %v5022
      %v5055 = vmul.f32 %v4799, %v5023
      %v5056 = vmul.f32 %v4800, %v5024
      %v5057 = vmul.f32 %v4801, %v5025
      %v5058 = vmul.f32 %v4802, %v5026
      %v5059 = vmul.f32 %v4803, %v5027
      %v5060 = vmul.f32 %v4804, %v5028
      %v5061 = vmul.f32 %v4805, %v5029
      %v5062 = vmul.f32 %v4806, %v5030
      %v5064 = vlaneseq
      %v5065 = vshrl.u32 %v5064, 7
      %v5066 = vsub.s32 0, %v5065
      %v5067 = vrot.slane %v4645, %v5066
      %v5069 = vmul.f32 %v5031, %v5067
      %v5070 = vmul.f32 %v5032, %v5067
      %v5071 = vmul.f32 %v5033, %v5067
      %v5072 = vmul.f32 %v5034, %v5067
      %v5073 = vmul.f32 %v5035, %v5067
      %v5074 = vmul.f32 %v5036, %v5067
      %v5075 = vmul.f32 %v5037, %v5067
      %v5076 = vmul.f32 %v5038, %v5067
      %v5077 = vmul.f32 %v5039, %v5067
      %v5078 = vmul.f32 %v5040, %v5067
      %v5079 = vmul.f32 %v5041, %v5067
      %v5080 = vmul.f32 %v5042, %v5067
      %v5081 = vmul.f32 %v5043, %v5067
      %v5082 = vmul.f32 %v5044, %v5067
      %v5083 = vmul.f32 %v5045, %v5067
      %v5084 = vmul.f32 %v5046, %v5067
      %v5085 = vmul.f32 %v5047, %v5067
      %v5086 = vmul.f32 %v5048, %v5067
      %v5087 = vmul.f32 %v5049, %v5067
      %v5088 = vmul.f32 %v5050, %v5067
      %v5089 = vmul.f32 %v5051, %v5067
      %v5090 = vmul.f32 %v5052, %v5067
      %v5091 = vmul.f32 %v5053, %v5067
      %v5092 = vmul.f32 %v5054, %v5067
      %v5093 = vmul.f32 %v5055, %v5067
      %v5094 = vmul.f32 %v5056, %v5067
      %v5095 = vmul.f32 %v5057, %v5067
      %v5096 = vmul.f32 %v5058, %v5067
      %v5097 = vmul.f32 %v5059, %v5067
      %v5098 = vmul.f32 %v5060, %v5067
      %v5099 = vmul.f32 %v5061, %v5067
      %v5100 = vmul.f32 %v5062, %v5067
      %v5102 = vlaneseq
      %v5103 = vshrl.u32 %v5102, 7
      %v5104 = vsub.s32 0, %v5103
      %v5105 = vrot.slane %v4646, %v5104
      %v5107 = vadd.f32 %v5069, %v5105
      %v5108 = vadd.f32 %v5070, %v5105
      %v5109 = vadd.f32 %v5071, %v5105
      %v5110 = vadd.f32 %v5072, %v5105
      %v5111 = vadd.f32 %v5073, %v5105
      %v5112 = vadd.f32 %v5074, %v5105
      %v5113 = vadd.f32 %v5075, %v5105
      %v5114 = vadd.f32 %v5076, %v5105
      %v5115 = vadd.f32 %v5077, %v5105
      %v5116 = vadd.f32 %v5078, %v5105
      %v5117 = vadd.f32 %v5079, %v5105
      %v5118 = vadd.f32 %v5080, %v5105
      %v5119 = vadd.f32 %v5081, %v5105
      %v5120 = vadd.f32 %v5082, %v5105
      %v5121 = vadd.f32 %v5083, %v5105
      %v5122 = vadd.f32 %v5084, %v5105
      %v5123 = vadd.f32 %v5085, %v5105
      %v5124 = vadd.f32 %v5086, %v5105
      %v5125 = vadd.f32 %v5087, %v5105
      %v5126 = vadd.f32 %v5088, %v5105
      %v5127 = vadd.f32 %v5089, %v5105
      %v5128 = vadd.f32 %v5090, %v5105
      %v5129 = vadd.f32 %v5091, %v5105
      %v5130 = vadd.f32 %v5092, %v5105
      %v5131 = vadd.f32 %v5093, %v5105
      %v5132 = vadd.f32 %v5094, %v5105
      %v5133 = vadd.f32 %v5095, %v5105
      %v5134 = vadd.f32 %v5096, %v5105
      %v5135 = vadd.f32 %v5097, %v5105
      %v5136 = vadd.f32 %v5098, %v5105
      %v5137 = vadd.f32 %v5099, %v5105
      %v5138 = vadd.f32 %v5100, %v5105
      %v5139 = vpack.c.bf16 %v5108, %v5107
      %v5140 = vpack.c.bf16 %v5110, %v5109
      %v5141 = vpack.c.bf16 %v5112, %v5111
      %v5142 = vpack.c.bf16 %v5114, %v5113
      %v5143 = vpack.c.bf16 %v5116, %v5115
      %v5144 = vpack.c.bf16 %v5118, %v5117
      %v5145 = vpack.c.bf16 %v5120, %v5119
      %v5146 = vpack.c.bf16 %v5122, %v5121
      %v5147 = vpack.c.bf16 %v5124, %v5123
      %v5148 = vpack.c.bf16 %v5126, %v5125
      %v5149 = vpack.c.bf16 %v5128, %v5127
      %v5150 = vpack.c.bf16 %v5130, %v5129
      %v5151 = vpack.c.bf16 %v5132, %v5131
      %v5152 = vpack.c.bf16 %v5134, %v5133
      %v5153 = vpack.c.bf16 %v5136, %v5135
      %v5154 = vpack.c.bf16 %v5138, %v5137
      %v5155 = vld [vmem:[%s13] sm:$0x3]
      %v5156 = vld [vmem:[%s14] sm:$0x1]
      %v5158 = vlaneseq
      %v5159 = vshrl.u32 %v5158, 7
      %v5160 = vsub.s32 0, %v5159
      %v5161 = vrot.slane %v5156, %v5160
      %v5164 = vsel %vm692, %v5139, 0
      %v5167 = vsel %vm692, %v5140, 0
      %v5170 = vsel %vm692, %v5141, 0
      %v5173 = vsel %vm692, %v5142, 0
      %v5176 = vsel %vm692, %v5143, 0
      %v5179 = vsel %vm692, %v5144, 0
      %v5182 = vsel %vm692, %v5145, 0
      %v5185 = vsel %vm692, %v5146, 0
      %v5188 = vsel %vm692, %v5147, 0
      %v5191 = vsel %vm692, %v5148, 0
      %v5194 = vsel %vm692, %v5149, 0
      %v5197 = vsel %vm692, %v5150, 0
      %v5200 = vsel %vm692, %v5151, 0
      %v5203 = vsel %vm692, %v5152, 0
      %v5206 = vsel %vm692, %v5153, 0
      %v5209 = vsel %vm692, %v5154, 0
      %v5212 = vsel %vm1326, %v5155, 0
      %5214 = vmatprep.subr.bf16.mxu0 0
      %5215 = vmatpush1.bf16.msra.mxu0 %v5212
      %5216 = vmatprep.subr.bf16.mxu0 0
      %5217 = vmatpush1.bf16.msra.mxu0 0
      %5218 = vmatprep.subr.bf16.mxu0 0
      %5219 = vmatpush1.bf16.msra.mxu0 0
      %5220 = vmatprep.subr.bf16.mxu0 0
      %5221 = vmatpush1.bf16.msra.mxu0 0
      %5222 = vmatprep.subr.bf16.mxu0 0
      %5223 = vmatpush1.bf16.msra.mxu0 0
      %5224 = vmatprep.subr.bf16.mxu0 0
      %5225 = vmatpush1.bf16.msra.mxu0 0
      %5226 = vmatprep.subr.bf16.mxu0 0
      %5227 = vmatpush1.bf16.msra.mxu0 0
      %5228 = vmatprep.subr.bf16.mxu0 0
      %5229 = vmatpush1.bf16.msra.mxu0 0
      %5230 = vmatprep.subr.bf16.mxu0 0
      %5231 = vmatpush1.bf16.msra.mxu0 0
      %5232 = vmatprep.subr.bf16.mxu0 0
      %5233 = vmatpush1.bf16.msra.mxu0 0
      %5234 = vmatprep.subr.bf16.mxu0 0
      %5235 = vmatpush1.bf16.msra.mxu0 0
      %5236 = vmatprep.subr.bf16.mxu0 0
      %5237 = vmatpush1.bf16.msra.mxu0 0
      %5238 = vmatprep.subr.bf16.mxu0 0
      %5239 = vmatpush1.bf16.msra.mxu0 0
      %5240 = vmatprep.subr.bf16.mxu0 0
      %5241 = vmatpush1.bf16.msra.mxu0 0
      %5242 = vmatprep.subr.bf16.mxu0 0
      %5243 = vmatpush1.bf16.msra.mxu0 0
      %5244 = vmatprep.subr.bf16.mxu0 0
      %5245 = vmatpush1.bf16.msra.mxu0 0
      %5246 = vmatprep.mubr.bf16.mxu0 0
      %5247 = vmatmul.mubr.bf16.gmra.mrb[0].mxu0 %v5164
      %v5248 = vpop.f32.mrb[0].mxu0
      %v5249 = vadd.f32 %v5161, %v5248
      %v5250 = vpop.f32.mrb[0].mxu0
      %v5251 = vpop.f32.mrb[0].mxu0
      %v5252 = vadd.f32 %v5161, %v5251
      %v5253 = vpop.f32.mrb[0].mxu0
      %5254 = vmatprep.mubr.bf16.mxu0 0
      %5255 = vmatmul.mubr.bf16.gmra.mrb[0].mxu0 %v5167
      %v5256 = vpop.f32.mrb[0].mxu0
      %v5257 = vadd.f32 %v5161, %v5256
      %v5258 = vpop.f32.mrb[0].mxu0
      %v5259 = vpop.f32.mrb[0].mxu0
      %v5260 = vadd.f32 %v5161, %v5259
      %v5261 = vpop.f32.mrb[0].mxu0
      %5262 = vmatprep.mubr.bf16.mxu0 0
      %5263 = vmatmul.mubr.bf16.gmra.mrb[0].mxu0 %v5170
      %v5264 = vpop.f32.mrb[0].mxu0
      %v5265 = vadd.f32 %v5161, %v5264
      %v5266 = vpop.f32.mrb[0].mxu0
      %v5267 = vpop.f32.mrb[0].mxu0
      %v5268 = vadd.f32 %v5161, %v5267
      %v5269 = vpop.f32.mrb[0].mxu0
      %5270 = vmatprep.mubr.bf16.mxu0 0
      %5271 = vmatmul.mubr.bf16.gmra.mrb[0].mxu0 %v5173
      %v5272 = vpop.f32.mrb[0].mxu0
      %v5273 = vadd.f32 %v5161, %v5272
      %v5274 = vpop.f32.mrb[0].mxu0
      %v5275 = vpop.f32.mrb[0].mxu0
      %v5276 = vadd.f32 %v5161, %v5275
      %v5277 = vpop.f32.mrb[0].mxu0
      %5278 = vmatprep.mubr.bf16.mxu0 0
      %5279 = vmatmul.mubr.bf16.gmra.mrb[0].mxu0 %v5176
      %v5280 = vpop.f32.mrb[0].mxu0
      %v5281 = vadd.f32 %v5161, %v5280
      %v5282 = vpop.f32.mrb[0].mxu0
      %v5283 = vpop.f32.mrb[0].mxu0
      %v5284 = vadd.f32 %v5161, %v5283
      %v5285 = vpop.f32.mrb[0].mxu0
      %5286 = vmatprep.mubr.bf16.mxu0 0
      %5287 = vmatmul.mubr.bf16.gmra.mrb[0].mxu0 %v5179
      %v5288 = vpop.f32.mrb[0].mxu0
      %v5289 = vadd.f32 %v5161, %v5288
      %v5290 = vpop.f32.mrb[0].mxu0
      %v5291 = vpop.f32.mrb[0].mxu0
      %v5292 = vadd.f32 %v5161, %v5291
      %v5293 = vpop.f32.mrb[0].mxu0
      %5294 = vmatprep.mubr.bf16.mxu0 0
      %5295 = vmatmul.mubr.bf16.gmra.mrb[0].mxu0 %v5182
      %v5296 = vpop.f32.mrb[0].mxu0
      %v5297 = vadd.f32 %v5161, %v5296
      %v5298 = vpop.f32.mrb[0].mxu0
      %v5299 = vpop.f32.mrb[0].mxu0
      %v5300 = vadd.f32 %v5161, %v5299
      %v5301 = vpop.f32.mrb[0].mxu0
      %5302 = vmatprep.mubr.bf16.mxu0 0
      %5303 = vmatmul.mubr.bf16.gmra.mrb[0].mxu0 %v5185
      %v5304 = vpop.f32.mrb[0].mxu0
      %v5305 = vadd.f32 %v5161, %v5304
      %v5306 = vpop.f32.mrb[0].mxu0
      %v5307 = vpop.f32.mrb[0].mxu0
      %v5308 = vadd.f32 %v5161, %v5307
      %v5309 = vpop.f32.mrb[0].mxu0
      %5310 = vmatprep.mubr.bf16.mxu0 0
      %5311 = vmatmul.mubr.bf16.gmra.mrb[0].mxu0 %v5188
      %v5312 = vpop.f32.mrb[0].mxu0
      %v5313 = vadd.f32 %v5161, %v5312
      %v5314 = vpop.f32.mrb[0].mxu0
      %v5315 = vpop.f32.mrb[0].mxu0
      %v5316 = vadd.f32 %v5161, %v5315
      %v5317 = vpop.f32.mrb[0].mxu0
      %5318 = vmatprep.mubr.bf16.mxu0 0
      %5319 = vmatmul.mubr.bf16.gmra.mrb[0].mxu0 %v5191
      %v5320 = vpop.f32.mrb[0].mxu0
      %v5321 = vadd.f32 %v5161, %v5320
      %v5322 = vpop.f32.mrb[0].mxu0
      %v5323 = vpop.f32.mrb[0].mxu0
      %v5324 = vadd.f32 %v5161, %v5323
      %v5325 = vpop.f32.mrb[0].mxu0
      %5326 = vmatprep.mubr.bf16.mxu0 0
      %5327 = vmatmul.mubr.bf16.gmra.mrb[0].mxu0 %v5194
      %v5328 = vpop.f32.mrb[0].mxu0
      %v5329 = vadd.f32 %v5161, %v5328
      %v5330 = vpop.f32.mrb[0].mxu0
      %v5331 = vpop.f32.mrb[0].mxu0
      %v5332 = vadd.f32 %v5161, %v5331
      %v5333 = vpop.f32.mrb[0].mxu0
      %5334 = vmatprep.mubr.bf16.mxu0 0
      %5335 = vmatmul.mubr.bf16.gmra.mrb[0].mxu0 %v5197
      %v5336 = vpop.f32.mrb[0].mxu0
      %v5337 = vadd.f32 %v5161, %v5336
      %v5338 = vpop.f32.mrb[0].mxu0
      %v5339 = vpop.f32.mrb[0].mxu0
      %v5340 = vadd.f32 %v5161, %v5339
      %v5341 = vpop.f32.mrb[0].mxu0
      %5342 = vmatprep.mubr.bf16.mxu0 0
      %5343 = vmatmul.mubr.bf16.gmra.mrb[0].mxu0 %v5200
      %v5344 = vpop.f32.mrb[0].mxu0
      %v5345 = vadd.f32 %v5161, %v5344
      %v5346 = vpop.f32.mrb[0].mxu0
      %v5347 = vpop.f32.mrb[0].mxu0
      %v5348 = vadd.f32 %v5161, %v5347
      %v5349 = vpop.f32.mrb[0].mxu0
      %5350 = vmatprep.mubr.bf16.mxu0 0
      %5351 = vmatmul.mubr.bf16.gmra.mrb[0].mxu0 %v5203
      %v5352 = vpop.f32.mrb[0].mxu0
      %v5353 = vadd.f32 %v5161, %v5352
      %v5354 = vpop.f32.mrb[0].mxu0
      %v5355 = vpop.f32.mrb[0].mxu0
      %v5356 = vadd.f32 %v5161, %v5355
      %v5357 = vpop.f32.mrb[0].mxu0
      %5358 = vmatprep.mubr.bf16.mxu0 0
      %5359 = vmatmul.mubr.bf16.gmra.mrb[0].mxu0 %v5206
      %v5360 = vpop.f32.mrb[0].mxu0
      %v5361 = vadd.f32 %v5161, %v5360
      %v5362 = vpop.f32.mrb[0].mxu0
      %v5363 = vpop.f32.mrb[0].mxu0
      %v5364 = vadd.f32 %v5161, %v5363
      %v5365 = vpop.f32.mrb[0].mxu0
      %5366 = vmatprep.mubr.bf16.mxu0 0
      %5367 = vmatmul.mubr.bf16.gmra.mrb[0].mxu0 %v5209
      %v5368 = vpop.f32.mrb[0].mxu0
      %v5369 = vadd.f32 %v5161, %v5368
      %v5370 = vpop.f32.mrb[0].mxu0
      %v5371 = vpop.f32.mrb[0].mxu0
      %v5372 = vadd.f32 %v5161, %v5371
      %v5373 = vpop.f32.mrb[0].mxu0
      %5374 = vdwg.mxu0
      %v5375 = vmul.f32 %v5249, 0.5
      %v5376 = vmul.f32 %v5252, 0.5
      %v5377 = vmul.f32 %v5257, 0.5
      %v5378 = vmul.f32 %v5260, 0.5
      %v5379 = vmul.f32 %v5265, 0.5
      %v5380 = vmul.f32 %v5268, 0.5
      %v5381 = vmul.f32 %v5273, 0.5
      %v5382 = vmul.f32 %v5276, 0.5
      %v5383 = vmul.f32 %v5281, 0.5
      %v5384 = vmul.f32 %v5284, 0.5
      %v5385 = vmul.f32 %v5289, 0.5
      %v5386 = vmul.f32 %v5292, 0.5
      %v5387 = vmul.f32 %v5297, 0.5
      %v5388 = vmul.f32 %v5300, 0.5
      %v5389 = vmul.f32 %v5305, 0.5
      %v5390 = vmul.f32 %v5308, 0.5
      %v5391 = vmul.f32 %v5313, 0.5
      %v5392 = vmul.f32 %v5316, 0.5
      %v5393 = vmul.f32 %v5321, 0.5
      %v5394 = vmul.f32 %v5324, 0.5
      %v5395 = vmul.f32 %v5329, 0.5
      %v5396 = vmul.f32 %v5332, 0.5
      %v5397 = vmul.f32 %v5337, 0.5
      %v5398 = vmul.f32 %v5340, 0.5
      %v5399 = vmul.f32 %v5345, 0.5
      %v5400 = vmul.f32 %v5348, 0.5
      %v5401 = vmul.f32 %v5353, 0.5
      %v5402 = vmul.f32 %v5356, 0.5
      %v5403 = vmul.f32 %v5361, 0.5
      %v5404 = vmul.f32 %v5364, 0.5
      %v5405 = vmul.f32 %v5369, 0.5
      %v5406 = vmul.f32 %v5372, 0.5
      %v5407 = vmul.f32 %v5249, 0.70710677
      %v5408 = vmul.f32 %v5252, 0.70710677
      %v5409 = vmul.f32 %v5257, 0.70710677
      %v5410 = vmul.f32 %v5260, 0.70710677
      %v5411 = vmul.f32 %v5265, 0.70710677
      %v5412 = vmul.f32 %v5268, 0.70710677
      %v5413 = vmul.f32 %v5273, 0.70710677
      %v5414 = vmul.f32 %v5276, 0.70710677
      %v5415 = vmul.f32 %v5281, 0.70710677
      %v5416 = vmul.f32 %v5284, 0.70710677
      %v5417 = vmul.f32 %v5289, 0.70710677
      %v5418 = vmul.f32 %v5292, 0.70710677
      %v5419 = vmul.f32 %v5297, 0.70710677
      %v5420 = vmul.f32 %v5300, 0.70710677
      %v5421 = vmul.f32 %v5305, 0.70710677
      %v5422 = vmul.f32 %v5308, 0.70710677
      %v5423 = vmul.f32 %v5313, 0.70710677
      %v5424 = vmul.f32 %v5316, 0.70710677
      %v5425 = vmul.f32 %v5321, 0.70710677
      %v5426 = vmul.f32 %v5324, 0.70710677
      %v5427 = vmul.f32 %v5329, 0.70710677
      %v5428 = vmul.f32 %v5332, 0.70710677
      %v5429 = vmul.f32 %v5337, 0.70710677
      %v5430 = vmul.f32 %v5340, 0.70710677
      %v5431 = vmul.f32 %v5345, 0.70710677
      %v5432 = vmul.f32 %v5348, 0.70710677
      %v5433 = vmul.f32 %v5353, 0.70710677
      %v5434 = vmul.f32 %v5356, 0.70710677
      %v5435 = vmul.f32 %v5361, 0.70710677
      %v5436 = vmul.f32 %v5364, 0.70710677
      %v5437 = vmul.f32 %v5369, 0.70710677
      %v5438 = vmul.f32 %v5372, 0.70710677
      %v5439 = vand.u32 2147483647, %v5407
      %v5440 = vand.u32 2147483647, %v5408
      %v5441 = vand.u32 2147483647, %v5409
      %v5442 = vand.u32 2147483647, %v5410
      %v5443 = vand.u32 2147483647, %v5411
      %v5444 = vand.u32 2147483647, %v5412
      %v5445 = vand.u32 2147483647, %v5413
      %v5446 = vand.u32 2147483647, %v5414
      %v5447 = vand.u32 2147483647, %v5415
      %v5448 = vand.u32 2147483647, %v5416
      %v5449 = vand.u32 2147483647, %v5417
      %v5450 = vand.u32 2147483647, %v5418
      %v5451 = vand.u32 2147483647, %v5419
      %v5452 = vand.u32 2147483647, %v5420
      %v5453 = vand.u32 2147483647, %v5421
      %v5454 = vand.u32 2147483647, %v5422
      %v5455 = vand.u32 2147483647, %v5423
      %v5456 = vand.u32 2147483647, %v5424
      %v5457 = vand.u32 2147483647, %v5425
      %v5458 = vand.u32 2147483647, %v5426
      %v5459 = vand.u32 2147483647, %v5427
      %v5460 = vand.u32 2147483647, %v5428
      %v5461 = vand.u32 2147483647, %v5429
      %v5462 = vand.u32 2147483647, %v5430
      %v5463 = vand.u32 2147483647, %v5431
      %v5464 = vand.u32 2147483647, %v5432
      %v5465 = vand.u32 2147483647, %v5433
      %v5466 = vand.u32 2147483647, %v5434
      %v5467 = vand.u32 2147483647, %v5435
      %v5468 = vand.u32 2147483647, %v5436
      %v5469 = vand.u32 2147483647, %v5437
      %v5470 = vand.u32 2147483647, %v5438
      %v5471 = vmul.f32 %v5439, 0.3275911
      %v5472 = vmul.f32 %v5440, 0.3275911
      %v5473 = vmul.f32 %v5441, 0.3275911
      %v5474 = vmul.f32 %v5442, 0.3275911
      %v5475 = vmul.f32 %v5443, 0.3275911
      %v5476 = vmul.f32 %v5444, 0.3275911
      %v5477 = vmul.f32 %v5445, 0.3275911
      %v5478 = vmul.f32 %v5446, 0.3275911
      %v5479 = vmul.f32 %v5447, 0.3275911
      %v5480 = vmul.f32 %v5448, 0.3275911
      %v5481 = vmul.f32 %v5449, 0.3275911
      %v5482 = vmul.f32 %v5450, 0.3275911
      %v5483 = vmul.f32 %v5451, 0.3275911
      %v5484 = vmul.f32 %v5452, 0.3275911
      %v5485 = vmul.f32 %v5453, 0.3275911
      %v5486 = vmul.f32 %v5454, 0.3275911
      %v5487 = vmul.f32 %v5455, 0.3275911
      %v5488 = vmul.f32 %v5456, 0.3275911
      %v5489 = vmul.f32 %v5457, 0.3275911
      %v5490 = vmul.f32 %v5458, 0.3275911
      %v5491 = vmul.f32 %v5459, 0.3275911
      %v5492 = vmul.f32 %v5460, 0.3275911
      %v5493 = vmul.f32 %v5461, 0.3275911
      %v5494 = vmul.f32 %v5462, 0.3275911
      %v5495 = vmul.f32 %v5463, 0.3275911
      %v5496 = vmul.f32 %v5464, 0.3275911
      %v5497 = vmul.f32 %v5465, 0.3275911
      %v5498 = vmul.f32 %v5466, 0.3275911
      %v5499 = vmul.f32 %v5467, 0.3275911
      %v5500 = vmul.f32 %v5468, 0.3275911
      %v5501 = vmul.f32 %v5469, 0.3275911
      %v5502 = vmul.f32 %v5470, 0.3275911
      %v5503 = vadd.f32 %v5471, 1.0
      %v5504 = vadd.f32 %v5472, 1.0
      %v5505 = vadd.f32 %v5473, 1.0
      %v5506 = vadd.f32 %v5474, 1.0
      %v5507 = vadd.f32 %v5475, 1.0
      %v5508 = vadd.f32 %v5476, 1.0
      %v5509 = vadd.f32 %v5477, 1.0
      %v5510 = vadd.f32 %v5478, 1.0
      %v5511 = vadd.f32 %v5479, 1.0
      %v5512 = vadd.f32 %v5480, 1.0
      %v5513 = vadd.f32 %v5481, 1.0
      %v5514 = vadd.f32 %v5482, 1.0
      %v5515 = vadd.f32 %v5483, 1.0
      %v5516 = vadd.f32 %v5484, 1.0
      %v5517 = vadd.f32 %v5485, 1.0
      %v5518 = vadd.f32 %v5486, 1.0
      %v5519 = vadd.f32 %v5487, 1.0
      %v5520 = vadd.f32 %v5488, 1.0
      %v5521 = vadd.f32 %v5489, 1.0
      %v5522 = vadd.f32 %v5490, 1.0
      %v5523 = vadd.f32 %v5491, 1.0
      %v5524 = vadd.f32 %v5492, 1.0
      %v5525 = vadd.f32 %v5493, 1.0
      %v5526 = vadd.f32 %v5494, 1.0
      %v5527 = vadd.f32 %v5495, 1.0
      %v5528 = vadd.f32 %v5496, 1.0
      %v5529 = vadd.f32 %v5497, 1.0
      %v5530 = vadd.f32 %v5498, 1.0
      %v5531 = vadd.f32 %v5499, 1.0
      %v5532 = vadd.f32 %v5500, 1.0
      %v5533 = vadd.f32 %v5501, 1.0
      %v5534 = vadd.f32 %v5502, 1.0
      %v5535 = vrcp.pop %v5503
      %v5536 = vmul.f32 1.0, %v5535
      %v5537 = vrcp.pop %v5504
      %v5538 = vmul.f32 1.0, %v5537
      %v5539 = vrcp.pop %v5505
      %v5540 = vmul.f32 1.0, %v5539
      %v5541 = vrcp.pop %v5506
      %v5542 = vmul.f32 1.0, %v5541
      %v5543 = vrcp.pop %v5507
      %v5544 = vmul.f32 1.0, %v5543
      %v5545 = vrcp.pop %v5508
      %v5546 = vmul.f32 1.0, %v5545
      %v5547 = vrcp.pop %v5509
      %v5548 = vmul.f32 1.0, %v5547
      %v5549 = vrcp.pop %v5510
      %v5550 = vmul.f32 1.0, %v5549
      %v5551 = vrcp.pop %v5511
      %v5552 = vmul.f32 1.0, %v5551
      %v5553 = vrcp.pop %v5512
      %v5554 = vmul.f32 1.0, %v5553
      %v5555 = vrcp.pop %v5513
      %v5556 = vmul.f32 1.0, %v5555
      %v5557 = vrcp.pop %v5514
      %v5558 = vmul.f32 1.0, %v5557
      %v5559 = vrcp.pop %v5515
      %v5560 = vmul.f32 1.0, %v5559
      %v5561 = vrcp.pop %v5516
      %v5562 = vmul.f32 1.0, %v5561
      %v5563 = vrcp.pop %v5517
      %v5564 = vmul.f32 1.0, %v5563
      %v5565 = vrcp.pop %v5518
      %v5566 = vmul.f32 1.0, %v5565
      %v5567 = vrcp.pop %v5519
      %v5568 = vmul.f32 1.0, %v5567
      %v5569 = vrcp.pop %v5520
      %v5570 = vmul.f32 1.0, %v5569
      %v5571 = vrcp.pop %v5521
      %v5572 = vmul.f32 1.0, %v5571
      %v5573 = vrcp.pop %v5522
      %v5574 = vmul.f32 1.0, %v5573
      %v5575 = vrcp.pop %v5523
      %v5576 = vmul.f32 1.0, %v5575
      %v5577 = vrcp.pop %v5524
      %v5578 = vmul.f32 1.0, %v5577
      %v5579 = vrcp.pop %v5525
      %v5580 = vmul.f32 1.0, %v5579
      %v5581 = vrcp.pop %v5526
      %v5582 = vmul.f32 1.0, %v5581
      %v5583 = vrcp.pop %v5527
      %v5584 = vmul.f32 1.0, %v5583
      %v5585 = vrcp.pop %v5528
      %v5586 = vmul.f32 1.0, %v5585
      %v5587 = vrcp.pop %v5529
      %v5588 = vmul.f32 1.0, %v5587
      %v5589 = vrcp.pop %v5530
      %v5590 = vmul.f32 1.0, %v5589
      %v5591 = vrcp.pop %v5531
      %v5592 = vmul.f32 1.0, %v5591
      %v5593 = vrcp.pop %v5532
      %v5594 = vmul.f32 1.0, %v5593
      %v5595 = vrcp.pop %v5533
      %v5596 = vmul.f32 1.0, %v5595
      %v5597 = vrcp.pop %v5534
      %v5598 = vmul.f32 1.0, %v5597
      %v5599 = vmul.f32 %v5536, 1.0614054
      %v5600 = vmul.f32 %v5538, 1.0614054
      %v5601 = vmul.f32 %v5540, 1.0614054
      %v5602 = vmul.f32 %v5542, 1.0614054
      %v5603 = vmul.f32 %v5544, 1.0614054
      %v5604 = vmul.f32 %v5546, 1.0614054
      %v5605 = vmul.f32 %v5548, 1.0614054
      %v5606 = vmul.f32 %v5550, 1.0614054
      %v5607 = vmul.f32 %v5552, 1.0614054
      %v5608 = vmul.f32 %v5554, 1.0614054
      %v5609 = vmul.f32 %v5556, 1.0614054
      %v5610 = vmul.f32 %v5558, 1.0614054
      %v5611 = vmul.f32 %v5560, 1.0614054
      %v5612 = vmul.f32 %v5562, 1.0614054
      %v5613 = vmul.f32 %v5564, 1.0614054
      %v5614 = vmul.f32 %v5566, 1.0614054
      %v5615 = vmul.f32 %v5568, 1.0614054
      %v5616 = vmul.f32 %v5570, 1.0614054
      %v5617 = vmul.f32 %v5572, 1.0614054
      %v5618 = vmul.f32 %v5574, 1.0614054
      %v5619 = vmul.f32 %v5576, 1.0614054
      %v5620 = vmul.f32 %v5578, 1.0614054
      %v5621 = vmul.f32 %v5580, 1.0614054
      %v5622 = vmul.f32 %v5582, 1.0614054
      %v5623 = vmul.f32 %v5584, 1.0614054
      %v5624 = vmul.f32 %v5586, 1.0614054
      %v5625 = vmul.f32 %v5588, 1.0614054
      %v5626 = vmul.f32 %v5590, 1.0614054
      %v5627 = vmul.f32 %v5592, 1.0614054
      %v5628 = vmul.f32 %v5594, 1.0614054
      %v5629 = vmul.f32 %v5596, 1.0614054
      %v5630 = vmul.f32 %v5598, 1.0614054
      %v5631 = vadd.f32 %v5599, -1.4531521
      %v5632 = vadd.f32 %v5600, -1.4531521
      %v5633 = vadd.f32 %v5601, -1.4531521
      %v5634 = vadd.f32 %v5602, -1.4531521
      %v5635 = vadd.f32 %v5603, -1.4531521
      %v5636 = vadd.f32 %v5604, -1.4531521
      %v5637 = vadd.f32 %v5605, -1.4531521
      %v5638 = vadd.f32 %v5606, -1.4531521
      %v5639 = vadd.f32 %v5607, -1.4531521
      %v5640 = vadd.f32 %v5608, -1.4531521
      %v5641 = vadd.f32 %v5609, -1.4531521
      %v5642 = vadd.f32 %v5610, -1.4531521
      %v5643 = vadd.f32 %v5611, -1.4531521
      %v5644 = vadd.f32 %v5612, -1.4531521
      %v5645 = vadd.f32 %v5613, -1.4531521
      %v5646 = vadd.f32 %v5614, -1.4531521
      %v5647 = vadd.f32 %v5615, -1.4531521
      %v5648 = vadd.f32 %v5616, -1.4531521
      %v5649 = vadd.f32 %v5617, -1.4531521
      %v5650 = vadd.f32 %v5618, -1.4531521
      %v5651 = vadd.f32 %v5619, -1.4531521
      %v5652 = vadd.f32 %v5620, -1.4531521
      %v5653 = vadd.f32 %v5621, -1.4531521
      %v5654 = vadd.f32 %v5622, -1.4531521
      %v5655 = vadd.f32 %v5623, -1.4531521
      %v5656 = vadd.f32 %v5624, -1.4531521
      %v5657 = vadd.f32 %v5625, -1.4531521
      %v5658 = vadd.f32 %v5626, -1.4531521
      %v5659 = vadd.f32 %v5627, -1.4531521
      %v5660 = vadd.f32 %v5628, -1.4531521
      %v5661 = vadd.f32 %v5629, -1.4531521
      %v5662 = vadd.f32 %v5630, -1.4531521
      %v5663 = vmul.f32 %v5631, %v5536
      %v5664 = vmul.f32 %v5632, %v5538
      %v5665 = vmul.f32 %v5633, %v5540
      %v5666 = vmul.f32 %v5634, %v5542
      %v5667 = vmul.f32 %v5635, %v5544
      %v5668 = vmul.f32 %v5636, %v5546
      %v5669 = vmul.f32 %v5637, %v5548
      %v5670 = vmul.f32 %v5638, %v5550
      %v5671 = vmul.f32 %v5639, %v5552
      %v5672 = vmul.f32 %v5640, %v5554
      %v5673 = vmul.f32 %v5641, %v5556
      %v5674 = vmul.f32 %v5642, %v5558
      %v5675 = vmul.f32 %v5643, %v5560
      %v5676 = vmul.f32 %v5644, %v5562
      %v5677 = vmul.f32 %v5645, %v5564
      %v5678 = vmul.f32 %v5646, %v5566
      %v5679 = vmul.f32 %v5647, %v5568
      %v5680 = vmul.f32 %v5648, %v5570
      %v5681 = vmul.f32 %v5649, %v5572
      %v5682 = vmul.f32 %v5650, %v5574
      %v5683 = vmul.f32 %v5651, %v5576
      %v5684 = vmul.f32 %v5652, %v5578
      %v5685 = vmul.f32 %v5653, %v5580
      %v5686 = vmul.f32 %v5654, %v5582
      %v5687 = vmul.f32 %v5655, %v5584
      %v5688 = vmul.f32 %v5656, %v5586
      %v5689 = vmul.f32 %v5657, %v5588
      %v5690 = vmul.f32 %v5658, %v5590
      %v5691 = vmul.f32 %v5659, %v5592
      %v5692 = vmul.f32 %v5660, %v5594
      %v5693 = vmul.f32 %v5661, %v5596
      %v5694 = vmul.f32 %v5662, %v5598
      %v5695 = vadd.f32 %v5663, 1.4214138
      %v5696 = vadd.f32 %v5664, 1.4214138
      %v5697 = vadd.f32 %v5665, 1.4214138
      %v5698 = vadd.f32 %v5666, 1.4214138
      %v5699 = vadd.f32 %v5667, 1.4214138
      %v5700 = vadd.f32 %v5668, 1.4214138
      %v5701 = vadd.f32 %v5669, 1.4214138
      %v5702 = vadd.f32 %v5670, 1.4214138
      %v5703 = vadd.f32 %v5671, 1.4214138
      %v5704 = vadd.f32 %v5672, 1.4214138
      %v5705 = vadd.f32 %v5673, 1.4214138
      %v5706 = vadd.f32 %v5674, 1.4214138
      %v5707 = vadd.f32 %v5675, 1.4214138
      %v5708 = vadd.f32 %v5676, 1.4214138
      %v5709 = vadd.f32 %v5677, 1.4214138
      %v5710 = vadd.f32 %v5678, 1.4214138
      %v5711 = vadd.f32 %v5679, 1.4214138
      %v5712 = vadd.f32 %v5680, 1.4214138
      %v5713 = vadd.f32 %v5681, 1.4214138
      %v5714 = vadd.f32 %v5682, 1.4214138
      %v5715 = vadd.f32 %v5683, 1.4214138
      %v5716 = vadd.f32 %v5684, 1.4214138
      %v5717 = vadd.f32 %v5685, 1.4214138
      %v5718 = vadd.f32 %v5686, 1.4214138
      %v5719 = vadd.f32 %v5687, 1.4214138
      %v5720 = vadd.f32 %v5688, 1.4214138
      %v5721 = vadd.f32 %v5689, 1.4214138
      %v5722 = vadd.f32 %v5690, 1.4214138
      %v5723 = vadd.f32 %v5691, 1.4214138
      %v5724 = vadd.f32 %v5692, 1.4214138
      %v5725 = vadd.f32 %v5693, 1.4214138
      %v5726 = vadd.f32 %v5694, 1.4214138
      %v5727 = vmul.f32 %v5695, %v5536
      %v5728 = vmul.f32 %v5696, %v5538
      %v5729 = vmul.f32 %v5697, %v5540
      %v5730 = vmul.f32 %v5698, %v5542
      %v5731 = vmul.f32 %v5699, %v5544
      %v5732 = vmul.f32 %v5700, %v5546
      %v5733 = vmul.f32 %v5701, %v5548
      %v5734 = vmul.f32 %v5702, %v5550
      %v5735 = vmul.f32 %v5703, %v5552
      %v5736 = vmul.f32 %v5704, %v5554
      %v5737 = vmul.f32 %v5705, %v5556
      %v5738 = vmul.f32 %v5706, %v5558
      %v5739 = vmul.f32 %v5707, %v5560
      %v5740 = vmul.f32 %v5708, %v5562
      %v5741 = vmul.f32 %v5709, %v5564
      %v5742 = vmul.f32 %v5710, %v5566
      %v5743 = vmul.f32 %v5711, %v5568
      %v5744 = vmul.f32 %v5712, %v5570
      %v5745 = vmul.f32 %v5713, %v5572
      %v5746 = vmul.f32 %v5714, %v5574
      %v5747 = vmul.f32 %v5715, %v5576
      %v5748 = vmul.f32 %v5716, %v5578
      %v5749 = vmul.f32 %v5717, %v5580
      %v5750 = vmul.f32 %v5718, %v5582
      %v5751 = vmul.f32 %v5719, %v5584
      %v5752 = vmul.f32 %v5720, %v5586
      %v5753 = vmul.f32 %v5721, %v5588
      %v5754 = vmul.f32 %v5722, %v5590
      %v5755 = vmul.f32 %v5723, %v5592
      %v5756 = vmul.f32 %v5724, %v5594
      %v5757 = vmul.f32 %v5725, %v5596
      %v5758 = vmul.f32 %v5726, %v5598
      %v5759 = vadd.f32 %v5727, -0.28449672
      %v5760 = vadd.f32 %v5728, -0.28449672
      %v5761 = vadd.f32 %v5729, -0.28449672
      %v5762 = vadd.f32 %v5730, -0.28449672
      %v5763 = vadd.f32 %v5731, -0.28449672
      %v5764 = vadd.f32 %v5732, -0.28449672
      %v5765 = vadd.f32 %v5733, -0.28449672
      %v5766 = vadd.f32 %v5734, -0.28449672
      %v5767 = vadd.f32 %v5735, -0.28449672
      %v5768 = vadd.f32 %v5736, -0.28449672
      %v5769 = vadd.f32 %v5737, -0.28449672
      %v5770 = vadd.f32 %v5738, -0.28449672
      %v5771 = vadd.f32 %v5739, -0.28449672
      %v5772 = vadd.f32 %v5740, -0.28449672
      %v5773 = vadd.f32 %v5741, -0.28449672
      %v5774 = vadd.f32 %v5742, -0.28449672
      %v5775 = vadd.f32 %v5743, -0.28449672
      %v5776 = vadd.f32 %v5744, -0.28449672
      %v5777 = vadd.f32 %v5745, -0.28449672
      %v5778 = vadd.f32 %v5746, -0.28449672
      %v5779 = vadd.f32 %v5747, -0.28449672
      %v5780 = vadd.f32 %v5748, -0.28449672
      %v5781 = vadd.f32 %v5749, -0.28449672
      %v5782 = vadd.f32 %v5750, -0.28449672
      %v5783 = vadd.f32 %v5751, -0.28449672
      %v5784 = vadd.f32 %v5752, -0.28449672
      %v5785 = vadd.f32 %v5753, -0.28449672
      %v5786 = vadd.f32 %v5754, -0.28449672
      %v5787 = vadd.f32 %v5755, -0.28449672
      %v5788 = vadd.f32 %v5756, -0.28449672
      %v5789 = vadd.f32 %v5757, -0.28449672
      %v5790 = vadd.f32 %v5758, -0.28449672
      %v5791 = vmul.f32 %v5759, %v5536
      %v5792 = vmul.f32 %v5760, %v5538
      %v5793 = vmul.f32 %v5761, %v5540
      %v5794 = vmul.f32 %v5762, %v5542
      %v5795 = vmul.f32 %v5763, %v5544
      %v5796 = vmul.f32 %v5764, %v5546
      %v5797 = vmul.f32 %v5765, %v5548
      %v5798 = vmul.f32 %v5766, %v5550
      %v5799 = vmul.f32 %v5767, %v5552
      %v5800 = vmul.f32 %v5768, %v5554
      %v5801 = vmul.f32 %v5769, %v5556
      %v5802 = vmul.f32 %v5770, %v5558
      %v5803 = vmul.f32 %v5771, %v5560
      %v5804 = vmul.f32 %v5772, %v5562
      %v5805 = vmul.f32 %v5773, %v5564
      %v5806 = vmul.f32 %v5774, %v5566
      %v5807 = vmul.f32 %v5775, %v5568
      %v5808 = vmul.f32 %v5776, %v5570
      %v5809 = vmul.f32 %v5777, %v5572
      %v5810 = vmul.f32 %v5778, %v5574
      %v5811 = vmul.f32 %v5779, %v5576
      %v5812 = vmul.f32 %v5780, %v5578
      %v5813 = vmul.f32 %v5781, %v5580
      %v5814 = vmul.f32 %v5782, %v5582
      %v5815 = vmul.f32 %v5783, %v5584
      %v5816 = vmul.f32 %v5784, %v5586
      %v5817 = vmul.f32 %v5785, %v5588
      %v5818 = vmul.f32 %v5786, %v5590
      %v5819 = vmul.f32 %v5787, %v5592
      %v5820 = vmul.f32 %v5788, %v5594
      %v5821 = vmul.f32 %v5789, %v5596
      %v5822 = vmul.f32 %v5790, %v5598
      %v5823 = vadd.f32 %v5791, 0.2548296
      %v5824 = vadd.f32 %v5792, 0.2548296
      %v5825 = vadd.f32 %v5793, 0.2548296
      %v5826 = vadd.f32 %v5794, 0.2548296
      %v5827 = vadd.f32 %v5795, 0.2548296
      %v5828 = vadd.f32 %v5796, 0.2548296
      %v5829 = vadd.f32 %v5797, 0.2548296
      %v5830 = vadd.f32 %v5798, 0.2548296
      %v5831 = vadd.f32 %v5799, 0.2548296
      %v5832 = vadd.f32 %v5800, 0.2548296
      %v5833 = vadd.f32 %v5801, 0.2548296
      %v5834 = vadd.f32 %v5802, 0.2548296
      %v5835 = vadd.f32 %v5803, 0.2548296
      %v5836 = vadd.f32 %v5804, 0.2548296
      %v5837 = vadd.f32 %v5805, 0.2548296
      %v5838 = vadd.f32 %v5806, 0.2548296
      %v5839 = vadd.f32 %v5807, 0.2548296
      %v5840 = vadd.f32 %v5808, 0.2548296
      %v5841 = vadd.f32 %v5809, 0.2548296
      %v5842 = vadd.f32 %v5810, 0.2548296
      %v5843 = vadd.f32 %v5811, 0.2548296
      %v5844 = vadd.f32 %v5812, 0.2548296
      %v5845 = vadd.f32 %v5813, 0.2548296
      %v5846 = vadd.f32 %v5814, 0.2548296
      %v5847 = vadd.f32 %v5815, 0.2548296
      %v5848 = vadd.f32 %v5816, 0.2548296
      %v5849 = vadd.f32 %v5817, 0.2548296
      %v5850 = vadd.f32 %v5818, 0.2548296
      %v5851 = vadd.f32 %v5819, 0.2548296
      %v5852 = vadd.f32 %v5820, 0.2548296
      %v5853 = vadd.f32 %v5821, 0.2548296
      %v5854 = vadd.f32 %v5822, 0.2548296
      %v5855 = vmul.f32 %v5823, %v5536
      %v5856 = vmul.f32 %v5824, %v5538
      %v5857 = vmul.f32 %v5825, %v5540
      %v5858 = vmul.f32 %v5826, %v5542
      %v5859 = vmul.f32 %v5827, %v5544
      %v5860 = vmul.f32 %v5828, %v5546
      %v5861 = vmul.f32 %v5829, %v5548
      %v5862 = vmul.f32 %v5830, %v5550
      %v5863 = vmul.f32 %v5831, %v5552
      %v5864 = vmul.f32 %v5832, %v5554
      %v5865 = vmul.f32 %v5833, %v5556
      %v5866 = vmul.f32 %v5834, %v5558
      %v5867 = vmul.f32 %v5835, %v5560
      %v5868 = vmul.f32 %v5836, %v5562
      %v5869 = vmul.f32 %v5837, %v5564
      %v5870 = vmul.f32 %v5838, %v5566
      %v5871 = vmul.f32 %v5839, %v5568
      %v5872 = vmul.f32 %v5840, %v5570
      %v5873 = vmul.f32 %v5841, %v5572
      %v5874 = vmul.f32 %v5842, %v5574
      %v5875 = vmul.f32 %v5843, %v5576
      %v5876 = vmul.f32 %v5844, %v5578
      %v5877 = vmul.f32 %v5845, %v5580
      %v5878 = vmul.f32 %v5846, %v5582
      %v5879 = vmul.f32 %v5847, %v5584
      %v5880 = vmul.f32 %v5848, %v5586
      %v5881 = vmul.f32 %v5849, %v5588
      %v5882 = vmul.f32 %v5850, %v5590
      %v5883 = vmul.f32 %v5851, %v5592
      %v5884 = vmul.f32 %v5852, %v5594
      %v5885 = vmul.f32 %v5853, %v5596
      %v5886 = vmul.f32 %v5854, %v5598
      %v5887 = vsub.f32 0.0, %v5439
      %v5888 = vsub.f32 0.0, %v5440
      %v5889 = vsub.f32 0.0, %v5441
      %v5890 = vsub.f32 0.0, %v5442
      %v5891 = vsub.f32 0.0, %v5443
      %v5892 = vsub.f32 0.0, %v5444
      %v5893 = vsub.f32 0.0, %v5445
      %v5894 = vsub.f32 0.0, %v5446
      %v5895 = vsub.f32 0.0, %v5447
      %v5896 = vsub.f32 0.0, %v5448
      %v5897 = vsub.f32 0.0, %v5449
      %v5898 = vsub.f32 0.0, %v5450
      %v5899 = vsub.f32 0.0, %v5451
      %v5900 = vsub.f32 0.0, %v5452
      %v5901 = vsub.f32 0.0, %v5453
      %v5902 = vsub.f32 0.0, %v5454
      %v5903 = vsub.f32 0.0, %v5455
      %v5904 = vsub.f32 0.0, %v5456
      %v5905 = vsub.f32 0.0, %v5457
      %v5906 = vsub.f32 0.0, %v5458
      %v5907 = vsub.f32 0.0, %v5459
      %v5908 = vsub.f32 0.0, %v5460
      %v5909 = vsub.f32 0.0, %v5461
      %v5910 = vsub.f32 0.0, %v5462
      %v5911 = vsub.f32 0.0, %v5463
      %v5912 = vsub.f32 0.0, %v5464
      %v5913 = vsub.f32 0.0, %v5465
      %v5914 = vsub.f32 0.0, %v5466
      %v5915 = vsub.f32 0.0, %v5467
      %v5916 = vsub.f32 0.0, %v5468
      %v5917 = vsub.f32 0.0, %v5469
      %v5918 = vsub.f32 0.0, %v5470
      %v5919 = vmul.f32 %v5887, %v5439
      %v5920 = vmul.f32 %v5888, %v5440
      %v5921 = vmul.f32 %v5889, %v5441
      %v5922 = vmul.f32 %v5890, %v5442
      %v5923 = vmul.f32 %v5891, %v5443
      %v5924 = vmul.f32 %v5892, %v5444
      %v5925 = vmul.f32 %v5893, %v5445
      %v5926 = vmul.f32 %v5894, %v5446
      %v5927 = vmul.f32 %v5895, %v5447
      %v5928 = vmul.f32 %v5896, %v5448
      %v5929 = vmul.f32 %v5897, %v5449
      %v5930 = vmul.f32 %v5898, %v5450
      %v5931 = vmul.f32 %v5899, %v5451
      %v5932 = vmul.f32 %v5900, %v5452
      %v5933 = vmul.f32 %v5901, %v5453
      %v5934 = vmul.f32 %v5902, %v5454
      %v5935 = vmul.f32 %v5903, %v5455
      %v5936 = vmul.f32 %v5904, %v5456
      %v5937 = vmul.f32 %v5905, %v5457
      %v5938 = vmul.f32 %v5906, %v5458
      %v5939 = vmul.f32 %v5907, %v5459
      %v5940 = vmul.f32 %v5908, %v5460
      %v5941 = vmul.f32 %v5909, %v5461
      %v5942 = vmul.f32 %v5910, %v5462
      %v5943 = vmul.f32 %v5911, %v5463
      %v5944 = vmul.f32 %v5912, %v5464
      %v5945 = vmul.f32 %v5913, %v5465
      %v5946 = vmul.f32 %v5914, %v5466
      %v5947 = vmul.f32 %v5915, %v5467
      %v5948 = vmul.f32 %v5916, %v5468
      %v5949 = vmul.f32 %v5917, %v5469
      %v5950 = vmul.f32 %v5918, %v5470
      %v5951 = vmul.f32 %v5919, 1.442695
      %v5952 = vpow.pop %v5951
      %v5953 = vmul.f32 %v5920, 1.442695
      %v5954 = vpow.pop %v5953
      %v5955 = vmul.f32 %v5921, 1.442695
      %v5956 = vpow.pop %v5955
      %v5957 = vmul.f32 %v5922, 1.442695
      %v5958 = vpow.pop %v5957
      %v5959 = vmul.f32 %v5923, 1.442695
      %v5960 = vpow.pop %v5959
      %v5961 = vmul.f32 %v5924, 1.442695
      %v5962 = vpow.pop %v5961
      %v5963 = vmul.f32 %v5925, 1.442695
      %v5964 = vpow.pop %v5963
      %v5965 = vmul.f32 %v5926, 1.442695
      %v5966 = vpow.pop %v5965
      %v5967 = vmul.f32 %v5927, 1.442695
      %v5968 = vpow.pop %v5967
      %v5969 = vmul.f32 %v5928, 1.442695
      %v5970 = vpow.pop %v5969
      %v5971 = vmul.f32 %v5929, 1.442695
      %v5972 = vpow.pop %v5971
      %v5973 = vmul.f32 %v5930, 1.442695
      %v5974 = vpow.pop %v5973
      %v5975 = vmul.f32 %v5931, 1.442695
      %v5976 = vpow.pop %v5975
      %v5977 = vmul.f32 %v5932, 1.442695
      %v5978 = vpow.pop %v5977
      %v5979 = vmul.f32 %v5933, 1.442695
      %v5980 = vpow.pop %v5979
      %v5981 = vmul.f32 %v5934, 1.442695
      %v5982 = vpow.pop %v5981
      %v5983 = vmul.f32 %v5935, 1.442695
      %v5984 = vpow.pop %v5983
      %v5985 = vmul.f32 %v5936, 1.442695
      %v5986 = vpow.pop %v5985
      %v5987 = vmul.f32 %v5937, 1.442695
      %v5988 = vpow.pop %v5987
      %v5989 = vmul.f32 %v5938, 1.442695
      %v5990 = vpow.pop %v5989
      %v5991 = vmul.f32 %v5939, 1.442695
      %v5992 = vpow.pop %v5991
      %v5993 = vmul.f32 %v5940, 1.442695
      %v5994 = vpow.pop %v5993
      %v5995 = vmul.f32 %v5941, 1.442695
      %v5996 = vpow.pop %v5995
      %v5997 = vmul.f32 %v5942, 1.442695
      %v5998 = vpow.pop %v5997
      %v5999 = vmul.f32 %v5943, 1.442695
      %v6000 = vpow.pop %v5999
      %v6001 = vmul.f32 %v5944, 1.442695
      %v6002 = vpow.pop %v6001
      %v6003 = vmul.f32 %v5945, 1.442695
      %v6004 = vpow.pop %v6003
      %v6005 = vmul.f32 %v5946, 1.442695
      %v6006 = vpow.pop %v6005
      %v6007 = vmul.f32 %v5947, 1.442695
      %v6008 = vpow.pop %v6007
      %v6009 = vmul.f32 %v5948, 1.442695
      %v6010 = vpow.pop %v6009
      %v6011 = vmul.f32 %v5949, 1.442695
      %v6012 = vpow.pop %v6011
      %v6013 = vmul.f32 %v5950, 1.442695
      %v6014 = vpow.pop %v6013
      %v6015 = vmul.f32 %v5855, %v5952
      %v6016 = vmul.f32 %v5856, %v5954
      %v6017 = vmul.f32 %v5857, %v5956
      %v6018 = vmul.f32 %v5858, %v5958
      %v6019 = vmul.f32 %v5859, %v5960
      %v6020 = vmul.f32 %v5860, %v5962
      %v6021 = vmul.f32 %v5861, %v5964
      %v6022 = vmul.f32 %v5862, %v5966
      %v6023 = vmul.f32 %v5863, %v5968
      %v6024 = vmul.f32 %v5864, %v5970
      %v6025 = vmul.f32 %v5865, %v5972
      %v6026 = vmul.f32 %v5866, %v5974
      %v6027 = vmul.f32 %v5867, %v5976
      %v6028 = vmul.f32 %v5868, %v5978
      %v6029 = vmul.f32 %v5869, %v5980
      %v6030 = vmul.f32 %v5870, %v5982
      %v6031 = vmul.f32 %v5871, %v5984
      %v6032 = vmul.f32 %v5872, %v5986
      %v6033 = vmul.f32 %v5873, %v5988
      %v6034 = vmul.f32 %v5874, %v5990
      %v6035 = vmul.f32 %v5875, %v5992
      %v6036 = vmul.f32 %v5876, %v5994
      %v6037 = vmul.f32 %v5877, %v5996
      %v6038 = vmul.f32 %v5878, %v5998
      %v6039 = vmul.f32 %v5879, %v6000
      %v6040 = vmul.f32 %v5880, %v6002
      %v6041 = vmul.f32 %v5881, %v6004
      %v6042 = vmul.f32 %v5882, %v6006
      %v6043 = vmul.f32 %v5883, %v6008
      %v6044 = vmul.f32 %v5884, %v6010
      %v6045 = vmul.f32 %v5885, %v6012
      %v6046 = vmul.f32 %v5886, %v6014
      %v6047 = vsub.f32 1.0, %v6015
      %v6048 = vsub.f32 1.0, %v6016
      %v6049 = vsub.f32 1.0, %v6017
      %v6050 = vsub.f32 1.0, %v6018
      %v6051 = vsub.f32 1.0, %v6019
      %v6052 = vsub.f32 1.0, %v6020
      %v6053 = vsub.f32 1.0, %v6021
      %v6054 = vsub.f32 1.0, %v6022
      %v6055 = vsub.f32 1.0, %v6023
      %v6056 = vsub.f32 1.0, %v6024
      %v6057 = vsub.f32 1.0, %v6025
      %v6058 = vsub.f32 1.0, %v6026
      %v6059 = vsub.f32 1.0, %v6027
      %v6060 = vsub.f32 1.0, %v6028
      %v6061 = vsub.f32 1.0, %v6029
      %v6062 = vsub.f32 1.0, %v6030
      %v6063 = vsub.f32 1.0, %v6031
      %v6064 = vsub.f32 1.0, %v6032
      %v6065 = vsub.f32 1.0, %v6033
      %v6066 = vsub.f32 1.0, %v6034
      %v6067 = vsub.f32 1.0, %v6035
      %v6068 = vsub.f32 1.0, %v6036
      %v6069 = vsub.f32 1.0, %v6037
      %v6070 = vsub.f32 1.0, %v6038
      %v6071 = vsub.f32 1.0, %v6039
      %v6072 = vsub.f32 1.0, %v6040
      %v6073 = vsub.f32 1.0, %v6041
      %v6074 = vsub.f32 1.0, %v6042
      %v6075 = vsub.f32 1.0, %v6043
      %v6076 = vsub.f32 1.0, %v6044
      %v6077 = vsub.f32 1.0, %v6045
      %v6078 = vsub.f32 1.0, %v6046
      %vm6079 = vcmp.lt.f32.partialorder %v5407, 0.0
      %vm6080 = vcmp.lt.f32.partialorder %v5408, 0.0
      %vm6081 = vcmp.lt.f32.partialorder %v5409, 0.0
      %vm6082 = vcmp.lt.f32.partialorder %v5410, 0.0
      %vm6083 = vcmp.lt.f32.partialorder %v5411, 0.0
      %vm6084 = vcmp.lt.f32.partialorder %v5412, 0.0
      %vm6085 = vcmp.lt.f32.partialorder %v5413, 0.0
      %vm6086 = vcmp.lt.f32.partialorder %v5414, 0.0
      %vm6087 = vcmp.lt.f32.partialorder %v5415, 0.0
      %vm6088 = vcmp.lt.f32.partialorder %v5416, 0.0
      %vm6089 = vcmp.lt.f32.partialorder %v5417, 0.0
      %vm6090 = vcmp.lt.f32.partialorder %v5418, 0.0
      %vm6091 = vcmp.lt.f32.partialorder %v5419, 0.0
      %vm6092 = vcmp.lt.f32.partialorder %v5420, 0.0
      %vm6093 = vcmp.lt.f32.partialorder %v5421, 0.0
      %vm6094 = vcmp.lt.f32.partialorder %v5422, 0.0
      %vm6095 = vcmp.lt.f32.partialorder %v5423, 0.0
      %vm6096 = vcmp.lt.f32.partialorder %v5424, 0.0
      %vm6097 = vcmp.lt.f32.partialorder %v5425, 0.0
      %vm6098 = vcmp.lt.f32.partialorder %v5426, 0.0
      %vm6099 = vcmp.lt.f32.partialorder %v5427, 0.0
      %vm6100 = vcmp.lt.f32.partialorder %v5428, 0.0
      %vm6101 = vcmp.lt.f32.partialorder %v5429, 0.0
      %vm6102 = vcmp.lt.f32.partialorder %v5430, 0.0
      %vm6103 = vcmp.lt.f32.partialorder %v5431, 0.0
      %vm6104 = vcmp.lt.f32.partialorder %v5432, 0.0
      %vm6105 = vcmp.lt.f32.partialorder %v5433, 0.0
      %vm6106 = vcmp.lt.f32.partialorder %v5434, 0.0
      %vm6107 = vcmp.lt.f32.partialorder %v5435, 0.0
      %vm6108 = vcmp.lt.f32.partialorder %v5436, 0.0
      %vm6109 = vcmp.lt.f32.partialorder %v5437, 0.0
      %vm6110 = vcmp.lt.f32.partialorder %v5438, 0.0
      %v6111 = vsub.f32 0.0, %v6047
      %v6112 = vsub.f32 0.0, %v6048
      %v6113 = vsub.f32 0.0, %v6049
      %v6114 = vsub.f32 0.0, %v6050
      %v6115 = vsub.f32 0.0, %v6051
      %v6116 = vsub.f32 0.0, %v6052
      %v6117 = vsub.f32 0.0, %v6053
      %v6118 = vsub.f32 0.0, %v6054
      %v6119 = vsub.f32 0.0, %v6055
      %v6120 = vsub.f32 0.0, %v6056
      %v6121 = vsub.f32 0.0, %v6057
      %v6122 = vsub.f32 0.0, %v6058
      %v6123 = vsub.f32 0.0, %v6059
      %v6124 = vsub.f32 0.0, %v6060
      %v6125 = vsub.f32 0.0, %v6061
      %v6126 = vsub.f32 0.0, %v6062
      %v6127 = vsub.f32 0.0, %v6063
      %v6128 = vsub.f32 0.0, %v6064
      %v6129 = vsub.f32 0.0, %v6065
      %v6130 = vsub.f32 0.0, %v6066
      %v6131 = vsub.f32 0.0, %v6067
      %v6132 = vsub.f32 0.0, %v6068
      %v6133 = vsub.f32 0.0, %v6069
      %v6134 = vsub.f32 0.0, %v6070
      %v6135 = vsub.f32 0.0, %v6071
      %v6136 = vsub.f32 0.0, %v6072
      %v6137 = vsub.f32 0.0, %v6073
      %v6138 = vsub.f32 0.0, %v6074
      %v6139 = vsub.f32 0.0, %v6075
      %v6140 = vsub.f32 0.0, %v6076
      %v6141 = vsub.f32 0.0, %v6077
      %v6142 = vsub.f32 0.0, %v6078
      %v6143 = vsel %vm6079, %v6111, %v6047
      %v6144 = vsel %vm6080, %v6112, %v6048
      %v6145 = vsel %vm6081, %v6113, %v6049
      %v6146 = vsel %vm6082, %v6114, %v6050
      %v6147 = vsel %vm6083, %v6115, %v6051
      %v6148 = vsel %vm6084, %v6116, %v6052
      %v6149 = vsel %vm6085, %v6117, %v6053
      %v6150 = vsel %vm6086, %v6118, %v6054
      %v6151 = vsel %vm6087, %v6119, %v6055
      %v6152 = vsel %vm6088, %v6120, %v6056
      %v6153 = vsel %vm6089, %v6121, %v6057
      %v6154 = vsel %vm6090, %v6122, %v6058
      %v6155 = vsel %vm6091, %v6123, %v6059
      %v6156 = vsel %vm6092, %v6124, %v6060
      %v6157 = vsel %vm6093, %v6125, %v6061
      %v6158 = vsel %vm6094, %v6126, %v6062
      %v6159 = vsel %vm6095, %v6127, %v6063
      %v6160 = vsel %vm6096, %v6128, %v6064
      %v6161 = vsel %vm6097, %v6129, %v6065
      %v6162 = vsel %vm6098, %v6130, %v6066
      %v6163 = vsel %vm6099, %v6131, %v6067
      %v6164 = vsel %vm6100, %v6132, %v6068
      %v6165 = vsel %vm6101, %v6133, %v6069
      %v6166 = vsel %vm6102, %v6134, %v6070
      %v6167 = vsel %vm6103, %v6135, %v6071
      %v6168 = vsel %vm6104, %v6136, %v6072
      %v6169 = vsel %vm6105, %v6137, %v6073
      %v6170 = vsel %vm6106, %v6138, %v6074
      %v6171 = vsel %vm6107, %v6139, %v6075
      %v6172 = vsel %vm6108, %v6140, %v6076
      %v6173 = vsel %vm6109, %v6141, %v6077
      %v6174 = vsel %vm6110, %v6142, %v6078
      %v6175 = vadd.f32 %v6143, 1.0
      %v6176 = vadd.f32 %v6144, 1.0
      %v6177 = vadd.f32 %v6145, 1.0
      %v6178 = vadd.f32 %v6146, 1.0
      %v6179 = vadd.f32 %v6147, 1.0
      %v6180 = vadd.f32 %v6148, 1.0
      %v6181 = vadd.f32 %v6149, 1.0
      %v6182 = vadd.f32 %v6150, 1.0
      %v6183 = vadd.f32 %v6151, 1.0
      %v6184 = vadd.f32 %v6152, 1.0
      %v6185 = vadd.f32 %v6153, 1.0
      %v6186 = vadd.f32 %v6154, 1.0
      %v6187 = vadd.f32 %v6155, 1.0
      %v6188 = vadd.f32 %v6156, 1.0
      %v6189 = vadd.f32 %v6157, 1.0
      %v6190 = vadd.f32 %v6158, 1.0
      %v6191 = vadd.f32 %v6159, 1.0
      %v6192 = vadd.f32 %v6160, 1.0
      %v6193 = vadd.f32 %v6161, 1.0
      %v6194 = vadd.f32 %v6162, 1.0
      %v6195 = vadd.f32 %v6163, 1.0
      %v6196 = vadd.f32 %v6164, 1.0
      %v6197 = vadd.f32 %v6165, 1.0
      %v6198 = vadd.f32 %v6166, 1.0
      %v6199 = vadd.f32 %v6167, 1.0
      %v6200 = vadd.f32 %v6168, 1.0
      %v6201 = vadd.f32 %v6169, 1.0
      %v6202 = vadd.f32 %v6170, 1.0
      %v6203 = vadd.f32 %v6171, 1.0
      %v6204 = vadd.f32 %v6172, 1.0
      %v6205 = vadd.f32 %v6173, 1.0
      %v6206 = vadd.f32 %v6174, 1.0
      %v6207 = vmul.f32 %v5375, %v6175
      %v6208 = vmul.f32 %v5376, %v6176
      %v6209 = vmul.f32 %v5377, %v6177
      %v6210 = vmul.f32 %v5378, %v6178
      %v6211 = vmul.f32 %v5379, %v6179
      %v6212 = vmul.f32 %v5380, %v6180
      %v6213 = vmul.f32 %v5381, %v6181
      %v6214 = vmul.f32 %v5382, %v6182
      %v6215 = vmul.f32 %v5383, %v6183
      %v6216 = vmul.f32 %v5384, %v6184
      %v6217 = vmul.f32 %v5385, %v6185
      %v6218 = vmul.f32 %v5386, %v6186
      %v6219 = vmul.f32 %v5387, %v6187
      %v6220 = vmul.f32 %v5388, %v6188
      %v6221 = vmul.f32 %v5389, %v6189
      %v6222 = vmul.f32 %v5390, %v6190
      %v6223 = vmul.f32 %v5391, %v6191
      %v6224 = vmul.f32 %v5392, %v6192
      %v6225 = vmul.f32 %v5393, %v6193
      %v6226 = vmul.f32 %v5394, %v6194
      %v6227 = vmul.f32 %v5395, %v6195
      %v6228 = vmul.f32 %v5396, %v6196
      %v6229 = vmul.f32 %v5397, %v6197
      %v6230 = vmul.f32 %v5398, %v6198
      %v6231 = vmul.f32 %v5399, %v6199
      %v6232 = vmul.f32 %v5400, %v6200
      %v6233 = vmul.f32 %v5401, %v6201
      %v6234 = vmul.f32 %v5402, %v6202
      %v6235 = vmul.f32 %v5403, %v6203
      %v6236 = vmul.f32 %v5404, %v6204
      %v6237 = vmul.f32 %v5405, %v6205
      %v6238 = vmul.f32 %v5406, %v6206
      %v6239 = vpack.c.bf16 %v6208, %v6207
      %v6240 = vpack.c.bf16 %v6210, %v6209
      %v6241 = vpack.c.bf16 %v6212, %v6211
      %v6242 = vpack.c.bf16 %v6214, %v6213
      %v6243 = vpack.c.bf16 %v6216, %v6215
      %v6244 = vpack.c.bf16 %v6218, %v6217
      %v6245 = vpack.c.bf16 %v6220, %v6219
      %v6246 = vpack.c.bf16 %v6222, %v6221
      %v6247 = vpack.c.bf16 %v6224, %v6223
      %v6248 = vpack.c.bf16 %v6226, %v6225
      %v6249 = vpack.c.bf16 %v6228, %v6227
      %v6250 = vpack.c.bf16 %v6230, %v6229
      %v6251 = vpack.c.bf16 %v6232, %v6231
      %v6252 = vpack.c.bf16 %v6234, %v6233
      %v6253 = vpack.c.bf16 %v6236, %v6235
      %v6254 = vpack.c.bf16 %v6238, %v6237
      %v6255 = vld [vmem:[%s15] sm:$0xf]
      %v6256 = vld [vmem:[%s16] sm:$0x1]
      %v6258 = vlaneseq
      %v6259 = vshrl.u32 %v6258, 7
      %v6260 = vsub.s32 0, %v6259
      %v6261 = vrot.slane %v6256, %v6260
      %v6264 = vsel %vm4399, %v6239, 0
      %v6267 = vsel %vm4399, %v6240, 0
      %v6270 = vsel %vm4399, %v6241, 0
      %v6273 = vsel %vm4399, %v6242, 0
      %v6276 = vsel %vm4399, %v6243, 0
      %v6279 = vsel %vm4399, %v6244, 0
      %v6282 = vsel %vm4399, %v6245, 0
      %v6285 = vsel %vm4399, %v6246, 0
      %v6288 = vsel %vm4399, %v6247, 0
      %v6291 = vsel %vm4399, %v6248, 0
      %v6294 = vsel %vm4399, %v6249, 0
      %v6297 = vsel %vm4399, %v6250, 0
      %v6300 = vsel %vm4399, %v6251, 0
      %v6303 = vsel %vm4399, %v6252, 0
      %v6306 = vsel %vm4399, %v6253, 0
      %v6309 = vsel %vm4399, %v6254, 0
      %v6312 = vsel %vm4448, %v6255, 0
      %6314 = vmatprep.subr.bf16.mxu0 0
      %6315 = vmatpush1.bf16.msra.mxu0 %v6312
      %6316 = vmatprep.subr.bf16.mxu0 0
      %6317 = vmatpush1.bf16.msra.mxu0 0
      %6318 = vmatprep.subr.bf16.mxu0 0
      %6319 = vmatpush1.bf16.msra.mxu0 0
      %6320 = vmatprep.subr.bf16.mxu0 0
      %6321 = vmatpush1.bf16.msra.mxu0 0
      %6322 = vmatprep.subr.bf16.mxu0 0
      %6323 = vmatpush1.bf16.msra.mxu0 0
      %6324 = vmatprep.subr.bf16.mxu0 0
      %6325 = vmatpush1.bf16.msra.mxu0 0
      %6326 = vmatprep.subr.bf16.mxu0 0
      %6327 = vmatpush1.bf16.msra.mxu0 0
      %6328 = vmatprep.subr.bf16.mxu0 0
      %6329 = vmatpush1.bf16.msra.mxu0 0
      %6330 = vmatprep.subr.bf16.mxu0 0
      %6331 = vmatpush1.bf16.msra.mxu0 0
      %6332 = vmatprep.subr.bf16.mxu0 0
      %6333 = vmatpush1.bf16.msra.mxu0 0
      %6334 = vmatprep.subr.bf16.mxu0 0
      %6335 = vmatpush1.bf16.msra.mxu0 0
      %6336 = vmatprep.subr.bf16.mxu0 0
      %6337 = vmatpush1.bf16.msra.mxu0 0
      %6338 = vmatprep.subr.bf16.mxu0 0
      %6339 = vmatpush1.bf16.msra.mxu0 0
      %6340 = vmatprep.subr.bf16.mxu0 0
      %6341 = vmatpush1.bf16.msra.mxu0 0
      %6342 = vmatprep.subr.bf16.mxu0 0
      %6343 = vmatpush1.bf16.msra.mxu0 0
      %6344 = vmatprep.subr.bf16.mxu0 0
      %6345 = vmatpush1.bf16.msra.mxu0 0
      %6346 = vmatprep.mubr.bf16.mxu0 0
      %6347 = vmatmul.mubr.bf16.gmra.mrb[0].mxu0 %v6264
      %v6348 = vpop.f32.mrb[0].mxu0
      %v6349 = vadd.f32 %v6261, %v6348
      %v6350 = vpop.f32.mrb[0].mxu0
      %v6351 = vpop.f32.mrb[0].mxu0
      %v6352 = vadd.f32 %v6261, %v6351
      %v6353 = vpop.f32.mrb[0].mxu0
      %6354 = vmatprep.mubr.bf16.mxu0 0
      %6355 = vmatmul.mubr.bf16.gmra.mrb[0].mxu0 %v6267
      %v6356 = vpop.f32.mrb[0].mxu0
      %v6357 = vadd.f32 %v6261, %v6356
      %v6358 = vpop.f32.mrb[0].mxu0
      %v6359 = vpop.f32.mrb[0].mxu0
      %v6360 = vadd.f32 %v6261, %v6359
      %v6361 = vpop.f32.mrb[0].mxu0
      %6362 = vmatprep.mubr.bf16.mxu0 0
      %6363 = vmatmul.mubr.bf16.gmra.mrb[0].mxu0 %v6270
      %v6364 = vpop.f32.mrb[0].mxu0
      %v6365 = vadd.f32 %v6261, %v6364
      %v6366 = vpop.f32.mrb[0].mxu0
      %v6367 = vpop.f32.mrb[0].mxu0
      %v6368 = vadd.f32 %v6261, %v6367
      %v6369 = vpop.f32.mrb[0].mxu0
      %6370 = vmatprep.mubr.bf16.mxu0 0
      %6371 = vmatmul.mubr.bf16.gmra.mrb[0].mxu0 %v6273
      %v6372 = vpop.f32.mrb[0].mxu0
      %v6373 = vadd.f32 %v6261, %v6372
      %v6374 = vpop.f32.mrb[0].mxu0
      %v6375 = vpop.f32.mrb[0].mxu0
      %v6376 = vadd.f32 %v6261, %v6375
      %v6377 = vpop.f32.mrb[0].mxu0
      %6378 = vmatprep.mubr.bf16.mxu0 0
      %6379 = vmatmul.mubr.bf16.gmra.mrb[0].mxu0 %v6276
      %v6380 = vpop.f32.mrb[0].mxu0
      %v6381 = vadd.f32 %v6261, %v6380
      %v6382 = vpop.f32.mrb[0].mxu0
      %v6383 = vpop.f32.mrb[0].mxu0
      %v6384 = vadd.f32 %v6261, %v6383
      %v6385 = vpop.f32.mrb[0].mxu0
      %6386 = vmatprep.mubr.bf16.mxu0 0
      %6387 = vmatmul.mubr.bf16.gmra.mrb[0].mxu0 %v6279
      %v6388 = vpop.f32.mrb[0].mxu0
      %v6389 = vadd.f32 %v6261, %v6388
      %v6390 = vpop.f32.mrb[0].mxu0
      %v6391 = vpop.f32.mrb[0].mxu0
      %v6392 = vadd.f32 %v6261, %v6391
      %v6393 = vpop.f32.mrb[0].mxu0
      %6394 = vmatprep.mubr.bf16.mxu0 0
      %6395 = vmatmul.mubr.bf16.gmra.mrb[0].mxu0 %v6282
      %v6396 = vpop.f32.mrb[0].mxu0
      %v6397 = vadd.f32 %v6261, %v6396
      %v6398 = vpop.f32.mrb[0].mxu0
      %v6399 = vpop.f32.mrb[0].mxu0
      %v6400 = vadd.f32 %v6261, %v6399
      %v6401 = vpop.f32.mrb[0].mxu0
      %6402 = vmatprep.mubr.bf16.mxu0 0
      %6403 = vmatmul.mubr.bf16.gmra.mrb[0].mxu0 %v6285
      %v6404 = vpop.f32.mrb[0].mxu0
      %v6405 = vadd.f32 %v6261, %v6404
      %v6406 = vpop.f32.mrb[0].mxu0
      %v6407 = vpop.f32.mrb[0].mxu0
      %v6408 = vadd.f32 %v6261, %v6407
      %v6409 = vpop.f32.mrb[0].mxu0
      %6410 = vmatprep.mubr.bf16.mxu0 0
      %6411 = vmatmul.mubr.bf16.gmra.mrb[0].mxu0 %v6288
      %v6412 = vpop.f32.mrb[0].mxu0
      %v6413 = vadd.f32 %v6261, %v6412
      %v6414 = vpop.f32.mrb[0].mxu0
      %v6415 = vpop.f32.mrb[0].mxu0
      %v6416 = vadd.f32 %v6261, %v6415
      %v6417 = vpop.f32.mrb[0].mxu0
      %6418 = vmatprep.mubr.bf16.mxu0 0
      %6419 = vmatmul.mubr.bf16.gmra.mrb[0].mxu0 %v6291
      %v6420 = vpop.f32.mrb[0].mxu0
      %v6421 = vadd.f32 %v6261, %v6420
      %v6422 = vpop.f32.mrb[0].mxu0
      %v6423 = vpop.f32.mrb[0].mxu0
      %v6424 = vadd.f32 %v6261, %v6423
      %v6425 = vpop.f32.mrb[0].mxu0
      %6426 = vmatprep.mubr.bf16.mxu0 0
      %6427 = vmatmul.mubr.bf16.gmra.mrb[0].mxu0 %v6294
      %v6428 = vpop.f32.mrb[0].mxu0
      %v6429 = vadd.f32 %v6261, %v6428
      %v6430 = vpop.f32.mrb[0].mxu0
      %v6431 = vpop.f32.mrb[0].mxu0
      %v6432 = vadd.f32 %v6261, %v6431
      %v6433 = vpop.f32.mrb[0].mxu0
      %6434 = vmatprep.mubr.bf16.mxu0 0
      %6435 = vmatmul.mubr.bf16.gmra.mrb[0].mxu0 %v6297
      %v6436 = vpop.f32.mrb[0].mxu0
      %v6437 = vadd.f32 %v6261, %v6436
      %v6438 = vpop.f32.mrb[0].mxu0
      %v6439 = vpop.f32.mrb[0].mxu0
      %v6440 = vadd.f32 %v6261, %v6439
      %v6441 = vpop.f32.mrb[0].mxu0
      %6442 = vmatprep.mubr.bf16.mxu0 0
      %6443 = vmatmul.mubr.bf16.gmra.mrb[0].mxu0 %v6300
      %v6444 = vpop.f32.mrb[0].mxu0
      %v6445 = vadd.f32 %v6261, %v6444
      %v6446 = vpop.f32.mrb[0].mxu0
      %v6447 = vpop.f32.mrb[0].mxu0
      %v6448 = vadd.f32 %v6261, %v6447
      %v6449 = vpop.f32.mrb[0].mxu0
      %6450 = vmatprep.mubr.bf16.mxu0 0
      %6451 = vmatmul.mubr.bf16.gmra.mrb[0].mxu0 %v6303
      %v6452 = vpop.f32.mrb[0].mxu0
      %v6453 = vadd.f32 %v6261, %v6452
      %v6454 = vpop.f32.mrb[0].mxu0
      %v6455 = vpop.f32.mrb[0].mxu0
      %v6456 = vadd.f32 %v6261, %v6455
      %v6457 = vpop.f32.mrb[0].mxu0
      %6458 = vmatprep.mubr.bf16.mxu0 0
      %6459 = vmatmul.mubr.bf16.gmra.mrb[0].mxu0 %v6306
      %v6460 = vpop.f32.mrb[0].mxu0
      %v6461 = vadd.f32 %v6261, %v6460
      %v6462 = vpop.f32.mrb[0].mxu0
      %v6463 = vpop.f32.mrb[0].mxu0
      %v6464 = vadd.f32 %v6261, %v6463
      %v6465 = vpop.f32.mrb[0].mxu0
      %6466 = vmatprep.mubr.bf16.mxu0 0
      %6467 = vmatmul.mubr.bf16.gmra.mrb[0].mxu0 %v6309
      %v6468 = vpop.f32.mrb[0].mxu0
      %v6469 = vadd.f32 %v6261, %v6468
      %v6470 = vpop.f32.mrb[0].mxu0
      %v6471 = vpop.f32.mrb[0].mxu0
      %v6472 = vadd.f32 %v6261, %v6471
      %v6473 = vpop.f32.mrb[0].mxu0
      %6474 = vdwg.mxu0
      %v6475 = vadd.f32 %v4613, %v6349
      %v6476 = vadd.f32 %v4614, %v6352
      %v6477 = vadd.f32 %v4615, %v6357
      %v6478 = vadd.f32 %v4616, %v6360
      %v6479 = vadd.f32 %v4617, %v6365
      %v6480 = vadd.f32 %v4618, %v6368
      %v6481 = vadd.f32 %v4619, %v6373
      %v6482 = vadd.f32 %v4620, %v6376
      %v6483 = vadd.f32 %v4621, %v6381
      %v6484 = vadd.f32 %v4622, %v6384
      %v6485 = vadd.f32 %v4623, %v6389
      %v6486 = vadd.f32 %v4624, %v6392
      %v6487 = vadd.f32 %v4625, %v6397
      %v6488 = vadd.f32 %v4626, %v6400
      %v6489 = vadd.f32 %v4627, %v6405
      %v6490 = vadd.f32 %v4628, %v6408
      %v6491 = vadd.f32 %v4629, %v6413
      %v6492 = vadd.f32 %v4630, %v6416
      %v6493 = vadd.f32 %v4631, %v6421
      %v6494 = vadd.f32 %v4632, %v6424
      %v6495 = vadd.f32 %v4633, %v6429
      %v6496 = vadd.f32 %v4634, %v6432
      %v6497 = vadd.f32 %v4635, %v6437
      %v6498 = vadd.f32 %v4636, %v6440
      %v6499 = vadd.f32 %v4637, %v6445
      %v6500 = vadd.f32 %v4638, %v6448
      %v6501 = vadd.f32 %v4639, %v6453
      %v6502 = vadd.f32 %v4640, %v6456
      %v6503 = vadd.f32 %v4641, %v6461
      %v6504 = vadd.f32 %v4642, %v6464
      %v6505 = vadd.f32 %v4643, %v6469
      %v6506 = vadd.f32 %v4644, %v6472
      %6507 = vst.msk [vmem:[%s652] sm:$0xff] %vm692, %v6475
      %6508 = vst.msk [vmem:[%s652 + $0x8] sm:$0xff] %vm692, %v6476
      %6509 = vst.msk [vmem:[%s652 + $0x10] sm:$0xff] %vm692, %v6477
      %6510 = vst.msk [vmem:[%s652 + $0x18] sm:$0xff] %vm692, %v6478
      %6511 = vst.msk [vmem:[%s652 + $0x20] sm:$0xff] %vm692, %v6479
      %6512 = vst.msk [vmem:[%s652 + $0x28] sm:$0xff] %vm692, %v6480
      %6513 = vst.msk [vmem:[%s652 + $0x30] sm:$0xff] %vm692, %v6481
      %6514 = vst.msk [vmem:[%s652 + $0x38] sm:$0xff] %vm692, %v6482
      %6515 = vst.msk [vmem:[%s652 + $0x40] sm:$0xff] %vm692, %v6483
      %6516 = vst.msk [vmem:[%s652 + $0x48] sm:$0xff] %vm692, %v6484
      %6517 = vst.msk [vmem:[%s652 + $0x50] sm:$0xff] %vm692, %v6485
      %6518 = vst.msk [vmem:[%s652 + $0x58] sm:$0xff] %vm692, %v6486
      %6519 = vst.msk [vmem:[%s652 + $0x60] sm:$0xff] %vm692, %v6487
      %6520 = vst.msk [vmem:[%s652 + $0x68] sm:$0xff] %vm692, %v6488
      %6521 = vst.msk [vmem:[%s652 + $0x70] sm:$0xff] %vm692, %v6489
      %6522 = vst.msk [vmem:[%s652 + $0x78] sm:$0xff] %vm692, %v6490
      %6523 = vst.msk [vmem:[%s652 + $0x80] sm:$0xff] %vm692, %v6491
      %6524 = vst.msk [vmem:[%s652 + $0x88] sm:$0xff] %vm692, %v6492
      %6525 = vst.msk [vmem:[%s652 + $0x90] sm:$0xff] %vm692, %v6493
      %6526 = vst.msk [vmem:[%s652 + $0x98] sm:$0xff] %vm692, %v6494
      %6527 = vst.msk [vmem:[%s652 + $0xa0] sm:$0xff] %vm692, %v6495
      %6528 = vst.msk [vmem:[%s652 + $0xa8] sm:$0xff] %vm692, %v6496
      %6529 = vst.msk [vmem:[%s652 + $0xb0] sm:$0xff] %vm692, %v6497
      %6530 = vst.msk [vmem:[%s652 + $0xb8] sm:$0xff] %vm692, %v6498
      %6531 = vst.msk [vmem:[%s652 + $0xc0] sm:$0xff] %vm692, %v6499
      %6532 = vst.msk [vmem:[%s652 + $0xc8] sm:$0xff] %vm692, %v6500
      %6533 = vst.msk [vmem:[%s652 + $0xd0] sm:$0xff] %vm692, %v6501
      %6534 = vst.msk [vmem:[%s652 + $0xd8] sm:$0xff] %vm692, %v6502
      %6535 = vst.msk [vmem:[%s652 + $0xe0] sm:$0xff] %vm692, %v6503
      %6536 = vst.msk [vmem:[%s652 + $0xe8] sm:$0xff] %vm692, %v6504
      %6537 = vst.msk [vmem:[%s652 + $0xf0] sm:$0xff] %vm692, %v6505
      %6538 = vst.msk [vmem:[%s652 + $0xf8] sm:$0xff] %vm692, %v6506
      %p6539 = scmp.lt.s32.totalorder %s32, 1
      %s6540 = scalar_select %p6539, %s32, 1
      %p6541 = scmp.lt.s32.totalorder %s33, 0
      %s6542 = scalar_select %p6541, %s33, 0
      %s6543 = smul.addr %s6542, 32
      %s6544 = smul.addr %s6540, 32
      %s6545 = sadd.s32 %s6543, %s6544
      %s6546 = smul.addr %s6545, 8
      %s6547 = scalar_lea.vmem %s17, %s6546
      // Predicated region
      $region89: #{tpu_custom_call.1} parent=87 // pred_check
        %p6548 = pneg %p438
      $region90: #{tpu_custom_call.1} parent=87 // pred_check_branch
        %6550 = sbr.rel (%p6548) target = $region92
      $region91: #{tpu_custom_call.1} parent=87 // pred_region
        _
      $region92: #{tpu_custom_call.1} parent=87 // pred_fallthru
        _
    $region88: #{tpu_custom_call.1} parent=5 // pred_fallthru
      _
    %p6551 = scmp.le.s32.totalorder 2, %s23
    // Predicated region
    $region93: #{tpu_custom_call.1} parent=5 // pred_check
      %p6552 = pneg %p6551
    $region94: #{tpu_custom_call.1} parent=5 // pred_check_branch
      %6554 = sbr.rel (%p6552) target = $region96
    $region95: #{tpu_custom_call.1} parent=5 // pred_region
      %s6555 = ssub.s32 %s23, 2
      // Predicated region
      $region97: #{tpu_custom_call.1} parent=95 // pred_check
        %p6556 = pneg %p444
      $region98: #{tpu_custom_call.1} parent=95 // pred_check_branch
        %6558 = sbr.rel (%p6556) target = $region100
      $region99: #{tpu_custom_call.1} parent=95 // pred_region
        %p6559 = scmp.lt.s32.totalorder %s34, 1
        %s6560 = scalar_select %p6559, %s34, 1
        %p6561 = scmp.lt.s32.totalorder %s35, 0
        %s6562 = scalar_select %p6561, %s35, 0
        %s6563 = smul.addr %s6562, 32
        %s6564 = smul.addr %s6560, 32
        %s6565 = sadd.s32 %s6563, %s6564
        %s6566 = smul.addr %s6565, 8
        %s6567 = scalar_lea.vmem %s17, %s6566
      $region100: #{tpu_custom_call.1} parent=95 // pred_fallthru
        _
    $region96: #{tpu_custom_call.1} parent=5 // pred_fallthru
      _
  $region6: #{tpu_custom_call.1} parent=0 // loop_footer
    %s27 = sadd.s32 1, %s23
  $region7: #{tpu_custom_call.1} parent=0 // loop_footer_branch
    %22 = sbr.rel target = $region3
  $region8: #{tpu_custom_call.1} parent=0 // loop_exit
    _

</llo_original>
